<compile_context>
chip_gen: v5e
topology: v5e:2x2
jax: 0.10.0
libtpu: 0.0.40
codegen_flags: <defaults>
</compile_context>

<pallas_src>
import jax
import jax.numpy as jnp
from jax.experimental import pallas as pl
from jax.experimental.pallas import tpu as pltpu


def _round_up(n, m):
    return ((n + m - 1) // m) * m


def _cdiv(a, b):
    return (a + b - 1) // b


def _mixer_kernel(x_ref, w1_ref, b1_ref, w2_ref, b2_ref, w3_ref, b3_ref,
                  a4_ref, o_ref, h2_ref):
    """One batch tile of the full mixer forward.

    x_ref  : (F, TB, T)       compute dtype  (x_ref[f] -> contiguous (TB, T))
    w1_ref : (T, Ht)          compute dtype  W1.T
    b1_ref : (1, Ht)          f32            b1
    w2_ref : (Ht, Ht)         compute dtype  W2.T / sqrt(Ht)
    b2_ref : (1, Ht)          f32            b2   / sqrt(Ht)
    w3_ref : (Hf*F,)          f32 SMEM       W3   / sqrt(Hf)   (scalars)
    b3_ref : (Hf,)            f32 SMEM       b3   / sqrt(Hf)
    a4_ref : (Hf, Ht, O_pad)  compute dtype  W4.T / norm, zero-padded lanes
    o_ref  : (TB, O_pad)      f32 output
    h2_ref : (F, TB, Ht)      compute-dtype VMEM scratch (token-mixed acts)
    """
    F = x_ref.shape[0]
    Hf = a4_ref.shape[0]
    cdt = w1_ref.dtype

    # Hoist small resident operands out of the loops (no per-iter broadcasts).
    w1 = w1_ref[...]
    w2 = w2_ref[...]
    b1 = b1_ref[...]
    b2 = b2_ref[...]

    # ---- token-mixing MLP (stages 1-2): dim_feature folded into M ----
    for f in range(F):
        h1 = jnp.dot(x_ref[f], w1, preferred_element_type=jnp.float32)
        h1 = jnp.maximum(h1 + b1, 0.0).astype(cdt)        # fused bias+ReLU+cast
        h2 = jnp.dot(h1, w2, preferred_element_type=jnp.float32) + b2
        h2_ref[f] = h2.astype(cdt)                         # norm_token folded in

    # ---- feature-mixing (stage 3) + ReLU + readout, per hidden feature ----
    acc = jnp.zeros(o_ref.shape, jnp.float32)
    for hf in range(Hf):
        # s[b, ht] = sum_f W3[hf,f]/sqrt(Hf) * h2[b, f, ht] + b3[hf]/sqrt(Hf)
        s = w3_ref[hf * F] * h2_ref[0] + b3_ref[hf]        # (TB, Ht) f32
        for f in range(1, F):
            s = s + w3_ref[hf * F + f] * h2_ref[f]
        s = jnp.maximum(s, 0.0).astype(cdt)                # fused ReLU + cast
        # readout contribution of this hf block: (TB, Ht) @ (Ht, O_pad)
        acc = acc + jnp.dot(s, a4_ref[hf], preferred_element_type=jnp.float32)

    o_ref[...] = acc.astype(o_ref.dtype)                   # single lane-dense store


def mlp_mixer_forward(x, W1, b1, W2, b2, W3, b3, W4, *, norm='std',
                      compute_dtype=jnp.bfloat16, block_b=None):
    B, F_dim, T_dim = x.shape
    Ht = W1.shape[0]
    Hf = W3.shape[0]
    O = W4.shape[0]

    inv_nt = 1.0 / (Ht ** 0.5)
    inv_nf = 1.0 / (Hf ** 0.5)
    if norm == 'std':
        inv_norm = 1.0 / (Hf * Ht ** 0.5)
    elif norm == 'mf':
        inv_norm = 1.0 / (Hf * Ht)
    else:
        raise ValueError('Model type is not well specified, it should be "mf" or "std"')

    O_pad = _round_up(max(O, 128), 128)          # lane-dense, unmasked output store
    cdt = jnp.dtype(compute_dtype)
    cdt_b = cdt.itemsize

    # ---- batch tile selection under an explicit VMEM budget ----
    def vmem_bytes(tb):
        x_tile = 2 * F_dim * tb * T_dim * cdt_b                    # double-buffered in
        o_tile = 2 * tb * O_pad * 4                                # double-buffered out
        scratch = F_dim * tb * Ht * cdt_b                          # h2 scratch
        weights = (T_dim * Ht + Ht * Ht + Hf * Ht * O_pad) * cdt_b + 2 * Ht * 4
        working = 6 * tb * max(Ht, O_pad) * 4                      # live f32 tiles / spill slack
        return x_tile + o_tile + scratch + weights + working

    VMEM_BUDGET = 24 * 1024 * 1024   # conservative: fits v7x (64 MiB) with headroom

    B8 = _round_up(B, 8)
    if block_b is None:
        steps = max(1, _cdiv(B8, 512))          # TB <= 512 amortizes grid-step overhead
        if B8 >= 16:
            steps = max(steps, 2)               # >=2 grid steps -> both v7x TCs get work
        TB = _round_up(_cdiv(B8, steps), 8)
        while TB > 8 and vmem_bytes(TB) > VMEM_BUDGET:
            steps += 1
            TB = _round_up(_cdiv(B8, steps), 8)
    else:
        TB = _round_up(block_b, 8)
    B_pad = _round_up(B, TB)
    grid = (B_pad // TB,)

    vmem_limit = int(min(48 * 1024 * 1024,
                         max(32 * 1024 * 1024, 2 * vmem_bytes(TB))))

    # ---- host-side parameter plumbing (scales folded, raw weights, no kron) ----
    w1t = W1.T.astype(cdt)                                         # (T, Ht)
    w2t = (W2.T * inv_nt).astype(cdt)                              # (Ht, Ht)
    b1r = b1.reshape(1, Ht).astype(jnp.float32)
    b2r = (b2 * inv_nt).reshape(1, Ht).astype(jnp.float32)
    w3s = (W3 * inv_nf).reshape(Hf * F_dim).astype(jnp.float32)    # SMEM scalars
    b3s = (b3 * inv_nf).astype(jnp.float32)                        # (Hf,)
    a4 = jnp.zeros((Hf * Ht, O_pad), jnp.float32).at[:, :O].set(W4.T * inv_norm)
    a4 = a4.reshape(Hf, Ht, O_pad).astype(cdt)                     # (Hf, Ht, O_pad)

    # x -> (F, B_pad, T) so that x_ref[f] is a contiguous (TB, T) row tile.
    x3 = jnp.transpose(x, (1, 0, 2))
    if B_pad != B:
        x3 = jnp.pad(x3, ((0, 0), (0, B_pad - B), (0, 0)))
    x3 = x3.astype(cdt)

    flops = 2 * B * F_dim * Ht * (T_dim + Ht + Hf) + 2 * B * Hf * Ht * O
    bytes_accessed = (x3.size * cdt_b + (w1t.size + w2t.size + a4.size) * cdt_b
                      + (b1r.size + b2r.size + w3s.size + b3s.size) * 4
                      + B_pad * O_pad * 4)

    def build(single_buffer_weights):
        def const_spec(shape):
            index_map = lambda i: (0,) * len(shape)
            if single_buffer_weights:
                # constant index_map -> fetched once; one buffer is enough.
                return pl.BlockSpec(shape, index_map, pipeline_mode=pl.Buffered(1))
            return pl.BlockSpec(shape, index_map)

        return pl.pallas_call(
            _mixer_kernel,
            out_shape=jax.ShapeDtypeStruct((B_pad, O_pad), jnp.float32),
            grid=grid,
            in_specs=[
                pl.BlockSpec((F_dim, TB, T_dim), lambda i: (0, i, 0)),  # x tile
                const_spec((T_dim, Ht)),                                # W1.T
                const_spec((1, Ht)),                                    # b1
                const_spec((Ht, Ht)),                                   # W2.T/sqrt(Ht)
                const_spec((1, Ht)),                                    # b2/sqrt(Ht)
                pl.BlockSpec(memory_space=pltpu.MemorySpace.SMEM),      # W3 scalars
                pl.BlockSpec(memory_space=pltpu.MemorySpace.SMEM),      # b3 scalars
                const_spec((Hf, Ht, O_pad)),                            # W4.T/norm
            ],
            out_specs=pl.BlockSpec((TB, O_pad), lambda i: (i, 0)),
            scratch_shapes=[pltpu.VMEM((F_dim, TB, Ht), cdt)],
            compiler_params=pltpu.CompilerParams(
                dimension_semantics=("parallel",),
                vmem_limit_bytes=vmem_limit),
            cost_estimate=pl.CostEstimate(flops=int(flops), transcendentals=0,
                                          bytes_accessed=int(bytes_accessed)),
        )

    args = (x3, w1t, b1r, w2t, b2r, w3s, b3s, a4)
    try:
        out = build(True)(*args)
    except Exception:
        # TODO(synk): drop this fallback once pl.Buffered(1) single-buffering of
        # resident weights is guaranteed on all deployed jax versions.
        out = build(False)(*args)

    return out[:B, :O]


def reference_forward(x, W1, b1, W2, b2, W3, b3, W4, *, norm='std'):
    """Pure-JAX transcription of the PyTorch forward, for correctness check."""
    B = x.shape[0]
    Ht, Hf = W1.shape[0], W3.shape[0]
    norm_token = Ht ** 0.5
    norm_feature = Hf ** 0.5
    norm_val = Hf * Ht ** 0.5 if norm == 'std' else Hf * Ht
    h = jnp.maximum(x @ W1.T + b1, 0.0)
    h = (h @ W2.T + b2) / norm_token
    h = jnp.swapaxes(h, 1, 2) @ W3.T + b3
    h = jnp.swapaxes(h, 1, 2) / norm_feature
    h = jnp.maximum(h, 0.0)
    h = h.reshape(B, -1)
    return (h @ W4.T) / norm_val


if __name__ == "__main__":
    # x: (batch, dim_feature, dim_token)
    B, F_dim, T_dim = 2, 8, 16        # batch, dim_feature, dim_token
    Ht, Hf, O = 32, 16, 4             # hidden_dim_token, hidden_dim_feature, out_dim

    key = jax.random.PRNGKey(0)
    kx, k1, kb1, k2, kb2, k3, kb3, k4 = jax.random.split(key, 8)
    x = jax.random.normal(kx, (B, F_dim, T_dim), jnp.float32)
    W1 = jax.random.normal(k1, (Ht, T_dim), jnp.float32)
    b1 = jax.random.normal(kb1, (Ht,), jnp.float32)
    W2 = jax.random.normal(k2, (Ht, Ht), jnp.float32)
    b2 = jax.random.normal(kb2, (Ht,), jnp.float32)
    W3 = jax.random.normal(k3, (Hf, F_dim), jnp.float32)
    b3 = jax.random.normal(kb3, (Hf,), jnp.float32)
    W4 = jax.random.normal(k4, (O, Hf * Ht), jnp.float32)

    ref = reference_forward(x, W1, b1, W2, b2, W3, b3, W4, norm='std')

    # f32-compute path: exact-math check on the small batch (single grid step)
    out_f32 = jax.block_until_ready(
        mlp_mixer_forward(x, W1, b1, W2, b2, W3, b3, W4, norm='std',
                          compute_dtype=jnp.float32))
    assert out_f32.shape == (B, O), out_f32.shape
    assert jnp.allclose(out_f32, ref, rtol=2e-2, atol=2e-2), (out_f32, ref)

    # default bf16-compute path on the small batch
    out_bf16 = jax.block_until_ready(
        mlp_mixer_forward(x, W1, b1, W2, b2, W3, b3, W4, norm='std'))
    assert out_bf16.shape == (B, O), out_bf16.shape
    assert jnp.allclose(out_bf16, ref, rtol=3e-2, atol=3e-2), (out_bf16, ref)

    # larger batch to exercise the multi-step tiled grid (and megacore) path
    B2 = 256
    x_big = jax.random.normal(jax.random.PRNGKey(1), (B2, F_dim, T_dim), jnp.float32)
    ref_big = reference_forward(x_big, W1, b1, W2, b2, W3, b3, W4, norm='std')
    out_big = jax.block_until_ready(
        mlp_mixer_forward(x_big, W1, b1, W2, b2, W3, b3, W4, norm='std'))
    assert out_big.shape == (B2, O), out_big.shape
    assert jnp.allclose(out_big, ref_big, rtol=3e-2, atol=3e-2)

    print("KERNEL_OK")
</pallas_src>

<mosaic_0001>
module attributes {stable_mosaic.version = 11 : i64} {
  func.func @_mixer_kernel(%arg0: i32, %arg1: memref<8x8x16xf32, #tpu.memory_space<vmem>>, %arg2: memref<16x32xf32, #tpu.memory_space<vmem>>, %arg3: memref<1x32xf32, #tpu.memory_space<vmem>>, %arg4: memref<32x32xf32, #tpu.memory_space<vmem>>, %arg5: memref<1x32xf32, #tpu.memory_space<vmem>>, %arg6: memref<128xf32, #tpu.memory_space<smem>>, %arg7: memref<16xf32, #tpu.memory_space<smem>>, %arg8: memref<16x32x128xf32, #tpu.memory_space<vmem>>, %arg9: memref<8x128xf32, #tpu.memory_space<vmem>>, %arg10: memref<8x8x32xf32, #tpu.memory_space<vmem>>) attributes {dimension_semantics = [#tpu.dimension_semantics<parallel>], iteration_bounds = array<i64: 1>, scalar_prefetch = 0 : i64, scratch_operands = 1 : i64, tpu.core_type = #tpu.core_type<tc>, window_params = [{transform_indices = @transform_0, window_bounds = array<i64: 8, 8, 16>}, {pipeline_mode = #tpu.pipeline_mode<synchronous>, transform_indices = @transform_1, window_bounds = array<i64: 16, 32>}, {pipeline_mode = #tpu.pipeline_mode<synchronous>, transform_indices = @transform_2, window_bounds = array<i64: 1, 32>}, {pipeline_mode = #tpu.pipeline_mode<synchronous>, transform_indices = @transform_3, window_bounds = array<i64: 32, 32>}, {pipeline_mode = #tpu.pipeline_mode<synchronous>, transform_indices = @transform_4, window_bounds = array<i64: 1, 32>}, {transform_indices = @transform_5, window_bounds = array<i64: 128>}, {transform_indices = @transform_6, window_bounds = array<i64: 16>}, {pipeline_mode = #tpu.pipeline_mode<synchronous>, transform_indices = @transform_7, window_bounds = array<i64: 16, 32, 128>}, {transform_indices = @transform_8, window_bounds = array<i64: 8, 128>}]} {
    %c0 = arith.constant 0 : index
    %c0_0 = arith.constant 0 : index
    %0 = vector.load %arg2[%c0, %c0_0] : memref<16x32xf32, #tpu.memory_space<vmem>>, vector<16x32xf32>
    %c0_1 = arith.constant 0 : index
    %c0_2 = arith.constant 0 : index
    %1 = vector.load %arg4[%c0_1, %c0_2] : memref<32x32xf32, #tpu.memory_space<vmem>>, vector<32x32xf32>
    %c0_3 = arith.constant 0 : index
    %c0_4 = arith.constant 0 : index
    %2 = vector.load %arg3[%c0_3, %c0_4] : memref<1x32xf32, #tpu.memory_space<vmem>>, vector<1x32xf32>
    %c0_5 = arith.constant 0 : index
    %c0_6 = arith.constant 0 : index
    %3 = vector.load %arg5[%c0_5, %c0_6] : memref<1x32xf32, #tpu.memory_space<vmem>>, vector<1x32xf32>
    %c0_7 = arith.constant 0 : index
    %c0_8 = arith.constant 0 : index
    %c0_9 = arith.constant 0 : index
    %4 = vector.load %arg1[%c0_7, %c0_8, %c0_9] : memref<8x8x16xf32, #tpu.memory_space<vmem>>, vector<1x8x16xf32>
    %5 = vector.shape_cast %4 : vector<1x8x16xf32> to vector<8x16xf32>
    %cst = arith.constant dense<0.000000e+00> : vector<8x32xf32>
    %6 = tpu.matmul %5, %0, %cst {dimension_numbers = #tpu.dot_dimension_numbers<[1], [0], [0], [1], [0, 0, 1, 1], [], []>} : vector<8x16xf32>, vector<16x32xf32>, vector<8x32xf32> -> vector<8x32xf32>
    %7 = vector.broadcast %2 : vector<1x32xf32> to vector<8x32xf32>
    %8 = arith.addf %6, %7 : vector<8x32xf32>
    %cst_10 = arith.constant 0.000000e+00 : f32
    %9 = vector.broadcast %cst_10 : f32 to vector<8x32xf32>
    %10 = arith.maximumf %8, %9 : vector<8x32xf32>
    %cst_11 = arith.constant dense<0.000000e+00> : vector<8x32xf32>
    %11 = tpu.matmul %10, %1, %cst_11 {dimension_numbers = #tpu.dot_dimension_numbers<[1], [0], [0], [1], [0, 0, 1, 1], [], []>} : vector<8x32xf32>, vector<32x32xf32>, vector<8x32xf32> -> vector<8x32xf32>
    %12 = vector.broadcast %3 : vector<1x32xf32> to vector<8x32xf32>
    %13 = arith.addf %11, %12 : vector<8x32xf32>
    %c0_12 = arith.constant 0 : index
    %c0_13 = arith.constant 0 : index
    %c0_14 = arith.constant 0 : index
    %14 = vector.load %arg10[%c0_12, %c0_13, %c0_14] : memref<8x8x32xf32, #tpu.memory_space<vmem>>, vector<1x8x32xf32>
    %15 = vector.shape_cast %14 : vector<1x8x32xf32> to vector<8x32xf32>
    %16 = vector.shape_cast %13 : vector<8x32xf32> to vector<1x8x32xf32>
    tpu.vector_store %arg10[%c0_12, %c0_13, %c0_14], %16 {strides = array<i32>} : memref<8x8x32xf32, #tpu.memory_space<vmem>>, vector<1x8x32xf32>,
    %c1 = arith.constant 1 : index
    %c0_15 = arith.constant 0 : index
    %c0_16 = arith.constant 0 : index
    %17 = vector.load %arg1[%c1, %c0_15, %c0_16] : memref<8x8x16xf32, #tpu.memory_space<vmem>>, vector<1x8x16xf32>
    %18 = vector.shape_cast %17 : vector<1x8x16xf32> to vector<8x16xf32>
    %cst_17 = arith.constant dense<0.000000e+00> : vector<8x32xf32>
    %19 = tpu.matmul %18, %0, %cst_17 {dimension_numbers = #tpu.dot_dimension_numbers<[1], [0], [0], [1], [0, 0, 1, 1], [], []>} : vector<8x16xf32>, vector<16x32xf32>, vector<8x32xf32> -> vector<8x32xf32>
    %20 = vector.broadcast %2 : vector<1x32xf32> to vector<8x32xf32>
    %21 = arith.addf %19, %20 : vector<8x32xf32>
    %cst_18 = arith.constant 0.000000e+00 : f32
    %22 = vector.broadcast %cst_18 : f32 to vector<8x32xf32>
    %23 = arith.maximumf %21, %22 : vector<8x32xf32>
    %cst_19 = arith.constant dense<0.000000e+00> : vector<8x32xf32>
    %24 = tpu.matmul %23, %1, %cst_19 {dimension_numbers = #tpu.dot_dimension_numbers<[1], [0], [0], [1], [0, 0, 1, 1], [], []>} : vector<8x32xf32>, vector<32x32xf32>, vector<8x32xf32> -> vector<8x32xf32>
    %25 = vector.broadcast %3 : vector<1x32xf32> to vector<8x32xf32>
    %26 = arith.addf %24, %25 : vector<8x32xf32>
    %c1_20 = arith.constant 1 : index
    %c0_21 = arith.constant 0 : index
    %c0_22 = arith.constant 0 : index
    %27 = vector.load %arg10[%c1_20, %c0_21, %c0_22] : memref<8x8x32xf32, #tpu.memory_space<vmem>>, vector<1x8x32xf32>
    %28 = vector.shape_cast %27 : vector<1x8x32xf32> to vector<8x32xf32>
    %29 = vector.shape_cast %26 : vector<8x32xf32> to vector<1x8x32xf32>
    tpu.vector_store %arg10[%c1_20, %c0_21, %c0_22], %29 {strides = array<i32>} : memref<8x8x32xf32, #tpu.memory_space<vmem>>, vector<1x8x32xf32>,
    %c2 = arith.constant 2 : index
    %c0_23 = arith.constant 0 : index
    %c0_24 = arith.constant 0 : index
    %30 = vector.load %arg1[%c2, %c0_23, %c0_24] : memref<8x8x16xf32, #tpu.memory_space<vmem>>, vector<1x8x16xf32>
    %31 = vector.shape_cast %30 : vector<1x8x16xf32> to vector<8x16xf32>
    %cst_25 = arith.constant dense<0.000000e+00> : vector<8x32xf32>
    %32 = tpu.matmul %31, %0, %cst_25 {dimension_numbers = #tpu.dot_dimension_numbers<[1], [0], [0], [1], [0, 0, 1, 1], [], []>} : vector<8x16xf32>, vector<16x32xf32>, vector<8x32xf32> -> vector<8x32xf32>
    %33 = vector.broadcast %2 : vector<1x32xf32> to vector<8x32xf32>
    %34 = arith.addf %32, %33 : vector<8x32xf32>
    %cst_26 = arith.constant 0.000000e+00 : f32
    %35 = vector.broadcast %cst_26 : f32 to vector<8x32xf32>
    %36 = arith.maximumf %34, %35 : vector<8x32xf32>
    %cst_27 = arith.constant dense<0.000000e+00> : vector<8x32xf32>
    %37 = tpu.matmul %36, %1, %cst_27 {dimension_numbers = #tpu.dot_dimension_numbers<[1], [0], [0], [1], [0, 0, 1, 1], [], []>} : vector<8x32xf32>, vector<32x32xf32>, vector<8x32xf32> -> vector<8x32xf32>
    %38 = vector.broadcast %3 : vector<1x32xf32> to vector<8x32xf32>
    %39 = arith.addf %37, %38 : vector<8x32xf32>
    %c2_28 = arith.constant 2 : index
    %c0_29 = arith.constant 0 : index
    %c0_30 = arith.constant 0 : index
    %40 = vector.load %arg10[%c2_28, %c0_29, %c0_30] : memref<8x8x32xf32, #tpu.memory_space<vmem>>, vector<1x8x32xf32>
    %41 = vector.shape_cast %40 : vector<1x8x32xf32> to vector<8x32xf32>
    %42 = vector.shape_cast %39 : vector<8x32xf32> to vector<1x8x32xf32>
    tpu.vector_store %arg10[%c2_28, %c0_29, %c0_30], %42 {strides = array<i32>} : memref<8x8x32xf32, #tpu.memory_space<vmem>>, vector<1x8x32xf32>,
    %c3 = arith.constant 3 : index
    %c0_31 = arith.constant 0 : index
    %c0_32 = arith.constant 0 : index
    %43 = vector.load %arg1[%c3, %c0_31, %c0_32] : memref<8x8x16xf32, #tpu.memory_space<vmem>>, vector<1x8x16xf32>
    %44 = vector.shape_cast %43 : vector<1x8x16xf32> to vector<8x16xf32>
    %cst_33 = arith.constant dense<0.000000e+00> : vector<8x32xf32>
    %45 = tpu.matmul %44, %0, %cst_33 {dimension_numbers = #tpu.dot_dimension_numbers<[1], [0], [0], [1], [0, 0, 1, 1], [], []>} : vector<8x16xf32>, vector<16x32xf32>, vector<8x32xf32> -> vector<8x32xf32>
    %46 = vector.broadcast %2 : vector<1x32xf32> to vector<8x32xf32>
    %47 = arith.addf %45, %46 : vector<8x32xf32>
    %cst_34 = arith.constant 0.000000e+00 : f32
    %48 = vector.broadcast %cst_34 : f32 to vector<8x32xf32>
    %49 = arith.maximumf %47, %48 : vector<8x32xf32>
    %cst_35 = arith.constant dense<0.000000e+00> : vector<8x32xf32>
    %50 = tpu.matmul %49, %1, %cst_35 {dimension_numbers = #tpu.dot_dimension_numbers<[1], [0], [0], [1], [0, 0, 1, 1], [], []>} : vector<8x32xf32>, vector<32x32xf32>, vector<8x32xf32> -> vector<8x32xf32>
    %51 = vector.broadcast %3 : vector<1x32xf32> to vector<8x32xf32>
    %52 = arith.addf %50, %51 : vector<8x32xf32>
    %c3_36 = arith.constant 3 : index
    %c0_37 = arith.constant 0 : index
    %c0_38 = arith.constant 0 : index
    %53 = vector.load %arg10[%c3_36, %c0_37, %c0_38] : memref<8x8x32xf32, #tpu.memory_space<vmem>>, vector<1x8x32xf32>
    %54 = vector.shape_cast %53 : vector<1x8x32xf32> to vector<8x32xf32>
    %55 = vector.shape_cast %52 : vector<8x32xf32> to vector<1x8x32xf32>
    tpu.vector_store %arg10[%c3_36, %c0_37, %c0_38], %55 {strides = array<i32>} : memref<8x8x32xf32, #tpu.memory_space<vmem>>, vector<1x8x32xf32>,
    %c4 = arith.constant 4 : index
    %c0_39 = arith.constant 0 : index
    %c0_40 = arith.constant 0 : index
    %56 = vector.load %arg1[%c4, %c0_39, %c0_40] : memref<8x8x16xf32, #tpu.memory_space<vmem>>, vector<1x8x16xf32>
    %57 = vector.shape_cast %56 : vector<1x8x16xf32> to vector<8x16xf32>
    %cst_41 = arith.constant dense<0.000000e+00> : vector<8x32xf32>
    %58 = tpu.matmul %57, %0, %cst_41 {dimension_numbers = #tpu.dot_dimension_numbers<[1], [0], [0], [1], [0, 0, 1, 1], [], []>} : vector<8x16xf32>, vector<16x32xf32>, vector<8x32xf32> -> vector<8x32xf32>
    %59 = vector.broadcast %2 : vector<1x32xf32> to vector<8x32xf32>
    %60 = arith.addf %58, %59 : vector<8x32xf32>
    %cst_42 = arith.constant 0.000000e+00 : f32
    %61 = vector.broadcast %cst_42 : f32 to vector<8x32xf32>
    %62 = arith.maximumf %60, %61 : vector<8x32xf32>
    %cst_43 = arith.constant dense<0.000000e+00> : vector<8x32xf32>
    %63 = tpu.matmul %62, %1, %cst_43 {dimension_numbers = #tpu.dot_dimension_numbers<[1], [0], [0], [1], [0, 0, 1, 1], [], []>} : vector<8x32xf32>, vector<32x32xf32>, vector<8x32xf32> -> vector<8x32xf32>
    %64 = vector.broadcast %3 : vector<1x32xf32> to vector<8x32xf32>
    %65 = arith.addf %63, %64 : vector<8x32xf32>
    %c4_44 = arith.constant 4 : index
    %c0_45 = arith.constant 0 : index
    %c0_46 = arith.constant 0 : index
    %66 = vector.load %arg10[%c4_44, %c0_45, %c0_46] : memref<8x8x32xf32, #tpu.memory_space<vmem>>, vector<1x8x32xf32>
    %67 = vector.shape_cast %66 : vector<1x8x32xf32> to vector<8x32xf32>
    %68 = vector.shape_cast %65 : vector<8x32xf32> to vector<1x8x32xf32>
    tpu.vector_store %arg10[%c4_44, %c0_45, %c0_46], %68 {strides = array<i32>} : memref<8x8x32xf32, #tpu.memory_space<vmem>>, vector<1x8x32xf32>,
    %c5 = arith.constant 5 : index
    %c0_47 = arith.constant 0 : index
    %c0_48 = arith.constant 0 : index
    %69 = vector.load %arg1[%c5, %c0_47, %c0_48] : memref<8x8x16xf32, #tpu.memory_space<vmem>>, vector<1x8x16xf32>
    %70 = vector.shape_cast %69 : vector<1x8x16xf32> to vector<8x16xf32>
    %cst_49 = arith.constant dense<0.000000e+00> : vector<8x32xf32>
    %71 = tpu.matmul %70, %0, %cst_49 {dimension_numbers = #tpu.dot_dimension_numbers<[1], [0], [0], [1], [0, 0, 1, 1], [], []>} : vector<8x16xf32>, vector<16x32xf32>, vector<8x32xf32> -> vector<8x32xf32>
    %72 = vector.broadcast %2 : vector<1x32xf32> to vector<8x32xf32>
    %73 = arith.addf %71, %72 : vector<8x32xf32>
    %cst_50 = arith.constant 0.000000e+00 : f32
    %74 = vector.broadcast %cst_50 : f32 to vector<8x32xf32>
    %75 = arith.maximumf %73, %74 : vector<8x32xf32>
    %cst_51 = arith.constant dense<0.000000e+00> : vector<8x32xf32>
    %76 = tpu.matmul %75, %1, %cst_51 {dimension_numbers = #tpu.dot_dimension_numbers<[1], [0], [0], [1], [0, 0, 1, 1], [], []>} : vector<8x32xf32>, vector<32x32xf32>, vector<8x32xf32> -> vector<8x32xf32>
    %77 = vector.broadcast %3 : vector<1x32xf32> to vector<8x32xf32>
    %78 = arith.addf %76, %77 : vector<8x32xf32>
    %c5_52 = arith.constant 5 : index
    %c0_53 = arith.constant 0 : index
    %c0_54 = arith.constant 0 : index
    %79 = vector.load %arg10[%c5_52, %c0_53, %c0_54] : memref<8x8x32xf32, #tpu.memory_space<vmem>>, vector<1x8x32xf32>
    %80 = vector.shape_cast %79 : vector<1x8x32xf32> to vector<8x32xf32>
    %81 = vector.shape_cast %78 : vector<8x32xf32> to vector<1x8x32xf32>
    tpu.vector_store %arg10[%c5_52, %c0_53, %c0_54], %81 {strides = array<i32>} : memref<8x8x32xf32, #tpu.memory_space<vmem>>, vector<1x8x32xf32>,
    %c6 = arith.constant 6 : index
    %c0_55 = arith.constant 0 : index
    %c0_56 = arith.constant 0 : index
    %82 = vector.load %arg1[%c6, %c0_55, %c0_56] : memref<8x8x16xf32, #tpu.memory_space<vmem>>, vector<1x8x16xf32>
    %83 = vector.shape_cast %82 : vector<1x8x16xf32> to vector<8x16xf32>
    %cst_57 = arith.constant dense<0.000000e+00> : vector<8x32xf32>
    %84 = tpu.matmul %83, %0, %cst_57 {dimension_numbers = #tpu.dot_dimension_numbers<[1], [0], [0], [1], [0, 0, 1, 1], [], []>} : vector<8x16xf32>, vector<16x32xf32>, vector<8x32xf32> -> vector<8x32xf32>
    %85 = vector.broadcast %2 : vector<1x32xf32> to vector<8x32xf32>
    %86 = arith.addf %84, %85 : vector<8x32xf32>
    %cst_58 = arith.constant 0.000000e+00 : f32
    %87 = vector.broadcast %cst_58 : f32 to vector<8x32xf32>
    %88 = arith.maximumf %86, %87 : vector<8x32xf32>
    %cst_59 = arith.constant dense<0.000000e+00> : vector<8x32xf32>
    %89 = tpu.matmul %88, %1, %cst_59 {dimension_numbers = #tpu.dot_dimension_numbers<[1], [0], [0], [1], [0, 0, 1, 1], [], []>} : vector<8x32xf32>, vector<32x32xf32>, vector<8x32xf32> -> vector<8x32xf32>
    %90 = vector.broadcast %3 : vector<1x32xf32> to vector<8x32xf32>
    %91 = arith.addf %89, %90 : vector<8x32xf32>
    %c6_60 = arith.constant 6 : index
    %c0_61 = arith.constant 0 : index
    %c0_62 = arith.constant 0 : index
    %92 = vector.load %arg10[%c6_60, %c0_61, %c0_62] : memref<8x8x32xf32, #tpu.memory_space<vmem>>, vector<1x8x32xf32>
    %93 = vector.shape_cast %92 : vector<1x8x32xf32> to vector<8x32xf32>
    %94 = vector.shape_cast %91 : vector<8x32xf32> to vector<1x8x32xf32>
    tpu.vector_store %arg10[%c6_60, %c0_61, %c0_62], %94 {strides = array<i32>} : memref<8x8x32xf32, #tpu.memory_space<vmem>>, vector<1x8x32xf32>,
    %c7 = arith.constant 7 : index
    %c0_63 = arith.constant 0 : index
    %c0_64 = arith.constant 0 : index
    %95 = vector.load %arg1[%c7, %c0_63, %c0_64] : memref<8x8x16xf32, #tpu.memory_space<vmem>>, vector<1x8x16xf32>
    %96 = vector.shape_cast %95 : vector<1x8x16xf32> to vector<8x16xf32>
    %cst_65 = arith.constant dense<0.000000e+00> : vector<8x32xf32>
    %97 = tpu.matmul %96, %0, %cst_65 {dimension_numbers = #tpu.dot_dimension_numbers<[1], [0], [0], [1], [0, 0, 1, 1], [], []>} : vector<8x16xf32>, vector<16x32xf32>, vector<8x32xf32> -> vector<8x32xf32>
    %98 = vector.broadcast %2 : vector<1x32xf32> to vector<8x32xf32>
    %99 = arith.addf %97, %98 : vector<8x32xf32>
    %cst_66 = arith.constant 0.000000e+00 : f32
    %100 = vector.broadcast %cst_66 : f32 to vector<8x32xf32>
    %101 = arith.maximumf %99, %100 : vector<8x32xf32>
    %cst_67 = arith.constant dense<0.000000e+00> : vector<8x32xf32>
    %102 = tpu.matmul %101, %1, %cst_67 {dimension_numbers = #tpu.dot_dimension_numbers<[1], [0], [0], [1], [0, 0, 1, 1], [], []>} : vector<8x32xf32>, vector<32x32xf32>, vector<8x32xf32> -> vector<8x32xf32>
    %103 = vector.broadcast %3 : vector<1x32xf32> to vector<8x32xf32>
    %104 = arith.addf %102, %103 : vector<8x32xf32>
    %c7_68 = arith.constant 7 : index
    %c0_69 = arith.constant 0 : index
    %c0_70 = arith.constant 0 : index
    %105 = vector.load %arg10[%c7_68, %c0_69, %c0_70] : memref<8x8x32xf32, #tpu.memory_space<vmem>>, vector<1x8x32xf32>
    %106 = vector.shape_cast %105 : vector<1x8x32xf32> to vector<8x32xf32>
    %107 = vector.shape_cast %104 : vector<8x32xf32> to vector<1x8x32xf32>
    tpu.vector_store %arg10[%c7_68, %c0_69, %c0_70], %107 {strides = array<i32>} : memref<8x8x32xf32, #tpu.memory_space<vmem>>, vector<1x8x32xf32>,
    %cst_71 = arith.constant 0.000000e+00 : f32
    %108 = vector.broadcast %cst_71 : f32 to vector<8x128xf32>
    %c0_72 = arith.constant 0 : index
    %109 = memref.load %arg6[%c0_72] : memref<128xf32, #tpu.memory_space<smem>>
    %c0_73 = arith.constant 0 : index
    %c0_74 = arith.constant 0 : index
    %c0_75 = arith.constant 0 : index
    %110 = vector.load %arg10[%c0_73, %c0_74, %c0_75] : memref<8x8x32xf32, #tpu.memory_space<vmem>>, vector<1x8x32xf32>
    %111 = vector.shape_cast %110 : vector<1x8x32xf32> to vector<8x32xf32>
    %112 = vector.broadcast %109 : f32 to vector<8x32xf32>
    %113 = arith.mulf %112, %111 : vector<8x32xf32>
    %c0_76 = arith.constant 0 : index
    %114 = memref.load %arg7[%c0_76] : memref<16xf32, #tpu.memory_space<smem>>
    %115 = vector.broadcast %114 : f32 to vector<8x32xf32>
    %116 = arith.addf %113, %115 : vector<8x32xf32>
    %c1_77 = arith.constant 1 : index
    %117 = memref.load %arg6[%c1_77] : memref<128xf32, #tpu.memory_space<smem>>
    %c1_78 = arith.constant 1 : index
    %c0_79 = arith.constant 0 : index
    %c0_80 = arith.constant 0 : index
    %118 = vector.load %arg10[%c1_78, %c0_79, %c0_80] : memref<8x8x32xf32, #tpu.memory_space<vmem>>, vector<1x8x32xf32>
    %119 = vector.shape_cast %118 : vector<1x8x32xf32> to vector<8x32xf32>
    %120 = vector.broadcast %117 : f32 to vector<8x32xf32>
    %121 = arith.mulf %120, %119 : vector<8x32xf32>
    %122 = arith.addf %116, %121 : vector<8x32xf32>
    %c2_81 = arith.constant 2 : index
    %123 = memref.load %arg6[%c2_81] : memref<128xf32, #tpu.memory_space<smem>>
    %c2_82 = arith.constant 2 : index
    %c0_83 = arith.constant 0 : index
    %c0_84 = arith.constant 0 : index
    %124 = vector.load %arg10[%c2_82, %c0_83, %c0_84] : memref<8x8x32xf32, #tpu.memory_space<vmem>>, vector<1x8x32xf32>
    %125 = vector.shape_cast %124 : vector<1x8x32xf32> to vector<8x32xf32>
    %126 = vector.broadcast %123 : f32 to vector<8x32xf32>
    %127 = arith.mulf %126, %125 : vector<8x32xf32>
    %128 = arith.addf %122, %127 : vector<8x32xf32>
    %c3_85 = arith.constant 3 : index
    %129 = memref.load %arg6[%c3_85] : memref<128xf32, #tpu.memory_space<smem>>
    %c3_86 = arith.constant 3 : index
    %c0_87 = arith.constant 0 : index
    %c0_88 = arith.constant 0 : index
    %130 = vector.load %arg10[%c3_86, %c0_87, %c0_88] : memref<8x8x32xf32, #tpu.memory_space<vmem>>, vector<1x8x32xf32>
    %131 = vector.shape_cast %130 : vector<1x8x32xf32> to vector<8x32xf32>
    %132 = vector.broadcast %129 : f32 to vector<8x32xf32>
    %133 = arith.mulf %132, %131 : vector<8x32xf32>
    %134 = arith.addf %128, %133 : vector<8x32xf32>
    %c4_89 = arith.constant 4 : index
    %135 = memref.load %arg6[%c4_89] : memref<128xf32, #tpu.memory_space<smem>>
    %c4_90 = arith.constant 4 : index
    %c0_91 = arith.constant 0 : index
    %c0_92 = arith.constant 0 : index
    %136 = vector.load %arg10[%c4_90, %c0_91, %c0_92] : memref<8x8x32xf32, #tpu.memory_space<vmem>>, vector<1x8x32xf32>
    %137 = vector.shape_cast %136 : vector<1x8x32xf32> to vector<8x32xf32>
    %138 = vector.broadcast %135 : f32 to vector<8x32xf32>
    %139 = arith.mulf %138, %137 : vector<8x32xf32>
    %140 = arith.addf %134, %139 : vector<8x32xf32>
    %c5_93 = arith.constant 5 : index
    %141 = memref.load %arg6[%c5_93] : memref<128xf32, #tpu.memory_space<smem>>
    %c5_94 = arith.constant 5 : index
    %c0_95 = arith.constant 0 : index
    %c0_96 = arith.constant 0 : index
    %142 = vector.load %arg10[%c5_94, %c0_95, %c0_96] : memref<8x8x32xf32, #tpu.memory_space<vmem>>, vector<1x8x32xf32>
    %143 = vector.shape_cast %142 : vector<1x8x32xf32> to vector<8x32xf32>
    %144 = vector.broadcast %141 : f32 to vector<8x32xf32>
    %145 = arith.mulf %144, %143 : vector<8x32xf32>
    %146 = arith.addf %140, %145 : vector<8x32xf32>
    %c6_97 = arith.constant 6 : index
    %147 = memref.load %arg6[%c6_97] : memref<128xf32, #tpu.memory_space<smem>>
    %c6_98 = arith.constant 6 : index
    %c0_99 = arith.constant 0 : index
    %c0_100 = arith.constant 0 : index
    %148 = vector.load %arg10[%c6_98, %c0_99, %c0_100] : memref<8x8x32xf32, #tpu.memory_space<vmem>>, vector<1x8x32xf32>
    %149 = vector.shape_cast %148 : vector<1x8x32xf32> to vector<8x32xf32>
    %150 = vector.broadcast %147 : f32 to vector<8x32xf32>
    %151 = arith.mulf %150, %149 : vector<8x32xf32>
    %152 = arith.addf %146, %151 : vector<8x32xf32>
    %c7_101 = arith.constant 7 : index
    %153 = memref.load %arg6[%c7_101] : memref<128xf32, #tpu.memory_space<smem>>
    %c7_102 = arith.constant 7 : index
    %c0_103 = arith.constant 0 : index
    %c0_104 = arith.constant 0 : index
    %154 = vector.load %arg10[%c7_102, %c0_103, %c0_104] : memref<8x8x32xf32, #tpu.memory_space<vmem>>, vector<1x8x32xf32>
    %155 = vector.shape_cast %154 : vector<1x8x32xf32> to vector<8x32xf32>
    %156 = vector.broadcast %153 : f32 to vector<8x32xf32>
    %157 = arith.mulf %156, %155 : vector<8x32xf32>
    %158 = arith.addf %152, %157 : vector<8x32xf32>
    %cst_105 = arith.constant 0.000000e+00 : f32
    %159 = vector.broadcast %cst_105 : f32 to vector<8x32xf32>
    %160 = arith.maximumf %158, %159 : vector<8x32xf32>
    %c0_106 = arith.constant 0 : index
    %c0_107 = arith.constant 0 : index
    %c0_108 = arith.constant 0 : index
    %161 = vector.load %arg8[%c0_106, %c0_107, %c0_108] : memref<16x32x128xf32, #tpu.memory_space<vmem>>, vector<1x32x128xf32>
    %162 = vector.shape_cast %161 : vector<1x32x128xf32> to vector<32x128xf32>
    %cst_109 = arith.constant dense<0.000000e+00> : vector<8x128xf32>
    %163 = tpu.matmul %160, %162, %cst_109 {dimension_numbers = #tpu.dot_dimension_numbers<[1], [0], [0], [1], [0, 0, 1, 1], [], []>} : vector<8x32xf32>, vector<32x128xf32>, vector<8x128xf32> -> vector<8x128xf32>
    %164 = arith.addf %108, %163 : vector<8x128xf32>
    %c8 = arith.constant 8 : index
    %165 = memref.load %arg6[%c8] : memref<128xf32, #tpu.memory_space<smem>>
    %c0_110 = arith.constant 0 : index
    %c0_111 = arith.constant 0 : index
    %c0_112 = arith.constant 0 : index
    %166 = vector.load %arg10[%c0_110, %c0_111, %c0_112] : memref<8x8x32xf32, #tpu.memory_space<vmem>>, vector<1x8x32xf32>
    %167 = vector.shape_cast %166 : vector<1x8x32xf32> to vector<8x32xf32>
    %168 = vector.broadcast %165 : f32 to vector<8x32xf32>
    %169 = arith.mulf %168, %167 : vector<8x32xf32>
    %c1_113 = arith.constant 1 : index
    %170 = memref.load %arg7[%c1_113] : memref<16xf32, #tpu.memory_space<smem>>
    %171 = vector.broadcast %170 : f32 to vector<8x32xf32>
    %172 = arith.addf %169, %171 : vector<8x32xf32>
    %c9 = arith.constant 9 : index
    %173 = memref.load %arg6[%c9] : memref<128xf32, #tpu.memory_space<smem>>
    %c1_114 = arith.constant 1 : index
    %c0_115 = arith.constant 0 : index
    %c0_116 = arith.constant 0 : index
    %174 = vector.load %arg10[%c1_114, %c0_115, %c0_116] : memref<8x8x32xf32, #tpu.memory_space<vmem>>, vector<1x8x32xf32>
    %175 = vector.shape_cast %174 : vector<1x8x32xf32> to vector<8x32xf32>
    %176 = vector.broadcast %173 : f32 to vector<8x32xf32>
    %177 = arith.mulf %176, %175 : vector<8x32xf32>
    %178 = arith.addf %172, %177 : vector<8x32xf32>
    %c10 = arith.constant 10 : index
    %179 = memref.load %arg6[%c10] : memref<128xf32, #tpu.memory_space<smem>>
    %c2_117 = arith.constant 2 : index
    %c0_118 = arith.constant 0 : index
    %c0_119 = arith.constant 0 : index
    %180 = vector.load %arg10[%c2_117, %c0_118, %c0_119] : memref<8x8x32xf32, #tpu.memory_space<vmem>>, vector<1x8x32xf32>
    %181 = vector.shape_cast %180 : vector<1x8x32xf32> to vector<8x32xf32>
    %182 = vector.broadcast %179 : f32 to vector<8x32xf32>
    %183 = arith.mulf %182, %181 : vector<8x32xf32>
    %184 = arith.addf %178, %183 : vector<8x32xf32>
    %c11 = arith.constant 11 : index
    %185 = memref.load %arg6[%c11] : memref<128xf32, #tpu.memory_space<smem>>
    %c3_120 = arith.constant 3 : index
    %c0_121 = arith.constant 0 : index
    %c0_122 = arith.constant 0 : index
    %186 = vector.load %arg10[%c3_120, %c0_121, %c0_122] : memref<8x8x32xf32, #tpu.memory_space<vmem>>, vector<1x8x32xf32>
    %187 = vector.shape_cast %186 : vector<1x8x32xf32> to vector<8x32xf32>
    %188 = vector.broadcast %185 : f32 to vector<8x32xf32>
    %189 = arith.mulf %188, %187 : vector<8x32xf32>
    %190 = arith.addf %184, %189 : vector<8x32xf32>
    %c12 = arith.constant 12 : index
    %191 = memref.load %arg6[%c12] : memref<128xf32, #tpu.memory_space<smem>>
    %c4_123 = arith.constant 4 : index
    %c0_124 = arith.constant 0 : index
    %c0_125 = arith.constant 0 : index
    %192 = vector.load %arg10[%c4_123, %c0_124, %c0_125] : memref<8x8x32xf32, #tpu.memory_space<vmem>>, vector<1x8x32xf32>
    %193 = vector.shape_cast %192 : vector<1x8x32xf32> to vector<8x32xf32>
    %194 = vector.broadcast %191 : f32 to vector<8x32xf32>
    %195 = arith.mulf %194, %193 : vector<8x32xf32>
    %196 = arith.addf %190, %195 : vector<8x32xf32>
    %c13 = arith.constant 13 : index
    %197 = memref.load %arg6[%c13] : memref<128xf32, #tpu.memory_space<smem>>
    %c5_126 = arith.constant 5 : index
    %c0_127 = arith.constant 0 : index
    %c0_128 = arith.constant 0 : index
    %198 = vector.load %arg10[%c5_126, %c0_127, %c0_128] : memref<8x8x32xf32, #tpu.memory_space<vmem>>, vector<1x8x32xf32>
    %199 = vector.shape_cast %198 : vector<1x8x32xf32> to vector<8x32xf32>
    %200 = vector.broadcast %197 : f32 to vector<8x32xf32>
    %201 = arith.mulf %200, %199 : vector<8x32xf32>
    %202 = arith.addf %196, %201 : vector<8x32xf32>
    %c14 = arith.constant 14 : index
    %203 = memref.load %arg6[%c14] : memref<128xf32, #tpu.memory_space<smem>>
    %c6_129 = arith.constant 6 : index
    %c0_130 = arith.constant 0 : index
    %c0_131 = arith.constant 0 : index
    %204 = vector.load %arg10[%c6_129, %c0_130, %c0_131] : memref<8x8x32xf32, #tpu.memory_space<vmem>>, vector<1x8x32xf32>
    %205 = vector.shape_cast %204 : vector<1x8x32xf32> to vector<8x32xf32>
    %206 = vector.broadcast %203 : f32 to vector<8x32xf32>
    %207 = arith.mulf %206, %205 : vector<8x32xf32>
    %208 = arith.addf %202, %207 : vector<8x32xf32>
    %c15 = arith.constant 15 : index
    %209 = memref.load %arg6[%c15] : memref<128xf32, #tpu.memory_space<smem>>
    %c7_132 = arith.constant 7 : index
    %c0_133 = arith.constant 0 : index
    %c0_134 = arith.constant 0 : index
    %210 = vector.load %arg10[%c7_132, %c0_133, %c0_134] : memref<8x8x32xf32, #tpu.memory_space<vmem>>, vector<1x8x32xf32>
    %211 = vector.shape_cast %210 : vector<1x8x32xf32> to vector<8x32xf32>
    %212 = vector.broadcast %209 : f32 to vector<8x32xf32>
    %213 = arith.mulf %212, %211 : vector<8x32xf32>
    %214 = arith.addf %208, %213 : vector<8x32xf32>
    %cst_135 = arith.constant 0.000000e+00 : f32
    %215 = vector.broadcast %cst_135 : f32 to vector<8x32xf32>
    %216 = arith.maximumf %214, %215 : vector<8x32xf32>
    %c1_136 = arith.constant 1 : index
    %c0_137 = arith.constant 0 : index
    %c0_138 = arith.constant 0 : index
    %217 = vector.load %arg8[%c1_136, %c0_137, %c0_138] : memref<16x32x128xf32, #tpu.memory_space<vmem>>, vector<1x32x128xf32>
    %218 = vector.shape_cast %217 : vector<1x32x128xf32> to vector<32x128xf32>
    %cst_139 = arith.constant dense<0.000000e+00> : vector<8x128xf32>
    %219 = tpu.matmul %216, %218, %cst_139 {dimension_numbers = #tpu.dot_dimension_numbers<[1], [0], [0], [1], [0, 0, 1, 1], [], []>} : vector<8x32xf32>, vector<32x128xf32>, vector<8x128xf32> -> vector<8x128xf32>
    %220 = arith.addf %164, %219 : vector<8x128xf32>
    %c16 = arith.constant 16 : index
    %221 = memref.load %arg6[%c16] : memref<128xf32, #tpu.memory_space<smem>>
    %c0_140 = arith.constant 0 : index
    %c0_141 = arith.constant 0 : index
    %c0_142 = arith.constant 0 : index
    %222 = vector.load %arg10[%c0_140, %c0_141, %c0_142] : memref<8x8x32xf32, #tpu.memory_space<vmem>>, vector<1x8x32xf32>
    %223 = vector.shape_cast %222 : vector<1x8x32xf32> to vector<8x32xf32>
    %224 = vector.broadcast %221 : f32 to vector<8x32xf32>
    %225 = arith.mulf %224, %223 : vector<8x32xf32>
    %c2_143 = arith.constant 2 : index
    %226 = memref.load %arg7[%c2_143] : memref<16xf32, #tpu.memory_space<smem>>
    %227 = vector.broadcast %226 : f32 to vector<8x32xf32>
    %228 = arith.addf %225, %227 : vector<8x32xf32>
    %c17 = arith.constant 17 : index
    %229 = memref.load %arg6[%c17] : memref<128xf32, #tpu.memory_space<smem>>
    %c1_144 = arith.constant 1 : index
    %c0_145 = arith.constant 0 : index
    %c0_146 = arith.constant 0 : index
    %230 = vector.load %arg10[%c1_144, %c0_145, %c0_146] : memref<8x8x32xf32, #tpu.memory_space<vmem>>, vector<1x8x32xf32>
    %231 = vector.shape_cast %230 : vector<1x8x32xf32> to vector<8x32xf32>
    %232 = vector.broadcast %229 : f32 to vector<8x32xf32>
    %233 = arith.mulf %232, %231 : vector<8x32xf32>
    %234 = arith.addf %228, %233 : vector<8x32xf32>
    %c18 = arith.constant 18 : index
    %235 = memref.load %arg6[%c18] : memref<128xf32, #tpu.memory_space<smem>>
    %c2_147 = arith.constant 2 : index
    %c0_148 = arith.constant 0 : index
    %c0_149 = arith.constant 0 : index
    %236 = vector.load %arg10[%c2_147, %c0_148, %c0_149] : memref<8x8x32xf32, #tpu.memory_space<vmem>>, vector<1x8x32xf32>
    %237 = vector.shape_cast %236 : vector<1x8x32xf32> to vector<8x32xf32>
    %238 = vector.broadcast %235 : f32 to vector<8x32xf32>
    %239 = arith.mulf %238, %237 : vector<8x32xf32>
    %240 = arith.addf %234, %239 : vector<8x32xf32>
    %c19 = arith.constant 19 : index
    %241 = memref.load %arg6[%c19] : memref<128xf32, #tpu.memory_space<smem>>
    %c3_150 = arith.constant 3 : index
    %c0_151 = arith.constant 0 : index
    %c0_152 = arith.constant 0 : index
    %242 = vector.load %arg10[%c3_150, %c0_151, %c0_152] : memref<8x8x32xf32, #tpu.memory_space<vmem>>, vector<1x8x32xf32>
    %243 = vector.shape_cast %242 : vector<1x8x32xf32> to vector<8x32xf32>
    %244 = vector.broadcast %241 : f32 to vector<8x32xf32>
    %245 = arith.mulf %244, %243 : vector<8x32xf32>
    %246 = arith.addf %240, %245 : vector<8x32xf32>
    %c20 = arith.constant 20 : index
    %247 = memref.load %arg6[%c20] : memref<128xf32, #tpu.memory_space<smem>>
    %c4_153 = arith.constant 4 : index
    %c0_154 = arith.constant 0 : index
    %c0_155 = arith.constant 0 : index
    %248 = vector.load %arg10[%c4_153, %c0_154, %c0_155] : memref<8x8x32xf32, #tpu.memory_space<vmem>>, vector<1x8x32xf32>
    %249 = vector.shape_cast %248 : vector<1x8x32xf32> to vector<8x32xf32>
    %250 = vector.broadcast %247 : f32 to vector<8x32xf32>
    %251 = arith.mulf %250, %249 : vector<8x32xf32>
    %252 = arith.addf %246, %251 : vector<8x32xf32>
    %c21 = arith.constant 21 : index
    %253 = memref.load %arg6[%c21] : memref<128xf32, #tpu.memory_space<smem>>
    %c5_156 = arith.constant 5 : index
    %c0_157 = arith.constant 0 : index
    %c0_158 = arith.constant 0 : index
    %254 = vector.load %arg10[%c5_156, %c0_157, %c0_158] : memref<8x8x32xf32, #tpu.memory_space<vmem>>, vector<1x8x32xf32>
    %255 = vector.shape_cast %254 : vector<1x8x32xf32> to vector<8x32xf32>
    %256 = vector.broadcast %253 : f32 to vector<8x32xf32>
    %257 = arith.mulf %256, %255 : vector<8x32xf32>
    %258 = arith.addf %252, %257 : vector<8x32xf32>
    %c22 = arith.constant 22 : index
    %259 = memref.load %arg6[%c22] : memref<128xf32, #tpu.memory_space<smem>>
    %c6_159 = arith.constant 6 : index
    %c0_160 = arith.constant 0 : index
    %c0_161 = arith.constant 0 : index
    %260 = vector.load %arg10[%c6_159, %c0_160, %c0_161] : memref<8x8x32xf32, #tpu.memory_space<vmem>>, vector<1x8x32xf32>
    %261 = vector.shape_cast %260 : vector<1x8x32xf32> to vector<8x32xf32>
    %262 = vector.broadcast %259 : f32 to vector<8x32xf32>
    %263 = arith.mulf %262, %261 : vector<8x32xf32>
    %264 = arith.addf %258, %263 : vector<8x32xf32>
    %c23 = arith.constant 23 : index
    %265 = memref.load %arg6[%c23] : memref<128xf32, #tpu.memory_space<smem>>
    %c7_162 = arith.constant 7 : index
    %c0_163 = arith.constant 0 : index
    %c0_164 = arith.constant 0 : index
    %266 = vector.load %arg10[%c7_162, %c0_163, %c0_164] : memref<8x8x32xf32, #tpu.memory_space<vmem>>, vector<1x8x32xf32>
    %267 = vector.shape_cast %266 : vector<1x8x32xf32> to vector<8x32xf32>
    %268 = vector.broadcast %265 : f32 to vector<8x32xf32>
    %269 = arith.mulf %268, %267 : vector<8x32xf32>
    %270 = arith.addf %264, %269 : vector<8x32xf32>
    %cst_165 = arith.constant 0.000000e+00 : f32
    %271 = vector.broadcast %cst_165 : f32 to vector<8x32xf32>
    %272 = arith.maximumf %270, %271 : vector<8x32xf32>
    %c2_166 = arith.constant 2 : index
    %c0_167 = arith.constant 0 : index
    %c0_168 = arith.constant 0 : index
    %273 = vector.load %arg8[%c2_166, %c0_167, %c0_168] : memref<16x32x128xf32, #tpu.memory_space<vmem>>, vector<1x32x128xf32>
    %274 = vector.shape_cast %273 : vector<1x32x128xf32> to vector<32x128xf32>
    %cst_169 = arith.constant dense<0.000000e+00> : vector<8x128xf32>
    %275 = tpu.matmul %272, %274, %cst_169 {dimension_numbers = #tpu.dot_dimension_numbers<[1], [0], [0], [1], [0, 0, 1, 1], [], []>} : vector<8x32xf32>, vector<32x128xf32>, vector<8x128xf32> -> vector<8x128xf32>
    %276 = arith.addf %220, %275 : vector<8x128xf32>
    %c24 = arith.constant 24 : index
    %277 = memref.load %arg6[%c24] : memref<128xf32, #tpu.memory_space<smem>>
    %c0_170 = arith.constant 0 : index
    %c0_171 = arith.constant 0 : index
    %c0_172 = arith.constant 0 : index
    %278 = vector.load %arg10[%c0_170, %c0_171, %c0_172] : memref<8x8x32xf32, #tpu.memory_space<vmem>>, vector<1x8x32xf32>
    %279 = vector.shape_cast %278 : vector<1x8x32xf32> to vector<8x32xf32>
    %280 = vector.broadcast %277 : f32 to vector<8x32xf32>
    %281 = arith.mulf %280, %279 : vector<8x32xf32>
    %c3_173 = arith.constant 3 : index
    %282 = memref.load %arg7[%c3_173] : memref<16xf32, #tpu.memory_space<smem>>
    %283 = vector.broadcast %282 : f32 to vector<8x32xf32>
    %284 = arith.addf %281, %283 : vector<8x32xf32>
    %c25 = arith.constant 25 : index
    %285 = memref.load %arg6[%c25] : memref<128xf32, #tpu.memory_space<smem>>
    %c1_174 = arith.constant 1 : index
    %c0_175 = arith.constant 0 : index
    %c0_176 = arith.constant 0 : index
    %286 = vector.load %arg10[%c1_174, %c0_175, %c0_176] : memref<8x8x32xf32, #tpu.memory_space<vmem>>, vector<1x8x32xf32>
    %287 = vector.shape_cast %286 : vector<1x8x32xf32> to vector<8x32xf32>
    %288 = vector.broadcast %285 : f32 to vector<8x32xf32>
    %289 = arith.mulf %288, %287 : vector<8x32xf32>
    %290 = arith.addf %284, %289 : vector<8x32xf32>
    %c26 = arith.constant 26 : index
    %291 = memref.load %arg6[%c26] : memref<128xf32, #tpu.memory_space<smem>>
    %c2_177 = arith.constant 2 : index
    %c0_178 = arith.constant 0 : index
    %c0_179 = arith.constant 0 : index
    %292 = vector.load %arg10[%c2_177, %c0_178, %c0_179] : memref<8x8x32xf32, #tpu.memory_space<vmem>>, vector<1x8x32xf32>
    %293 = vector.shape_cast %292 : vector<1x8x32xf32> to vector<8x32xf32>
    %294 = vector.broadcast %291 : f32 to vector<8x32xf32>
    %295 = arith.mulf %294, %293 : vector<8x32xf32>
    %296 = arith.addf %290, %295 : vector<8x32xf32>
    %c27 = arith.constant 27 : index
    %297 = memref.load %arg6[%c27] : memref<128xf32, #tpu.memory_space<smem>>
    %c3_180 = arith.constant 3 : index
    %c0_181 = arith.constant 0 : index
    %c0_182 = arith.constant 0 : index
    %298 = vector.load %arg10[%c3_180, %c0_181, %c0_182] : memref<8x8x32xf32, #tpu.memory_space<vmem>>, vector<1x8x32xf32>
    %299 = vector.shape_cast %298 : vector<1x8x32xf32> to vector<8x32xf32>
    %300 = vector.broadcast %297 : f32 to vector<8x32xf32>
    %301 = arith.mulf %300, %299 : vector<8x32xf32>
    %302 = arith.addf %296, %301 : vector<8x32xf32>
    %c28 = arith.constant 28 : index
    %303 = memref.load %arg6[%c28] : memref<128xf32, #tpu.memory_space<smem>>
    %c4_183 = arith.constant 4 : index
    %c0_184 = arith.constant 0 : index
    %c0_185 = arith.constant 0 : index
    %304 = vector.load %arg10[%c4_183, %c0_184, %c0_185] : memref<8x8x32xf32, #tpu.memory_space<vmem>>, vector<1x8x32xf32>
    %305 = vector.shape_cast %304 : vector<1x8x32xf32> to vector<8x32xf32>
    %306 = vector.broadcast %303 : f32 to vector<8x32xf32>
    %307 = arith.mulf %306, %305 : vector<8x32xf32>
    %308 = arith.addf %302, %307 : vector<8x32xf32>
    %c29 = arith.constant 29 : index
    %309 = memref.load %arg6[%c29] : memref<128xf32, #tpu.memory_space<smem>>
    %c5_186 = arith.constant 5 : index
    %c0_187 = arith.constant 0 : index
    %c0_188 = arith.constant 0 : index
    %310 = vector.load %arg10[%c5_186, %c0_187, %c0_188] : memref<8x8x32xf32, #tpu.memory_space<vmem>>, vector<1x8x32xf32>
    %311 = vector.shape_cast %310 : vector<1x8x32xf32> to vector<8x32xf32>
    %312 = vector.broadcast %309 : f32 to vector<8x32xf32>
    %313 = arith.mulf %312, %311 : vector<8x32xf32>
    %314 = arith.addf %308, %313 : vector<8x32xf32>
    %c30 = arith.constant 30 : index
    %315 = memref.load %arg6[%c30] : memref<128xf32, #tpu.memory_space<smem>>
    %c6_189 = arith.constant 6 : index
    %c0_190 = arith.constant 0 : index
    %c0_191 = arith.constant 0 : index
    %316 = vector.load %arg10[%c6_189, %c0_190, %c0_191] : memref<8x8x32xf32, #tpu.memory_space<vmem>>, vector<1x8x32xf32>
    %317 = vector.shape_cast %316 : vector<1x8x32xf32> to vector<8x32xf32>
    %318 = vector.broadcast %315 : f32 to vector<8x32xf32>
    %319 = arith.mulf %318, %317 : vector<8x32xf32>
    %320 = arith.addf %314, %319 : vector<8x32xf32>
    %c31 = arith.constant 31 : index
    %321 = memref.load %arg6[%c31] : memref<128xf32, #tpu.memory_space<smem>>
    %c7_192 = arith.constant 7 : index
    %c0_193 = arith.constant 0 : index
    %c0_194 = arith.constant 0 : index
    %322 = vector.load %arg10[%c7_192, %c0_193, %c0_194] : memref<8x8x32xf32, #tpu.memory_space<vmem>>, vector<1x8x32xf32>
    %323 = vector.shape_cast %322 : vector<1x8x32xf32> to vector<8x32xf32>
    %324 = vector.broadcast %321 : f32 to vector<8x32xf32>
    %325 = arith.mulf %324, %323 : vector<8x32xf32>
    %326 = arith.addf %320, %325 : vector<8x32xf32>
    %cst_195 = arith.constant 0.000000e+00 : f32
    %327 = vector.broadcast %cst_195 : f32 to vector<8x32xf32>
    %328 = arith.maximumf %326, %327 : vector<8x32xf32>
    %c3_196 = arith.constant 3 : index
    %c0_197 = arith.constant 0 : index
    %c0_198 = arith.constant 0 : index
    %329 = vector.load %arg8[%c3_196, %c0_197, %c0_198] : memref<16x32x128xf32, #tpu.memory_space<vmem>>, vector<1x32x128xf32>
    %330 = vector.shape_cast %329 : vector<1x32x128xf32> to vector<32x128xf32>
    %cst_199 = arith.constant dense<0.000000e+00> : vector<8x128xf32>
    %331 = tpu.matmul %328, %330, %cst_199 {dimension_numbers = #tpu.dot_dimension_numbers<[1], [0], [0], [1], [0, 0, 1, 1], [], []>} : vector<8x32xf32>, vector<32x128xf32>, vector<8x128xf32> -> vector<8x128xf32>
    %332 = arith.addf %276, %331 : vector<8x128xf32>
    %c32 = arith.constant 32 : index
    %333 = memref.load %arg6[%c32] : memref<128xf32, #tpu.memory_space<smem>>
    %c0_200 = arith.constant 0 : index
    %c0_201 = arith.constant 0 : index
    %c0_202 = arith.constant 0 : index
    %334 = vector.load %arg10[%c0_200, %c0_201, %c0_202] : memref<8x8x32xf32, #tpu.memory_space<vmem>>, vector<1x8x32xf32>
    %335 = vector.shape_cast %334 : vector<1x8x32xf32> to vector<8x32xf32>
    %336 = vector.broadcast %333 : f32 to vector<8x32xf32>
    %337 = arith.mulf %336, %335 : vector<8x32xf32>
    %c4_203 = arith.constant 4 : index
    %338 = memref.load %arg7[%c4_203] : memref<16xf32, #tpu.memory_space<smem>>
    %339 = vector.broadcast %338 : f32 to vector<8x32xf32>
    %340 = arith.addf %337, %339 : vector<8x32xf32>
    %c33 = arith.constant 33 : index
    %341 = memref.load %arg6[%c33] : memref<128xf32, #tpu.memory_space<smem>>
    %c1_204 = arith.constant 1 : index
    %c0_205 = arith.constant 0 : index
    %c0_206 = arith.constant 0 : index
    %342 = vector.load %arg10[%c1_204, %c0_205, %c0_206] : memref<8x8x32xf32, #tpu.memory_space<vmem>>, vector<1x8x32xf32>
    %343 = vector.shape_cast %342 : vector<1x8x32xf32> to vector<8x32xf32>
    %344 = vector.broadcast %341 : f32 to vector<8x32xf32>
    %345 = arith.mulf %344, %343 : vector<8x32xf32>
    %346 = arith.addf %340, %345 : vector<8x32xf32>
    %c34 = arith.constant 34 : index
    %347 = memref.load %arg6[%c34] : memref<128xf32, #tpu.memory_space<smem>>
    %c2_207 = arith.constant 2 : index
    %c0_208 = arith.constant 0 : index
    %c0_209 = arith.constant 0 : index
    %348 = vector.load %arg10[%c2_207, %c0_208, %c0_209] : memref<8x8x32xf32, #tpu.memory_space<vmem>>, vector<1x8x32xf32>
    %349 = vector.shape_cast %348 : vector<1x8x32xf32> to vector<8x32xf32>
    %350 = vector.broadcast %347 : f32 to vector<8x32xf32>
    %351 = arith.mulf %350, %349 : vector<8x32xf32>
    %352 = arith.addf %346, %351 : vector<8x32xf32>
    %c35 = arith.constant 35 : index
    %353 = memref.load %arg6[%c35] : memref<128xf32, #tpu.memory_space<smem>>
    %c3_210 = arith.constant 3 : index
    %c0_211 = arith.constant 0 : index
    %c0_212 = arith.constant 0 : index
    %354 = vector.load %arg10[%c3_210, %c0_211, %c0_212] : memref<8x8x32xf32, #tpu.memory_space<vmem>>, vector<1x8x32xf32>
    %355 = vector.shape_cast %354 : vector<1x8x32xf32> to vector<8x32xf32>
    %356 = vector.broadcast %353 : f32 to vector<8x32xf32>
    %357 = arith.mulf %356, %355 : vector<8x32xf32>
    %358 = arith.addf %352, %357 : vector<8x32xf32>
    %c36 = arith.constant 36 : index
    %359 = memref.load %arg6[%c36] : memref<128xf32, #tpu.memory_space<smem>>
    %c4_213 = arith.constant 4 : index
    %c0_214 = arith.constant 0 : index
    %c0_215 = arith.constant 0 : index
    %360 = vector.load %arg10[%c4_213, %c0_214, %c0_215] : memref<8x8x32xf32, #tpu.memory_space<vmem>>, vector<1x8x32xf32>
    %361 = vector.shape_cast %360 : vector<1x8x32xf32> to vector<8x32xf32>
    %362 = vector.broadcast %359 : f32 to vector<8x32xf32>
    %363 = arith.mulf %362, %361 : vector<8x32xf32>
    %364 = arith.addf %358, %363 : vector<8x32xf32>
    %c37 = arith.constant 37 : index
    %365 = memref.load %arg6[%c37] : memref<128xf32, #tpu.memory_space<smem>>
    %c5_216 = arith.constant 5 : index
    %c0_217 = arith.constant 0 : index
    %c0_218 = arith.constant 0 : index
    %366 = vector.load %arg10[%c5_216, %c0_217, %c0_218] : memref<8x8x32xf32, #tpu.memory_space<vmem>>, vector<1x8x32xf32>
    %367 = vector.shape_cast %366 : vector<1x8x32xf32> to vector<8x32xf32>
    %368 = vector.broadcast %365 : f32 to vector<8x32xf32>
    %369 = arith.mulf %368, %367 : vector<8x32xf32>
    %370 = arith.addf %364, %369 : vector<8x32xf32>
    %c38 = arith.constant 38 : index
    %371 = memref.load %arg6[%c38] : memref<128xf32, #tpu.memory_space<smem>>
    %c6_219 = arith.constant 6 : index
    %c0_220 = arith.constant 0 : index
    %c0_221 = arith.constant 0 : index
    %372 = vector.load %arg10[%c6_219, %c0_220, %c0_221] : memref<8x8x32xf32, #tpu.memory_space<vmem>>, vector<1x8x32xf32>
    %373 = vector.shape_cast %372 : vector<1x8x32xf32> to vector<8x32xf32>
    %374 = vector.broadcast %371 : f32 to vector<8x32xf32>
    %375 = arith.mulf %374, %373 : vector<8x32xf32>
    %376 = arith.addf %370, %375 : vector<8x32xf32>
    %c39 = arith.constant 39 : index
    %377 = memref.load %arg6[%c39] : memref<128xf32, #tpu.memory_space<smem>>
    %c7_222 = arith.constant 7 : index
    %c0_223 = arith.constant 0 : index
    %c0_224 = arith.constant 0 : index
    %378 = vector.load %arg10[%c7_222, %c0_223, %c0_224] : memref<8x8x32xf32, #tpu.memory_space<vmem>>, vector<1x8x32xf32>
    %379 = vector.shape_cast %378 : vector<1x8x32xf32> to vector<8x32xf32>
    %380 = vector.broadcast %377 : f32 to vector<8x32xf32>
    %381 = arith.mulf %380, %379 : vector<8x32xf32>
    %382 = arith.addf %376, %381 : vector<8x32xf32>
    %cst_225 = arith.constant 0.000000e+00 : f32
    %383 = vector.broadcast %cst_225 : f32 to vector<8x32xf32>
    %384 = arith.maximumf %382, %383 : vector<8x32xf32>
    %c4_226 = arith.constant 4 : index
    %c0_227 = arith.constant 0 : index
    %c0_228 = arith.constant 0 : index
    %385 = vector.load %arg8[%c4_226, %c0_227, %c0_228] : memref<16x32x128xf32, #tpu.memory_space<vmem>>, vector<1x32x128xf32>
    %386 = vector.shape_cast %385 : vector<1x32x128xf32> to vector<32x128xf32>
    %cst_229 = arith.constant dense<0.000000e+00> : vector<8x128xf32>
    %387 = tpu.matmul %384, %386, %cst_229 {dimension_numbers = #tpu.dot_dimension_numbers<[1], [0], [0], [1], [0, 0, 1, 1], [], []>} : vector<8x32xf32>, vector<32x128xf32>, vector<8x128xf32> -> vector<8x128xf32>
    %388 = arith.addf %332, %387 : vector<8x128xf32>
    %c40 = arith.constant 40 : index
    %389 = memref.load %arg6[%c40] : memref<128xf32, #tpu.memory_space<smem>>
    %c0_230 = arith.constant 0 : index
    %c0_231 = arith.constant 0 : index
    %c0_232 = arith.constant 0 : index
    %390 = vector.load %arg10[%c0_230, %c0_231, %c0_232] : memref<8x8x32xf32, #tpu.memory_space<vmem>>, vector<1x8x32xf32>
    %391 = vector.shape_cast %390 : vector<1x8x32xf32> to vector<8x32xf32>
    %392 = vector.broadcast %389 : f32 to vector<8x32xf32>
    %393 = arith.mulf %392, %391 : vector<8x32xf32>
    %c5_233 = arith.constant 5 : index
    %394 = memref.load %arg7[%c5_233] : memref<16xf32, #tpu.memory_space<smem>>
    %395 = vector.broadcast %394 : f32 to vector<8x32xf32>
    %396 = arith.addf %393, %395 : vector<8x32xf32>
    %c41 = arith.constant 41 : index
    %397 = memref.load %arg6[%c41] : memref<128xf32, #tpu.memory_space<smem>>
    %c1_234 = arith.constant 1 : index
    %c0_235 = arith.constant 0 : index
    %c0_236 = arith.constant 0 : index
    %398 = vector.load %arg10[%c1_234, %c0_235, %c0_236] : memref<8x8x32xf32, #tpu.memory_space<vmem>>, vector<1x8x32xf32>
    %399 = vector.shape_cast %398 : vector<1x8x32xf32> to vector<8x32xf32>
    %400 = vector.broadcast %397 : f32 to vector<8x32xf32>
    %401 = arith.mulf %400, %399 : vector<8x32xf32>
    %402 = arith.addf %396, %401 : vector<8x32xf32>
    %c42 = arith.constant 42 : index
    %403 = memref.load %arg6[%c42] : memref<128xf32, #tpu.memory_space<smem>>
    %c2_237 = arith.constant 2 : index
    %c0_238 = arith.constant 0 : index
    %c0_239 = arith.constant 0 : index
    %404 = vector.load %arg10[%c2_237, %c0_238, %c0_239] : memref<8x8x32xf32, #tpu.memory_space<vmem>>, vector<1x8x32xf32>
    %405 = vector.shape_cast %404 : vector<1x8x32xf32> to vector<8x32xf32>
    %406 = vector.broadcast %403 : f32 to vector<8x32xf32>
    %407 = arith.mulf %406, %405 : vector<8x32xf32>
    %408 = arith.addf %402, %407 : vector<8x32xf32>
    %c43 = arith.constant 43 : index
    %409 = memref.load %arg6[%c43] : memref<128xf32, #tpu.memory_space<smem>>
    %c3_240 = arith.constant 3 : index
    %c0_241 = arith.constant 0 : index
    %c0_242 = arith.constant 0 : index
    %410 = vector.load %arg10[%c3_240, %c0_241, %c0_242] : memref<8x8x32xf32, #tpu.memory_space<vmem>>, vector<1x8x32xf32>
    %411 = vector.shape_cast %410 : vector<1x8x32xf32> to vector<8x32xf32>
    %412 = vector.broadcast %409 : f32 to vector<8x32xf32>
    %413 = arith.mulf %412, %411 : vector<8x32xf32>
    %414 = arith.addf %408, %413 : vector<8x32xf32>
    %c44 = arith.constant 44 : index
    %415 = memref.load %arg6[%c44] : memref<128xf32, #tpu.memory_space<smem>>
    %c4_243 = arith.constant 4 : index
    %c0_244 = arith.constant 0 : index
    %c0_245 = arith.constant 0 : index
    %416 = vector.load %arg10[%c4_243, %c0_244, %c0_245] : memref<8x8x32xf32, #tpu.memory_space<vmem>>, vector<1x8x32xf32>
    %417 = vector.shape_cast %416 : vector<1x8x32xf32> to vector<8x32xf32>
    %418 = vector.broadcast %415 : f32 to vector<8x32xf32>
    %419 = arith.mulf %418, %417 : vector<8x32xf32>
    %420 = arith.addf %414, %419 : vector<8x32xf32>
    %c45 = arith.constant 45 : index
    %421 = memref.load %arg6[%c45] : memref<128xf32, #tpu.memory_space<smem>>
    %c5_246 = arith.constant 5 : index
    %c0_247 = arith.constant 0 : index
    %c0_248 = arith.constant 0 : index
    %422 = vector.load %arg10[%c5_246, %c0_247, %c0_248] : memref<8x8x32xf32, #tpu.memory_space<vmem>>, vector<1x8x32xf32>
    %423 = vector.shape_cast %422 : vector<1x8x32xf32> to vector<8x32xf32>
    %424 = vector.broadcast %421 : f32 to vector<8x32xf32>
    %425 = arith.mulf %424, %423 : vector<8x32xf32>
    %426 = arith.addf %420, %425 : vector<8x32xf32>
    %c46 = arith.constant 46 : index
    %427 = memref.load %arg6[%c46] : memref<128xf32, #tpu.memory_space<smem>>
    %c6_249 = arith.constant 6 : index
    %c0_250 = arith.constant 0 : index
    %c0_251 = arith.constant 0 : index
    %428 = vector.load %arg10[%c6_249, %c0_250, %c0_251] : memref<8x8x32xf32, #tpu.memory_space<vmem>>, vector<1x8x32xf32>
    %429 = vector.shape_cast %428 : vector<1x8x32xf32> to vector<8x32xf32>
    %430 = vector.broadcast %427 : f32 to vector<8x32xf32>
    %431 = arith.mulf %430, %429 : vector<8x32xf32>
    %432 = arith.addf %426, %431 : vector<8x32xf32>
    %c47 = arith.constant 47 : index
    %433 = memref.load %arg6[%c47] : memref<128xf32, #tpu.memory_space<smem>>
    %c7_252 = arith.constant 7 : index
    %c0_253 = arith.constant 0 : index
    %c0_254 = arith.constant 0 : index
    %434 = vector.load %arg10[%c7_252, %c0_253, %c0_254] : memref<8x8x32xf32, #tpu.memory_space<vmem>>, vector<1x8x32xf32>
    %435 = vector.shape_cast %434 : vector<1x8x32xf32> to vector<8x32xf32>
    %436 = vector.broadcast %433 : f32 to vector<8x32xf32>
    %437 = arith.mulf %436, %435 : vector<8x32xf32>
    %438 = arith.addf %432, %437 : vector<8x32xf32>
    %cst_255 = arith.constant 0.000000e+00 : f32
    %439 = vector.broadcast %cst_255 : f32 to vector<8x32xf32>
    %440 = arith.maximumf %438, %439 : vector<8x32xf32>
    %c5_256 = arith.constant 5 : index
    %c0_257 = arith.constant 0 : index
    %c0_258 = arith.constant 0 : index
    %441 = vector.load %arg8[%c5_256, %c0_257, %c0_258] : memref<16x32x128xf32, #tpu.memory_space<vmem>>, vector<1x32x128xf32>
    %442 = vector.shape_cast %441 : vector<1x32x128xf32> to vector<32x128xf32>
    %cst_259 = arith.constant dense<0.000000e+00> : vector<8x128xf32>
    %443 = tpu.matmul %440, %442, %cst_259 {dimension_numbers = #tpu.dot_dimension_numbers<[1], [0], [0], [1], [0, 0, 1, 1], [], []>} : vector<8x32xf32>, vector<32x128xf32>, vector<8x128xf32> -> vector<8x128xf32>
    %444 = arith.addf %388, %443 : vector<8x128xf32>
    %c48 = arith.constant 48 : index
    %445 = memref.load %arg6[%c48] : memref<128xf32, #tpu.memory_space<smem>>
    %c0_260 = arith.constant 0 : index
    %c0_261 = arith.constant 0 : index
    %c0_262 = arith.constant 0 : index
    %446 = vector.load %arg10[%c0_260, %c0_261, %c0_262] : memref<8x8x32xf32, #tpu.memory_space<vmem>>, vector<1x8x32xf32>
    %447 = vector.shape_cast %446 : vector<1x8x32xf32> to vector<8x32xf32>
    %448 = vector.broadcast %445 : f32 to vector<8x32xf32>
    %449 = arith.mulf %448, %447 : vector<8x32xf32>
    %c6_263 = arith.constant 6 : index
    %450 = memref.load %arg7[%c6_263] : memref<16xf32, #tpu.memory_space<smem>>
    %451 = vector.broadcast %450 : f32 to vector<8x32xf32>
    %452 = arith.addf %449, %451 : vector<8x32xf32>
    %c49 = arith.constant 49 : index
    %453 = memref.load %arg6[%c49] : memref<128xf32, #tpu.memory_space<smem>>
    %c1_264 = arith.constant 1 : index
    %c0_265 = arith.constant 0 : index
    %c0_266 = arith.constant 0 : index
    %454 = vector.load %arg10[%c1_264, %c0_265, %c0_266] : memref<8x8x32xf32, #tpu.memory_space<vmem>>, vector<1x8x32xf32>
    %455 = vector.shape_cast %454 : vector<1x8x32xf32> to vector<8x32xf32>
    %456 = vector.broadcast %453 : f32 to vector<8x32xf32>
    %457 = arith.mulf %456, %455 : vector<8x32xf32>
    %458 = arith.addf %452, %457 : vector<8x32xf32>
    %c50 = arith.constant 50 : index
    %459 = memref.load %arg6[%c50] : memref<128xf32, #tpu.memory_space<smem>>
    %c2_267 = arith.constant 2 : index
    %c0_268 = arith.constant 0 : index
    %c0_269 = arith.constant 0 : index
    %460 = vector.load %arg10[%c2_267, %c0_268, %c0_269] : memref<8x8x32xf32, #tpu.memory_space<vmem>>, vector<1x8x32xf32>
    %461 = vector.shape_cast %460 : vector<1x8x32xf32> to vector<8x32xf32>
    %462 = vector.broadcast %459 : f32 to vector<8x32xf32>
    %463 = arith.mulf %462, %461 : vector<8x32xf32>
    %464 = arith.addf %458, %463 : vector<8x32xf32>
    %c51 = arith.constant 51 : index
    %465 = memref.load %arg6[%c51] : memref<128xf32, #tpu.memory_space<smem>>
    %c3_270 = arith.constant 3 : index
    %c0_271 = arith.constant 0 : index
    %c0_272 = arith.constant 0 : index
    %466 = vector.load %arg10[%c3_270, %c0_271, %c0_272] : memref<8x8x32xf32, #tpu.memory_space<vmem>>, vector<1x8x32xf32>
    %467 = vector.shape_cast %466 : vector<1x8x32xf32> to vector<8x32xf32>
    %468 = vector.broadcast %465 : f32 to vector<8x32xf32>
    %469 = arith.mulf %468, %467 : vector<8x32xf32>
    %470 = arith.addf %464, %469 : vector<8x32xf32>
    %c52 = arith.constant 52 : index
    %471 = memref.load %arg6[%c52] : memref<128xf32, #tpu.memory_space<smem>>
    %c4_273 = arith.constant 4 : index
    %c0_274 = arith.constant 0 : index
    %c0_275 = arith.constant 0 : index
    %472 = vector.load %arg10[%c4_273, %c0_274, %c0_275] : memref<8x8x32xf32, #tpu.memory_space<vmem>>, vector<1x8x32xf32>
    %473 = vector.shape_cast %472 : vector<1x8x32xf32> to vector<8x32xf32>
    %474 = vector.broadcast %471 : f32 to vector<8x32xf32>
    %475 = arith.mulf %474, %473 : vector<8x32xf32>
    %476 = arith.addf %470, %475 : vector<8x32xf32>
    %c53 = arith.constant 53 : index
    %477 = memref.load %arg6[%c53] : memref<128xf32, #tpu.memory_space<smem>>
    %c5_276 = arith.constant 5 : index
    %c0_277 = arith.constant 0 : index
    %c0_278 = arith.constant 0 : index
    %478 = vector.load %arg10[%c5_276, %c0_277, %c0_278] : memref<8x8x32xf32, #tpu.memory_space<vmem>>, vector<1x8x32xf32>
    %479 = vector.shape_cast %478 : vector<1x8x32xf32> to vector<8x32xf32>
    %480 = vector.broadcast %477 : f32 to vector<8x32xf32>
    %481 = arith.mulf %480, %479 : vector<8x32xf32>
    %482 = arith.addf %476, %481 : vector<8x32xf32>
    %c54 = arith.constant 54 : index
    %483 = memref.load %arg6[%c54] : memref<128xf32, #tpu.memory_space<smem>>
    %c6_279 = arith.constant 6 : index
    %c0_280 = arith.constant 0 : index
    %c0_281 = arith.constant 0 : index
    %484 = vector.load %arg10[%c6_279, %c0_280, %c0_281] : memref<8x8x32xf32, #tpu.memory_space<vmem>>, vector<1x8x32xf32>
    %485 = vector.shape_cast %484 : vector<1x8x32xf32> to vector<8x32xf32>
    %486 = vector.broadcast %483 : f32 to vector<8x32xf32>
    %487 = arith.mulf %486, %485 : vector<8x32xf32>
    %488 = arith.addf %482, %487 : vector<8x32xf32>
    %c55 = arith.constant 55 : index
    %489 = memref.load %arg6[%c55] : memref<128xf32, #tpu.memory_space<smem>>
    %c7_282 = arith.constant 7 : index
    %c0_283 = arith.constant 0 : index
    %c0_284 = arith.constant 0 : index
    %490 = vector.load %arg10[%c7_282, %c0_283, %c0_284] : memref<8x8x32xf32, #tpu.memory_space<vmem>>, vector<1x8x32xf32>
    %491 = vector.shape_cast %490 : vector<1x8x32xf32> to vector<8x32xf32>
    %492 = vector.broadcast %489 : f32 to vector<8x32xf32>
    %493 = arith.mulf %492, %491 : vector<8x32xf32>
    %494 = arith.addf %488, %493 : vector<8x32xf32>
    %cst_285 = arith.constant 0.000000e+00 : f32
    %495 = vector.broadcast %cst_285 : f32 to vector<8x32xf32>
    %496 = arith.maximumf %494, %495 : vector<8x32xf32>
    %c6_286 = arith.constant 6 : index
    %c0_287 = arith.constant 0 : index
    %c0_288 = arith.constant 0 : index
    %497 = vector.load %arg8[%c6_286, %c0_287, %c0_288] : memref<16x32x128xf32, #tpu.memory_space<vmem>>, vector<1x32x128xf32>
    %498 = vector.shape_cast %497 : vector<1x32x128xf32> to vector<32x128xf32>
    %cst_289 = arith.constant dense<0.000000e+00> : vector<8x128xf32>
    %499 = tpu.matmul %496, %498, %cst_289 {dimension_numbers = #tpu.dot_dimension_numbers<[1], [0], [0], [1], [0, 0, 1, 1], [], []>} : vector<8x32xf32>, vector<32x128xf32>, vector<8x128xf32> -> vector<8x128xf32>
    %500 = arith.addf %444, %499 : vector<8x128xf32>
    %c56 = arith.constant 56 : index
    %501 = memref.load %arg6[%c56] : memref<128xf32, #tpu.memory_space<smem>>
    %c0_290 = arith.constant 0 : index
    %c0_291 = arith.constant 0 : index
    %c0_292 = arith.constant 0 : index
    %502 = vector.load %arg10[%c0_290, %c0_291, %c0_292] : memref<8x8x32xf32, #tpu.memory_space<vmem>>, vector<1x8x32xf32>
    %503 = vector.shape_cast %502 : vector<1x8x32xf32> to vector<8x32xf32>
    %504 = vector.broadcast %501 : f32 to vector<8x32xf32>
    %505 = arith.mulf %504, %503 : vector<8x32xf32>
    %c7_293 = arith.constant 7 : index
    %506 = memref.load %arg7[%c7_293] : memref<16xf32, #tpu.memory_space<smem>>
    %507 = vector.broadcast %506 : f32 to vector<8x32xf32>
    %508 = arith.addf %505, %507 : vector<8x32xf32>
    %c57 = arith.constant 57 : index
    %509 = memref.load %arg6[%c57] : memref<128xf32, #tpu.memory_space<smem>>
    %c1_294 = arith.constant 1 : index
    %c0_295 = arith.constant 0 : index
    %c0_296 = arith.constant 0 : index
    %510 = vector.load %arg10[%c1_294, %c0_295, %c0_296] : memref<8x8x32xf32, #tpu.memory_space<vmem>>, vector<1x8x32xf32>
    %511 = vector.shape_cast %510 : vector<1x8x32xf32> to vector<8x32xf32>
    %512 = vector.broadcast %509 : f32 to vector<8x32xf32>
    %513 = arith.mulf %512, %511 : vector<8x32xf32>
    %514 = arith.addf %508, %513 : vector<8x32xf32>
    %c58 = arith.constant 58 : index
    %515 = memref.load %arg6[%c58] : memref<128xf32, #tpu.memory_space<smem>>
    %c2_297 = arith.constant 2 : index
    %c0_298 = arith.constant 0 : index
    %c0_299 = arith.constant 0 : index
    %516 = vector.load %arg10[%c2_297, %c0_298, %c0_299] : memref<8x8x32xf32, #tpu.memory_space<vmem>>, vector<1x8x32xf32>
    %517 = vector.shape_cast %516 : vector<1x8x32xf32> to vector<8x32xf32>
    %518 = vector.broadcast %515 : f32 to vector<8x32xf32>
    %519 = arith.mulf %518, %517 : vector<8x32xf32>
    %520 = arith.addf %514, %519 : vector<8x32xf32>
    %c59 = arith.constant 59 : index
    %521 = memref.load %arg6[%c59] : memref<128xf32, #tpu.memory_space<smem>>
    %c3_300 = arith.constant 3 : index
    %c0_301 = arith.constant 0 : index
    %c0_302 = arith.constant 0 : index
    %522 = vector.load %arg10[%c3_300, %c0_301, %c0_302] : memref<8x8x32xf32, #tpu.memory_space<vmem>>, vector<1x8x32xf32>
    %523 = vector.shape_cast %522 : vector<1x8x32xf32> to vector<8x32xf32>
    %524 = vector.broadcast %521 : f32 to vector<8x32xf32>
    %525 = arith.mulf %524, %523 : vector<8x32xf32>
    %526 = arith.addf %520, %525 : vector<8x32xf32>
    %c60 = arith.constant 60 : index
    %527 = memref.load %arg6[%c60] : memref<128xf32, #tpu.memory_space<smem>>
    %c4_303 = arith.constant 4 : index
    %c0_304 = arith.constant 0 : index
    %c0_305 = arith.constant 0 : index
    %528 = vector.load %arg10[%c4_303, %c0_304, %c0_305] : memref<8x8x32xf32, #tpu.memory_space<vmem>>, vector<1x8x32xf32>
    %529 = vector.shape_cast %528 : vector<1x8x32xf32> to vector<8x32xf32>
    %530 = vector.broadcast %527 : f32 to vector<8x32xf32>
    %531 = arith.mulf %530, %529 : vector<8x32xf32>
    %532 = arith.addf %526, %531 : vector<8x32xf32>
    %c61 = arith.constant 61 : index
    %533 = memref.load %arg6[%c61] : memref<128xf32, #tpu.memory_space<smem>>
    %c5_306 = arith.constant 5 : index
    %c0_307 = arith.constant 0 : index
    %c0_308 = arith.constant 0 : index
    %534 = vector.load %arg10[%c5_306, %c0_307, %c0_308] : memref<8x8x32xf32, #tpu.memory_space<vmem>>, vector<1x8x32xf32>
    %535 = vector.shape_cast %534 : vector<1x8x32xf32> to vector<8x32xf32>
    %536 = vector.broadcast %533 : f32 to vector<8x32xf32>
    %537 = arith.mulf %536, %535 : vector<8x32xf32>
    %538 = arith.addf %532, %537 : vector<8x32xf32>
    %c62 = arith.constant 62 : index
    %539 = memref.load %arg6[%c62] : memref<128xf32, #tpu.memory_space<smem>>
    %c6_309 = arith.constant 6 : index
    %c0_310 = arith.constant 0 : index
    %c0_311 = arith.constant 0 : index
    %540 = vector.load %arg10[%c6_309, %c0_310, %c0_311] : memref<8x8x32xf32, #tpu.memory_space<vmem>>, vector<1x8x32xf32>
    %541 = vector.shape_cast %540 : vector<1x8x32xf32> to vector<8x32xf32>
    %542 = vector.broadcast %539 : f32 to vector<8x32xf32>
    %543 = arith.mulf %542, %541 : vector<8x32xf32>
    %544 = arith.addf %538, %543 : vector<8x32xf32>
    %c63 = arith.constant 63 : index
    %545 = memref.load %arg6[%c63] : memref<128xf32, #tpu.memory_space<smem>>
    %c7_312 = arith.constant 7 : index
    %c0_313 = arith.constant 0 : index
    %c0_314 = arith.constant 0 : index
    %546 = vector.load %arg10[%c7_312, %c0_313, %c0_314] : memref<8x8x32xf32, #tpu.memory_space<vmem>>, vector<1x8x32xf32>
    %547 = vector.shape_cast %546 : vector<1x8x32xf32> to vector<8x32xf32>
    %548 = vector.broadcast %545 : f32 to vector<8x32xf32>
    %549 = arith.mulf %548, %547 : vector<8x32xf32>
    %550 = arith.addf %544, %549 : vector<8x32xf32>
    %cst_315 = arith.constant 0.000000e+00 : f32
    %551 = vector.broadcast %cst_315 : f32 to vector<8x32xf32>
    %552 = arith.maximumf %550, %551 : vector<8x32xf32>
    %c7_316 = arith.constant 7 : index
    %c0_317 = arith.constant 0 : index
    %c0_318 = arith.constant 0 : index
    %553 = vector.load %arg8[%c7_316, %c0_317, %c0_318] : memref<16x32x128xf32, #tpu.memory_space<vmem>>, vector<1x32x128xf32>
    %554 = vector.shape_cast %553 : vector<1x32x128xf32> to vector<32x128xf32>
    %cst_319 = arith.constant dense<0.000000e+00> : vector<8x128xf32>
    %555 = tpu.matmul %552, %554, %cst_319 {dimension_numbers = #tpu.dot_dimension_numbers<[1], [0], [0], [1], [0, 0, 1, 1], [], []>} : vector<8x32xf32>, vector<32x128xf32>, vector<8x128xf32> -> vector<8x128xf32>
    %556 = arith.addf %500, %555 : vector<8x128xf32>
    %c64 = arith.constant 64 : index
    %557 = memref.load %arg6[%c64] : memref<128xf32, #tpu.memory_space<smem>>
    %c0_320 = arith.constant 0 : index
    %c0_321 = arith.constant 0 : index
    %c0_322 = arith.constant 0 : index
    %558 = vector.load %arg10[%c0_320, %c0_321, %c0_322] : memref<8x8x32xf32, #tpu.memory_space<vmem>>, vector<1x8x32xf32>
    %559 = vector.shape_cast %558 : vector<1x8x32xf32> to vector<8x32xf32>
    %560 = vector.broadcast %557 : f32 to vector<8x32xf32>
    %561 = arith.mulf %560, %559 : vector<8x32xf32>
    %c8_323 = arith.constant 8 : index
    %562 = memref.load %arg7[%c8_323] : memref<16xf32, #tpu.memory_space<smem>>
    %563 = vector.broadcast %562 : f32 to vector<8x32xf32>
    %564 = arith.addf %561, %563 : vector<8x32xf32>
    %c65 = arith.constant 65 : index
    %565 = memref.load %arg6[%c65] : memref<128xf32, #tpu.memory_space<smem>>
    %c1_324 = arith.constant 1 : index
    %c0_325 = arith.constant 0 : index
    %c0_326 = arith.constant 0 : index
    %566 = vector.load %arg10[%c1_324, %c0_325, %c0_326] : memref<8x8x32xf32, #tpu.memory_space<vmem>>, vector<1x8x32xf32>
    %567 = vector.shape_cast %566 : vector<1x8x32xf32> to vector<8x32xf32>
    %568 = vector.broadcast %565 : f32 to vector<8x32xf32>
    %569 = arith.mulf %568, %567 : vector<8x32xf32>
    %570 = arith.addf %564, %569 : vector<8x32xf32>
    %c66 = arith.constant 66 : index
    %571 = memref.load %arg6[%c66] : memref<128xf32, #tpu.memory_space<smem>>
    %c2_327 = arith.constant 2 : index
    %c0_328 = arith.constant 0 : index
    %c0_329 = arith.constant 0 : index
    %572 = vector.load %arg10[%c2_327, %c0_328, %c0_329] : memref<8x8x32xf32, #tpu.memory_space<vmem>>, vector<1x8x32xf32>
    %573 = vector.shape_cast %572 : vector<1x8x32xf32> to vector<8x32xf32>
    %574 = vector.broadcast %571 : f32 to vector<8x32xf32>
    %575 = arith.mulf %574, %573 : vector<8x32xf32>
    %576 = arith.addf %570, %575 : vector<8x32xf32>
    %c67 = arith.constant 67 : index
    %577 = memref.load %arg6[%c67] : memref<128xf32, #tpu.memory_space<smem>>
    %c3_330 = arith.constant 3 : index
    %c0_331 = arith.constant 0 : index
    %c0_332 = arith.constant 0 : index
    %578 = vector.load %arg10[%c3_330, %c0_331, %c0_332] : memref<8x8x32xf32, #tpu.memory_space<vmem>>, vector<1x8x32xf32>
    %579 = vector.shape_cast %578 : vector<1x8x32xf32> to vector<8x32xf32>
    %580 = vector.broadcast %577 : f32 to vector<8x32xf32>
    %581 = arith.mulf %580, %579 : vector<8x32xf32>
    %582 = arith.addf %576, %581 : vector<8x32xf32>
    %c68 = arith.constant 68 : index
    %583 = memref.load %arg6[%c68] : memref<128xf32, #tpu.memory_space<smem>>
    %c4_333 = arith.constant 4 : index
    %c0_334 = arith.constant 0 : index
    %c0_335 = arith.constant 0 : index
    %584 = vector.load %arg10[%c4_333, %c0_334, %c0_335] : memref<8x8x32xf32, #tpu.memory_space<vmem>>, vector<1x8x32xf32>
    %585 = vector.shape_cast %584 : vector<1x8x32xf32> to vector<8x32xf32>
    %586 = vector.broadcast %583 : f32 to vector<8x32xf32>
    %587 = arith.mulf %586, %585 : vector<8x32xf32>
    %588 = arith.addf %582, %587 : vector<8x32xf32>
    %c69 = arith.constant 69 : index
    %589 = memref.load %arg6[%c69] : memref<128xf32, #tpu.memory_space<smem>>
    %c5_336 = arith.constant 5 : index
    %c0_337 = arith.constant 0 : index
    %c0_338 = arith.constant 0 : index
    %590 = vector.load %arg10[%c5_336, %c0_337, %c0_338] : memref<8x8x32xf32, #tpu.memory_space<vmem>>, vector<1x8x32xf32>
    %591 = vector.shape_cast %590 : vector<1x8x32xf32> to vector<8x32xf32>
    %592 = vector.broadcast %589 : f32 to vector<8x32xf32>
    %593 = arith.mulf %592, %591 : vector<8x32xf32>
    %594 = arith.addf %588, %593 : vector<8x32xf32>
    %c70 = arith.constant 70 : index
    %595 = memref.load %arg6[%c70] : memref<128xf32, #tpu.memory_space<smem>>
    %c6_339 = arith.constant 6 : index
    %c0_340 = arith.constant 0 : index
    %c0_341 = arith.constant 0 : index
    %596 = vector.load %arg10[%c6_339, %c0_340, %c0_341] : memref<8x8x32xf32, #tpu.memory_space<vmem>>, vector<1x8x32xf32>
    %597 = vector.shape_cast %596 : vector<1x8x32xf32> to vector<8x32xf32>
    %598 = vector.broadcast %595 : f32 to vector<8x32xf32>
    %599 = arith.mulf %598, %597 : vector<8x32xf32>
    %600 = arith.addf %594, %599 : vector<8x32xf32>
    %c71 = arith.constant 71 : index
    %601 = memref.load %arg6[%c71] : memref<128xf32, #tpu.memory_space<smem>>
    %c7_342 = arith.constant 7 : index
    %c0_343 = arith.constant 0 : index
    %c0_344 = arith.constant 0 : index
    %602 = vector.load %arg10[%c7_342, %c0_343, %c0_344] : memref<8x8x32xf32, #tpu.memory_space<vmem>>, vector<1x8x32xf32>
    %603 = vector.shape_cast %602 : vector<1x8x32xf32> to vector<8x32xf32>
    %604 = vector.broadcast %601 : f32 to vector<8x32xf32>
    %605 = arith.mulf %604, %603 : vector<8x32xf32>
    %606 = arith.addf %600, %605 : vector<8x32xf32>
    %cst_345 = arith.constant 0.000000e+00 : f32
    %607 = vector.broadcast %cst_345 : f32 to vector<8x32xf32>
    %608 = arith.maximumf %606, %607 : vector<8x32xf32>
    %c8_346 = arith.constant 8 : index
    %c0_347 = arith.constant 0 : index
    %c0_348 = arith.constant 0 : index
    %609 = vector.load %arg8[%c8_346, %c0_347, %c0_348] : memref<16x32x128xf32, #tpu.memory_space<vmem>>, vector<1x32x128xf32>
    %610 = vector.shape_cast %609 : vector<1x32x128xf32> to vector<32x128xf32>
    %cst_349 = arith.constant dense<0.000000e+00> : vector<8x128xf32>
    %611 = tpu.matmul %608, %610, %cst_349 {dimension_numbers = #tpu.dot_dimension_numbers<[1], [0], [0], [1], [0, 0, 1, 1], [], []>} : vector<8x32xf32>, vector<32x128xf32>, vector<8x128xf32> -> vector<8x128xf32>
    %612 = arith.addf %556, %611 : vector<8x128xf32>
    %c72 = arith.constant 72 : index
    %613 = memref.load %arg6[%c72] : memref<128xf32, #tpu.memory_space<smem>>
    %c0_350 = arith.constant 0 : index
    %c0_351 = arith.constant 0 : index
    %c0_352 = arith.constant 0 : index
    %614 = vector.load %arg10[%c0_350, %c0_351, %c0_352] : memref<8x8x32xf32, #tpu.memory_space<vmem>>, vector<1x8x32xf32>
    %615 = vector.shape_cast %614 : vector<1x8x32xf32> to vector<8x32xf32>
    %616 = vector.broadcast %613 : f32 to vector<8x32xf32>
    %617 = arith.mulf %616, %615 : vector<8x32xf32>
    %c9_353 = arith.constant 9 : index
    %618 = memref.load %arg7[%c9_353] : memref<16xf32, #tpu.memory_space<smem>>
    %619 = vector.broadcast %618 : f32 to vector<8x32xf32>
    %620 = arith.addf %617, %619 : vector<8x32xf32>
    %c73 = arith.constant 73 : index
    %621 = memref.load %arg6[%c73] : memref<128xf32, #tpu.memory_space<smem>>
    %c1_354 = arith.constant 1 : index
    %c0_355 = arith.constant 0 : index
    %c0_356 = arith.constant 0 : index
    %622 = vector.load %arg10[%c1_354, %c0_355, %c0_356] : memref<8x8x32xf32, #tpu.memory_space<vmem>>, vector<1x8x32xf32>
    %623 = vector.shape_cast %622 : vector<1x8x32xf32> to vector<8x32xf32>
    %624 = vector.broadcast %621 : f32 to vector<8x32xf32>
    %625 = arith.mulf %624, %623 : vector<8x32xf32>
    %626 = arith.addf %620, %625 : vector<8x32xf32>
    %c74 = arith.constant 74 : index
    %627 = memref.load %arg6[%c74] : memref<128xf32, #tpu.memory_space<smem>>
    %c2_357 = arith.constant 2 : index
    %c0_358 = arith.constant 0 : index
    %c0_359 = arith.constant 0 : index
    %628 = vector.load %arg10[%c2_357, %c0_358, %c0_359] : memref<8x8x32xf32, #tpu.memory_space<vmem>>, vector<1x8x32xf32>
    %629 = vector.shape_cast %628 : vector<1x8x32xf32> to vector<8x32xf32>
    %630 = vector.broadcast %627 : f32 to vector<8x32xf32>
    %631 = arith.mulf %630, %629 : vector<8x32xf32>
    %632 = arith.addf %626, %631 : vector<8x32xf32>
    %c75 = arith.constant 75 : index
    %633 = memref.load %arg6[%c75] : memref<128xf32, #tpu.memory_space<smem>>
    %c3_360 = arith.constant 3 : index
    %c0_361 = arith.constant 0 : index
    %c0_362 = arith.constant 0 : index
    %634 = vector.load %arg10[%c3_360, %c0_361, %c0_362] : memref<8x8x32xf32, #tpu.memory_space<vmem>>, vector<1x8x32xf32>
    %635 = vector.shape_cast %634 : vector<1x8x32xf32> to vector<8x32xf32>
    %636 = vector.broadcast %633 : f32 to vector<8x32xf32>
    %637 = arith.mulf %636, %635 : vector<8x32xf32>
    %638 = arith.addf %632, %637 : vector<8x32xf32>
    %c76 = arith.constant 76 : index
    %639 = memref.load %arg6[%c76] : memref<128xf32, #tpu.memory_space<smem>>
    %c4_363 = arith.constant 4 : index
    %c0_364 = arith.constant 0 : index
    %c0_365 = arith.constant 0 : index
    %640 = vector.load %arg10[%c4_363, %c0_364, %c0_365] : memref<8x8x32xf32, #tpu.memory_space<vmem>>, vector<1x8x32xf32>
    %641 = vector.shape_cast %640 : vector<1x8x32xf32> to vector<8x32xf32>
    %642 = vector.broadcast %639 : f32 to vector<8x32xf32>
    %643 = arith.mulf %642, %641 : vector<8x32xf32>
    %644 = arith.addf %638, %643 : vector<8x32xf32>
    %c77 = arith.constant 77 : index
    %645 = memref.load %arg6[%c77] : memref<128xf32, #tpu.memory_space<smem>>
    %c5_366 = arith.constant 5 : index
    %c0_367 = arith.constant 0 : index
    %c0_368 = arith.constant 0 : index
    %646 = vector.load %arg10[%c5_366, %c0_367, %c0_368] : memref<8x8x32xf32, #tpu.memory_space<vmem>>, vector<1x8x32xf32>
    %647 = vector.shape_cast %646 : vector<1x8x32xf32> to vector<8x32xf32>
    %648 = vector.broadcast %645 : f32 to vector<8x32xf32>
    %649 = arith.mulf %648, %647 : vector<8x32xf32>
    %650 = arith.addf %644, %649 : vector<8x32xf32>
    %c78 = arith.constant 78 : index
    %651 = memref.load %arg6[%c78] : memref<128xf32, #tpu.memory_space<smem>>
    %c6_369 = arith.constant 6 : index
    %c0_370 = arith.constant 0 : index
    %c0_371 = arith.constant 0 : index
    %652 = vector.load %arg10[%c6_369, %c0_370, %c0_371] : memref<8x8x32xf32, #tpu.memory_space<vmem>>, vector<1x8x32xf32>
    %653 = vector.shape_cast %652 : vector<1x8x32xf32> to vector<8x32xf32>
    %654 = vector.broadcast %651 : f32 to vector<8x32xf32>
    %655 = arith.mulf %654, %653 : vector<8x32xf32>
    %656 = arith.addf %650, %655 : vector<8x32xf32>
    %c79 = arith.constant 79 : index
    %657 = memref.load %arg6[%c79] : memref<128xf32, #tpu.memory_space<smem>>
    %c7_372 = arith.constant 7 : index
    %c0_373 = arith.constant 0 : index
    %c0_374 = arith.constant 0 : index
    %658 = vector.load %arg10[%c7_372, %c0_373, %c0_374] : memref<8x8x32xf32, #tpu.memory_space<vmem>>, vector<1x8x32xf32>
    %659 = vector.shape_cast %658 : vector<1x8x32xf32> to vector<8x32xf32>
    %660 = vector.broadcast %657 : f32 to vector<8x32xf32>
    %661 = arith.mulf %660, %659 : vector<8x32xf32>
    %662 = arith.addf %656, %661 : vector<8x32xf32>
    %cst_375 = arith.constant 0.000000e+00 : f32
    %663 = vector.broadcast %cst_375 : f32 to vector<8x32xf32>
    %664 = arith.maximumf %662, %663 : vector<8x32xf32>
    %c9_376 = arith.constant 9 : index
    %c0_377 = arith.constant 0 : index
    %c0_378 = arith.constant 0 : index
    %665 = vector.load %arg8[%c9_376, %c0_377, %c0_378] : memref<16x32x128xf32, #tpu.memory_space<vmem>>, vector<1x32x128xf32>
    %666 = vector.shape_cast %665 : vector<1x32x128xf32> to vector<32x128xf32>
    %cst_379 = arith.constant dense<0.000000e+00> : vector<8x128xf32>
    %667 = tpu.matmul %664, %666, %cst_379 {dimension_numbers = #tpu.dot_dimension_numbers<[1], [0], [0], [1], [0, 0, 1, 1], [], []>} : vector<8x32xf32>, vector<32x128xf32>, vector<8x128xf32> -> vector<8x128xf32>
    %668 = arith.addf %612, %667 : vector<8x128xf32>
    %c80 = arith.constant 80 : index
    %669 = memref.load %arg6[%c80] : memref<128xf32, #tpu.memory_space<smem>>
    %c0_380 = arith.constant 0 : index
    %c0_381 = arith.constant 0 : index
    %c0_382 = arith.constant 0 : index
    %670 = vector.load %arg10[%c0_380, %c0_381, %c0_382] : memref<8x8x32xf32, #tpu.memory_space<vmem>>, vector<1x8x32xf32>
    %671 = vector.shape_cast %670 : vector<1x8x32xf32> to vector<8x32xf32>
    %672 = vector.broadcast %669 : f32 to vector<8x32xf32>
    %673 = arith.mulf %672, %671 : vector<8x32xf32>
    %c10_383 = arith.constant 10 : index
    %674 = memref.load %arg7[%c10_383] : memref<16xf32, #tpu.memory_space<smem>>
    %675 = vector.broadcast %674 : f32 to vector<8x32xf32>
    %676 = arith.addf %673, %675 : vector<8x32xf32>
    %c81 = arith.constant 81 : index
    %677 = memref.load %arg6[%c81] : memref<128xf32, #tpu.memory_space<smem>>
    %c1_384 = arith.constant 1 : index
    %c0_385 = arith.constant 0 : index
    %c0_386 = arith.constant 0 : index
    %678 = vector.load %arg10[%c1_384, %c0_385, %c0_386] : memref<8x8x32xf32, #tpu.memory_space<vmem>>, vector<1x8x32xf32>
    %679 = vector.shape_cast %678 : vector<1x8x32xf32> to vector<8x32xf32>
    %680 = vector.broadcast %677 : f32 to vector<8x32xf32>
    %681 = arith.mulf %680, %679 : vector<8x32xf32>
    %682 = arith.addf %676, %681 : vector<8x32xf32>
    %c82 = arith.constant 82 : index
    %683 = memref.load %arg6[%c82] : memref<128xf32, #tpu.memory_space<smem>>
    %c2_387 = arith.constant 2 : index
    %c0_388 = arith.constant 0 : index
    %c0_389 = arith.constant 0 : index
    %684 = vector.load %arg10[%c2_387, %c0_388, %c0_389] : memref<8x8x32xf32, #tpu.memory_space<vmem>>, vector<1x8x32xf32>
    %685 = vector.shape_cast %684 : vector<1x8x32xf32> to vector<8x32xf32>
    %686 = vector.broadcast %683 : f32 to vector<8x32xf32>
    %687 = arith.mulf %686, %685 : vector<8x32xf32>
    %688 = arith.addf %682, %687 : vector<8x32xf32>
    %c83 = arith.constant 83 : index
    %689 = memref.load %arg6[%c83] : memref<128xf32, #tpu.memory_space<smem>>
    %c3_390 = arith.constant 3 : index
    %c0_391 = arith.constant 0 : index
    %c0_392 = arith.constant 0 : index
    %690 = vector.load %arg10[%c3_390, %c0_391, %c0_392] : memref<8x8x32xf32, #tpu.memory_space<vmem>>, vector<1x8x32xf32>
    %691 = vector.shape_cast %690 : vector<1x8x32xf32> to vector<8x32xf32>
    %692 = vector.broadcast %689 : f32 to vector<8x32xf32>
    %693 = arith.mulf %692, %691 : vector<8x32xf32>
    %694 = arith.addf %688, %693 : vector<8x32xf32>
    %c84 = arith.constant 84 : index
    %695 = memref.load %arg6[%c84] : memref<128xf32, #tpu.memory_space<smem>>
    %c4_393 = arith.constant 4 : index
    %c0_394 = arith.constant 0 : index
    %c0_395 = arith.constant 0 : index
    %696 = vector.load %arg10[%c4_393, %c0_394, %c0_395] : memref<8x8x32xf32, #tpu.memory_space<vmem>>, vector<1x8x32xf32>
    %697 = vector.shape_cast %696 : vector<1x8x32xf32> to vector<8x32xf32>
    %698 = vector.broadcast %695 : f32 to vector<8x32xf32>
    %699 = arith.mulf %698, %697 : vector<8x32xf32>
    %700 = arith.addf %694, %699 : vector<8x32xf32>
    %c85 = arith.constant 85 : index
    %701 = memref.load %arg6[%c85] : memref<128xf32, #tpu.memory_space<smem>>
    %c5_396 = arith.constant 5 : index
    %c0_397 = arith.constant 0 : index
    %c0_398 = arith.constant 0 : index
    %702 = vector.load %arg10[%c5_396, %c0_397, %c0_398] : memref<8x8x32xf32, #tpu.memory_space<vmem>>, vector<1x8x32xf32>
    %703 = vector.shape_cast %702 : vector<1x8x32xf32> to vector<8x32xf32>
    %704 = vector.broadcast %701 : f32 to vector<8x32xf32>
    %705 = arith.mulf %704, %703 : vector<8x32xf32>
    %706 = arith.addf %700, %705 : vector<8x32xf32>
    %c86 = arith.constant 86 : index
    %707 = memref.load %arg6[%c86] : memref<128xf32, #tpu.memory_space<smem>>
    %c6_399 = arith.constant 6 : index
    %c0_400 = arith.constant 0 : index
    %c0_401 = arith.constant 0 : index
    %708 = vector.load %arg10[%c6_399, %c0_400, %c0_401] : memref<8x8x32xf32, #tpu.memory_space<vmem>>, vector<1x8x32xf32>
    %709 = vector.shape_cast %708 : vector<1x8x32xf32> to vector<8x32xf32>
    %710 = vector.broadcast %707 : f32 to vector<8x32xf32>
    %711 = arith.mulf %710, %709 : vector<8x32xf32>
    %712 = arith.addf %706, %711 : vector<8x32xf32>
    %c87 = arith.constant 87 : index
    %713 = memref.load %arg6[%c87] : memref<128xf32, #tpu.memory_space<smem>>
    %c7_402 = arith.constant 7 : index
    %c0_403 = arith.constant 0 : index
    %c0_404 = arith.constant 0 : index
    %714 = vector.load %arg10[%c7_402, %c0_403, %c0_404] : memref<8x8x32xf32, #tpu.memory_space<vmem>>, vector<1x8x32xf32>
    %715 = vector.shape_cast %714 : vector<1x8x32xf32> to vector<8x32xf32>
    %716 = vector.broadcast %713 : f32 to vector<8x32xf32>
    %717 = arith.mulf %716, %715 : vector<8x32xf32>
    %718 = arith.addf %712, %717 : vector<8x32xf32>
    %cst_405 = arith.constant 0.000000e+00 : f32
    %719 = vector.broadcast %cst_405 : f32 to vector<8x32xf32>
    %720 = arith.maximumf %718, %719 : vector<8x32xf32>
    %c10_406 = arith.constant 10 : index
    %c0_407 = arith.constant 0 : index
    %c0_408 = arith.constant 0 : index
    %721 = vector.load %arg8[%c10_406, %c0_407, %c0_408] : memref<16x32x128xf32, #tpu.memory_space<vmem>>, vector<1x32x128xf32>
    %722 = vector.shape_cast %721 : vector<1x32x128xf32> to vector<32x128xf32>
    %cst_409 = arith.constant dense<0.000000e+00> : vector<8x128xf32>
    %723 = tpu.matmul %720, %722, %cst_409 {dimension_numbers = #tpu.dot_dimension_numbers<[1], [0], [0], [1], [0, 0, 1, 1], [], []>} : vector<8x32xf32>, vector<32x128xf32>, vector<8x128xf32> -> vector<8x128xf32>
    %724 = arith.addf %668, %723 : vector<8x128xf32>
    %c88 = arith.constant 88 : index
    %725 = memref.load %arg6[%c88] : memref<128xf32, #tpu.memory_space<smem>>
    %c0_410 = arith.constant 0 : index
    %c0_411 = arith.constant 0 : index
    %c0_412 = arith.constant 0 : index
    %726 = vector.load %arg10[%c0_410, %c0_411, %c0_412] : memref<8x8x32xf32, #tpu.memory_space<vmem>>, vector<1x8x32xf32>
    %727 = vector.shape_cast %726 : vector<1x8x32xf32> to vector<8x32xf32>
    %728 = vector.broadcast %725 : f32 to vector<8x32xf32>
    %729 = arith.mulf %728, %727 : vector<8x32xf32>
    %c11_413 = arith.constant 11 : index
    %730 = memref.load %arg7[%c11_413] : memref<16xf32, #tpu.memory_space<smem>>
    %731 = vector.broadcast %730 : f32 to vector<8x32xf32>
    %732 = arith.addf %729, %731 : vector<8x32xf32>
    %c89 = arith.constant 89 : index
    %733 = memref.load %arg6[%c89] : memref<128xf32, #tpu.memory_space<smem>>
    %c1_414 = arith.constant 1 : index
    %c0_415 = arith.constant 0 : index
    %c0_416 = arith.constant 0 : index
    %734 = vector.load %arg10[%c1_414, %c0_415, %c0_416] : memref<8x8x32xf32, #tpu.memory_space<vmem>>, vector<1x8x32xf32>
    %735 = vector.shape_cast %734 : vector<1x8x32xf32> to vector<8x32xf32>
    %736 = vector.broadcast %733 : f32 to vector<8x32xf32>
    %737 = arith.mulf %736, %735 : vector<8x32xf32>
    %738 = arith.addf %732, %737 : vector<8x32xf32>
    %c90 = arith.constant 90 : index
    %739 = memref.load %arg6[%c90] : memref<128xf32, #tpu.memory_space<smem>>
    %c2_417 = arith.constant 2 : index
    %c0_418 = arith.constant 0 : index
    %c0_419 = arith.constant 0 : index
    %740 = vector.load %arg10[%c2_417, %c0_418, %c0_419] : memref<8x8x32xf32, #tpu.memory_space<vmem>>, vector<1x8x32xf32>
    %741 = vector.shape_cast %740 : vector<1x8x32xf32> to vector<8x32xf32>
    %742 = vector.broadcast %739 : f32 to vector<8x32xf32>
    %743 = arith.mulf %742, %741 : vector<8x32xf32>
    %744 = arith.addf %738, %743 : vector<8x32xf32>
    %c91 = arith.constant 91 : index
    %745 = memref.load %arg6[%c91] : memref<128xf32, #tpu.memory_space<smem>>
    %c3_420 = arith.constant 3 : index
    %c0_421 = arith.constant 0 : index
    %c0_422 = arith.constant 0 : index
    %746 = vector.load %arg10[%c3_420, %c0_421, %c0_422] : memref<8x8x32xf32, #tpu.memory_space<vmem>>, vector<1x8x32xf32>
    %747 = vector.shape_cast %746 : vector<1x8x32xf32> to vector<8x32xf32>
    %748 = vector.broadcast %745 : f32 to vector<8x32xf32>
    %749 = arith.mulf %748, %747 : vector<8x32xf32>
    %750 = arith.addf %744, %749 : vector<8x32xf32>
    %c92 = arith.constant 92 : index
    %751 = memref.load %arg6[%c92] : memref<128xf32, #tpu.memory_space<smem>>
    %c4_423 = arith.constant 4 : index
    %c0_424 = arith.constant 0 : index
    %c0_425 = arith.constant 0 : index
    %752 = vector.load %arg10[%c4_423, %c0_424, %c0_425] : memref<8x8x32xf32, #tpu.memory_space<vmem>>, vector<1x8x32xf32>
    %753 = vector.shape_cast %752 : vector<1x8x32xf32> to vector<8x32xf32>
    %754 = vector.broadcast %751 : f32 to vector<8x32xf32>
    %755 = arith.mulf %754, %753 : vector<8x32xf32>
    %756 = arith.addf %750, %755 : vector<8x32xf32>
    %c93 = arith.constant 93 : index
    %757 = memref.load %arg6[%c93] : memref<128xf32, #tpu.memory_space<smem>>
    %c5_426 = arith.constant 5 : index
    %c0_427 = arith.constant 0 : index
    %c0_428 = arith.constant 0 : index
    %758 = vector.load %arg10[%c5_426, %c0_427, %c0_428] : memref<8x8x32xf32, #tpu.memory_space<vmem>>, vector<1x8x32xf32>
    %759 = vector.shape_cast %758 : vector<1x8x32xf32> to vector<8x32xf32>
    %760 = vector.broadcast %757 : f32 to vector<8x32xf32>
    %761 = arith.mulf %760, %759 : vector<8x32xf32>
    %762 = arith.addf %756, %761 : vector<8x32xf32>
    %c94 = arith.constant 94 : index
    %763 = memref.load %arg6[%c94] : memref<128xf32, #tpu.memory_space<smem>>
    %c6_429 = arith.constant 6 : index
    %c0_430 = arith.constant 0 : index
    %c0_431 = arith.constant 0 : index
    %764 = vector.load %arg10[%c6_429, %c0_430, %c0_431] : memref<8x8x32xf32, #tpu.memory_space<vmem>>, vector<1x8x32xf32>
    %765 = vector.shape_cast %764 : vector<1x8x32xf32> to vector<8x32xf32>
    %766 = vector.broadcast %763 : f32 to vector<8x32xf32>
    %767 = arith.mulf %766, %765 : vector<8x32xf32>
    %768 = arith.addf %762, %767 : vector<8x32xf32>
    %c95 = arith.constant 95 : index
    %769 = memref.load %arg6[%c95] : memref<128xf32, #tpu.memory_space<smem>>
    %c7_432 = arith.constant 7 : index
    %c0_433 = arith.constant 0 : index
    %c0_434 = arith.constant 0 : index
    %770 = vector.load %arg10[%c7_432, %c0_433, %c0_434] : memref<8x8x32xf32, #tpu.memory_space<vmem>>, vector<1x8x32xf32>
    %771 = vector.shape_cast %770 : vector<1x8x32xf32> to vector<8x32xf32>
    %772 = vector.broadcast %769 : f32 to vector<8x32xf32>
    %773 = arith.mulf %772, %771 : vector<8x32xf32>
    %774 = arith.addf %768, %773 : vector<8x32xf32>
    %cst_435 = arith.constant 0.000000e+00 : f32
    %775 = vector.broadcast %cst_435 : f32 to vector<8x32xf32>
    %776 = arith.maximumf %774, %775 : vector<8x32xf32>
    %c11_436 = arith.constant 11 : index
    %c0_437 = arith.constant 0 : index
    %c0_438 = arith.constant 0 : index
    %777 = vector.load %arg8[%c11_436, %c0_437, %c0_438] : memref<16x32x128xf32, #tpu.memory_space<vmem>>, vector<1x32x128xf32>
    %778 = vector.shape_cast %777 : vector<1x32x128xf32> to vector<32x128xf32>
    %cst_439 = arith.constant dense<0.000000e+00> : vector<8x128xf32>
    %779 = tpu.matmul %776, %778, %cst_439 {dimension_numbers = #tpu.dot_dimension_numbers<[1], [0], [0], [1], [0, 0, 1, 1], [], []>} : vector<8x32xf32>, vector<32x128xf32>, vector<8x128xf32> -> vector<8x128xf32>
    %780 = arith.addf %724, %779 : vector<8x128xf32>
    %c96 = arith.constant 96 : index
    %781 = memref.load %arg6[%c96] : memref<128xf32, #tpu.memory_space<smem>>
    %c0_440 = arith.constant 0 : index
    %c0_441 = arith.constant 0 : index
    %c0_442 = arith.constant 0 : index
    %782 = vector.load %arg10[%c0_440, %c0_441, %c0_442] : memref<8x8x32xf32, #tpu.memory_space<vmem>>, vector<1x8x32xf32>
    %783 = vector.shape_cast %782 : vector<1x8x32xf32> to vector<8x32xf32>
    %784 = vector.broadcast %781 : f32 to vector<8x32xf32>
    %785 = arith.mulf %784, %783 : vector<8x32xf32>
    %c12_443 = arith.constant 12 : index
    %786 = memref.load %arg7[%c12_443] : memref<16xf32, #tpu.memory_space<smem>>
    %787 = vector.broadcast %786 : f32 to vector<8x32xf32>
    %788 = arith.addf %785, %787 : vector<8x32xf32>
    %c97 = arith.constant 97 : index
    %789 = memref.load %arg6[%c97] : memref<128xf32, #tpu.memory_space<smem>>
    %c1_444 = arith.constant 1 : index
    %c0_445 = arith.constant 0 : index
    %c0_446 = arith.constant 0 : index
    %790 = vector.load %arg10[%c1_444, %c0_445, %c0_446] : memref<8x8x32xf32, #tpu.memory_space<vmem>>, vector<1x8x32xf32>
    %791 = vector.shape_cast %790 : vector<1x8x32xf32> to vector<8x32xf32>
    %792 = vector.broadcast %789 : f32 to vector<8x32xf32>
    %793 = arith.mulf %792, %791 : vector<8x32xf32>
    %794 = arith.addf %788, %793 : vector<8x32xf32>
    %c98 = arith.constant 98 : index
    %795 = memref.load %arg6[%c98] : memref<128xf32, #tpu.memory_space<smem>>
    %c2_447 = arith.constant 2 : index
    %c0_448 = arith.constant 0 : index
    %c0_449 = arith.constant 0 : index
    %796 = vector.load %arg10[%c2_447, %c0_448, %c0_449] : memref<8x8x32xf32, #tpu.memory_space<vmem>>, vector<1x8x32xf32>
    %797 = vector.shape_cast %796 : vector<1x8x32xf32> to vector<8x32xf32>
    %798 = vector.broadcast %795 : f32 to vector<8x32xf32>
    %799 = arith.mulf %798, %797 : vector<8x32xf32>
    %800 = arith.addf %794, %799 : vector<8x32xf32>
    %c99 = arith.constant 99 : index
    %801 = memref.load %arg6[%c99] : memref<128xf32, #tpu.memory_space<smem>>
    %c3_450 = arith.constant 3 : index
    %c0_451 = arith.constant 0 : index
    %c0_452 = arith.constant 0 : index
    %802 = vector.load %arg10[%c3_450, %c0_451, %c0_452] : memref<8x8x32xf32, #tpu.memory_space<vmem>>, vector<1x8x32xf32>
    %803 = vector.shape_cast %802 : vector<1x8x32xf32> to vector<8x32xf32>
    %804 = vector.broadcast %801 : f32 to vector<8x32xf32>
    %805 = arith.mulf %804, %803 : vector<8x32xf32>
    %806 = arith.addf %800, %805 : vector<8x32xf32>
    %c100 = arith.constant 100 : index
    %807 = memref.load %arg6[%c100] : memref<128xf32, #tpu.memory_space<smem>>
    %c4_453 = arith.constant 4 : index
    %c0_454 = arith.constant 0 : index
    %c0_455 = arith.constant 0 : index
    %808 = vector.load %arg10[%c4_453, %c0_454, %c0_455] : memref<8x8x32xf32, #tpu.memory_space<vmem>>, vector<1x8x32xf32>
    %809 = vector.shape_cast %808 : vector<1x8x32xf32> to vector<8x32xf32>
    %810 = vector.broadcast %807 : f32 to vector<8x32xf32>
    %811 = arith.mulf %810, %809 : vector<8x32xf32>
    %812 = arith.addf %806, %811 : vector<8x32xf32>
    %c101 = arith.constant 101 : index
    %813 = memref.load %arg6[%c101] : memref<128xf32, #tpu.memory_space<smem>>
    %c5_456 = arith.constant 5 : index
    %c0_457 = arith.constant 0 : index
    %c0_458 = arith.constant 0 : index
    %814 = vector.load %arg10[%c5_456, %c0_457, %c0_458] : memref<8x8x32xf32, #tpu.memory_space<vmem>>, vector<1x8x32xf32>
    %815 = vector.shape_cast %814 : vector<1x8x32xf32> to vector<8x32xf32>
    %816 = vector.broadcast %813 : f32 to vector<8x32xf32>
    %817 = arith.mulf %816, %815 : vector<8x32xf32>
    %818 = arith.addf %812, %817 : vector<8x32xf32>
    %c102 = arith.constant 102 : index
    %819 = memref.load %arg6[%c102] : memref<128xf32, #tpu.memory_space<smem>>
    %c6_459 = arith.constant 6 : index
    %c0_460 = arith.constant 0 : index
    %c0_461 = arith.constant 0 : index
    %820 = vector.load %arg10[%c6_459, %c0_460, %c0_461] : memref<8x8x32xf32, #tpu.memory_space<vmem>>, vector<1x8x32xf32>
    %821 = vector.shape_cast %820 : vector<1x8x32xf32> to vector<8x32xf32>
    %822 = vector.broadcast %819 : f32 to vector<8x32xf32>
    %823 = arith.mulf %822, %821 : vector<8x32xf32>
    %824 = arith.addf %818, %823 : vector<8x32xf32>
    %c103 = arith.constant 103 : index
    %825 = memref.load %arg6[%c103] : memref<128xf32, #tpu.memory_space<smem>>
    %c7_462 = arith.constant 7 : index
    %c0_463 = arith.constant 0 : index
    %c0_464 = arith.constant 0 : index
    %826 = vector.load %arg10[%c7_462, %c0_463, %c0_464] : memref<8x8x32xf32, #tpu.memory_space<vmem>>, vector<1x8x32xf32>
    %827 = vector.shape_cast %826 : vector<1x8x32xf32> to vector<8x32xf32>
    %828 = vector.broadcast %825 : f32 to vector<8x32xf32>
    %829 = arith.mulf %828, %827 : vector<8x32xf32>
    %830 = arith.addf %824, %829 : vector<8x32xf32>
    %cst_465 = arith.constant 0.000000e+00 : f32
    %831 = vector.broadcast %cst_465 : f32 to vector<8x32xf32>
    %832 = arith.maximumf %830, %831 : vector<8x32xf32>
    %c12_466 = arith.constant 12 : index
    %c0_467 = arith.constant 0 : index
    %c0_468 = arith.constant 0 : index
    %833 = vector.load %arg8[%c12_466, %c0_467, %c0_468] : memref<16x32x128xf32, #tpu.memory_space<vmem>>, vector<1x32x128xf32>
    %834 = vector.shape_cast %833 : vector<1x32x128xf32> to vector<32x128xf32>
    %cst_469 = arith.constant dense<0.000000e+00> : vector<8x128xf32>
    %835 = tpu.matmul %832, %834, %cst_469 {dimension_numbers = #tpu.dot_dimension_numbers<[1], [0], [0], [1], [0, 0, 1, 1], [], []>} : vector<8x32xf32>, vector<32x128xf32>, vector<8x128xf32> -> vector<8x128xf32>
    %836 = arith.addf %780, %835 : vector<8x128xf32>
    %c104 = arith.constant 104 : index
    %837 = memref.load %arg6[%c104] : memref<128xf32, #tpu.memory_space<smem>>
    %c0_470 = arith.constant 0 : index
    %c0_471 = arith.constant 0 : index
    %c0_472 = arith.constant 0 : index
    %838 = vector.load %arg10[%c0_470, %c0_471, %c0_472] : memref<8x8x32xf32, #tpu.memory_space<vmem>>, vector<1x8x32xf32>
    %839 = vector.shape_cast %838 : vector<1x8x32xf32> to vector<8x32xf32>
    %840 = vector.broadcast %837 : f32 to vector<8x32xf32>
    %841 = arith.mulf %840, %839 : vector<8x32xf32>
    %c13_473 = arith.constant 13 : index
    %842 = memref.load %arg7[%c13_473] : memref<16xf32, #tpu.memory_space<smem>>
    %843 = vector.broadcast %842 : f32 to vector<8x32xf32>
    %844 = arith.addf %841, %843 : vector<8x32xf32>
    %c105 = arith.constant 105 : index
    %845 = memref.load %arg6[%c105] : memref<128xf32, #tpu.memory_space<smem>>
    %c1_474 = arith.constant 1 : index
    %c0_475 = arith.constant 0 : index
    %c0_476 = arith.constant 0 : index
    %846 = vector.load %arg10[%c1_474, %c0_475, %c0_476] : memref<8x8x32xf32, #tpu.memory_space<vmem>>, vector<1x8x32xf32>
    %847 = vector.shape_cast %846 : vector<1x8x32xf32> to vector<8x32xf32>
    %848 = vector.broadcast %845 : f32 to vector<8x32xf32>
    %849 = arith.mulf %848, %847 : vector<8x32xf32>
    %850 = arith.addf %844, %849 : vector<8x32xf32>
    %c106 = arith.constant 106 : index
    %851 = memref.load %arg6[%c106] : memref<128xf32, #tpu.memory_space<smem>>
    %c2_477 = arith.constant 2 : index
    %c0_478 = arith.constant 0 : index
    %c0_479 = arith.constant 0 : index
    %852 = vector.load %arg10[%c2_477, %c0_478, %c0_479] : memref<8x8x32xf32, #tpu.memory_space<vmem>>, vector<1x8x32xf32>
    %853 = vector.shape_cast %852 : vector<1x8x32xf32> to vector<8x32xf32>
    %854 = vector.broadcast %851 : f32 to vector<8x32xf32>
    %855 = arith.mulf %854, %853 : vector<8x32xf32>
    %856 = arith.addf %850, %855 : vector<8x32xf32>
    %c107 = arith.constant 107 : index
    %857 = memref.load %arg6[%c107] : memref<128xf32, #tpu.memory_space<smem>>
    %c3_480 = arith.constant 3 : index
    %c0_481 = arith.constant 0 : index
    %c0_482 = arith.constant 0 : index
    %858 = vector.load %arg10[%c3_480, %c0_481, %c0_482] : memref<8x8x32xf32, #tpu.memory_space<vmem>>, vector<1x8x32xf32>
    %859 = vector.shape_cast %858 : vector<1x8x32xf32> to vector<8x32xf32>
    %860 = vector.broadcast %857 : f32 to vector<8x32xf32>
    %861 = arith.mulf %860, %859 : vector<8x32xf32>
    %862 = arith.addf %856, %861 : vector<8x32xf32>
    %c108 = arith.constant 108 : index
    %863 = memref.load %arg6[%c108] : memref<128xf32, #tpu.memory_space<smem>>
    %c4_483 = arith.constant 4 : index
    %c0_484 = arith.constant 0 : index
    %c0_485 = arith.constant 0 : index
    %864 = vector.load %arg10[%c4_483, %c0_484, %c0_485] : memref<8x8x32xf32, #tpu.memory_space<vmem>>, vector<1x8x32xf32>
    %865 = vector.shape_cast %864 : vector<1x8x32xf32> to vector<8x32xf32>
    %866 = vector.broadcast %863 : f32 to vector<8x32xf32>
    %867 = arith.mulf %866, %865 : vector<8x32xf32>
    %868 = arith.addf %862, %867 : vector<8x32xf32>
    %c109 = arith.constant 109 : index
    %869 = memref.load %arg6[%c109] : memref<128xf32, #tpu.memory_space<smem>>
    %c5_486 = arith.constant 5 : index
    %c0_487 = arith.constant 0 : index
    %c0_488 = arith.constant 0 : index
    %870 = vector.load %arg10[%c5_486, %c0_487, %c0_488] : memref<8x8x32xf32, #tpu.memory_space<vmem>>, vector<1x8x32xf32>
    %871 = vector.shape_cast %870 : vector<1x8x32xf32> to vector<8x32xf32>
    %872 = vector.broadcast %869 : f32 to vector<8x32xf32>
    %873 = arith.mulf %872, %871 : vector<8x32xf32>
    %874 = arith.addf %868, %873 : vector<8x32xf32>
    %c110 = arith.constant 110 : index
    %875 = memref.load %arg6[%c110] : memref<128xf32, #tpu.memory_space<smem>>
    %c6_489 = arith.constant 6 : index
    %c0_490 = arith.constant 0 : index
    %c0_491 = arith.constant 0 : index
    %876 = vector.load %arg10[%c6_489, %c0_490, %c0_491] : memref<8x8x32xf32, #tpu.memory_space<vmem>>, vector<1x8x32xf32>
    %877 = vector.shape_cast %876 : vector<1x8x32xf32> to vector<8x32xf32>
    %878 = vector.broadcast %875 : f32 to vector<8x32xf32>
    %879 = arith.mulf %878, %877 : vector<8x32xf32>
    %880 = arith.addf %874, %879 : vector<8x32xf32>
    %c111 = arith.constant 111 : index
    %881 = memref.load %arg6[%c111] : memref<128xf32, #tpu.memory_space<smem>>
    %c7_492 = arith.constant 7 : index
    %c0_493 = arith.constant 0 : index
    %c0_494 = arith.constant 0 : index
    %882 = vector.load %arg10[%c7_492, %c0_493, %c0_494] : memref<8x8x32xf32, #tpu.memory_space<vmem>>, vector<1x8x32xf32>
    %883 = vector.shape_cast %882 : vector<1x8x32xf32> to vector<8x32xf32>
    %884 = vector.broadcast %881 : f32 to vector<8x32xf32>
    %885 = arith.mulf %884, %883 : vector<8x32xf32>
    %886 = arith.addf %880, %885 : vector<8x32xf32>
    %cst_495 = arith.constant 0.000000e+00 : f32
    %887 = vector.broadcast %cst_495 : f32 to vector<8x32xf32>
    %888 = arith.maximumf %886, %887 : vector<8x32xf32>
    %c13_496 = arith.constant 13 : index
    %c0_497 = arith.constant 0 : index
    %c0_498 = arith.constant 0 : index
    %889 = vector.load %arg8[%c13_496, %c0_497, %c0_498] : memref<16x32x128xf32, #tpu.memory_space<vmem>>, vector<1x32x128xf32>
    %890 = vector.shape_cast %889 : vector<1x32x128xf32> to vector<32x128xf32>
    %cst_499 = arith.constant dense<0.000000e+00> : vector<8x128xf32>
    %891 = tpu.matmul %888, %890, %cst_499 {dimension_numbers = #tpu.dot_dimension_numbers<[1], [0], [0], [1], [0, 0, 1, 1], [], []>} : vector<8x32xf32>, vector<32x128xf32>, vector<8x128xf32> -> vector<8x128xf32>
    %892 = arith.addf %836, %891 : vector<8x128xf32>
    %c112 = arith.constant 112 : index
    %893 = memref.load %arg6[%c112] : memref<128xf32, #tpu.memory_space<smem>>
    %c0_500 = arith.constant 0 : index
    %c0_501 = arith.constant 0 : index
    %c0_502 = arith.constant 0 : index
    %894 = vector.load %arg10[%c0_500, %c0_501, %c0_502] : memref<8x8x32xf32, #tpu.memory_space<vmem>>, vector<1x8x32xf32>
    %895 = vector.shape_cast %894 : vector<1x8x32xf32> to vector<8x32xf32>
    %896 = vector.broadcast %893 : f32 to vector<8x32xf32>
    %897 = arith.mulf %896, %895 : vector<8x32xf32>
    %c14_503 = arith.constant 14 : index
    %898 = memref.load %arg7[%c14_503] : memref<16xf32, #tpu.memory_space<smem>>
    %899 = vector.broadcast %898 : f32 to vector<8x32xf32>
    %900 = arith.addf %897, %899 : vector<8x32xf32>
    %c113 = arith.constant 113 : index
    %901 = memref.load %arg6[%c113] : memref<128xf32, #tpu.memory_space<smem>>
    %c1_504 = arith.constant 1 : index
    %c0_505 = arith.constant 0 : index
    %c0_506 = arith.constant 0 : index
    %902 = vector.load %arg10[%c1_504, %c0_505, %c0_506] : memref<8x8x32xf32, #tpu.memory_space<vmem>>, vector<1x8x32xf32>
    %903 = vector.shape_cast %902 : vector<1x8x32xf32> to vector<8x32xf32>
    %904 = vector.broadcast %901 : f32 to vector<8x32xf32>
    %905 = arith.mulf %904, %903 : vector<8x32xf32>
    %906 = arith.addf %900, %905 : vector<8x32xf32>
    %c114 = arith.constant 114 : index
    %907 = memref.load %arg6[%c114] : memref<128xf32, #tpu.memory_space<smem>>
    %c2_507 = arith.constant 2 : index
    %c0_508 = arith.constant 0 : index
    %c0_509 = arith.constant 0 : index
    %908 = vector.load %arg10[%c2_507, %c0_508, %c0_509] : memref<8x8x32xf32, #tpu.memory_space<vmem>>, vector<1x8x32xf32>
    %909 = vector.shape_cast %908 : vector<1x8x32xf32> to vector<8x32xf32>
    %910 = vector.broadcast %907 : f32 to vector<8x32xf32>
    %911 = arith.mulf %910, %909 : vector<8x32xf32>
    %912 = arith.addf %906, %911 : vector<8x32xf32>
    %c115 = arith.constant 115 : index
    %913 = memref.load %arg6[%c115] : memref<128xf32, #tpu.memory_space<smem>>
    %c3_510 = arith.constant 3 : index
    %c0_511 = arith.constant 0 : index
    %c0_512 = arith.constant 0 : index
    %914 = vector.load %arg10[%c3_510, %c0_511, %c0_512] : memref<8x8x32xf32, #tpu.memory_space<vmem>>, vector<1x8x32xf32>
    %915 = vector.shape_cast %914 : vector<1x8x32xf32> to vector<8x32xf32>
    %916 = vector.broadcast %913 : f32 to vector<8x32xf32>
    %917 = arith.mulf %916, %915 : vector<8x32xf32>
    %918 = arith.addf %912, %917 : vector<8x32xf32>
    %c116 = arith.constant 116 : index
    %919 = memref.load %arg6[%c116] : memref<128xf32, #tpu.memory_space<smem>>
    %c4_513 = arith.constant 4 : index
    %c0_514 = arith.constant 0 : index
    %c0_515 = arith.constant 0 : index
    %920 = vector.load %arg10[%c4_513, %c0_514, %c0_515] : memref<8x8x32xf32, #tpu.memory_space<vmem>>, vector<1x8x32xf32>
    %921 = vector.shape_cast %920 : vector<1x8x32xf32> to vector<8x32xf32>
    %922 = vector.broadcast %919 : f32 to vector<8x32xf32>
    %923 = arith.mulf %922, %921 : vector<8x32xf32>
    %924 = arith.addf %918, %923 : vector<8x32xf32>
    %c117 = arith.constant 117 : index
    %925 = memref.load %arg6[%c117] : memref<128xf32, #tpu.memory_space<smem>>
    %c5_516 = arith.constant 5 : index
    %c0_517 = arith.constant 0 : index
    %c0_518 = arith.constant 0 : index
    %926 = vector.load %arg10[%c5_516, %c0_517, %c0_518] : memref<8x8x32xf32, #tpu.memory_space<vmem>>, vector<1x8x32xf32>
    %927 = vector.shape_cast %926 : vector<1x8x32xf32> to vector<8x32xf32>
    %928 = vector.broadcast %925 : f32 to vector<8x32xf32>
    %929 = arith.mulf %928, %927 : vector<8x32xf32>
    %930 = arith.addf %924, %929 : vector<8x32xf32>
    %c118 = arith.constant 118 : index
    %931 = memref.load %arg6[%c118] : memref<128xf32, #tpu.memory_space<smem>>
    %c6_519 = arith.constant 6 : index
    %c0_520 = arith.constant 0 : index
    %c0_521 = arith.constant 0 : index
    %932 = vector.load %arg10[%c6_519, %c0_520, %c0_521] : memref<8x8x32xf32, #tpu.memory_space<vmem>>, vector<1x8x32xf32>
    %933 = vector.shape_cast %932 : vector<1x8x32xf32> to vector<8x32xf32>
    %934 = vector.broadcast %931 : f32 to vector<8x32xf32>
    %935 = arith.mulf %934, %933 : vector<8x32xf32>
    %936 = arith.addf %930, %935 : vector<8x32xf32>
    %c119 = arith.constant 119 : index
    %937 = memref.load %arg6[%c119] : memref<128xf32, #tpu.memory_space<smem>>
    %c7_522 = arith.constant 7 : index
    %c0_523 = arith.constant 0 : index
    %c0_524 = arith.constant 0 : index
    %938 = vector.load %arg10[%c7_522, %c0_523, %c0_524] : memref<8x8x32xf32, #tpu.memory_space<vmem>>, vector<1x8x32xf32>
    %939 = vector.shape_cast %938 : vector<1x8x32xf32> to vector<8x32xf32>
    %940 = vector.broadcast %937 : f32 to vector<8x32xf32>
    %941 = arith.mulf %940, %939 : vector<8x32xf32>
    %942 = arith.addf %936, %941 : vector<8x32xf32>
    %cst_525 = arith.constant 0.000000e+00 : f32
    %943 = vector.broadcast %cst_525 : f32 to vector<8x32xf32>
    %944 = arith.maximumf %942, %943 : vector<8x32xf32>
    %c14_526 = arith.constant 14 : index
    %c0_527 = arith.constant 0 : index
    %c0_528 = arith.constant 0 : index
    %945 = vector.load %arg8[%c14_526, %c0_527, %c0_528] : memref<16x32x128xf32, #tpu.memory_space<vmem>>, vector<1x32x128xf32>
    %946 = vector.shape_cast %945 : vector<1x32x128xf32> to vector<32x128xf32>
    %cst_529 = arith.constant dense<0.000000e+00> : vector<8x128xf32>
    %947 = tpu.matmul %944, %946, %cst_529 {dimension_numbers = #tpu.dot_dimension_numbers<[1], [0], [0], [1], [0, 0, 1, 1], [], []>} : vector<8x32xf32>, vector<32x128xf32>, vector<8x128xf32> -> vector<8x128xf32>
    %948 = arith.addf %892, %947 : vector<8x128xf32>
    %c120 = arith.constant 120 : index
    %949 = memref.load %arg6[%c120] : memref<128xf32, #tpu.memory_space<smem>>
    %c0_530 = arith.constant 0 : index
    %c0_531 = arith.constant 0 : index
    %c0_532 = arith.constant 0 : index
    %950 = vector.load %arg10[%c0_530, %c0_531, %c0_532] : memref<8x8x32xf32, #tpu.memory_space<vmem>>, vector<1x8x32xf32>
    %951 = vector.shape_cast %950 : vector<1x8x32xf32> to vector<8x32xf32>
    %952 = vector.broadcast %949 : f32 to vector<8x32xf32>
    %953 = arith.mulf %952, %951 : vector<8x32xf32>
    %c15_533 = arith.constant 15 : index
    %954 = memref.load %arg7[%c15_533] : memref<16xf32, #tpu.memory_space<smem>>
    %955 = vector.broadcast %954 : f32 to vector<8x32xf32>
    %956 = arith.addf %953, %955 : vector<8x32xf32>
    %c121 = arith.constant 121 : index
    %957 = memref.load %arg6[%c121] : memref<128xf32, #tpu.memory_space<smem>>
    %c1_534 = arith.constant 1 : index
    %c0_535 = arith.constant 0 : index
    %c0_536 = arith.constant 0 : index
    %958 = vector.load %arg10[%c1_534, %c0_535, %c0_536] : memref<8x8x32xf32, #tpu.memory_space<vmem>>, vector<1x8x32xf32>
    %959 = vector.shape_cast %958 : vector<1x8x32xf32> to vector<8x32xf32>
    %960 = vector.broadcast %957 : f32 to vector<8x32xf32>
    %961 = arith.mulf %960, %959 : vector<8x32xf32>
    %962 = arith.addf %956, %961 : vector<8x32xf32>
    %c122 = arith.constant 122 : index
    %963 = memref.load %arg6[%c122] : memref<128xf32, #tpu.memory_space<smem>>
    %c2_537 = arith.constant 2 : index
    %c0_538 = arith.constant 0 : index
    %c0_539 = arith.constant 0 : index
    %964 = vector.load %arg10[%c2_537, %c0_538, %c0_539] : memref<8x8x32xf32, #tpu.memory_space<vmem>>, vector<1x8x32xf32>
    %965 = vector.shape_cast %964 : vector<1x8x32xf32> to vector<8x32xf32>
    %966 = vector.broadcast %963 : f32 to vector<8x32xf32>
    %967 = arith.mulf %966, %965 : vector<8x32xf32>
    %968 = arith.addf %962, %967 : vector<8x32xf32>
    %c123 = arith.constant 123 : index
    %969 = memref.load %arg6[%c123] : memref<128xf32, #tpu.memory_space<smem>>
    %c3_540 = arith.constant 3 : index
    %c0_541 = arith.constant 0 : index
    %c0_542 = arith.constant 0 : index
    %970 = vector.load %arg10[%c3_540, %c0_541, %c0_542] : memref<8x8x32xf32, #tpu.memory_space<vmem>>, vector<1x8x32xf32>
    %971 = vector.shape_cast %970 : vector<1x8x32xf32> to vector<8x32xf32>
    %972 = vector.broadcast %969 : f32 to vector<8x32xf32>
    %973 = arith.mulf %972, %971 : vector<8x32xf32>
    %974 = arith.addf %968, %973 : vector<8x32xf32>
    %c124 = arith.constant 124 : index
    %975 = memref.load %arg6[%c124] : memref<128xf32, #tpu.memory_space<smem>>
    %c4_543 = arith.constant 4 : index
    %c0_544 = arith.constant 0 : index
    %c0_545 = arith.constant 0 : index
    %976 = vector.load %arg10[%c4_543, %c0_544, %c0_545] : memref<8x8x32xf32, #tpu.memory_space<vmem>>, vector<1x8x32xf32>
    %977 = vector.shape_cast %976 : vector<1x8x32xf32> to vector<8x32xf32>
    %978 = vector.broadcast %975 : f32 to vector<8x32xf32>
    %979 = arith.mulf %978, %977 : vector<8x32xf32>
    %980 = arith.addf %974, %979 : vector<8x32xf32>
    %c125 = arith.constant 125 : index
    %981 = memref.load %arg6[%c125] : memref<128xf32, #tpu.memory_space<smem>>
    %c5_546 = arith.constant 5 : index
    %c0_547 = arith.constant 0 : index
    %c0_548 = arith.constant 0 : index
    %982 = vector.load %arg10[%c5_546, %c0_547, %c0_548] : memref<8x8x32xf32, #tpu.memory_space<vmem>>, vector<1x8x32xf32>
    %983 = vector.shape_cast %982 : vector<1x8x32xf32> to vector<8x32xf32>
    %984 = vector.broadcast %981 : f32 to vector<8x32xf32>
    %985 = arith.mulf %984, %983 : vector<8x32xf32>
    %986 = arith.addf %980, %985 : vector<8x32xf32>
    %c126 = arith.constant 126 : index
    %987 = memref.load %arg6[%c126] : memref<128xf32, #tpu.memory_space<smem>>
    %c6_549 = arith.constant 6 : index
    %c0_550 = arith.constant 0 : index
    %c0_551 = arith.constant 0 : index
    %988 = vector.load %arg10[%c6_549, %c0_550, %c0_551] : memref<8x8x32xf32, #tpu.memory_space<vmem>>, vector<1x8x32xf32>
    %989 = vector.shape_cast %988 : vector<1x8x32xf32> to vector<8x32xf32>
    %990 = vector.broadcast %987 : f32 to vector<8x32xf32>
    %991 = arith.mulf %990, %989 : vector<8x32xf32>
    %992 = arith.addf %986, %991 : vector<8x32xf32>
    %c127 = arith.constant 127 : index
    %993 = memref.load %arg6[%c127] : memref<128xf32, #tpu.memory_space<smem>>
    %c7_552 = arith.constant 7 : index
    %c0_553 = arith.constant 0 : index
    %c0_554 = arith.constant 0 : index
    %994 = vector.load %arg10[%c7_552, %c0_553, %c0_554] : memref<8x8x32xf32, #tpu.memory_space<vmem>>, vector<1x8x32xf32>
    %995 = vector.shape_cast %994 : vector<1x8x32xf32> to vector<8x32xf32>
    %996 = vector.broadcast %993 : f32 to vector<8x32xf32>
    %997 = arith.mulf %996, %995 : vector<8x32xf32>
    %998 = arith.addf %992, %997 : vector<8x32xf32>
    %cst_555 = arith.constant 0.000000e+00 : f32
    %999 = vector.broadcast %cst_555 : f32 to vector<8x32xf32>
    %1000 = arith.maximumf %998, %999 : vector<8x32xf32>
    %c15_556 = arith.constant 15 : index
    %c0_557 = arith.constant 0 : index
    %c0_558 = arith.constant 0 : index
    %1001 = vector.load %arg8[%c15_556, %c0_557, %c0_558] : memref<16x32x128xf32, #tpu.memory_space<vmem>>, vector<1x32x128xf32>
    %1002 = vector.shape_cast %1001 : vector<1x32x128xf32> to vector<32x128xf32>
    %cst_559 = arith.constant dense<0.000000e+00> : vector<8x128xf32>
    %1003 = tpu.matmul %1000, %1002, %cst_559 {dimension_numbers = #tpu.dot_dimension_numbers<[1], [0], [0], [1], [0, 0, 1, 1], [], []>} : vector<8x32xf32>, vector<32x128xf32>, vector<8x128xf32> -> vector<8x128xf32>
    %1004 = arith.addf %948, %1003 : vector<8x128xf32>
    %c0_560 = arith.constant 0 : index
    %c0_561 = arith.constant 0 : index
    %1005 = vector.load %arg9[%c0_560, %c0_561] : memref<8x128xf32, #tpu.memory_space<vmem>>, vector<8x128xf32>
    tpu.vector_store %arg9[%c0_560, %c0_561], %1004 {strides = array<i32>} : memref<8x128xf32, #tpu.memory_space<vmem>>, vector<8x128xf32>,
    return
  }
  func.func @transform_0(%arg0: i32) -> (i32, i32, i32) {
    %c0_i32 = arith.constant 0 : i32
    %c0_i32_0 = arith.constant 0 : i32
    %c0_i32_1 = arith.constant 0 : i32
    return %c0_i32, %arg0, %c0_i32_0 : i32, i32, i32
  }
  func.func @transform_1(%arg0: i32) -> (i32, i32) {
    %c0_i32 = arith.constant 0 : i32
    %c0_i32_0 = arith.constant 0 : i32
    %c0_i32_1 = arith.constant 0 : i32
    return %c0_i32, %c0_i32_0 : i32, i32
  }
  func.func @transform_2(%arg0: i32) -> (i32, i32) {
    %c0_i32 = arith.constant 0 : i32
    %c0_i32_0 = arith.constant 0 : i32
    %c0_i32_1 = arith.constant 0 : i32
    return %c0_i32, %c0_i32_0 : i32, i32
  }
  func.func @transform_3(%arg0: i32) -> (i32, i32) {
    %c0_i32 = arith.constant 0 : i32
    %c0_i32_0 = arith.constant 0 : i32
    %c0_i32_1 = arith.constant 0 : i32
    return %c0_i32, %c0_i32_0 : i32, i32
  }
  func.func @transform_4(%arg0: i32) -> (i32, i32) {
    %c0_i32 = arith.constant 0 : i32
    %c0_i32_0 = arith.constant 0 : i32
    %c0_i32_1 = arith.constant 0 : i32
    return %c0_i32, %c0_i32_0 : i32, i32
  }
  func.func @transform_5(%arg0: i32) -> i32 {
    %c0_i32 = arith.constant 0 : i32
    %c0_i32_0 = arith.constant 0 : i32
    return %c0_i32 : i32
  }
  func.func @transform_6(%arg0: i32) -> i32 {
    %c0_i32 = arith.constant 0 : i32
    %c0_i32_0 = arith.constant 0 : i32
    return %c0_i32 : i32
  }
  func.func @transform_7(%arg0: i32) -> (i32, i32, i32) {
    %c0_i32 = arith.constant 0 : i32
    %c0_i32_0 = arith.constant 0 : i32
    %c0_i32_1 = arith.constant 0 : i32
    %c0_i32_2 = arith.constant 0 : i32
    return %c0_i32, %c0_i32_0, %c0_i32_1 : i32, i32, i32
  }
  func.func @transform_8(%arg0: i32) -> (i32, i32) {
    %c0_i32 = arith.constant 0 : i32
    %c0_i32_0 = arith.constant 0 : i32
    return %arg0, %c0_i32 : i32, i32
  }
}

module attributes {stable_mosaic.version = 11 : i64} {
  func.func @_mixer_kernel(%arg0: i32, %arg1: memref<8x8x16xf32, #tpu.memory_space<vmem>>, %arg2: memref<16x32xf32, #tpu.memory_space<vmem>>, %arg3: memref<1x32xf32, #tpu.memory_space<vmem>>, %arg4: memref<32x32xf32, #tpu.memory_space<vmem>>, %arg5: memref<1x32xf32, #tpu.memory_space<vmem>>, %arg6: memref<128xf32, #tpu.memory_space<smem>>, %arg7: memref<16xf32, #tpu.memory_space<smem>>, %arg8: memref<16x32x128xf32, #tpu.memory_space<vmem>>, %arg9: memref<8x128xf32, #tpu.memory_space<vmem>>, %arg10: memref<8x8x32xf32, #tpu.memory_space<vmem>>) attributes {dimension_semantics = [#tpu.dimension_semantics<parallel>], iteration_bounds = array<i64: 1>, scalar_prefetch = 0 : i64, scratch_operands = 1 : i64, tpu.core_type = #tpu.core_type<tc>, window_params = [{transform_indices = @transform_0, window_bounds = array<i64: 8, 8, 16>}, {pipeline_mode = #tpu.pipeline_mode<synchronous>, transform_indices = @transform_1, window_bounds = array<i64: 16, 32>}, {pipeline_mode = #tpu.pipeline_mode<synchronous>, transform_indices = @transform_2, window_bounds = array<i64: 1, 32>}, {pipeline_mode = #tpu.pipeline_mode<synchronous>, transform_indices = @transform_3, window_bounds = array<i64: 32, 32>}, {pipeline_mode = #tpu.pipeline_mode<synchronous>, transform_indices = @transform_4, window_bounds = array<i64: 1, 32>}, {transform_indices = @transform_5, window_bounds = array<i64: 128>}, {transform_indices = @transform_6, window_bounds = array<i64: 16>}, {pipeline_mode = #tpu.pipeline_mode<synchronous>, transform_indices = @transform_7, window_bounds = array<i64: 16, 32, 128>}, {transform_indices = @transform_8, window_bounds = array<i64: 8, 128>}]} {
    %c0 = arith.constant 0 : index
    %c0_0 = arith.constant 0 : index
    %0 = vector.load %arg2[%c0, %c0_0] : memref<16x32xf32, #tpu.memory_space<vmem>>, vector<16x32xf32>
    %c0_1 = arith.constant 0 : index
    %c0_2 = arith.constant 0 : index
    %1 = vector.load %arg4[%c0_1, %c0_2] : memref<32x32xf32, #tpu.memory_space<vmem>>, vector<32x32xf32>
    %c0_3 = arith.constant 0 : index
    %c0_4 = arith.constant 0 : index
    %2 = vector.load %arg3[%c0_3, %c0_4] : memref<1x32xf32, #tpu.memory_space<vmem>>, vector<1x32xf32>
    %c0_5 = arith.constant 0 : index
    %c0_6 = arith.constant 0 : index
    %3 = vector.load %arg5[%c0_5, %c0_6] : memref<1x32xf32, #tpu.memory_space<vmem>>, vector<1x32xf32>
    %c0_7 = arith.constant 0 : index
    %c0_8 = arith.constant 0 : index
    %c0_9 = arith.constant 0 : index
    %4 = vector.load %arg1[%c0_7, %c0_8, %c0_9] : memref<8x8x16xf32, #tpu.memory_space<vmem>>, vector<1x8x16xf32>
    %5 = vector.shape_cast %4 : vector<1x8x16xf32> to vector<8x16xf32>
    %cst = arith.constant dense<0.000000e+00> : vector<8x32xf32>
    %6 = tpu.matmul %5, %0, %cst {dimension_numbers = #tpu.dot_dimension_numbers<[1], [0], [0], [1], [0, 0, 1, 1], [], []>} : vector<8x16xf32>, vector<16x32xf32>, vector<8x32xf32> -> vector<8x32xf32>
    %7 = vector.broadcast %2 : vector<1x32xf32> to vector<8x32xf32>
    %8 = arith.addf %6, %7 : vector<8x32xf32>
    %cst_10 = arith.constant 0.000000e+00 : f32
    %9 = vector.broadcast %cst_10 : f32 to vector<8x32xf32>
    %10 = arith.maximumf %8, %9 : vector<8x32xf32>
    %cst_11 = arith.constant dense<0.000000e+00> : vector<8x32xf32>
    %11 = tpu.matmul %10, %1, %cst_11 {dimension_numbers = #tpu.dot_dimension_numbers<[1], [0], [0], [1], [0, 0, 1, 1], [], []>} : vector<8x32xf32>, vector<32x32xf32>, vector<8x32xf32> -> vector<8x32xf32>
    %12 = vector.broadcast %3 : vector<1x32xf32> to vector<8x32xf32>
    %13 = arith.addf %11, %12 : vector<8x32xf32>
    %c0_12 = arith.constant 0 : index
    %c0_13 = arith.constant 0 : index
    %c0_14 = arith.constant 0 : index
    %14 = vector.load %arg10[%c0_12, %c0_13, %c0_14] : memref<8x8x32xf32, #tpu.memory_space<vmem>>, vector<1x8x32xf32>
    %15 = vector.shape_cast %14 : vector<1x8x32xf32> to vector<8x32xf32>
    %16 = vector.shape_cast %13 : vector<8x32xf32> to vector<1x8x32xf32>
    tpu.vector_store %arg10[%c0_12, %c0_13, %c0_14], %16 {strides = array<i32>} : memref<8x8x32xf32, #tpu.memory_space<vmem>>, vector<1x8x32xf32>,
    %c1 = arith.constant 1 : index
    %c0_15 = arith.constant 0 : index
    %c0_16 = arith.constant 0 : index
    %17 = vector.load %arg1[%c1, %c0_15, %c0_16] : memref<8x8x16xf32, #tpu.memory_space<vmem>>, vector<1x8x16xf32>
    %18 = vector.shape_cast %17 : vector<1x8x16xf32> to vector<8x16xf32>
    %cst_17 = arith.constant dense<0.000000e+00> : vector<8x32xf32>
    %19 = tpu.matmul %18, %0, %cst_17 {dimension_numbers = #tpu.dot_dimension_numbers<[1], [0], [0], [1], [0, 0, 1, 1], [], []>} : vector<8x16xf32>, vector<16x32xf32>, vector<8x32xf32> -> vector<8x32xf32>
    %20 = vector.broadcast %2 : vector<1x32xf32> to vector<8x32xf32>
    %21 = arith.addf %19, %20 : vector<8x32xf32>
    %cst_18 = arith.constant 0.000000e+00 : f32
    %22 = vector.broadcast %cst_18 : f32 to vector<8x32xf32>
    %23 = arith.maximumf %21, %22 : vector<8x32xf32>
    %cst_19 = arith.constant dense<0.000000e+00> : vector<8x32xf32>
    %24 = tpu.matmul %23, %1, %cst_19 {dimension_numbers = #tpu.dot_dimension_numbers<[1], [0], [0], [1], [0, 0, 1, 1], [], []>} : vector<8x32xf32>, vector<32x32xf32>, vector<8x32xf32> -> vector<8x32xf32>
    %25 = vector.broadcast %3 : vector<1x32xf32> to vector<8x32xf32>
    %26 = arith.addf %24, %25 : vector<8x32xf32>
    %c1_20 = arith.constant 1 : index
    %c0_21 = arith.constant 0 : index
    %c0_22 = arith.constant 0 : index
    %27 = vector.load %arg10[%c1_20, %c0_21, %c0_22] : memref<8x8x32xf32, #tpu.memory_space<vmem>>, vector<1x8x32xf32>
    %28 = vector.shape_cast %27 : vector<1x8x32xf32> to vector<8x32xf32>
    %29 = vector.shape_cast %26 : vector<8x32xf32> to vector<1x8x32xf32>
    tpu.vector_store %arg10[%c1_20, %c0_21, %c0_22], %29 {strides = array<i32>} : memref<8x8x32xf32, #tpu.memory_space<vmem>>, vector<1x8x32xf32>,
    %c2 = arith.constant 2 : index
    %c0_23 = arith.constant 0 : index
    %c0_24 = arith.constant 0 : index
    %30 = vector.load %arg1[%c2, %c0_23, %c0_24] : memref<8x8x16xf32, #tpu.memory_space<vmem>>, vector<1x8x16xf32>
    %31 = vector.shape_cast %30 : vector<1x8x16xf32> to vector<8x16xf32>
    %cst_25 = arith.constant dense<0.000000e+00> : vector<8x32xf32>
    %32 = tpu.matmul %31, %0, %cst_25 {dimension_numbers = #tpu.dot_dimension_numbers<[1], [0], [0], [1], [0, 0, 1, 1], [], []>} : vector<8x16xf32>, vector<16x32xf32>, vector<8x32xf32> -> vector<8x32xf32>
    %33 = vector.broadcast %2 : vector<1x32xf32> to vector<8x32xf32>
    %34 = arith.addf %32, %33 : vector<8x32xf32>
    %cst_26 = arith.constant 0.000000e+00 : f32
    %35 = vector.broadcast %cst_26 : f32 to vector<8x32xf32>
    %36 = arith.maximumf %34, %35 : vector<8x32xf32>
    %cst_27 = arith.constant dense<0.000000e+00> : vector<8x32xf32>
    %37 = tpu.matmul %36, %1, %cst_27 {dimension_numbers = #tpu.dot_dimension_numbers<[1], [0], [0], [1], [0, 0, 1, 1], [], []>} : vector<8x32xf32>, vector<32x32xf32>, vector<8x32xf32> -> vector<8x32xf32>
    %38 = vector.broadcast %3 : vector<1x32xf32> to vector<8x32xf32>
    %39 = arith.addf %37, %38 : vector<8x32xf32>
    %c2_28 = arith.constant 2 : index
    %c0_29 = arith.constant 0 : index
    %c0_30 = arith.constant 0 : index
    %40 = vector.load %arg10[%c2_28, %c0_29, %c0_30] : memref<8x8x32xf32, #tpu.memory_space<vmem>>, vector<1x8x32xf32>
    %41 = vector.shape_cast %40 : vector<1x8x32xf32> to vector<8x32xf32>
    %42 = vector.shape_cast %39 : vector<8x32xf32> to vector<1x8x32xf32>
    tpu.vector_store %arg10[%c2_28, %c0_29, %c0_30], %42 {strides = array<i32>} : memref<8x8x32xf32, #tpu.memory_space<vmem>>, vector<1x8x32xf32>,
    %c3 = arith.constant 3 : index
    %c0_31 = arith.constant 0 : index
    %c0_32 = arith.constant 0 : index
    %43 = vector.load %arg1[%c3, %c0_31, %c0_32] : memref<8x8x16xf32, #tpu.memory_space<vmem>>, vector<1x8x16xf32>
    %44 = vector.shape_cast %43 : vector<1x8x16xf32> to vector<8x16xf32>
    %cst_33 = arith.constant dense<0.000000e+00> : vector<8x32xf32>
    %45 = tpu.matmul %44, %0, %cst_33 {dimension_numbers = #tpu.dot_dimension_numbers<[1], [0], [0], [1], [0, 0, 1, 1], [], []>} : vector<8x16xf32>, vector<16x32xf32>, vector<8x32xf32> -> vector<8x32xf32>
    %46 = vector.broadcast %2 : vector<1x32xf32> to vector<8x32xf32>
    %47 = arith.addf %45, %46 : vector<8x32xf32>
    %cst_34 = arith.constant 0.000000e+00 : f32
    %48 = vector.broadcast %cst_34 : f32 to vector<8x32xf32>
    %49 = arith.maximumf %47, %48 : vector<8x32xf32>
    %cst_35 = arith.constant dense<0.000000e+00> : vector<8x32xf32>
    %50 = tpu.matmul %49, %1, %cst_35 {dimension_numbers = #tpu.dot_dimension_numbers<[1], [0], [0], [1], [0, 0, 1, 1], [], []>} : vector<8x32xf32>, vector<32x32xf32>, vector<8x32xf32> -> vector<8x32xf32>
    %51 = vector.broadcast %3 : vector<1x32xf32> to vector<8x32xf32>
    %52 = arith.addf %50, %51 : vector<8x32xf32>
    %c3_36 = arith.constant 3 : index
    %c0_37 = arith.constant 0 : index
    %c0_38 = arith.constant 0 : index
    %53 = vector.load %arg10[%c3_36, %c0_37, %c0_38] : memref<8x8x32xf32, #tpu.memory_space<vmem>>, vector<1x8x32xf32>
    %54 = vector.shape_cast %53 : vector<1x8x32xf32> to vector<8x32xf32>
    %55 = vector.shape_cast %52 : vector<8x32xf32> to vector<1x8x32xf32>
    tpu.vector_store %arg10[%c3_36, %c0_37, %c0_38], %55 {strides = array<i32>} : memref<8x8x32xf32, #tpu.memory_space<vmem>>, vector<1x8x32xf32>,
    %c4 = arith.constant 4 : index
    %c0_39 = arith.constant 0 : index
    %c0_40 = arith.constant 0 : index
    %56 = vector.load %arg1[%c4, %c0_39, %c0_40] : memref<8x8x16xf32, #tpu.memory_space<vmem>>, vector<1x8x16xf32>
    %57 = vector.shape_cast %56 : vector<1x8x16xf32> to vector<8x16xf32>
    %cst_41 = arith.constant dense<0.000000e+00> : vector<8x32xf32>
    %58 = tpu.matmul %57, %0, %cst_41 {dimension_numbers = #tpu.dot_dimension_numbers<[1], [0], [0], [1], [0, 0, 1, 1], [], []>} : vector<8x16xf32>, vector<16x32xf32>, vector<8x32xf32> -> vector<8x32xf32>
    %59 = vector.broadcast %2 : vector<1x32xf32> to vector<8x32xf32>
    %60 = arith.addf %58, %59 : vector<8x32xf32>
    %cst_42 = arith.constant 0.000000e+00 : f32
    %61 = vector.broadcast %cst_42 : f32 to vector<8x32xf32>
    %62 = arith.maximumf %60, %61 : vector<8x32xf32>
    %cst_43 = arith.constant dense<0.000000e+00> : vector<8x32xf32>
    %63 = tpu.matmul %62, %1, %cst_43 {dimension_numbers = #tpu.dot_dimension_numbers<[1], [0], [0], [1], [0, 0, 1, 1], [], []>} : vector<8x32xf32>, vector<32x32xf32>, vector<8x32xf32> -> vector<8x32xf32>
    %64 = vector.broadcast %3 : vector<1x32xf32> to vector<8x32xf32>
    %65 = arith.addf %63, %64 : vector<8x32xf32>
    %c4_44 = arith.constant 4 : index
    %c0_45 = arith.constant 0 : index
    %c0_46 = arith.constant 0 : index
    %66 = vector.load %arg10[%c4_44, %c0_45, %c0_46] : memref<8x8x32xf32, #tpu.memory_space<vmem>>, vector<1x8x32xf32>
    %67 = vector.shape_cast %66 : vector<1x8x32xf32> to vector<8x32xf32>
    %68 = vector.shape_cast %65 : vector<8x32xf32> to vector<1x8x32xf32>
    tpu.vector_store %arg10[%c4_44, %c0_45, %c0_46], %68 {strides = array<i32>} : memref<8x8x32xf32, #tpu.memory_space<vmem>>, vector<1x8x32xf32>,
    %c5 = arith.constant 5 : index
    %c0_47 = arith.constant 0 : index
    %c0_48 = arith.constant 0 : index
    %69 = vector.load %arg1[%c5, %c0_47, %c0_48] : memref<8x8x16xf32, #tpu.memory_space<vmem>>, vector<1x8x16xf32>
    %70 = vector.shape_cast %69 : vector<1x8x16xf32> to vector<8x16xf32>
    %cst_49 = arith.constant dense<0.000000e+00> : vector<8x32xf32>
    %71 = tpu.matmul %70, %0, %cst_49 {dimension_numbers = #tpu.dot_dimension_numbers<[1], [0], [0], [1], [0, 0, 1, 1], [], []>} : vector<8x16xf32>, vector<16x32xf32>, vector<8x32xf32> -> vector<8x32xf32>
    %72 = vector.broadcast %2 : vector<1x32xf32> to vector<8x32xf32>
    %73 = arith.addf %71, %72 : vector<8x32xf32>
    %cst_50 = arith.constant 0.000000e+00 : f32
    %74 = vector.broadcast %cst_50 : f32 to vector<8x32xf32>
    %75 = arith.maximumf %73, %74 : vector<8x32xf32>
    %cst_51 = arith.constant dense<0.000000e+00> : vector<8x32xf32>
    %76 = tpu.matmul %75, %1, %cst_51 {dimension_numbers = #tpu.dot_dimension_numbers<[1], [0], [0], [1], [0, 0, 1, 1], [], []>} : vector<8x32xf32>, vector<32x32xf32>, vector<8x32xf32> -> vector<8x32xf32>
    %77 = vector.broadcast %3 : vector<1x32xf32> to vector<8x32xf32>
    %78 = arith.addf %76, %77 : vector<8x32xf32>
    %c5_52 = arith.constant 5 : index
    %c0_53 = arith.constant 0 : index
    %c0_54 = arith.constant 0 : index
    %79 = vector.load %arg10[%c5_52, %c0_53, %c0_54] : memref<8x8x32xf32, #tpu.memory_space<vmem>>, vector<1x8x32xf32>
    %80 = vector.shape_cast %79 : vector<1x8x32xf32> to vector<8x32xf32>
    %81 = vector.shape_cast %78 : vector<8x32xf32> to vector<1x8x32xf32>
    tpu.vector_store %arg10[%c5_52, %c0_53, %c0_54], %81 {strides = array<i32>} : memref<8x8x32xf32, #tpu.memory_space<vmem>>, vector<1x8x32xf32>,
    %c6 = arith.constant 6 : index
    %c0_55 = arith.constant 0 : index
    %c0_56 = arith.constant 0 : index
    %82 = vector.load %arg1[%c6, %c0_55, %c0_56] : memref<8x8x16xf32, #tpu.memory_space<vmem>>, vector<1x8x16xf32>
    %83 = vector.shape_cast %82 : vector<1x8x16xf32> to vector<8x16xf32>
    %cst_57 = arith.constant dense<0.000000e+00> : vector<8x32xf32>
    %84 = tpu.matmul %83, %0, %cst_57 {dimension_numbers = #tpu.dot_dimension_numbers<[1], [0], [0], [1], [0, 0, 1, 1], [], []>} : vector<8x16xf32>, vector<16x32xf32>, vector<8x32xf32> -> vector<8x32xf32>
    %85 = vector.broadcast %2 : vector<1x32xf32> to vector<8x32xf32>
    %86 = arith.addf %84, %85 : vector<8x32xf32>
    %cst_58 = arith.constant 0.000000e+00 : f32
    %87 = vector.broadcast %cst_58 : f32 to vector<8x32xf32>
    %88 = arith.maximumf %86, %87 : vector<8x32xf32>
    %cst_59 = arith.constant dense<0.000000e+00> : vector<8x32xf32>
    %89 = tpu.matmul %88, %1, %cst_59 {dimension_numbers = #tpu.dot_dimension_numbers<[1], [0], [0], [1], [0, 0, 1, 1], [], []>} : vector<8x32xf32>, vector<32x32xf32>, vector<8x32xf32> -> vector<8x32xf32>
    %90 = vector.broadcast %3 : vector<1x32xf32> to vector<8x32xf32>
    %91 = arith.addf %89, %90 : vector<8x32xf32>
    %c6_60 = arith.constant 6 : index
    %c0_61 = arith.constant 0 : index
    %c0_62 = arith.constant 0 : index
    %92 = vector.load %arg10[%c6_60, %c0_61, %c0_62] : memref<8x8x32xf32, #tpu.memory_space<vmem>>, vector<1x8x32xf32>
    %93 = vector.shape_cast %92 : vector<1x8x32xf32> to vector<8x32xf32>
    %94 = vector.shape_cast %91 : vector<8x32xf32> to vector<1x8x32xf32>
    tpu.vector_store %arg10[%c6_60, %c0_61, %c0_62], %94 {strides = array<i32>} : memref<8x8x32xf32, #tpu.memory_space<vmem>>, vector<1x8x32xf32>,
    %c7 = arith.constant 7 : index
    %c0_63 = arith.constant 0 : index
    %c0_64 = arith.constant 0 : index
    %95 = vector.load %arg1[%c7, %c0_63, %c0_64] : memref<8x8x16xf32, #tpu.memory_space<vmem>>, vector<1x8x16xf32>
    %96 = vector.shape_cast %95 : vector<1x8x16xf32> to vector<8x16xf32>
    %cst_65 = arith.constant dense<0.000000e+00> : vector<8x32xf32>
    %97 = tpu.matmul %96, %0, %cst_65 {dimension_numbers = #tpu.dot_dimension_numbers<[1], [0], [0], [1], [0, 0, 1, 1], [], []>} : vector<8x16xf32>, vector<16x32xf32>, vector<8x32xf32> -> vector<8x32xf32>
    %98 = vector.broadcast %2 : vector<1x32xf32> to vector<8x32xf32>
    %99 = arith.addf %97, %98 : vector<8x32xf32>
    %cst_66 = arith.constant 0.000000e+00 : f32
    %100 = vector.broadcast %cst_66 : f32 to vector<8x32xf32>
    %101 = arith.maximumf %99, %100 : vector<8x32xf32>
    %cst_67 = arith.constant dense<0.000000e+00> : vector<8x32xf32>
    %102 = tpu.matmul %101, %1, %cst_67 {dimension_numbers = #tpu.dot_dimension_numbers<[1], [0], [0], [1], [0, 0, 1, 1], [], []>} : vector<8x32xf32>, vector<32x32xf32>, vector<8x32xf32> -> vector<8x32xf32>
    %103 = vector.broadcast %3 : vector<1x32xf32> to vector<8x32xf32>
    %104 = arith.addf %102, %103 : vector<8x32xf32>
    %c7_68 = arith.constant 7 : index
    %c0_69 = arith.constant 0 : index
    %c0_70 = arith.constant 0 : index
    %105 = vector.load %arg10[%c7_68, %c0_69, %c0_70] : memref<8x8x32xf32, #tpu.memory_space<vmem>>, vector<1x8x32xf32>
    %106 = vector.shape_cast %105 : vector<1x8x32xf32> to vector<8x32xf32>
    %107 = vector.shape_cast %104 : vector<8x32xf32> to vector<1x8x32xf32>
    tpu.vector_store %arg10[%c7_68, %c0_69, %c0_70], %107 {strides = array<i32>} : memref<8x8x32xf32, #tpu.memory_space<vmem>>, vector<1x8x32xf32>,
    %cst_71 = arith.constant 0.000000e+00 : f32
    %108 = vector.broadcast %cst_71 : f32 to vector<8x128xf32>
    %c0_72 = arith.constant 0 : index
    %109 = memref.load %arg6[%c0_72] : memref<128xf32, #tpu.memory_space<smem>>
    %c0_73 = arith.constant 0 : index
    %c0_74 = arith.constant 0 : index
    %c0_75 = arith.constant 0 : index
    %110 = vector.load %arg10[%c0_73, %c0_74, %c0_75] : memref<8x8x32xf32, #tpu.memory_space<vmem>>, vector<1x8x32xf32>
    %111 = vector.shape_cast %110 : vector<1x8x32xf32> to vector<8x32xf32>
    %112 = vector.broadcast %109 : f32 to vector<8x32xf32>
    %113 = arith.mulf %112, %111 : vector<8x32xf32>
    %c0_76 = arith.constant 0 : index
    %114 = memref.load %arg7[%c0_76] : memref<16xf32, #tpu.memory_space<smem>>
    %115 = vector.broadcast %114 : f32 to vector<8x32xf32>
    %116 = arith.addf %113, %115 : vector<8x32xf32>
    %c1_77 = arith.constant 1 : index
    %117 = memref.load %arg6[%c1_77] : memref<128xf32, #tpu.memory_space<smem>>
    %c1_78 = arith.constant 1 : index
    %c0_79 = arith.constant 0 : index
    %c0_80 = arith.constant 0 : index
    %118 = vector.load %arg10[%c1_78, %c0_79, %c0_80] : memref<8x8x32xf32, #tpu.memory_space<vmem>>, vector<1x8x32xf32>
    %119 = vector.shape_cast %118 : vector<1x8x32xf32> to vector<8x32xf32>
    %120 = vector.broadcast %117 : f32 to vector<8x32xf32>
    %121 = arith.mulf %120, %119 : vector<8x32xf32>
    %122 = arith.addf %116, %121 : vector<8x32xf32>
    %c2_81 = arith.constant 2 : index
    %123 = memref.load %arg6[%c2_81] : memref<128xf32, #tpu.memory_space<smem>>
    %c2_82 = arith.constant 2 : index
    %c0_83 = arith.constant 0 : index
    %c0_84 = arith.constant 0 : index
    %124 = vector.load %arg10[%c2_82, %c0_83, %c0_84] : memref<8x8x32xf32, #tpu.memory_space<vmem>>, vector<1x8x32xf32>
    %125 = vector.shape_cast %124 : vector<1x8x32xf32> to vector<8x32xf32>
    %126 = vector.broadcast %123 : f32 to vector<8x32xf32>
    %127 = arith.mulf %126, %125 : vector<8x32xf32>
    %128 = arith.addf %122, %127 : vector<8x32xf32>
    %c3_85 = arith.constant 3 : index
    %129 = memref.load %arg6[%c3_85] : memref<128xf32, #tpu.memory_space<smem>>
    %c3_86 = arith.constant 3 : index
    %c0_87 = arith.constant 0 : index
    %c0_88 = arith.constant 0 : index
    %130 = vector.load %arg10[%c3_86, %c0_87, %c0_88] : memref<8x8x32xf32, #tpu.memory_space<vmem>>, vector<1x8x32xf32>
    %131 = vector.shape_cast %130 : vector<1x8x32xf32> to vector<8x32xf32>
    %132 = vector.broadcast %129 : f32 to vector<8x32xf32>
    %133 = arith.mulf %132, %131 : vector<8x32xf32>
    %134 = arith.addf %128, %133 : vector<8x32xf32>
    %c4_89 = arith.constant 4 : index
    %135 = memref.load %arg6[%c4_89] : memref<128xf32, #tpu.memory_space<smem>>
    %c4_90 = arith.constant 4 : index
    %c0_91 = arith.constant 0 : index
    %c0_92 = arith.constant 0 : index
    %136 = vector.load %arg10[%c4_90, %c0_91, %c0_92] : memref<8x8x32xf32, #tpu.memory_space<vmem>>, vector<1x8x32xf32>
    %137 = vector.shape_cast %136 : vector<1x8x32xf32> to vector<8x32xf32>
    %138 = vector.broadcast %135 : f32 to vector<8x32xf32>
    %139 = arith.mulf %138, %137 : vector<8x32xf32>
    %140 = arith.addf %134, %139 : vector<8x32xf32>
    %c5_93 = arith.constant 5 : index
    %141 = memref.load %arg6[%c5_93] : memref<128xf32, #tpu.memory_space<smem>>
    %c5_94 = arith.constant 5 : index
    %c0_95 = arith.constant 0 : index
    %c0_96 = arith.constant 0 : index
    %142 = vector.load %arg10[%c5_94, %c0_95, %c0_96] : memref<8x8x32xf32, #tpu.memory_space<vmem>>, vector<1x8x32xf32>
    %143 = vector.shape_cast %142 : vector<1x8x32xf32> to vector<8x32xf32>
    %144 = vector.broadcast %141 : f32 to vector<8x32xf32>
    %145 = arith.mulf %144, %143 : vector<8x32xf32>
    %146 = arith.addf %140, %145 : vector<8x32xf32>
    %c6_97 = arith.constant 6 : index
    %147 = memref.load %arg6[%c6_97] : memref<128xf32, #tpu.memory_space<smem>>
    %c6_98 = arith.constant 6 : index
    %c0_99 = arith.constant 0 : index
    %c0_100 = arith.constant 0 : index
    %148 = vector.load %arg10[%c6_98, %c0_99, %c0_100] : memref<8x8x32xf32, #tpu.memory_space<vmem>>, vector<1x8x32xf32>
    %149 = vector.shape_cast %148 : vector<1x8x32xf32> to vector<8x32xf32>
    %150 = vector.broadcast %147 : f32 to vector<8x32xf32>
    %151 = arith.mulf %150, %149 : vector<8x32xf32>
    %152 = arith.addf %146, %151 : vector<8x32xf32>
    %c7_101 = arith.constant 7 : index
    %153 = memref.load %arg6[%c7_101] : memref<128xf32, #tpu.memory_space<smem>>
    %c7_102 = arith.constant 7 : index
    %c0_103 = arith.constant 0 : index
    %c0_104 = arith.constant 0 : index
    %154 = vector.load %arg10[%c7_102, %c0_103, %c0_104] : memref<8x8x32xf32, #tpu.memory_space<vmem>>, vector<1x8x32xf32>
    %155 = vector.shape_cast %154 : vector<1x8x32xf32> to vector<8x32xf32>
    %156 = vector.broadcast %153 : f32 to vector<8x32xf32>
    %157 = arith.mulf %156, %155 : vector<8x32xf32>
    %158 = arith.addf %152, %157 : vector<8x32xf32>
    %cst_105 = arith.constant 0.000000e+00 : f32
    %159 = vector.broadcast %cst_105 : f32 to vector<8x32xf32>
    %160 = arith.maximumf %158, %159 : vector<8x32xf32>
    %c0_106 = arith.constant 0 : index
    %c0_107 = arith.constant 0 : index
    %c0_108 = arith.constant 0 : index
    %161 = vector.load %arg8[%c0_106, %c0_107, %c0_108] : memref<16x32x128xf32, #tpu.memory_space<vmem>>, vector<1x32x128xf32>
    %162 = vector.shape_cast %161 : vector<1x32x128xf32> to vector<32x128xf32>
    %cst_109 = arith.constant dense<0.000000e+00> : vector<8x128xf32>
    %163 = tpu.matmul %160, %162, %cst_109 {dimension_numbers = #tpu.dot_dimension_numbers<[1], [0], [0], [1], [0, 0, 1, 1], [], []>} : vector<8x32xf32>, vector<32x128xf32>, vector<8x128xf32> -> vector<8x128xf32>
    %164 = arith.addf %108, %163 : vector<8x128xf32>
    %c8 = arith.constant 8 : index
    %165 = memref.load %arg6[%c8] : memref<128xf32, #tpu.memory_space<smem>>
    %c0_110 = arith.constant 0 : index
    %c0_111 = arith.constant 0 : index
    %c0_112 = arith.constant 0 : index
    %166 = vector.load %arg10[%c0_110, %c0_111, %c0_112] : memref<8x8x32xf32, #tpu.memory_space<vmem>>, vector<1x8x32xf32>
    %167 = vector.shape_cast %166 : vector<1x8x32xf32> to vector<8x32xf32>
    %168 = vector.broadcast %165 : f32 to vector<8x32xf32>
    %169 = arith.mulf %168, %167 : vector<8x32xf32>
    %c1_113 = arith.constant 1 : index
    %170 = memref.load %arg7[%c1_113] : memref<16xf32, #tpu.memory_space<smem>>
    %171 = vector.broadcast %170 : f32 to vector<8x32xf32>
    %172 = arith.addf %169, %171 : vector<8x32xf32>
    %c9 = arith.constant 9 : index
    %173 = memref.load %arg6[%c9] : memref<128xf32, #tpu.memory_space<smem>>
    %c1_114 = arith.constant 1 : index
    %c0_115 = arith.constant 0 : index
    %c0_116 = arith.constant 0 : index
    %174 = vector.load %arg10[%c1_114, %c0_115, %c0_116] : memref<8x8x32xf32, #tpu.memory_space<vmem>>, vector<1x8x32xf32>
    %175 = vector.shape_cast %174 : vector<1x8x32xf32> to vector<8x32xf32>
    %176 = vector.broadcast %173 : f32 to vector<8x32xf32>
    %177 = arith.mulf %176, %175 : vector<8x32xf32>
    %178 = arith.addf %172, %177 : vector<8x32xf32>
    %c10 = arith.constant 10 : index
    %179 = memref.load %arg6[%c10] : memref<128xf32, #tpu.memory_space<smem>>
    %c2_117 = arith.constant 2 : index
    %c0_118 = arith.constant 0 : index
    %c0_119 = arith.constant 0 : index
    %180 = vector.load %arg10[%c2_117, %c0_118, %c0_119] : memref<8x8x32xf32, #tpu.memory_space<vmem>>, vector<1x8x32xf32>
    %181 = vector.shape_cast %180 : vector<1x8x32xf32> to vector<8x32xf32>
    %182 = vector.broadcast %179 : f32 to vector<8x32xf32>
    %183 = arith.mulf %182, %181 : vector<8x32xf32>
    %184 = arith.addf %178, %183 : vector<8x32xf32>
    %c11 = arith.constant 11 : index
    %185 = memref.load %arg6[%c11] : memref<128xf32, #tpu.memory_space<smem>>
    %c3_120 = arith.constant 3 : index
    %c0_121 = arith.constant 0 : index
    %c0_122 = arith.constant 0 : index
    %186 = vector.load %arg10[%c3_120, %c0_121, %c0_122] : memref<8x8x32xf32, #tpu.memory_space<vmem>>, vector<1x8x32xf32>
    %187 = vector.shape_cast %186 : vector<1x8x32xf32> to vector<8x32xf32>
    %188 = vector.broadcast %185 : f32 to vector<8x32xf32>
    %189 = arith.mulf %188, %187 : vector<8x32xf32>
    %190 = arith.addf %184, %189 : vector<8x32xf32>
    %c12 = arith.constant 12 : index
    %191 = memref.load %arg6[%c12] : memref<128xf32, #tpu.memory_space<smem>>
    %c4_123 = arith.constant 4 : index
    %c0_124 = arith.constant 0 : index
    %c0_125 = arith.constant 0 : index
    %192 = vector.load %arg10[%c4_123, %c0_124, %c0_125] : memref<8x8x32xf32, #tpu.memory_space<vmem>>, vector<1x8x32xf32>
    %193 = vector.shape_cast %192 : vector<1x8x32xf32> to vector<8x32xf32>
    %194 = vector.broadcast %191 : f32 to vector<8x32xf32>
    %195 = arith.mulf %194, %193 : vector<8x32xf32>
    %196 = arith.addf %190, %195 : vector<8x32xf32>
    %c13 = arith.constant 13 : index
    %197 = memref.load %arg6[%c13] : memref<128xf32, #tpu.memory_space<smem>>
    %c5_126 = arith.constant 5 : index
    %c0_127 = arith.constant 0 : index
    %c0_128 = arith.constant 0 : index
    %198 = vector.load %arg10[%c5_126, %c0_127, %c0_128] : memref<8x8x32xf32, #tpu.memory_space<vmem>>, vector<1x8x32xf32>
    %199 = vector.shape_cast %198 : vector<1x8x32xf32> to vector<8x32xf32>
    %200 = vector.broadcast %197 : f32 to vector<8x32xf32>
    %201 = arith.mulf %200, %199 : vector<8x32xf32>
    %202 = arith.addf %196, %201 : vector<8x32xf32>
    %c14 = arith.constant 14 : index
    %203 = memref.load %arg6[%c14] : memref<128xf32, #tpu.memory_space<smem>>
    %c6_129 = arith.constant 6 : index
    %c0_130 = arith.constant 0 : index
    %c0_131 = arith.constant 0 : index
    %204 = vector.load %arg10[%c6_129, %c0_130, %c0_131] : memref<8x8x32xf32, #tpu.memory_space<vmem>>, vector<1x8x32xf32>
    %205 = vector.shape_cast %204 : vector<1x8x32xf32> to vector<8x32xf32>
    %206 = vector.broadcast %203 : f32 to vector<8x32xf32>
    %207 = arith.mulf %206, %205 : vector<8x32xf32>
    %208 = arith.addf %202, %207 : vector<8x32xf32>
    %c15 = arith.constant 15 : index
    %209 = memref.load %arg6[%c15] : memref<128xf32, #tpu.memory_space<smem>>
    %c7_132 = arith.constant 7 : index
    %c0_133 = arith.constant 0 : index
    %c0_134 = arith.constant 0 : index
    %210 = vector.load %arg10[%c7_132, %c0_133, %c0_134] : memref<8x8x32xf32, #tpu.memory_space<vmem>>, vector<1x8x32xf32>
    %211 = vector.shape_cast %210 : vector<1x8x32xf32> to vector<8x32xf32>
    %212 = vector.broadcast %209 : f32 to vector<8x32xf32>
    %213 = arith.mulf %212, %211 : vector<8x32xf32>
    %214 = arith.addf %208, %213 : vector<8x32xf32>
    %cst_135 = arith.constant 0.000000e+00 : f32
    %215 = vector.broadcast %cst_135 : f32 to vector<8x32xf32>
    %216 = arith.maximumf %214, %215 : vector<8x32xf32>
    %c1_136 = arith.constant 1 : index
    %c0_137 = arith.constant 0 : index
    %c0_138 = arith.constant 0 : index
    %217 = vector.load %arg8[%c1_136, %c0_137, %c0_138] : memref<16x32x128xf32, #tpu.memory_space<vmem>>, vector<1x32x128xf32>
    %218 = vector.shape_cast %217 : vector<1x32x128xf32> to vector<32x128xf32>
    %cst_139 = arith.constant dense<0.000000e+00> : vector<8x128xf32>
    %219 = tpu.matmul %216, %218, %cst_139 {dimension_numbers = #tpu.dot_dimension_numbers<[1], [0], [0], [1], [0, 0, 1, 1], [], []>} : vector<8x32xf32>, vector<32x128xf32>, vector<8x128xf32> -> vector<8x128xf32>
    %220 = arith.addf %164, %219 : vector<8x128xf32>
    %c16 = arith.constant 16 : index
    %221 = memref.load %arg6[%c16] : memref<128xf32, #tpu.memory_space<smem>>
    %c0_140 = arith.constant 0 : index
    %c0_141 = arith.constant 0 : index
    %c0_142 = arith.constant 0 : index
    %222 = vector.load %arg10[%c0_140, %c0_141, %c0_142] : memref<8x8x32xf32, #tpu.memory_space<vmem>>, vector<1x8x32xf32>
    %223 = vector.shape_cast %222 : vector<1x8x32xf32> to vector<8x32xf32>
    %224 = vector.broadcast %221 : f32 to vector<8x32xf32>
    %225 = arith.mulf %224, %223 : vector<8x32xf32>
    %c2_143 = arith.constant 2 : index
    %226 = memref.load %arg7[%c2_143] : memref<16xf32, #tpu.memory_space<smem>>
    %227 = vector.broadcast %226 : f32 to vector<8x32xf32>
    %228 = arith.addf %225, %227 : vector<8x32xf32>
    %c17 = arith.constant 17 : index
    %229 = memref.load %arg6[%c17] : memref<128xf32, #tpu.memory_space<smem>>
    %c1_144 = arith.constant 1 : index
    %c0_145 = arith.constant 0 : index
    %c0_146 = arith.constant 0 : index
    %230 = vector.load %arg10[%c1_144, %c0_145, %c0_146] : memref<8x8x32xf32, #tpu.memory_space<vmem>>, vector<1x8x32xf32>
    %231 = vector.shape_cast %230 : vector<1x8x32xf32> to vector<8x32xf32>
    %232 = vector.broadcast %229 : f32 to vector<8x32xf32>
    %233 = arith.mulf %232, %231 : vector<8x32xf32>
    %234 = arith.addf %228, %233 : vector<8x32xf32>
    %c18 = arith.constant 18 : index
    %235 = memref.load %arg6[%c18] : memref<128xf32, #tpu.memory_space<smem>>
    %c2_147 = arith.constant 2 : index
    %c0_148 = arith.constant 0 : index
    %c0_149 = arith.constant 0 : index
    %236 = vector.load %arg10[%c2_147, %c0_148, %c0_149] : memref<8x8x32xf32, #tpu.memory_space<vmem>>, vector<1x8x32xf32>
    %237 = vector.shape_cast %236 : vector<1x8x32xf32> to vector<8x32xf32>
    %238 = vector.broadcast %235 : f32 to vector<8x32xf32>
    %239 = arith.mulf %238, %237 : vector<8x32xf32>
    %240 = arith.addf %234, %239 : vector<8x32xf32>
    %c19 = arith.constant 19 : index
    %241 = memref.load %arg6[%c19] : memref<128xf32, #tpu.memory_space<smem>>
    %c3_150 = arith.constant 3 : index
    %c0_151 = arith.constant 0 : index
    %c0_152 = arith.constant 0 : index
    %242 = vector.load %arg10[%c3_150, %c0_151, %c0_152] : memref<8x8x32xf32, #tpu.memory_space<vmem>>, vector<1x8x32xf32>
    %243 = vector.shape_cast %242 : vector<1x8x32xf32> to vector<8x32xf32>
    %244 = vector.broadcast %241 : f32 to vector<8x32xf32>
    %245 = arith.mulf %244, %243 : vector<8x32xf32>
    %246 = arith.addf %240, %245 : vector<8x32xf32>
    %c20 = arith.constant 20 : index
    %247 = memref.load %arg6[%c20] : memref<128xf32, #tpu.memory_space<smem>>
    %c4_153 = arith.constant 4 : index
    %c0_154 = arith.constant 0 : index
    %c0_155 = arith.constant 0 : index
    %248 = vector.load %arg10[%c4_153, %c0_154, %c0_155] : memref<8x8x32xf32, #tpu.memory_space<vmem>>, vector<1x8x32xf32>
    %249 = vector.shape_cast %248 : vector<1x8x32xf32> to vector<8x32xf32>
    %250 = vector.broadcast %247 : f32 to vector<8x32xf32>
    %251 = arith.mulf %250, %249 : vector<8x32xf32>
    %252 = arith.addf %246, %251 : vector<8x32xf32>
    %c21 = arith.constant 21 : index
    %253 = memref.load %arg6[%c21] : memref<128xf32, #tpu.memory_space<smem>>
    %c5_156 = arith.constant 5 : index
    %c0_157 = arith.constant 0 : index
    %c0_158 = arith.constant 0 : index
    %254 = vector.load %arg10[%c5_156, %c0_157, %c0_158] : memref<8x8x32xf32, #tpu.memory_space<vmem>>, vector<1x8x32xf32>
    %255 = vector.shape_cast %254 : vector<1x8x32xf32> to vector<8x32xf32>
    %256 = vector.broadcast %253 : f32 to vector<8x32xf32>
    %257 = arith.mulf %256, %255 : vector<8x32xf32>
    %258 = arith.addf %252, %257 : vector<8x32xf32>
    %c22 = arith.constant 22 : index
    %259 = memref.load %arg6[%c22] : memref<128xf32, #tpu.memory_space<smem>>
    %c6_159 = arith.constant 6 : index
    %c0_160 = arith.constant 0 : index
    %c0_161 = arith.constant 0 : index
    %260 = vector.load %arg10[%c6_159, %c0_160, %c0_161] : memref<8x8x32xf32, #tpu.memory_space<vmem>>, vector<1x8x32xf32>
    %261 = vector.shape_cast %260 : vector<1x8x32xf32> to vector<8x32xf32>
    %262 = vector.broadcast %259 : f32 to vector<8x32xf32>
    %263 = arith.mulf %262, %261 : vector<8x32xf32>
    %264 = arith.addf %258, %263 : vector<8x32xf32>
    %c23 = arith.constant 23 : index
    %265 = memref.load %arg6[%c23] : memref<128xf32, #tpu.memory_space<smem>>
    %c7_162 = arith.constant 7 : index
    %c0_163 = arith.constant 0 : index
    %c0_164 = arith.constant 0 : index
    %266 = vector.load %arg10[%c7_162, %c0_163, %c0_164] : memref<8x8x32xf32, #tpu.memory_space<vmem>>, vector<1x8x32xf32>
    %267 = vector.shape_cast %266 : vector<1x8x32xf32> to vector<8x32xf32>
    %268 = vector.broadcast %265 : f32 to vector<8x32xf32>
    %269 = arith.mulf %268, %267 : vector<8x32xf32>
    %270 = arith.addf %264, %269 : vector<8x32xf32>
    %cst_165 = arith.constant 0.000000e+00 : f32
    %271 = vector.broadcast %cst_165 : f32 to vector<8x32xf32>
    %272 = arith.maximumf %270, %271 : vector<8x32xf32>
    %c2_166 = arith.constant 2 : index
    %c0_167 = arith.constant 0 : index
    %c0_168 = arith.constant 0 : index
    %273 = vector.load %arg8[%c2_166, %c0_167, %c0_168] : memref<16x32x128xf32, #tpu.memory_space<vmem>>, vector<1x32x128xf32>
    %274 = vector.shape_cast %273 : vector<1x32x128xf32> to vector<32x128xf32>
    %cst_169 = arith.constant dense<0.000000e+00> : vector<8x128xf32>
    %275 = tpu.matmul %272, %274, %cst_169 {dimension_numbers = #tpu.dot_dimension_numbers<[1], [0], [0], [1], [0, 0, 1, 1], [], []>} : vector<8x32xf32>, vector<32x128xf32>, vector<8x128xf32> -> vector<8x128xf32>
    %276 = arith.addf %220, %275 : vector<8x128xf32>
    %c24 = arith.constant 24 : index
    %277 = memref.load %arg6[%c24] : memref<128xf32, #tpu.memory_space<smem>>
    %c0_170 = arith.constant 0 : index
    %c0_171 = arith.constant 0 : index
    %c0_172 = arith.constant 0 : index
    %278 = vector.load %arg10[%c0_170, %c0_171, %c0_172] : memref<8x8x32xf32, #tpu.memory_space<vmem>>, vector<1x8x32xf32>
    %279 = vector.shape_cast %278 : vector<1x8x32xf32> to vector<8x32xf32>
    %280 = vector.broadcast %277 : f32 to vector<8x32xf32>
    %281 = arith.mulf %280, %279 : vector<8x32xf32>
    %c3_173 = arith.constant 3 : index
    %282 = memref.load %arg7[%c3_173] : memref<16xf32, #tpu.memory_space<smem>>
    %283 = vector.broadcast %282 : f32 to vector<8x32xf32>
    %284 = arith.addf %281, %283 : vector<8x32xf32>
    %c25 = arith.constant 25 : index
    %285 = memref.load %arg6[%c25] : memref<128xf32, #tpu.memory_space<smem>>
    %c1_174 = arith.constant 1 : index
    %c0_175 = arith.constant 0 : index
    %c0_176 = arith.constant 0 : index
    %286 = vector.load %arg10[%c1_174, %c0_175, %c0_176] : memref<8x8x32xf32, #tpu.memory_space<vmem>>, vector<1x8x32xf32>
    %287 = vector.shape_cast %286 : vector<1x8x32xf32> to vector<8x32xf32>
    %288 = vector.broadcast %285 : f32 to vector<8x32xf32>
    %289 = arith.mulf %288, %287 : vector<8x32xf32>
    %290 = arith.addf %284, %289 : vector<8x32xf32>
    %c26 = arith.constant 26 : index
    %291 = memref.load %arg6[%c26] : memref<128xf32, #tpu.memory_space<smem>>
    %c2_177 = arith.constant 2 : index
    %c0_178 = arith.constant 0 : index
    %c0_179 = arith.constant 0 : index
    %292 = vector.load %arg10[%c2_177, %c0_178, %c0_179] : memref<8x8x32xf32, #tpu.memory_space<vmem>>, vector<1x8x32xf32>
    %293 = vector.shape_cast %292 : vector<1x8x32xf32> to vector<8x32xf32>
    %294 = vector.broadcast %291 : f32 to vector<8x32xf32>
    %295 = arith.mulf %294, %293 : vector<8x32xf32>
    %296 = arith.addf %290, %295 : vector<8x32xf32>
    %c27 = arith.constant 27 : index
    %297 = memref.load %arg6[%c27] : memref<128xf32, #tpu.memory_space<smem>>
    %c3_180 = arith.constant 3 : index
    %c0_181 = arith.constant 0 : index
    %c0_182 = arith.constant 0 : index
    %298 = vector.load %arg10[%c3_180, %c0_181, %c0_182] : memref<8x8x32xf32, #tpu.memory_space<vmem>>, vector<1x8x32xf32>
    %299 = vector.shape_cast %298 : vector<1x8x32xf32> to vector<8x32xf32>
    %300 = vector.broadcast %297 : f32 to vector<8x32xf32>
    %301 = arith.mulf %300, %299 : vector<8x32xf32>
    %302 = arith.addf %296, %301 : vector<8x32xf32>
    %c28 = arith.constant 28 : index
    %303 = memref.load %arg6[%c28] : memref<128xf32, #tpu.memory_space<smem>>
    %c4_183 = arith.constant 4 : index
    %c0_184 = arith.constant 0 : index
    %c0_185 = arith.constant 0 : index
    %304 = vector.load %arg10[%c4_183, %c0_184, %c0_185] : memref<8x8x32xf32, #tpu.memory_space<vmem>>, vector<1x8x32xf32>
    %305 = vector.shape_cast %304 : vector<1x8x32xf32> to vector<8x32xf32>
    %306 = vector.broadcast %303 : f32 to vector<8x32xf32>
    %307 = arith.mulf %306, %305 : vector<8x32xf32>
    %308 = arith.addf %302, %307 : vector<8x32xf32>
    %c29 = arith.constant 29 : index
    %309 = memref.load %arg6[%c29] : memref<128xf32, #tpu.memory_space<smem>>
    %c5_186 = arith.constant 5 : index
    %c0_187 = arith.constant 0 : index
    %c0_188 = arith.constant 0 : index
    %310 = vector.load %arg10[%c5_186, %c0_187, %c0_188] : memref<8x8x32xf32, #tpu.memory_space<vmem>>, vector<1x8x32xf32>
    %311 = vector.shape_cast %310 : vector<1x8x32xf32> to vector<8x32xf32>
    %312 = vector.broadcast %309 : f32 to vector<8x32xf32>
    %313 = arith.mulf %312, %311 : vector<8x32xf32>
    %314 = arith.addf %308, %313 : vector<8x32xf32>
    %c30 = arith.constant 30 : index
    %315 = memref.load %arg6[%c30] : memref<128xf32, #tpu.memory_space<smem>>
    %c6_189 = arith.constant 6 : index
    %c0_190 = arith.constant 0 : index
    %c0_191 = arith.constant 0 : index
    %316 = vector.load %arg10[%c6_189, %c0_190, %c0_191] : memref<8x8x32xf32, #tpu.memory_space<vmem>>, vector<1x8x32xf32>
    %317 = vector.shape_cast %316 : vector<1x8x32xf32> to vector<8x32xf32>
    %318 = vector.broadcast %315 : f32 to vector<8x32xf32>
    %319 = arith.mulf %318, %317 : vector<8x32xf32>
    %320 = arith.addf %314, %319 : vector<8x32xf32>
    %c31 = arith.constant 31 : index
    %321 = memref.load %arg6[%c31] : memref<128xf32, #tpu.memory_space<smem>>
    %c7_192 = arith.constant 7 : index
    %c0_193 = arith.constant 0 : index
    %c0_194 = arith.constant 0 : index
    %322 = vector.load %arg10[%c7_192, %c0_193, %c0_194] : memref<8x8x32xf32, #tpu.memory_space<vmem>>, vector<1x8x32xf32>
    %323 = vector.shape_cast %322 : vector<1x8x32xf32> to vector<8x32xf32>
    %324 = vector.broadcast %321 : f32 to vector<8x32xf32>
    %325 = arith.mulf %324, %323 : vector<8x32xf32>
    %326 = arith.addf %320, %325 : vector<8x32xf32>
    %cst_195 = arith.constant 0.000000e+00 : f32
    %327 = vector.broadcast %cst_195 : f32 to vector<8x32xf32>
    %328 = arith.maximumf %326, %327 : vector<8x32xf32>
    %c3_196 = arith.constant 3 : index
    %c0_197 = arith.constant 0 : index
    %c0_198 = arith.constant 0 : index
    %329 = vector.load %arg8[%c3_196, %c0_197, %c0_198] : memref<16x32x128xf32, #tpu.memory_space<vmem>>, vector<1x32x128xf32>
    %330 = vector.shape_cast %329 : vector<1x32x128xf32> to vector<32x128xf32>
    %cst_199 = arith.constant dense<0.000000e+00> : vector<8x128xf32>
    %331 = tpu.matmul %328, %330, %cst_199 {dimension_numbers = #tpu.dot_dimension_numbers<[1], [0], [0], [1], [0, 0, 1, 1], [], []>} : vector<8x32xf32>, vector<32x128xf32>, vector<8x128xf32> -> vector<8x128xf32>
    %332 = arith.addf %276, %331 : vector<8x128xf32>
    %c32 = arith.constant 32 : index
    %333 = memref.load %arg6[%c32] : memref<128xf32, #tpu.memory_space<smem>>
    %c0_200 = arith.constant 0 : index
    %c0_201 = arith.constant 0 : index
    %c0_202 = arith.constant 0 : index
    %334 = vector.load %arg10[%c0_200, %c0_201, %c0_202] : memref<8x8x32xf32, #tpu.memory_space<vmem>>, vector<1x8x32xf32>
    %335 = vector.shape_cast %334 : vector<1x8x32xf32> to vector<8x32xf32>
    %336 = vector.broadcast %333 : f32 to vector<8x32xf32>
    %337 = arith.mulf %336, %335 : vector<8x32xf32>
    %c4_203 = arith.constant 4 : index
    %338 = memref.load %arg7[%c4_203] : memref<16xf32, #tpu.memory_space<smem>>
    %339 = vector.broadcast %338 : f32 to vector<8x32xf32>
    %340 = arith.addf %337, %339 : vector<8x32xf32>
    %c33 = arith.constant 33 : index
    %341 = memref.load %arg6[%c33] : memref<128xf32, #tpu.memory_space<smem>>
    %c1_204 = arith.constant 1 : index
    %c0_205 = arith.constant 0 : index
    %c0_206 = arith.constant 0 : index
    %342 = vector.load %arg10[%c1_204, %c0_205, %c0_206] : memref<8x8x32xf32, #tpu.memory_space<vmem>>, vector<1x8x32xf32>
    %343 = vector.shape_cast %342 : vector<1x8x32xf32> to vector<8x32xf32>
    %344 = vector.broadcast %341 : f32 to vector<8x32xf32>
    %345 = arith.mulf %344, %343 : vector<8x32xf32>
    %346 = arith.addf %340, %345 : vector<8x32xf32>
    %c34 = arith.constant 34 : index
    %347 = memref.load %arg6[%c34] : memref<128xf32, #tpu.memory_space<smem>>
    %c2_207 = arith.constant 2 : index
    %c0_208 = arith.constant 0 : index
    %c0_209 = arith.constant 0 : index
    %348 = vector.load %arg10[%c2_207, %c0_208, %c0_209] : memref<8x8x32xf32, #tpu.memory_space<vmem>>, vector<1x8x32xf32>
    %349 = vector.shape_cast %348 : vector<1x8x32xf32> to vector<8x32xf32>
    %350 = vector.broadcast %347 : f32 to vector<8x32xf32>
    %351 = arith.mulf %350, %349 : vector<8x32xf32>
    %352 = arith.addf %346, %351 : vector<8x32xf32>
    %c35 = arith.constant 35 : index
    %353 = memref.load %arg6[%c35] : memref<128xf32, #tpu.memory_space<smem>>
    %c3_210 = arith.constant 3 : index
    %c0_211 = arith.constant 0 : index
    %c0_212 = arith.constant 0 : index
    %354 = vector.load %arg10[%c3_210, %c0_211, %c0_212] : memref<8x8x32xf32, #tpu.memory_space<vmem>>, vector<1x8x32xf32>
    %355 = vector.shape_cast %354 : vector<1x8x32xf32> to vector<8x32xf32>
    %356 = vector.broadcast %353 : f32 to vector<8x32xf32>
    %357 = arith.mulf %356, %355 : vector<8x32xf32>
    %358 = arith.addf %352, %357 : vector<8x32xf32>
    %c36 = arith.constant 36 : index
    %359 = memref.load %arg6[%c36] : memref<128xf32, #tpu.memory_space<smem>>
    %c4_213 = arith.constant 4 : index
    %c0_214 = arith.constant 0 : index
    %c0_215 = arith.constant 0 : index
    %360 = vector.load %arg10[%c4_213, %c0_214, %c0_215] : memref<8x8x32xf32, #tpu.memory_space<vmem>>, vector<1x8x32xf32>
    %361 = vector.shape_cast %360 : vector<1x8x32xf32> to vector<8x32xf32>
    %362 = vector.broadcast %359 : f32 to vector<8x32xf32>
    %363 = arith.mulf %362, %361 : vector<8x32xf32>
    %364 = arith.addf %358, %363 : vector<8x32xf32>
    %c37 = arith.constant 37 : index
    %365 = memref.load %arg6[%c37] : memref<128xf32, #tpu.memory_space<smem>>
    %c5_216 = arith.constant 5 : index
    %c0_217 = arith.constant 0 : index
    %c0_218 = arith.constant 0 : index
    %366 = vector.load %arg10[%c5_216, %c0_217, %c0_218] : memref<8x8x32xf32, #tpu.memory_space<vmem>>, vector<1x8x32xf32>
    %367 = vector.shape_cast %366 : vector<1x8x32xf32> to vector<8x32xf32>
    %368 = vector.broadcast %365 : f32 to vector<8x32xf32>
    %369 = arith.mulf %368, %367 : vector<8x32xf32>
    %370 = arith.addf %364, %369 : vector<8x32xf32>
    %c38 = arith.constant 38 : index
    %371 = memref.load %arg6[%c38] : memref<128xf32, #tpu.memory_space<smem>>
    %c6_219 = arith.constant 6 : index
    %c0_220 = arith.constant 0 : index
    %c0_221 = arith.constant 0 : index
    %372 = vector.load %arg10[%c6_219, %c0_220, %c0_221] : memref<8x8x32xf32, #tpu.memory_space<vmem>>, vector<1x8x32xf32>
    %373 = vector.shape_cast %372 : vector<1x8x32xf32> to vector<8x32xf32>
    %374 = vector.broadcast %371 : f32 to vector<8x32xf32>
    %375 = arith.mulf %374, %373 : vector<8x32xf32>
    %376 = arith.addf %370, %375 : vector<8x32xf32>
    %c39 = arith.constant 39 : index
    %377 = memref.load %arg6[%c39] : memref<128xf32, #tpu.memory_space<smem>>
    %c7_222 = arith.constant 7 : index
    %c0_223 = arith.constant 0 : index
    %c0_224 = arith.constant 0 : index
    %378 = vector.load %arg10[%c7_222, %c0_223, %c0_224] : memref<8x8x32xf32, #tpu.memory_space<vmem>>, vector<1x8x32xf32>
    %379 = vector.shape_cast %378 : vector<1x8x32xf32> to vector<8x32xf32>
    %380 = vector.broadcast %377 : f32 to vector<8x32xf32>
    %381 = arith.mulf %380, %379 : vector<8x32xf32>
    %382 = arith.addf %376, %381 : vector<8x32xf32>
    %cst_225 = arith.constant 0.000000e+00 : f32
    %383 = vector.broadcast %cst_225 : f32 to vector<8x32xf32>
    %384 = arith.maximumf %382, %383 : vector<8x32xf32>
    %c4_226 = arith.constant 4 : index
    %c0_227 = arith.constant 0 : index
    %c0_228 = arith.constant 0 : index
    %385 = vector.load %arg8[%c4_226, %c0_227, %c0_228] : memref<16x32x128xf32, #tpu.memory_space<vmem>>, vector<1x32x128xf32>
    %386 = vector.shape_cast %385 : vector<1x32x128xf32> to vector<32x128xf32>
    %cst_229 = arith.constant dense<0.000000e+00> : vector<8x128xf32>
    %387 = tpu.matmul %384, %386, %cst_229 {dimension_numbers = #tpu.dot_dimension_numbers<[1], [0], [0], [1], [0, 0, 1, 1], [], []>} : vector<8x32xf32>, vector<32x128xf32>, vector<8x128xf32> -> vector<8x128xf32>
    %388 = arith.addf %332, %387 : vector<8x128xf32>
    %c40 = arith.constant 40 : index
    %389 = memref.load %arg6[%c40] : memref<128xf32, #tpu.memory_space<smem>>
    %c0_230 = arith.constant 0 : index
    %c0_231 = arith.constant 0 : index
    %c0_232 = arith.constant 0 : index
    %390 = vector.load %arg10[%c0_230, %c0_231, %c0_232] : memref<8x8x32xf32, #tpu.memory_space<vmem>>, vector<1x8x32xf32>
    %391 = vector.shape_cast %390 : vector<1x8x32xf32> to vector<8x32xf32>
    %392 = vector.broadcast %389 : f32 to vector<8x32xf32>
    %393 = arith.mulf %392, %391 : vector<8x32xf32>
    %c5_233 = arith.constant 5 : index
    %394 = memref.load %arg7[%c5_233] : memref<16xf32, #tpu.memory_space<smem>>
    %395 = vector.broadcast %394 : f32 to vector<8x32xf32>
    %396 = arith.addf %393, %395 : vector<8x32xf32>
    %c41 = arith.constant 41 : index
    %397 = memref.load %arg6[%c41] : memref<128xf32, #tpu.memory_space<smem>>
    %c1_234 = arith.constant 1 : index
    %c0_235 = arith.constant 0 : index
    %c0_236 = arith.constant 0 : index
    %398 = vector.load %arg10[%c1_234, %c0_235, %c0_236] : memref<8x8x32xf32, #tpu.memory_space<vmem>>, vector<1x8x32xf32>
    %399 = vector.shape_cast %398 : vector<1x8x32xf32> to vector<8x32xf32>
    %400 = vector.broadcast %397 : f32 to vector<8x32xf32>
    %401 = arith.mulf %400, %399 : vector<8x32xf32>
    %402 = arith.addf %396, %401 : vector<8x32xf32>
    %c42 = arith.constant 42 : index
    %403 = memref.load %arg6[%c42] : memref<128xf32, #tpu.memory_space<smem>>
    %c2_237 = arith.constant 2 : index
    %c0_238 = arith.constant 0 : index
    %c0_239 = arith.constant 0 : index
    %404 = vector.load %arg10[%c2_237, %c0_238, %c0_239] : memref<8x8x32xf32, #tpu.memory_space<vmem>>, vector<1x8x32xf32>
    %405 = vector.shape_cast %404 : vector<1x8x32xf32> to vector<8x32xf32>
    %406 = vector.broadcast %403 : f32 to vector<8x32xf32>
    %407 = arith.mulf %406, %405 : vector<8x32xf32>
    %408 = arith.addf %402, %407 : vector<8x32xf32>
    %c43 = arith.constant 43 : index
    %409 = memref.load %arg6[%c43] : memref<128xf32, #tpu.memory_space<smem>>
    %c3_240 = arith.constant 3 : index
    %c0_241 = arith.constant 0 : index
    %c0_242 = arith.constant 0 : index
    %410 = vector.load %arg10[%c3_240, %c0_241, %c0_242] : memref<8x8x32xf32, #tpu.memory_space<vmem>>, vector<1x8x32xf32>
    %411 = vector.shape_cast %410 : vector<1x8x32xf32> to vector<8x32xf32>
    %412 = vector.broadcast %409 : f32 to vector<8x32xf32>
    %413 = arith.mulf %412, %411 : vector<8x32xf32>
    %414 = arith.addf %408, %413 : vector<8x32xf32>
    %c44 = arith.constant 44 : index
    %415 = memref.load %arg6[%c44] : memref<128xf32, #tpu.memory_space<smem>>
    %c4_243 = arith.constant 4 : index
    %c0_244 = arith.constant 0 : index
    %c0_245 = arith.constant 0 : index
    %416 = vector.load %arg10[%c4_243, %c0_244, %c0_245] : memref<8x8x32xf32, #tpu.memory_space<vmem>>, vector<1x8x32xf32>
    %417 = vector.shape_cast %416 : vector<1x8x32xf32> to vector<8x32xf32>
    %418 = vector.broadcast %415 : f32 to vector<8x32xf32>
    %419 = arith.mulf %418, %417 : vector<8x32xf32>
    %420 = arith.addf %414, %419 : vector<8x32xf32>
    %c45 = arith.constant 45 : index
    %421 = memref.load %arg6[%c45] : memref<128xf32, #tpu.memory_space<smem>>
    %c5_246 = arith.constant 5 : index
    %c0_247 = arith.constant 0 : index
    %c0_248 = arith.constant 0 : index
    %422 = vector.load %arg10[%c5_246, %c0_247, %c0_248] : memref<8x8x32xf32, #tpu.memory_space<vmem>>, vector<1x8x32xf32>
    %423 = vector.shape_cast %422 : vector<1x8x32xf32> to vector<8x32xf32>
    %424 = vector.broadcast %421 : f32 to vector<8x32xf32>
    %425 = arith.mulf %424, %423 : vector<8x32xf32>
    %426 = arith.addf %420, %425 : vector<8x32xf32>
    %c46 = arith.constant 46 : index
    %427 = memref.load %arg6[%c46] : memref<128xf32, #tpu.memory_space<smem>>
    %c6_249 = arith.constant 6 : index
    %c0_250 = arith.constant 0 : index
    %c0_251 = arith.constant 0 : index
    %428 = vector.load %arg10[%c6_249, %c0_250, %c0_251] : memref<8x8x32xf32, #tpu.memory_space<vmem>>, vector<1x8x32xf32>
    %429 = vector.shape_cast %428 : vector<1x8x32xf32> to vector<8x32xf32>
    %430 = vector.broadcast %427 : f32 to vector<8x32xf32>
    %431 = arith.mulf %430, %429 : vector<8x32xf32>
    %432 = arith.addf %426, %431 : vector<8x32xf32>
    %c47 = arith.constant 47 : index
    %433 = memref.load %arg6[%c47] : memref<128xf32, #tpu.memory_space<smem>>
    %c7_252 = arith.constant 7 : index
    %c0_253 = arith.constant 0 : index
    %c0_254 = arith.constant 0 : index
    %434 = vector.load %arg10[%c7_252, %c0_253, %c0_254] : memref<8x8x32xf32, #tpu.memory_space<vmem>>, vector<1x8x32xf32>
    %435 = vector.shape_cast %434 : vector<1x8x32xf32> to vector<8x32xf32>
    %436 = vector.broadcast %433 : f32 to vector<8x32xf32>
    %437 = arith.mulf %436, %435 : vector<8x32xf32>
    %438 = arith.addf %432, %437 : vector<8x32xf32>
    %cst_255 = arith.constant 0.000000e+00 : f32
    %439 = vector.broadcast %cst_255 : f32 to vector<8x32xf32>
    %440 = arith.maximumf %438, %439 : vector<8x32xf32>
    %c5_256 = arith.constant 5 : index
    %c0_257 = arith.constant 0 : index
    %c0_258 = arith.constant 0 : index
    %441 = vector.load %arg8[%c5_256, %c0_257, %c0_258] : memref<16x32x128xf32, #tpu.memory_space<vmem>>, vector<1x32x128xf32>
    %442 = vector.shape_cast %441 : vector<1x32x128xf32> to vector<32x128xf32>
    %cst_259 = arith.constant dense<0.000000e+00> : vector<8x128xf32>
    %443 = tpu.matmul %440, %442, %cst_259 {dimension_numbers = #tpu.dot_dimension_numbers<[1], [0], [0], [1], [0, 0, 1, 1], [], []>} : vector<8x32xf32>, vector<32x128xf32>, vector<8x128xf32> -> vector<8x128xf32>
    %444 = arith.addf %388, %443 : vector<8x128xf32>
    %c48 = arith.constant 48 : index
    %445 = memref.load %arg6[%c48] : memref<128xf32, #tpu.memory_space<smem>>
    %c0_260 = arith.constant 0 : index
    %c0_261 = arith.constant 0 : index
    %c0_262 = arith.constant 0 : index
    %446 = vector.load %arg10[%c0_260, %c0_261, %c0_262] : memref<8x8x32xf32, #tpu.memory_space<vmem>>, vector<1x8x32xf32>
    %447 = vector.shape_cast %446 : vector<1x8x32xf32> to vector<8x32xf32>
    %448 = vector.broadcast %445 : f32 to vector<8x32xf32>
    %449 = arith.mulf %448, %447 : vector<8x32xf32>
    %c6_263 = arith.constant 6 : index
    %450 = memref.load %arg7[%c6_263] : memref<16xf32, #tpu.memory_space<smem>>
    %451 = vector.broadcast %450 : f32 to vector<8x32xf32>
    %452 = arith.addf %449, %451 : vector<8x32xf32>
    %c49 = arith.constant 49 : index
    %453 = memref.load %arg6[%c49] : memref<128xf32, #tpu.memory_space<smem>>
    %c1_264 = arith.constant 1 : index
    %c0_265 = arith.constant 0 : index
    %c0_266 = arith.constant 0 : index
    %454 = vector.load %arg10[%c1_264, %c0_265, %c0_266] : memref<8x8x32xf32, #tpu.memory_space<vmem>>, vector<1x8x32xf32>
    %455 = vector.shape_cast %454 : vector<1x8x32xf32> to vector<8x32xf32>
    %456 = vector.broadcast %453 : f32 to vector<8x32xf32>
    %457 = arith.mulf %456, %455 : vector<8x32xf32>
    %458 = arith.addf %452, %457 : vector<8x32xf32>
    %c50 = arith.constant 50 : index
    %459 = memref.load %arg6[%c50] : memref<128xf32, #tpu.memory_space<smem>>
    %c2_267 = arith.constant 2 : index
    %c0_268 = arith.constant 0 : index
    %c0_269 = arith.constant 0 : index
    %460 = vector.load %arg10[%c2_267, %c0_268, %c0_269] : memref<8x8x32xf32, #tpu.memory_space<vmem>>, vector<1x8x32xf32>
    %461 = vector.shape_cast %460 : vector<1x8x32xf32> to vector<8x32xf32>
    %462 = vector.broadcast %459 : f32 to vector<8x32xf32>
    %463 = arith.mulf %462, %461 : vector<8x32xf32>
    %464 = arith.addf %458, %463 : vector<8x32xf32>
    %c51 = arith.constant 51 : index
    %465 = memref.load %arg6[%c51] : memref<128xf32, #tpu.memory_space<smem>>
    %c3_270 = arith.constant 3 : index
    %c0_271 = arith.constant 0 : index
    %c0_272 = arith.constant 0 : index
    %466 = vector.load %arg10[%c3_270, %c0_271, %c0_272] : memref<8x8x32xf32, #tpu.memory_space<vmem>>, vector<1x8x32xf32>
    %467 = vector.shape_cast %466 : vector<1x8x32xf32> to vector<8x32xf32>
    %468 = vector.broadcast %465 : f32 to vector<8x32xf32>
    %469 = arith.mulf %468, %467 : vector<8x32xf32>
    %470 = arith.addf %464, %469 : vector<8x32xf32>
    %c52 = arith.constant 52 : index
    %471 = memref.load %arg6[%c52] : memref<128xf32, #tpu.memory_space<smem>>
    %c4_273 = arith.constant 4 : index
    %c0_274 = arith.constant 0 : index
    %c0_275 = arith.constant 0 : index
    %472 = vector.load %arg10[%c4_273, %c0_274, %c0_275] : memref<8x8x32xf32, #tpu.memory_space<vmem>>, vector<1x8x32xf32>
    %473 = vector.shape_cast %472 : vector<1x8x32xf32> to vector<8x32xf32>
    %474 = vector.broadcast %471 : f32 to vector<8x32xf32>
    %475 = arith.mulf %474, %473 : vector<8x32xf32>
    %476 = arith.addf %470, %475 : vector<8x32xf32>
    %c53 = arith.constant 53 : index
    %477 = memref.load %arg6[%c53] : memref<128xf32, #tpu.memory_space<smem>>
    %c5_276 = arith.constant 5 : index
    %c0_277 = arith.constant 0 : index
    %c0_278 = arith.constant 0 : index
    %478 = vector.load %arg10[%c5_276, %c0_277, %c0_278] : memref<8x8x32xf32, #tpu.memory_space<vmem>>, vector<1x8x32xf32>
    %479 = vector.shape_cast %478 : vector<1x8x32xf32> to vector<8x32xf32>
    %480 = vector.broadcast %477 : f32 to vector<8x32xf32>
    %481 = arith.mulf %480, %479 : vector<8x32xf32>
    %482 = arith.addf %476, %481 : vector<8x32xf32>
    %c54 = arith.constant 54 : index
    %483 = memref.load %arg6[%c54] : memref<128xf32, #tpu.memory_space<smem>>
    %c6_279 = arith.constant 6 : index
    %c0_280 = arith.constant 0 : index
    %c0_281 = arith.constant 0 : index
    %484 = vector.load %arg10[%c6_279, %c0_280, %c0_281] : memref<8x8x32xf32, #tpu.memory_space<vmem>>, vector<1x8x32xf32>
    %485 = vector.shape_cast %484 : vector<1x8x32xf32> to vector<8x32xf32>
    %486 = vector.broadcast %483 : f32 to vector<8x32xf32>
    %487 = arith.mulf %486, %485 : vector<8x32xf32>
    %488 = arith.addf %482, %487 : vector<8x32xf32>
    %c55 = arith.constant 55 : index
    %489 = memref.load %arg6[%c55] : memref<128xf32, #tpu.memory_space<smem>>
    %c7_282 = arith.constant 7 : index
    %c0_283 = arith.constant 0 : index
    %c0_284 = arith.constant 0 : index
    %490 = vector.load %arg10[%c7_282, %c0_283, %c0_284] : memref<8x8x32xf32, #tpu.memory_space<vmem>>, vector<1x8x32xf32>
    %491 = vector.shape_cast %490 : vector<1x8x32xf32> to vector<8x32xf32>
    %492 = vector.broadcast %489 : f32 to vector<8x32xf32>
    %493 = arith.mulf %492, %491 : vector<8x32xf32>
    %494 = arith.addf %488, %493 : vector<8x32xf32>
    %cst_285 = arith.constant 0.000000e+00 : f32
    %495 = vector.broadcast %cst_285 : f32 to vector<8x32xf32>
    %496 = arith.maximumf %494, %495 : vector<8x32xf32>
    %c6_286 = arith.constant 6 : index
    %c0_287 = arith.constant 0 : index
    %c0_288 = arith.constant 0 : index
    %497 = vector.load %arg8[%c6_286, %c0_287, %c0_288] : memref<16x32x128xf32, #tpu.memory_space<vmem>>, vector<1x32x128xf32>
    %498 = vector.shape_cast %497 : vector<1x32x128xf32> to vector<32x128xf32>
    %cst_289 = arith.constant dense<0.000000e+00> : vector<8x128xf32>
    %499 = tpu.matmul %496, %498, %cst_289 {dimension_numbers = #tpu.dot_dimension_numbers<[1], [0], [0], [1], [0, 0, 1, 1], [], []>} : vector<8x32xf32>, vector<32x128xf32>, vector<8x128xf32> -> vector<8x128xf32>
    %500 = arith.addf %444, %499 : vector<8x128xf32>
    %c56 = arith.constant 56 : index
    %501 = memref.load %arg6[%c56] : memref<128xf32, #tpu.memory_space<smem>>
    %c0_290 = arith.constant 0 : index
    %c0_291 = arith.constant 0 : index
    %c0_292 = arith.constant 0 : index
    %502 = vector.load %arg10[%c0_290, %c0_291, %c0_292] : memref<8x8x32xf32, #tpu.memory_space<vmem>>, vector<1x8x32xf32>
    %503 = vector.shape_cast %502 : vector<1x8x32xf32> to vector<8x32xf32>
    %504 = vector.broadcast %501 : f32 to vector<8x32xf32>
    %505 = arith.mulf %504, %503 : vector<8x32xf32>
    %c7_293 = arith.constant 7 : index
    %506 = memref.load %arg7[%c7_293] : memref<16xf32, #tpu.memory_space<smem>>
    %507 = vector.broadcast %506 : f32 to vector<8x32xf32>
    %508 = arith.addf %505, %507 : vector<8x32xf32>
    %c57 = arith.constant 57 : index
    %509 = memref.load %arg6[%c57] : memref<128xf32, #tpu.memory_space<smem>>
    %c1_294 = arith.constant 1 : index
    %c0_295 = arith.constant 0 : index
    %c0_296 = arith.constant 0 : index
    %510 = vector.load %arg10[%c1_294, %c0_295, %c0_296] : memref<8x8x32xf32, #tpu.memory_space<vmem>>, vector<1x8x32xf32>
    %511 = vector.shape_cast %510 : vector<1x8x32xf32> to vector<8x32xf32>
    %512 = vector.broadcast %509 : f32 to vector<8x32xf32>
    %513 = arith.mulf %512, %511 : vector<8x32xf32>
    %514 = arith.addf %508, %513 : vector<8x32xf32>
    %c58 = arith.constant 58 : index
    %515 = memref.load %arg6[%c58] : memref<128xf32, #tpu.memory_space<smem>>
    %c2_297 = arith.constant 2 : index
    %c0_298 = arith.constant 0 : index
    %c0_299 = arith.constant 0 : index
    %516 = vector.load %arg10[%c2_297, %c0_298, %c0_299] : memref<8x8x32xf32, #tpu.memory_space<vmem>>, vector<1x8x32xf32>
    %517 = vector.shape_cast %516 : vector<1x8x32xf32> to vector<8x32xf32>
    %518 = vector.broadcast %515 : f32 to vector<8x32xf32>
    %519 = arith.mulf %518, %517 : vector<8x32xf32>
    %520 = arith.addf %514, %519 : vector<8x32xf32>
    %c59 = arith.constant 59 : index
    %521 = memref.load %arg6[%c59] : memref<128xf32, #tpu.memory_space<smem>>
    %c3_300 = arith.constant 3 : index
    %c0_301 = arith.constant 0 : index
    %c0_302 = arith.constant 0 : index
    %522 = vector.load %arg10[%c3_300, %c0_301, %c0_302] : memref<8x8x32xf32, #tpu.memory_space<vmem>>, vector<1x8x32xf32>
    %523 = vector.shape_cast %522 : vector<1x8x32xf32> to vector<8x32xf32>
    %524 = vector.broadcast %521 : f32 to vector<8x32xf32>
    %525 = arith.mulf %524, %523 : vector<8x32xf32>
    %526 = arith.addf %520, %525 : vector<8x32xf32>
    %c60 = arith.constant 60 : index
    %527 = memref.load %arg6[%c60] : memref<128xf32, #tpu.memory_space<smem>>
    %c4_303 = arith.constant 4 : index
    %c0_304 = arith.constant 0 : index
    %c0_305 = arith.constant 0 : index
    %528 = vector.load %arg10[%c4_303, %c0_304, %c0_305] : memref<8x8x32xf32, #tpu.memory_space<vmem>>, vector<1x8x32xf32>
    %529 = vector.shape_cast %528 : vector<1x8x32xf32> to vector<8x32xf32>
    %530 = vector.broadcast %527 : f32 to vector<8x32xf32>
    %531 = arith.mulf %530, %529 : vector<8x32xf32>
    %532 = arith.addf %526, %531 : vector<8x32xf32>
    %c61 = arith.constant 61 : index
    %533 = memref.load %arg6[%c61] : memref<128xf32, #tpu.memory_space<smem>>
    %c5_306 = arith.constant 5 : index
    %c0_307 = arith.constant 0 : index
    %c0_308 = arith.constant 0 : index
    %534 = vector.load %arg10[%c5_306, %c0_307, %c0_308] : memref<8x8x32xf32, #tpu.memory_space<vmem>>, vector<1x8x32xf32>
    %535 = vector.shape_cast %534 : vector<1x8x32xf32> to vector<8x32xf32>
    %536 = vector.broadcast %533 : f32 to vector<8x32xf32>
    %537 = arith.mulf %536, %535 : vector<8x32xf32>
    %538 = arith.addf %532, %537 : vector<8x32xf32>
    %c62 = arith.constant 62 : index
    %539 = memref.load %arg6[%c62] : memref<128xf32, #tpu.memory_space<smem>>
    %c6_309 = arith.constant 6 : index
    %c0_310 = arith.constant 0 : index
    %c0_311 = arith.constant 0 : index
    %540 = vector.load %arg10[%c6_309, %c0_310, %c0_311] : memref<8x8x32xf32, #tpu.memory_space<vmem>>, vector<1x8x32xf32>
    %541 = vector.shape_cast %540 : vector<1x8x32xf32> to vector<8x32xf32>
    %542 = vector.broadcast %539 : f32 to vector<8x32xf32>
    %543 = arith.mulf %542, %541 : vector<8x32xf32>
    %544 = arith.addf %538, %543 : vector<8x32xf32>
    %c63 = arith.constant 63 : index
    %545 = memref.load %arg6[%c63] : memref<128xf32, #tpu.memory_space<smem>>
    %c7_312 = arith.constant 7 : index
    %c0_313 = arith.constant 0 : index
    %c0_314 = arith.constant 0 : index
    %546 = vector.load %arg10[%c7_312, %c0_313, %c0_314] : memref<8x8x32xf32, #tpu.memory_space<vmem>>, vector<1x8x32xf32>
    %547 = vector.shape_cast %546 : vector<1x8x32xf32> to vector<8x32xf32>
    %548 = vector.broadcast %545 : f32 to vector<8x32xf32>
    %549 = arith.mulf %548, %547 : vector<8x32xf32>
    %550 = arith.addf %544, %549 : vector<8x32xf32>
    %cst_315 = arith.constant 0.000000e+00 : f32
    %551 = vector.broadcast %cst_315 : f32 to vector<8x32xf32>
    %552 = arith.maximumf %550, %551 : vector<8x32xf32>
    %c7_316 = arith.constant 7 : index
    %c0_317 = arith.constant 0 : index
    %c0_318 = arith.constant 0 : index
    %553 = vector.load %arg8[%c7_316, %c0_317, %c0_318] : memref<16x32x128xf32, #tpu.memory_space<vmem>>, vector<1x32x128xf32>
    %554 = vector.shape_cast %553 : vector<1x32x128xf32> to vector<32x128xf32>
    %cst_319 = arith.constant dense<0.000000e+00> : vector<8x128xf32>
    %555 = tpu.matmul %552, %554, %cst_319 {dimension_numbers = #tpu.dot_dimension_numbers<[1], [0], [0], [1], [0, 0, 1, 1], [], []>} : vector<8x32xf32>, vector<32x128xf32>, vector<8x128xf32> -> vector<8x128xf32>
    %556 = arith.addf %500, %555 : vector<8x128xf32>
    %c64 = arith.constant 64 : index
    %557 = memref.load %arg6[%c64] : memref<128xf32, #tpu.memory_space<smem>>
    %c0_320 = arith.constant 0 : index
    %c0_321 = arith.constant 0 : index
    %c0_322 = arith.constant 0 : index
    %558 = vector.load %arg10[%c0_320, %c0_321, %c0_322] : memref<8x8x32xf32, #tpu.memory_space<vmem>>, vector<1x8x32xf32>
    %559 = vector.shape_cast %558 : vector<1x8x32xf32> to vector<8x32xf32>
    %560 = vector.broadcast %557 : f32 to vector<8x32xf32>
    %561 = arith.mulf %560, %559 : vector<8x32xf32>
    %c8_323 = arith.constant 8 : index
    %562 = memref.load %arg7[%c8_323] : memref<16xf32, #tpu.memory_space<smem>>
    %563 = vector.broadcast %562 : f32 to vector<8x32xf32>
    %564 = arith.addf %561, %563 : vector<8x32xf32>
    %c65 = arith.constant 65 : index
    %565 = memref.load %arg6[%c65] : memref<128xf32, #tpu.memory_space<smem>>
    %c1_324 = arith.constant 1 : index
    %c0_325 = arith.constant 0 : index
    %c0_326 = arith.constant 0 : index
    %566 = vector.load %arg10[%c1_324, %c0_325, %c0_326] : memref<8x8x32xf32, #tpu.memory_space<vmem>>, vector<1x8x32xf32>
    %567 = vector.shape_cast %566 : vector<1x8x32xf32> to vector<8x32xf32>
    %568 = vector.broadcast %565 : f32 to vector<8x32xf32>
    %569 = arith.mulf %568, %567 : vector<8x32xf32>
    %570 = arith.addf %564, %569 : vector<8x32xf32>
    %c66 = arith.constant 66 : index
    %571 = memref.load %arg6[%c66] : memref<128xf32, #tpu.memory_space<smem>>
    %c2_327 = arith.constant 2 : index
    %c0_328 = arith.constant 0 : index
    %c0_329 = arith.constant 0 : index
    %572 = vector.load %arg10[%c2_327, %c0_328, %c0_329] : memref<8x8x32xf32, #tpu.memory_space<vmem>>, vector<1x8x32xf32>
    %573 = vector.shape_cast %572 : vector<1x8x32xf32> to vector<8x32xf32>
    %574 = vector.broadcast %571 : f32 to vector<8x32xf32>
    %575 = arith.mulf %574, %573 : vector<8x32xf32>
    %576 = arith.addf %570, %575 : vector<8x32xf32>
    %c67 = arith.constant 67 : index
    %577 = memref.load %arg6[%c67] : memref<128xf32, #tpu.memory_space<smem>>
    %c3_330 = arith.constant 3 : index
    %c0_331 = arith.constant 0 : index
    %c0_332 = arith.constant 0 : index
    %578 = vector.load %arg10[%c3_330, %c0_331, %c0_332] : memref<8x8x32xf32, #tpu.memory_space<vmem>>, vector<1x8x32xf32>
    %579 = vector.shape_cast %578 : vector<1x8x32xf32> to vector<8x32xf32>
    %580 = vector.broadcast %577 : f32 to vector<8x32xf32>
    %581 = arith.mulf %580, %579 : vector<8x32xf32>
    %582 = arith.addf %576, %581 : vector<8x32xf32>
    %c68 = arith.constant 68 : index
    %583 = memref.load %arg6[%c68] : memref<128xf32, #tpu.memory_space<smem>>
    %c4_333 = arith.constant 4 : index
    %c0_334 = arith.constant 0 : index
    %c0_335 = arith.constant 0 : index
    %584 = vector.load %arg10[%c4_333, %c0_334, %c0_335] : memref<8x8x32xf32, #tpu.memory_space<vmem>>, vector<1x8x32xf32>
    %585 = vector.shape_cast %584 : vector<1x8x32xf32> to vector<8x32xf32>
    %586 = vector.broadcast %583 : f32 to vector<8x32xf32>
    %587 = arith.mulf %586, %585 : vector<8x32xf32>
    %588 = arith.addf %582, %587 : vector<8x32xf32>
    %c69 = arith.constant 69 : index
    %589 = memref.load %arg6[%c69] : memref<128xf32, #tpu.memory_space<smem>>
    %c5_336 = arith.constant 5 : index
    %c0_337 = arith.constant 0 : index
    %c0_338 = arith.constant 0 : index
    %590 = vector.load %arg10[%c5_336, %c0_337, %c0_338] : memref<8x8x32xf32, #tpu.memory_space<vmem>>, vector<1x8x32xf32>
    %591 = vector.shape_cast %590 : vector<1x8x32xf32> to vector<8x32xf32>
    %592 = vector.broadcast %589 : f32 to vector<8x32xf32>
    %593 = arith.mulf %592, %591 : vector<8x32xf32>
    %594 = arith.addf %588, %593 : vector<8x32xf32>
    %c70 = arith.constant 70 : index
    %595 = memref.load %arg6[%c70] : memref<128xf32, #tpu.memory_space<smem>>
    %c6_339 = arith.constant 6 : index
    %c0_340 = arith.constant 0 : index
    %c0_341 = arith.constant 0 : index
    %596 = vector.load %arg10[%c6_339, %c0_340, %c0_341] : memref<8x8x32xf32, #tpu.memory_space<vmem>>, vector<1x8x32xf32>
    %597 = vector.shape_cast %596 : vector<1x8x32xf32> to vector<8x32xf32>
    %598 = vector.broadcast %595 : f32 to vector<8x32xf32>
    %599 = arith.mulf %598, %597 : vector<8x32xf32>
    %600 = arith.addf %594, %599 : vector<8x32xf32>
    %c71 = arith.constant 71 : index
    %601 = memref.load %arg6[%c71] : memref<128xf32, #tpu.memory_space<smem>>
    %c7_342 = arith.constant 7 : index
    %c0_343 = arith.constant 0 : index
    %c0_344 = arith.constant 0 : index
    %602 = vector.load %arg10[%c7_342, %c0_343, %c0_344] : memref<8x8x32xf32, #tpu.memory_space<vmem>>, vector<1x8x32xf32>
    %603 = vector.shape_cast %602 : vector<1x8x32xf32> to vector<8x32xf32>
    %604 = vector.broadcast %601 : f32 to vector<8x32xf32>
    %605 = arith.mulf %604, %603 : vector<8x32xf32>
    %606 = arith.addf %600, %605 : vector<8x32xf32>
    %cst_345 = arith.constant 0.000000e+00 : f32
    %607 = vector.broadcast %cst_345 : f32 to vector<8x32xf32>
    %608 = arith.maximumf %606, %607 : vector<8x32xf32>
    %c8_346 = arith.constant 8 : index
    %c0_347 = arith.constant 0 : index
    %c0_348 = arith.constant 0 : index
    %609 = vector.load %arg8[%c8_346, %c0_347, %c0_348] : memref<16x32x128xf32, #tpu.memory_space<vmem>>, vector<1x32x128xf32>
    %610 = vector.shape_cast %609 : vector<1x32x128xf32> to vector<32x128xf32>
    %cst_349 = arith.constant dense<0.000000e+00> : vector<8x128xf32>
    %611 = tpu.matmul %608, %610, %cst_349 {dimension_numbers = #tpu.dot_dimension_numbers<[1], [0], [0], [1], [0, 0, 1, 1], [], []>} : vector<8x32xf32>, vector<32x128xf32>, vector<8x128xf32> -> vector<8x128xf32>
    %612 = arith.addf %556, %611 : vector<8x128xf32>
    %c72 = arith.constant 72 : index
    %613 = memref.load %arg6[%c72] : memref<128xf32, #tpu.memory_space<smem>>
    %c0_350 = arith.constant 0 : index
    %c0_351 = arith.constant 0 : index
    %c0_352 = arith.constant 0 : index
    %614 = vector.load %arg10[%c0_350, %c0_351, %c0_352] : memref<8x8x32xf32, #tpu.memory_space<vmem>>, vector<1x8x32xf32>
    %615 = vector.shape_cast %614 : vector<1x8x32xf32> to vector<8x32xf32>
    %616 = vector.broadcast %613 : f32 to vector<8x32xf32>
    %617 = arith.mulf %616, %615 : vector<8x32xf32>
    %c9_353 = arith.constant 9 : index
    %618 = memref.load %arg7[%c9_353] : memref<16xf32, #tpu.memory_space<smem>>
    %619 = vector.broadcast %618 : f32 to vector<8x32xf32>
    %620 = arith.addf %617, %619 : vector<8x32xf32>
    %c73 = arith.constant 73 : index
    %621 = memref.load %arg6[%c73] : memref<128xf32, #tpu.memory_space<smem>>
    %c1_354 = arith.constant 1 : index
    %c0_355 = arith.constant 0 : index
    %c0_356 = arith.constant 0 : index
    %622 = vector.load %arg10[%c1_354, %c0_355, %c0_356] : memref<8x8x32xf32, #tpu.memory_space<vmem>>, vector<1x8x32xf32>
    %623 = vector.shape_cast %622 : vector<1x8x32xf32> to vector<8x32xf32>
    %624 = vector.broadcast %621 : f32 to vector<8x32xf32>
    %625 = arith.mulf %624, %623 : vector<8x32xf32>
    %626 = arith.addf %620, %625 : vector<8x32xf32>
    %c74 = arith.constant 74 : index
    %627 = memref.load %arg6[%c74] : memref<128xf32, #tpu.memory_space<smem>>
    %c2_357 = arith.constant 2 : index
    %c0_358 = arith.constant 0 : index
    %c0_359 = arith.constant 0 : index
    %628 = vector.load %arg10[%c2_357, %c0_358, %c0_359] : memref<8x8x32xf32, #tpu.memory_space<vmem>>, vector<1x8x32xf32>
    %629 = vector.shape_cast %628 : vector<1x8x32xf32> to vector<8x32xf32>
    %630 = vector.broadcast %627 : f32 to vector<8x32xf32>
    %631 = arith.mulf %630, %629 : vector<8x32xf32>
    %632 = arith.addf %626, %631 : vector<8x32xf32>
    %c75 = arith.constant 75 : index
    %633 = memref.load %arg6[%c75] : memref<128xf32, #tpu.memory_space<smem>>
    %c3_360 = arith.constant 3 : index
    %c0_361 = arith.constant 0 : index
    %c0_362 = arith.constant 0 : index
    %634 = vector.load %arg10[%c3_360, %c0_361, %c0_362] : memref<8x8x32xf32, #tpu.memory_space<vmem>>, vector<1x8x32xf32>
    %635 = vector.shape_cast %634 : vector<1x8x32xf32> to vector<8x32xf32>
    %636 = vector.broadcast %633 : f32 to vector<8x32xf32>
    %637 = arith.mulf %636, %635 : vector<8x32xf32>
    %638 = arith.addf %632, %637 : vector<8x32xf32>
    %c76 = arith.constant 76 : index
    %639 = memref.load %arg6[%c76] : memref<128xf32, #tpu.memory_space<smem>>
    %c4_363 = arith.constant 4 : index
    %c0_364 = arith.constant 0 : index
    %c0_365 = arith.constant 0 : index
    %640 = vector.load %arg10[%c4_363, %c0_364, %c0_365] : memref<8x8x32xf32, #tpu.memory_space<vmem>>, vector<1x8x32xf32>
    %641 = vector.shape_cast %640 : vector<1x8x32xf32> to vector<8x32xf32>
    %642 = vector.broadcast %639 : f32 to vector<8x32xf32>
    %643 = arith.mulf %642, %641 : vector<8x32xf32>
    %644 = arith.addf %638, %643 : vector<8x32xf32>
    %c77 = arith.constant 77 : index
    %645 = memref.load %arg6[%c77] : memref<128xf32, #tpu.memory_space<smem>>
    %c5_366 = arith.constant 5 : index
    %c0_367 = arith.constant 0 : index
    %c0_368 = arith.constant 0 : index
    %646 = vector.load %arg10[%c5_366, %c0_367, %c0_368] : memref<8x8x32xf32, #tpu.memory_space<vmem>>, vector<1x8x32xf32>
    %647 = vector.shape_cast %646 : vector<1x8x32xf32> to vector<8x32xf32>
    %648 = vector.broadcast %645 : f32 to vector<8x32xf32>
    %649 = arith.mulf %648, %647 : vector<8x32xf32>
    %650 = arith.addf %644, %649 : vector<8x32xf32>
    %c78 = arith.constant 78 : index
    %651 = memref.load %arg6[%c78] : memref<128xf32, #tpu.memory_space<smem>>
    %c6_369 = arith.constant 6 : index
    %c0_370 = arith.constant 0 : index
    %c0_371 = arith.constant 0 : index
    %652 = vector.load %arg10[%c6_369, %c0_370, %c0_371] : memref<8x8x32xf32, #tpu.memory_space<vmem>>, vector<1x8x32xf32>
    %653 = vector.shape_cast %652 : vector<1x8x32xf32> to vector<8x32xf32>
    %654 = vector.broadcast %651 : f32 to vector<8x32xf32>
    %655 = arith.mulf %654, %653 : vector<8x32xf32>
    %656 = arith.addf %650, %655 : vector<8x32xf32>
    %c79 = arith.constant 79 : index
    %657 = memref.load %arg6[%c79] : memref<128xf32, #tpu.memory_space<smem>>
    %c7_372 = arith.constant 7 : index
    %c0_373 = arith.constant 0 : index
    %c0_374 = arith.constant 0 : index
    %658 = vector.load %arg10[%c7_372, %c0_373, %c0_374] : memref<8x8x32xf32, #tpu.memory_space<vmem>>, vector<1x8x32xf32>
    %659 = vector.shape_cast %658 : vector<1x8x32xf32> to vector<8x32xf32>
    %660 = vector.broadcast %657 : f32 to vector<8x32xf32>
    %661 = arith.mulf %660, %659 : vector<8x32xf32>
    %662 = arith.addf %656, %661 : vector<8x32xf32>
    %cst_375 = arith.constant 0.000000e+00 : f32
    %663 = vector.broadcast %cst_375 : f32 to vector<8x32xf32>
    %664 = arith.maximumf %662, %663 : vector<8x32xf32>
    %c9_376 = arith.constant 9 : index
    %c0_377 = arith.constant 0 : index
    %c0_378 = arith.constant 0 : index
    %665 = vector.load %arg8[%c9_376, %c0_377, %c0_378] : memref<16x32x128xf32, #tpu.memory_space<vmem>>, vector<1x32x128xf32>
    %666 = vector.shape_cast %665 : vector<1x32x128xf32> to vector<32x128xf32>
    %cst_379 = arith.constant dense<0.000000e+00> : vector<8x128xf32>
    %667 = tpu.matmul %664, %666, %cst_379 {dimension_numbers = #tpu.dot_dimension_numbers<[1], [0], [0], [1], [0, 0, 1, 1], [], []>} : vector<8x32xf32>, vector<32x128xf32>, vector<8x128xf32> -> vector<8x128xf32>
    %668 = arith.addf %612, %667 : vector<8x128xf32>
    %c80 = arith.constant 80 : index
    %669 = memref.load %arg6[%c80] : memref<128xf32, #tpu.memory_space<smem>>
    %c0_380 = arith.constant 0 : index
    %c0_381 = arith.constant 0 : index
    %c0_382 = arith.constant 0 : index
    %670 = vector.load %arg10[%c0_380, %c0_381, %c0_382] : memref<8x8x32xf32, #tpu.memory_space<vmem>>, vector<1x8x32xf32>
    %671 = vector.shape_cast %670 : vector<1x8x32xf32> to vector<8x32xf32>
    %672 = vector.broadcast %669 : f32 to vector<8x32xf32>
    %673 = arith.mulf %672, %671 : vector<8x32xf32>
    %c10_383 = arith.constant 10 : index
    %674 = memref.load %arg7[%c10_383] : memref<16xf32, #tpu.memory_space<smem>>
    %675 = vector.broadcast %674 : f32 to vector<8x32xf32>
    %676 = arith.addf %673, %675 : vector<8x32xf32>
    %c81 = arith.constant 81 : index
    %677 = memref.load %arg6[%c81] : memref<128xf32, #tpu.memory_space<smem>>
    %c1_384 = arith.constant 1 : index
    %c0_385 = arith.constant 0 : index
    %c0_386 = arith.constant 0 : index
    %678 = vector.load %arg10[%c1_384, %c0_385, %c0_386] : memref<8x8x32xf32, #tpu.memory_space<vmem>>, vector<1x8x32xf32>
    %679 = vector.shape_cast %678 : vector<1x8x32xf32> to vector<8x32xf32>
    %680 = vector.broadcast %677 : f32 to vector<8x32xf32>
    %681 = arith.mulf %680, %679 : vector<8x32xf32>
    %682 = arith.addf %676, %681 : vector<8x32xf32>
    %c82 = arith.constant 82 : index
    %683 = memref.load %arg6[%c82] : memref<128xf32, #tpu.memory_space<smem>>
    %c2_387 = arith.constant 2 : index
    %c0_388 = arith.constant 0 : index
    %c0_389 = arith.constant 0 : index
    %684 = vector.load %arg10[%c2_387, %c0_388, %c0_389] : memref<8x8x32xf32, #tpu.memory_space<vmem>>, vector<1x8x32xf32>
    %685 = vector.shape_cast %684 : vector<1x8x32xf32> to vector<8x32xf32>
    %686 = vector.broadcast %683 : f32 to vector<8x32xf32>
    %687 = arith.mulf %686, %685 : vector<8x32xf32>
    %688 = arith.addf %682, %687 : vector<8x32xf32>
    %c83 = arith.constant 83 : index
    %689 = memref.load %arg6[%c83] : memref<128xf32, #tpu.memory_space<smem>>
    %c3_390 = arith.constant 3 : index
    %c0_391 = arith.constant 0 : index
    %c0_392 = arith.constant 0 : index
    %690 = vector.load %arg10[%c3_390, %c0_391, %c0_392] : memref<8x8x32xf32, #tpu.memory_space<vmem>>, vector<1x8x32xf32>
    %691 = vector.shape_cast %690 : vector<1x8x32xf32> to vector<8x32xf32>
    %692 = vector.broadcast %689 : f32 to vector<8x32xf32>
    %693 = arith.mulf %692, %691 : vector<8x32xf32>
    %694 = arith.addf %688, %693 : vector<8x32xf32>
    %c84 = arith.constant 84 : index
    %695 = memref.load %arg6[%c84] : memref<128xf32, #tpu.memory_space<smem>>
    %c4_393 = arith.constant 4 : index
    %c0_394 = arith.constant 0 : index
    %c0_395 = arith.constant 0 : index
    %696 = vector.load %arg10[%c4_393, %c0_394, %c0_395] : memref<8x8x32xf32, #tpu.memory_space<vmem>>, vector<1x8x32xf32>
    %697 = vector.shape_cast %696 : vector<1x8x32xf32> to vector<8x32xf32>
    %698 = vector.broadcast %695 : f32 to vector<8x32xf32>
    %699 = arith.mulf %698, %697 : vector<8x32xf32>
    %700 = arith.addf %694, %699 : vector<8x32xf32>
    %c85 = arith.constant 85 : index
    %701 = memref.load %arg6[%c85] : memref<128xf32, #tpu.memory_space<smem>>
    %c5_396 = arith.constant 5 : index
    %c0_397 = arith.constant 0 : index
    %c0_398 = arith.constant 0 : index
    %702 = vector.load %arg10[%c5_396, %c0_397, %c0_398] : memref<8x8x32xf32, #tpu.memory_space<vmem>>, vector<1x8x32xf32>
    %703 = vector.shape_cast %702 : vector<1x8x32xf32> to vector<8x32xf32>
    %704 = vector.broadcast %701 : f32 to vector<8x32xf32>
    %705 = arith.mulf %704, %703 : vector<8x32xf32>
    %706 = arith.addf %700, %705 : vector<8x32xf32>
    %c86 = arith.constant 86 : index
    %707 = memref.load %arg6[%c86] : memref<128xf32, #tpu.memory_space<smem>>
    %c6_399 = arith.constant 6 : index
    %c0_400 = arith.constant 0 : index
    %c0_401 = arith.constant 0 : index
    %708 = vector.load %arg10[%c6_399, %c0_400, %c0_401] : memref<8x8x32xf32, #tpu.memory_space<vmem>>, vector<1x8x32xf32>
    %709 = vector.shape_cast %708 : vector<1x8x32xf32> to vector<8x32xf32>
    %710 = vector.broadcast %707 : f32 to vector<8x32xf32>
    %711 = arith.mulf %710, %709 : vector<8x32xf32>
    %712 = arith.addf %706, %711 : vector<8x32xf32>
    %c87 = arith.constant 87 : index
    %713 = memref.load %arg6[%c87] : memref<128xf32, #tpu.memory_space<smem>>
    %c7_402 = arith.constant 7 : index
    %c0_403 = arith.constant 0 : index
    %c0_404 = arith.constant 0 : index
    %714 = vector.load %arg10[%c7_402, %c0_403, %c0_404] : memref<8x8x32xf32, #tpu.memory_space<vmem>>, vector<1x8x32xf32>
    %715 = vector.shape_cast %714 : vector<1x8x32xf32> to vector<8x32xf32>
    %716 = vector.broadcast %713 : f32 to vector<8x32xf32>
    %717 = arith.mulf %716, %715 : vector<8x32xf32>
    %718 = arith.addf %712, %717 : vector<8x32xf32>
    %cst_405 = arith.constant 0.000000e+00 : f32
    %719 = vector.broadcast %cst_405 : f32 to vector<8x32xf32>
    %720 = arith.maximumf %718, %719 : vector<8x32xf32>
    %c10_406 = arith.constant 10 : index
    %c0_407 = arith.constant 0 : index
    %c0_408 = arith.constant 0 : index
    %721 = vector.load %arg8[%c10_406, %c0_407, %c0_408] : memref<16x32x128xf32, #tpu.memory_space<vmem>>, vector<1x32x128xf32>
    %722 = vector.shape_cast %721 : vector<1x32x128xf32> to vector<32x128xf32>
    %cst_409 = arith.constant dense<0.000000e+00> : vector<8x128xf32>
    %723 = tpu.matmul %720, %722, %cst_409 {dimension_numbers = #tpu.dot_dimension_numbers<[1], [0], [0], [1], [0, 0, 1, 1], [], []>} : vector<8x32xf32>, vector<32x128xf32>, vector<8x128xf32> -> vector<8x128xf32>
    %724 = arith.addf %668, %723 : vector<8x128xf32>
    %c88 = arith.constant 88 : index
    %725 = memref.load %arg6[%c88] : memref<128xf32, #tpu.memory_space<smem>>
    %c0_410 = arith.constant 0 : index
    %c0_411 = arith.constant 0 : index
    %c0_412 = arith.constant 0 : index
    %726 = vector.load %arg10[%c0_410, %c0_411, %c0_412] : memref<8x8x32xf32, #tpu.memory_space<vmem>>, vector<1x8x32xf32>
    %727 = vector.shape_cast %726 : vector<1x8x32xf32> to vector<8x32xf32>
    %728 = vector.broadcast %725 : f32 to vector<8x32xf32>
    %729 = arith.mulf %728, %727 : vector<8x32xf32>
    %c11_413 = arith.constant 11 : index
    %730 = memref.load %arg7[%c11_413] : memref<16xf32, #tpu.memory_space<smem>>
    %731 = vector.broadcast %730 : f32 to vector<8x32xf32>
    %732 = arith.addf %729, %731 : vector<8x32xf32>
    %c89 = arith.constant 89 : index
    %733 = memref.load %arg6[%c89] : memref<128xf32, #tpu.memory_space<smem>>
    %c1_414 = arith.constant 1 : index
    %c0_415 = arith.constant 0 : index
    %c0_416 = arith.constant 0 : index
    %734 = vector.load %arg10[%c1_414, %c0_415, %c0_416] : memref<8x8x32xf32, #tpu.memory_space<vmem>>, vector<1x8x32xf32>
    %735 = vector.shape_cast %734 : vector<1x8x32xf32> to vector<8x32xf32>
    %736 = vector.broadcast %733 : f32 to vector<8x32xf32>
    %737 = arith.mulf %736, %735 : vector<8x32xf32>
    %738 = arith.addf %732, %737 : vector<8x32xf32>
    %c90 = arith.constant 90 : index
    %739 = memref.load %arg6[%c90] : memref<128xf32, #tpu.memory_space<smem>>
    %c2_417 = arith.constant 2 : index
    %c0_418 = arith.constant 0 : index
    %c0_419 = arith.constant 0 : index
    %740 = vector.load %arg10[%c2_417, %c0_418, %c0_419] : memref<8x8x32xf32, #tpu.memory_space<vmem>>, vector<1x8x32xf32>
    %741 = vector.shape_cast %740 : vector<1x8x32xf32> to vector<8x32xf32>
    %742 = vector.broadcast %739 : f32 to vector<8x32xf32>
    %743 = arith.mulf %742, %741 : vector<8x32xf32>
    %744 = arith.addf %738, %743 : vector<8x32xf32>
    %c91 = arith.constant 91 : index
    %745 = memref.load %arg6[%c91] : memref<128xf32, #tpu.memory_space<smem>>
    %c3_420 = arith.constant 3 : index
    %c0_421 = arith.constant 0 : index
    %c0_422 = arith.constant 0 : index
    %746 = vector.load %arg10[%c3_420, %c0_421, %c0_422] : memref<8x8x32xf32, #tpu.memory_space<vmem>>, vector<1x8x32xf32>
    %747 = vector.shape_cast %746 : vector<1x8x32xf32> to vector<8x32xf32>
    %748 = vector.broadcast %745 : f32 to vector<8x32xf32>
    %749 = arith.mulf %748, %747 : vector<8x32xf32>
    %750 = arith.addf %744, %749 : vector<8x32xf32>
    %c92 = arith.constant 92 : index
    %751 = memref.load %arg6[%c92] : memref<128xf32, #tpu.memory_space<smem>>
    %c4_423 = arith.constant 4 : index
    %c0_424 = arith.constant 0 : index
    %c0_425 = arith.constant 0 : index
    %752 = vector.load %arg10[%c4_423, %c0_424, %c0_425] : memref<8x8x32xf32, #tpu.memory_space<vmem>>, vector<1x8x32xf32>
    %753 = vector.shape_cast %752 : vector<1x8x32xf32> to vector<8x32xf32>
    %754 = vector.broadcast %751 : f32 to vector<8x32xf32>
    %755 = arith.mulf %754, %753 : vector<8x32xf32>
    %756 = arith.addf %750, %755 : vector<8x32xf32>
    %c93 = arith.constant 93 : index
    %757 = memref.load %arg6[%c93] : memref<128xf32, #tpu.memory_space<smem>>
    %c5_426 = arith.constant 5 : index
    %c0_427 = arith.constant 0 : index
    %c0_428 = arith.constant 0 : index
    %758 = vector.load %arg10[%c5_426, %c0_427, %c0_428] : memref<8x8x32xf32, #tpu.memory_space<vmem>>, vector<1x8x32xf32>
    %759 = vector.shape_cast %758 : vector<1x8x32xf32> to vector<8x32xf32>
    %760 = vector.broadcast %757 : f32 to vector<8x32xf32>
    %761 = arith.mulf %760, %759 : vector<8x32xf32>
    %762 = arith.addf %756, %761 : vector<8x32xf32>
    %c94 = arith.constant 94 : index
    %763 = memref.load %arg6[%c94] : memref<128xf32, #tpu.memory_space<smem>>
    %c6_429 = arith.constant 6 : index
    %c0_430 = arith.constant 0 : index
    %c0_431 = arith.constant 0 : index
    %764 = vector.load %arg10[%c6_429, %c0_430, %c0_431] : memref<8x8x32xf32, #tpu.memory_space<vmem>>, vector<1x8x32xf32>
    %765 = vector.shape_cast %764 : vector<1x8x32xf32> to vector<8x32xf32>
    %766 = vector.broadcast %763 : f32 to vector<8x32xf32>
    %767 = arith.mulf %766, %765 : vector<8x32xf32>
    %768 = arith.addf %762, %767 : vector<8x32xf32>
    %c95 = arith.constant 95 : index
    %769 = memref.load %arg6[%c95] : memref<128xf32, #tpu.memory_space<smem>>
    %c7_432 = arith.constant 7 : index
    %c0_433 = arith.constant 0 : index
    %c0_434 = arith.constant 0 : index
    %770 = vector.load %arg10[%c7_432, %c0_433, %c0_434] : memref<8x8x32xf32, #tpu.memory_space<vmem>>, vector<1x8x32xf32>
    %771 = vector.shape_cast %770 : vector<1x8x32xf32> to vector<8x32xf32>
    %772 = vector.broadcast %769 : f32 to vector<8x32xf32>
    %773 = arith.mulf %772, %771 : vector<8x32xf32>
    %774 = arith.addf %768, %773 : vector<8x32xf32>
    %cst_435 = arith.constant 0.000000e+00 : f32
    %775 = vector.broadcast %cst_435 : f32 to vector<8x32xf32>
    %776 = arith.maximumf %774, %775 : vector<8x32xf32>
    %c11_436 = arith.constant 11 : index
    %c0_437 = arith.constant 0 : index
    %c0_438 = arith.constant 0 : index
    %777 = vector.load %arg8[%c11_436, %c0_437, %c0_438] : memref<16x32x128xf32, #tpu.memory_space<vmem>>, vector<1x32x128xf32>
    %778 = vector.shape_cast %777 : vector<1x32x128xf32> to vector<32x128xf32>
    %cst_439 = arith.constant dense<0.000000e+00> : vector<8x128xf32>
    %779 = tpu.matmul %776, %778, %cst_439 {dimension_numbers = #tpu.dot_dimension_numbers<[1], [0], [0], [1], [0, 0, 1, 1], [], []>} : vector<8x32xf32>, vector<32x128xf32>, vector<8x128xf32> -> vector<8x128xf32>
    %780 = arith.addf %724, %779 : vector<8x128xf32>
    %c96 = arith.constant 96 : index
    %781 = memref.load %arg6[%c96] : memref<128xf32, #tpu.memory_space<smem>>
    %c0_440 = arith.constant 0 : index
    %c0_441 = arith.constant 0 : index
    %c0_442 = arith.constant 0 : index
    %782 = vector.load %arg10[%c0_440, %c0_441, %c0_442] : memref<8x8x32xf32, #tpu.memory_space<vmem>>, vector<1x8x32xf32>
    %783 = vector.shape_cast %782 : vector<1x8x32xf32> to vector<8x32xf32>
    %784 = vector.broadcast %781 : f32 to vector<8x32xf32>
    %785 = arith.mulf %784, %783 : vector<8x32xf32>
    %c12_443 = arith.constant 12 : index
    %786 = memref.load %arg7[%c12_443] : memref<16xf32, #tpu.memory_space<smem>>
    %787 = vector.broadcast %786 : f32 to vector<8x32xf32>
    %788 = arith.addf %785, %787 : vector<8x32xf32>
    %c97 = arith.constant 97 : index
    %789 = memref.load %arg6[%c97] : memref<128xf32, #tpu.memory_space<smem>>
    %c1_444 = arith.constant 1 : index
    %c0_445 = arith.constant 0 : index
    %c0_446 = arith.constant 0 : index
    %790 = vector.load %arg10[%c1_444, %c0_445, %c0_446] : memref<8x8x32xf32, #tpu.memory_space<vmem>>, vector<1x8x32xf32>
    %791 = vector.shape_cast %790 : vector<1x8x32xf32> to vector<8x32xf32>
    %792 = vector.broadcast %789 : f32 to vector<8x32xf32>
    %793 = arith.mulf %792, %791 : vector<8x32xf32>
    %794 = arith.addf %788, %793 : vector<8x32xf32>
    %c98 = arith.constant 98 : index
    %795 = memref.load %arg6[%c98] : memref<128xf32, #tpu.memory_space<smem>>
    %c2_447 = arith.constant 2 : index
    %c0_448 = arith.constant 0 : index
    %c0_449 = arith.constant 0 : index
    %796 = vector.load %arg10[%c2_447, %c0_448, %c0_449] : memref<8x8x32xf32, #tpu.memory_space<vmem>>, vector<1x8x32xf32>
    %797 = vector.shape_cast %796 : vector<1x8x32xf32> to vector<8x32xf32>
    %798 = vector.broadcast %795 : f32 to vector<8x32xf32>
    %799 = arith.mulf %798, %797 : vector<8x32xf32>
    %800 = arith.addf %794, %799 : vector<8x32xf32>
    %c99 = arith.constant 99 : index
    %801 = memref.load %arg6[%c99] : memref<128xf32, #tpu.memory_space<smem>>
    %c3_450 = arith.constant 3 : index
    %c0_451 = arith.constant 0 : index
    %c0_452 = arith.constant 0 : index
    %802 = vector.load %arg10[%c3_450, %c0_451, %c0_452] : memref<8x8x32xf32, #tpu.memory_space<vmem>>, vector<1x8x32xf32>
    %803 = vector.shape_cast %802 : vector<1x8x32xf32> to vector<8x32xf32>
    %804 = vector.broadcast %801 : f32 to vector<8x32xf32>
    %805 = arith.mulf %804, %803 : vector<8x32xf32>
    %806 = arith.addf %800, %805 : vector<8x32xf32>
    %c100 = arith.constant 100 : index
    %807 = memref.load %arg6[%c100] : memref<128xf32, #tpu.memory_space<smem>>
    %c4_453 = arith.constant 4 : index
    %c0_454 = arith.constant 0 : index
    %c0_455 = arith.constant 0 : index
    %808 = vector.load %arg10[%c4_453, %c0_454, %c0_455] : memref<8x8x32xf32, #tpu.memory_space<vmem>>, vector<1x8x32xf32>
    %809 = vector.shape_cast %808 : vector<1x8x32xf32> to vector<8x32xf32>
    %810 = vector.broadcast %807 : f32 to vector<8x32xf32>
    %811 = arith.mulf %810, %809 : vector<8x32xf32>
    %812 = arith.addf %806, %811 : vector<8x32xf32>
    %c101 = arith.constant 101 : index
    %813 = memref.load %arg6[%c101] : memref<128xf32, #tpu.memory_space<smem>>
    %c5_456 = arith.constant 5 : index
    %c0_457 = arith.constant 0 : index
    %c0_458 = arith.constant 0 : index
    %814 = vector.load %arg10[%c5_456, %c0_457, %c0_458] : memref<8x8x32xf32, #tpu.memory_space<vmem>>, vector<1x8x32xf32>
    %815 = vector.shape_cast %814 : vector<1x8x32xf32> to vector<8x32xf32>
    %816 = vector.broadcast %813 : f32 to vector<8x32xf32>
    %817 = arith.mulf %816, %815 : vector<8x32xf32>
    %818 = arith.addf %812, %817 : vector<8x32xf32>
    %c102 = arith.constant 102 : index
    %819 = memref.load %arg6[%c102] : memref<128xf32, #tpu.memory_space<smem>>
    %c6_459 = arith.constant 6 : index
    %c0_460 = arith.constant 0 : index
    %c0_461 = arith.constant 0 : index
    %820 = vector.load %arg10[%c6_459, %c0_460, %c0_461] : memref<8x8x32xf32, #tpu.memory_space<vmem>>, vector<1x8x32xf32>
    %821 = vector.shape_cast %820 : vector<1x8x32xf32> to vector<8x32xf32>
    %822 = vector.broadcast %819 : f32 to vector<8x32xf32>
    %823 = arith.mulf %822, %821 : vector<8x32xf32>
    %824 = arith.addf %818, %823 : vector<8x32xf32>
    %c103 = arith.constant 103 : index
    %825 = memref.load %arg6[%c103] : memref<128xf32, #tpu.memory_space<smem>>
    %c7_462 = arith.constant 7 : index
    %c0_463 = arith.constant 0 : index
    %c0_464 = arith.constant 0 : index
    %826 = vector.load %arg10[%c7_462, %c0_463, %c0_464] : memref<8x8x32xf32, #tpu.memory_space<vmem>>, vector<1x8x32xf32>
    %827 = vector.shape_cast %826 : vector<1x8x32xf32> to vector<8x32xf32>
    %828 = vector.broadcast %825 : f32 to vector<8x32xf32>
    %829 = arith.mulf %828, %827 : vector<8x32xf32>
    %830 = arith.addf %824, %829 : vector<8x32xf32>
    %cst_465 = arith.constant 0.000000e+00 : f32
    %831 = vector.broadcast %cst_465 : f32 to vector<8x32xf32>
    %832 = arith.maximumf %830, %831 : vector<8x32xf32>
    %c12_466 = arith.constant 12 : index
    %c0_467 = arith.constant 0 : index
    %c0_468 = arith.constant 0 : index
    %833 = vector.load %arg8[%c12_466, %c0_467, %c0_468] : memref<16x32x128xf32, #tpu.memory_space<vmem>>, vector<1x32x128xf32>
    %834 = vector.shape_cast %833 : vector<1x32x128xf32> to vector<32x128xf32>
    %cst_469 = arith.constant dense<0.000000e+00> : vector<8x128xf32>
    %835 = tpu.matmul %832, %834, %cst_469 {dimension_numbers = #tpu.dot_dimension_numbers<[1], [0], [0], [1], [0, 0, 1, 1], [], []>} : vector<8x32xf32>, vector<32x128xf32>, vector<8x128xf32> -> vector<8x128xf32>
    %836 = arith.addf %780, %835 : vector<8x128xf32>
    %c104 = arith.constant 104 : index
    %837 = memref.load %arg6[%c104] : memref<128xf32, #tpu.memory_space<smem>>
    %c0_470 = arith.constant 0 : index
    %c0_471 = arith.constant 0 : index
    %c0_472 = arith.constant 0 : index
    %838 = vector.load %arg10[%c0_470, %c0_471, %c0_472] : memref<8x8x32xf32, #tpu.memory_space<vmem>>, vector<1x8x32xf32>
    %839 = vector.shape_cast %838 : vector<1x8x32xf32> to vector<8x32xf32>
    %840 = vector.broadcast %837 : f32 to vector<8x32xf32>
    %841 = arith.mulf %840, %839 : vector<8x32xf32>
    %c13_473 = arith.constant 13 : index
    %842 = memref.load %arg7[%c13_473] : memref<16xf32, #tpu.memory_space<smem>>
    %843 = vector.broadcast %842 : f32 to vector<8x32xf32>
    %844 = arith.addf %841, %843 : vector<8x32xf32>
    %c105 = arith.constant 105 : index
    %845 = memref.load %arg6[%c105] : memref<128xf32, #tpu.memory_space<smem>>
    %c1_474 = arith.constant 1 : index
    %c0_475 = arith.constant 0 : index
    %c0_476 = arith.constant 0 : index
    %846 = vector.load %arg10[%c1_474, %c0_475, %c0_476] : memref<8x8x32xf32, #tpu.memory_space<vmem>>, vector<1x8x32xf32>
    %847 = vector.shape_cast %846 : vector<1x8x32xf32> to vector<8x32xf32>
    %848 = vector.broadcast %845 : f32 to vector<8x32xf32>
    %849 = arith.mulf %848, %847 : vector<8x32xf32>
    %850 = arith.addf %844, %849 : vector<8x32xf32>
    %c106 = arith.constant 106 : index
    %851 = memref.load %arg6[%c106] : memref<128xf32, #tpu.memory_space<smem>>
    %c2_477 = arith.constant 2 : index
    %c0_478 = arith.constant 0 : index
    %c0_479 = arith.constant 0 : index
    %852 = vector.load %arg10[%c2_477, %c0_478, %c0_479] : memref<8x8x32xf32, #tpu.memory_space<vmem>>, vector<1x8x32xf32>
    %853 = vector.shape_cast %852 : vector<1x8x32xf32> to vector<8x32xf32>
    %854 = vector.broadcast %851 : f32 to vector<8x32xf32>
    %855 = arith.mulf %854, %853 : vector<8x32xf32>
    %856 = arith.addf %850, %855 : vector<8x32xf32>
    %c107 = arith.constant 107 : index
    %857 = memref.load %arg6[%c107] : memref<128xf32, #tpu.memory_space<smem>>
    %c3_480 = arith.constant 3 : index
    %c0_481 = arith.constant 0 : index
    %c0_482 = arith.constant 0 : index
    %858 = vector.load %arg10[%c3_480, %c0_481, %c0_482] : memref<8x8x32xf32, #tpu.memory_space<vmem>>, vector<1x8x32xf32>
    %859 = vector.shape_cast %858 : vector<1x8x32xf32> to vector<8x32xf32>
    %860 = vector.broadcast %857 : f32 to vector<8x32xf32>
    %861 = arith.mulf %860, %859 : vector<8x32xf32>
    %862 = arith.addf %856, %861 : vector<8x32xf32>
    %c108 = arith.constant 108 : index
    %863 = memref.load %arg6[%c108] : memref<128xf32, #tpu.memory_space<smem>>
    %c4_483 = arith.constant 4 : index
    %c0_484 = arith.constant 0 : index
    %c0_485 = arith.constant 0 : index
    %864 = vector.load %arg10[%c4_483, %c0_484, %c0_485] : memref<8x8x32xf32, #tpu.memory_space<vmem>>, vector<1x8x32xf32>
    %865 = vector.shape_cast %864 : vector<1x8x32xf32> to vector<8x32xf32>
    %866 = vector.broadcast %863 : f32 to vector<8x32xf32>
    %867 = arith.mulf %866, %865 : vector<8x32xf32>
    %868 = arith.addf %862, %867 : vector<8x32xf32>
    %c109 = arith.constant 109 : index
    %869 = memref.load %arg6[%c109] : memref<128xf32, #tpu.memory_space<smem>>
    %c5_486 = arith.constant 5 : index
    %c0_487 = arith.constant 0 : index
    %c0_488 = arith.constant 0 : index
    %870 = vector.load %arg10[%c5_486, %c0_487, %c0_488] : memref<8x8x32xf32, #tpu.memory_space<vmem>>, vector<1x8x32xf32>
    %871 = vector.shape_cast %870 : vector<1x8x32xf32> to vector<8x32xf32>
    %872 = vector.broadcast %869 : f32 to vector<8x32xf32>
    %873 = arith.mulf %872, %871 : vector<8x32xf32>
    %874 = arith.addf %868, %873 : vector<8x32xf32>
    %c110 = arith.constant 110 : index
    %875 = memref.load %arg6[%c110] : memref<128xf32, #tpu.memory_space<smem>>
    %c6_489 = arith.constant 6 : index
    %c0_490 = arith.constant 0 : index
    %c0_491 = arith.constant 0 : index
    %876 = vector.load %arg10[%c6_489, %c0_490, %c0_491] : memref<8x8x32xf32, #tpu.memory_space<vmem>>, vector<1x8x32xf32>
    %877 = vector.shape_cast %876 : vector<1x8x32xf32> to vector<8x32xf32>
    %878 = vector.broadcast %875 : f32 to vector<8x32xf32>
    %879 = arith.mulf %878, %877 : vector<8x32xf32>
    %880 = arith.addf %874, %879 : vector<8x32xf32>
    %c111 = arith.constant 111 : index
    %881 = memref.load %arg6[%c111] : memref<128xf32, #tpu.memory_space<smem>>
    %c7_492 = arith.constant 7 : index
    %c0_493 = arith.constant 0 : index
    %c0_494 = arith.constant 0 : index
    %882 = vector.load %arg10[%c7_492, %c0_493, %c0_494] : memref<8x8x32xf32, #tpu.memory_space<vmem>>, vector<1x8x32xf32>
    %883 = vector.shape_cast %882 : vector<1x8x32xf32> to vector<8x32xf32>
    %884 = vector.broadcast %881 : f32 to vector<8x32xf32>
    %885 = arith.mulf %884, %883 : vector<8x32xf32>
    %886 = arith.addf %880, %885 : vector<8x32xf32>
    %cst_495 = arith.constant 0.000000e+00 : f32
    %887 = vector.broadcast %cst_495 : f32 to vector<8x32xf32>
    %888 = arith.maximumf %886, %887 : vector<8x32xf32>
    %c13_496 = arith.constant 13 : index
    %c0_497 = arith.constant 0 : index
    %c0_498 = arith.constant 0 : index
    %889 = vector.load %arg8[%c13_496, %c0_497, %c0_498] : memref<16x32x128xf32, #tpu.memory_space<vmem>>, vector<1x32x128xf32>
    %890 = vector.shape_cast %889 : vector<1x32x128xf32> to vector<32x128xf32>
    %cst_499 = arith.constant dense<0.000000e+00> : vector<8x128xf32>
    %891 = tpu.matmul %888, %890, %cst_499 {dimension_numbers = #tpu.dot_dimension_numbers<[1], [0], [0], [1], [0, 0, 1, 1], [], []>} : vector<8x32xf32>, vector<32x128xf32>, vector<8x128xf32> -> vector<8x128xf32>
    %892 = arith.addf %836, %891 : vector<8x128xf32>
    %c112 = arith.constant 112 : index
    %893 = memref.load %arg6[%c112] : memref<128xf32, #tpu.memory_space<smem>>
    %c0_500 = arith.constant 0 : index
    %c0_501 = arith.constant 0 : index
    %c0_502 = arith.constant 0 : index
    %894 = vector.load %arg10[%c0_500, %c0_501, %c0_502] : memref<8x8x32xf32, #tpu.memory_space<vmem>>, vector<1x8x32xf32>
    %895 = vector.shape_cast %894 : vector<1x8x32xf32> to vector<8x32xf32>
    %896 = vector.broadcast %893 : f32 to vector<8x32xf32>
    %897 = arith.mulf %896, %895 : vector<8x32xf32>
    %c14_503 = arith.constant 14 : index
    %898 = memref.load %arg7[%c14_503] : memref<16xf32, #tpu.memory_space<smem>>
    %899 = vector.broadcast %898 : f32 to vector<8x32xf32>
    %900 = arith.addf %897, %899 : vector<8x32xf32>
    %c113 = arith.constant 113 : index
    %901 = memref.load %arg6[%c113] : memref<128xf32, #tpu.memory_space<smem>>
    %c1_504 = arith.constant 1 : index
    %c0_505 = arith.constant 0 : index
    %c0_506 = arith.constant 0 : index
    %902 = vector.load %arg10[%c1_504, %c0_505, %c0_506] : memref<8x8x32xf32, #tpu.memory_space<vmem>>, vector<1x8x32xf32>
    %903 = vector.shape_cast %902 : vector<1x8x32xf32> to vector<8x32xf32>
    %904 = vector.broadcast %901 : f32 to vector<8x32xf32>
    %905 = arith.mulf %904, %903 : vector<8x32xf32>
    %906 = arith.addf %900, %905 : vector<8x32xf32>
    %c114 = arith.constant 114 : index
    %907 = memref.load %arg6[%c114] : memref<128xf32, #tpu.memory_space<smem>>
    %c2_507 = arith.constant 2 : index
    %c0_508 = arith.constant 0 : index
    %c0_509 = arith.constant 0 : index
    %908 = vector.load %arg10[%c2_507, %c0_508, %c0_509] : memref<8x8x32xf32, #tpu.memory_space<vmem>>, vector<1x8x32xf32>
    %909 = vector.shape_cast %908 : vector<1x8x32xf32> to vector<8x32xf32>
    %910 = vector.broadcast %907 : f32 to vector<8x32xf32>
    %911 = arith.mulf %910, %909 : vector<8x32xf32>
    %912 = arith.addf %906, %911 : vector<8x32xf32>
    %c115 = arith.constant 115 : index
    %913 = memref.load %arg6[%c115] : memref<128xf32, #tpu.memory_space<smem>>
    %c3_510 = arith.constant 3 : index
    %c0_511 = arith.constant 0 : index
    %c0_512 = arith.constant 0 : index
    %914 = vector.load %arg10[%c3_510, %c0_511, %c0_512] : memref<8x8x32xf32, #tpu.memory_space<vmem>>, vector<1x8x32xf32>
    %915 = vector.shape_cast %914 : vector<1x8x32xf32> to vector<8x32xf32>
    %916 = vector.broadcast %913 : f32 to vector<8x32xf32>
    %917 = arith.mulf %916, %915 : vector<8x32xf32>
    %918 = arith.addf %912, %917 : vector<8x32xf32>
    %c116 = arith.constant 116 : index
    %919 = memref.load %arg6[%c116] : memref<128xf32, #tpu.memory_space<smem>>
    %c4_513 = arith.constant 4 : index
    %c0_514 = arith.constant 0 : index
    %c0_515 = arith.constant 0 : index
    %920 = vector.load %arg10[%c4_513, %c0_514, %c0_515] : memref<8x8x32xf32, #tpu.memory_space<vmem>>, vector<1x8x32xf32>
    %921 = vector.shape_cast %920 : vector<1x8x32xf32> to vector<8x32xf32>
    %922 = vector.broadcast %919 : f32 to vector<8x32xf32>
    %923 = arith.mulf %922, %921 : vector<8x32xf32>
    %924 = arith.addf %918, %923 : vector<8x32xf32>
    %c117 = arith.constant 117 : index
    %925 = memref.load %arg6[%c117] : memref<128xf32, #tpu.memory_space<smem>>
    %c5_516 = arith.constant 5 : index
    %c0_517 = arith.constant 0 : index
    %c0_518 = arith.constant 0 : index
    %926 = vector.load %arg10[%c5_516, %c0_517, %c0_518] : memref<8x8x32xf32, #tpu.memory_space<vmem>>, vector<1x8x32xf32>
    %927 = vector.shape_cast %926 : vector<1x8x32xf32> to vector<8x32xf32>
    %928 = vector.broadcast %925 : f32 to vector<8x32xf32>
    %929 = arith.mulf %928, %927 : vector<8x32xf32>
    %930 = arith.addf %924, %929 : vector<8x32xf32>
    %c118 = arith.constant 118 : index
    %931 = memref.load %arg6[%c118] : memref<128xf32, #tpu.memory_space<smem>>
    %c6_519 = arith.constant 6 : index
    %c0_520 = arith.constant 0 : index
    %c0_521 = arith.constant 0 : index
    %932 = vector.load %arg10[%c6_519, %c0_520, %c0_521] : memref<8x8x32xf32, #tpu.memory_space<vmem>>, vector<1x8x32xf32>
    %933 = vector.shape_cast %932 : vector<1x8x32xf32> to vector<8x32xf32>
    %934 = vector.broadcast %931 : f32 to vector<8x32xf32>
    %935 = arith.mulf %934, %933 : vector<8x32xf32>
    %936 = arith.addf %930, %935 : vector<8x32xf32>
    %c119 = arith.constant 119 : index
    %937 = memref.load %arg6[%c119] : memref<128xf32, #tpu.memory_space<smem>>
    %c7_522 = arith.constant 7 : index
    %c0_523 = arith.constant 0 : index
    %c0_524 = arith.constant 0 : index
    %938 = vector.load %arg10[%c7_522, %c0_523, %c0_524] : memref<8x8x32xf32, #tpu.memory_space<vmem>>, vector<1x8x32xf32>
    %939 = vector.shape_cast %938 : vector<1x8x32xf32> to vector<8x32xf32>
    %940 = vector.broadcast %937 : f32 to vector<8x32xf32>
    %941 = arith.mulf %940, %939 : vector<8x32xf32>
    %942 = arith.addf %936, %941 : vector<8x32xf32>
    %cst_525 = arith.constant 0.000000e+00 : f32
    %943 = vector.broadcast %cst_525 : f32 to vector<8x32xf32>
    %944 = arith.maximumf %942, %943 : vector<8x32xf32>
    %c14_526 = arith.constant 14 : index
    %c0_527 = arith.constant 0 : index
    %c0_528 = arith.constant 0 : index
    %945 = vector.load %arg8[%c14_526, %c0_527, %c0_528] : memref<16x32x128xf32, #tpu.memory_space<vmem>>, vector<1x32x128xf32>
    %946 = vector.shape_cast %945 : vector<1x32x128xf32> to vector<32x128xf32>
    %cst_529 = arith.constant dense<0.000000e+00> : vector<8x128xf32>
    %947 = tpu.matmul %944, %946, %cst_529 {dimension_numbers = #tpu.dot_dimension_numbers<[1], [0], [0], [1], [0, 0, 1, 1], [], []>} : vector<8x32xf32>, vector<32x128xf32>, vector<8x128xf32> -> vector<8x128xf32>
    %948 = arith.addf %892, %947 : vector<8x128xf32>
    %c120 = arith.constant 120 : index
    %949 = memref.load %arg6[%c120] : memref<128xf32, #tpu.memory_space<smem>>
    %c0_530 = arith.constant 0 : index
    %c0_531 = arith.constant 0 : index
    %c0_532 = arith.constant 0 : index
    %950 = vector.load %arg10[%c0_530, %c0_531, %c0_532] : memref<8x8x32xf32, #tpu.memory_space<vmem>>, vector<1x8x32xf32>
    %951 = vector.shape_cast %950 : vector<1x8x32xf32> to vector<8x32xf32>
    %952 = vector.broadcast %949 : f32 to vector<8x32xf32>
    %953 = arith.mulf %952, %951 : vector<8x32xf32>
    %c15_533 = arith.constant 15 : index
    %954 = memref.load %arg7[%c15_533] : memref<16xf32, #tpu.memory_space<smem>>
    %955 = vector.broadcast %954 : f32 to vector<8x32xf32>
    %956 = arith.addf %953, %955 : vector<8x32xf32>
    %c121 = arith.constant 121 : index
    %957 = memref.load %arg6[%c121] : memref<128xf32, #tpu.memory_space<smem>>
    %c1_534 = arith.constant 1 : index
    %c0_535 = arith.constant 0 : index
    %c0_536 = arith.constant 0 : index
    %958 = vector.load %arg10[%c1_534, %c0_535, %c0_536] : memref<8x8x32xf32, #tpu.memory_space<vmem>>, vector<1x8x32xf32>
    %959 = vector.shape_cast %958 : vector<1x8x32xf32> to vector<8x32xf32>
    %960 = vector.broadcast %957 : f32 to vector<8x32xf32>
    %961 = arith.mulf %960, %959 : vector<8x32xf32>
    %962 = arith.addf %956, %961 : vector<8x32xf32>
    %c122 = arith.constant 122 : index
    %963 = memref.load %arg6[%c122] : memref<128xf32, #tpu.memory_space<smem>>
    %c2_537 = arith.constant 2 : index
    %c0_538 = arith.constant 0 : index
    %c0_539 = arith.constant 0 : index
    %964 = vector.load %arg10[%c2_537, %c0_538, %c0_539] : memref<8x8x32xf32, #tpu.memory_space<vmem>>, vector<1x8x32xf32>
    %965 = vector.shape_cast %964 : vector<1x8x32xf32> to vector<8x32xf32>
    %966 = vector.broadcast %963 : f32 to vector<8x32xf32>
    %967 = arith.mulf %966, %965 : vector<8x32xf32>
    %968 = arith.addf %962, %967 : vector<8x32xf32>
    %c123 = arith.constant 123 : index
    %969 = memref.load %arg6[%c123] : memref<128xf32, #tpu.memory_space<smem>>
    %c3_540 = arith.constant 3 : index
    %c0_541 = arith.constant 0 : index
    %c0_542 = arith.constant 0 : index
    %970 = vector.load %arg10[%c3_540, %c0_541, %c0_542] : memref<8x8x32xf32, #tpu.memory_space<vmem>>, vector<1x8x32xf32>
    %971 = vector.shape_cast %970 : vector<1x8x32xf32> to vector<8x32xf32>
    %972 = vector.broadcast %969 : f32 to vector<8x32xf32>
    %973 = arith.mulf %972, %971 : vector<8x32xf32>
    %974 = arith.addf %968, %973 : vector<8x32xf32>
    %c124 = arith.constant 124 : index
    %975 = memref.load %arg6[%c124] : memref<128xf32, #tpu.memory_space<smem>>
    %c4_543 = arith.constant 4 : index
    %c0_544 = arith.constant 0 : index
    %c0_545 = arith.constant 0 : index
    %976 = vector.load %arg10[%c4_543, %c0_544, %c0_545] : memref<8x8x32xf32, #tpu.memory_space<vmem>>, vector<1x8x32xf32>
    %977 = vector.shape_cast %976 : vector<1x8x32xf32> to vector<8x32xf32>
    %978 = vector.broadcast %975 : f32 to vector<8x32xf32>
    %979 = arith.mulf %978, %977 : vector<8x32xf32>
    %980 = arith.addf %974, %979 : vector<8x32xf32>
    %c125 = arith.constant 125 : index
    %981 = memref.load %arg6[%c125] : memref<128xf32, #tpu.memory_space<smem>>
    %c5_546 = arith.constant 5 : index
    %c0_547 = arith.constant 0 : index
    %c0_548 = arith.constant 0 : index
    %982 = vector.load %arg10[%c5_546, %c0_547, %c0_548] : memref<8x8x32xf32, #tpu.memory_space<vmem>>, vector<1x8x32xf32>
    %983 = vector.shape_cast %982 : vector<1x8x32xf32> to vector<8x32xf32>
    %984 = vector.broadcast %981 : f32 to vector<8x32xf32>
    %985 = arith.mulf %984, %983 : vector<8x32xf32>
    %986 = arith.addf %980, %985 : vector<8x32xf32>
    %c126 = arith.constant 126 : index
    %987 = memref.load %arg6[%c126] : memref<128xf32, #tpu.memory_space<smem>>
    %c6_549 = arith.constant 6 : index
    %c0_550 = arith.constant 0 : index
    %c0_551 = arith.constant 0 : index
    %988 = vector.load %arg10[%c6_549, %c0_550, %c0_551] : memref<8x8x32xf32, #tpu.memory_space<vmem>>, vector<1x8x32xf32>
    %989 = vector.shape_cast %988 : vector<1x8x32xf32> to vector<8x32xf32>
    %990 = vector.broadcast %987 : f32 to vector<8x32xf32>
    %991 = arith.mulf %990, %989 : vector<8x32xf32>
    %992 = arith.addf %986, %991 : vector<8x32xf32>
    %c127 = arith.constant 127 : index
    %993 = memref.load %arg6[%c127] : memref<128xf32, #tpu.memory_space<smem>>
    %c7_552 = arith.constant 7 : index
    %c0_553 = arith.constant 0 : index
    %c0_554 = arith.constant 0 : index
    %994 = vector.load %arg10[%c7_552, %c0_553, %c0_554] : memref<8x8x32xf32, #tpu.memory_space<vmem>>, vector<1x8x32xf32>
    %995 = vector.shape_cast %994 : vector<1x8x32xf32> to vector<8x32xf32>
    %996 = vector.broadcast %993 : f32 to vector<8x32xf32>
    %997 = arith.mulf %996, %995 : vector<8x32xf32>
    %998 = arith.addf %992, %997 : vector<8x32xf32>
    %cst_555 = arith.constant 0.000000e+00 : f32
    %999 = vector.broadcast %cst_555 : f32 to vector<8x32xf32>
    %1000 = arith.maximumf %998, %999 : vector<8x32xf32>
    %c15_556 = arith.constant 15 : index
    %c0_557 = arith.constant 0 : index
    %c0_558 = arith.constant 0 : index
    %1001 = vector.load %arg8[%c15_556, %c0_557, %c0_558] : memref<16x32x128xf32, #tpu.memory_space<vmem>>, vector<1x32x128xf32>
    %1002 = vector.shape_cast %1001 : vector<1x32x128xf32> to vector<32x128xf32>
    %cst_559 = arith.constant dense<0.000000e+00> : vector<8x128xf32>
    %1003 = tpu.matmul %1000, %1002, %cst_559 {dimension_numbers = #tpu.dot_dimension_numbers<[1], [0], [0], [1], [0, 0, 1, 1], [], []>} : vector<8x32xf32>, vector<32x128xf32>, vector<8x128xf32> -> vector<8x128xf32>
    %1004 = arith.addf %948, %1003 : vector<8x128xf32>
    %c0_560 = arith.constant 0 : index
    %c0_561 = arith.constant 0 : index
    %1005 = vector.load %arg9[%c0_560, %c0_561] : memref<8x128xf32, #tpu.memory_space<vmem>>, vector<8x128xf32>
    tpu.vector_store %arg9[%c0_560, %c0_561], %1004 {strides = array<i32>} : memref<8x128xf32, #tpu.memory_space<vmem>>, vector<8x128xf32>,
    return
  }
  func.func @transform_0(%arg0: i32) -> (i32, i32, i32) {
    %c0_i32 = arith.constant 0 : i32
    %c0_i32_0 = arith.constant 0 : i32
    %c0_i32_1 = arith.constant 0 : i32
    return %c0_i32, %arg0, %c0_i32_0 : i32, i32, i32
  }
  func.func @transform_1(%arg0: i32) -> (i32, i32) {
    %c0_i32 = arith.constant 0 : i32
    %c0_i32_0 = arith.constant 0 : i32
    %c0_i32_1 = arith.constant 0 : i32
    return %c0_i32, %c0_i32_0 : i32, i32
  }
  func.func @transform_2(%arg0: i32) -> (i32, i32) {
    %c0_i32 = arith.constant 0 : i32
    %c0_i32_0 = arith.constant 0 : i32
    %c0_i32_1 = arith.constant 0 : i32
    return %c0_i32, %c0_i32_0 : i32, i32
  }
  func.func @transform_3(%arg0: i32) -> (i32, i32) {
    %c0_i32 = arith.constant 0 : i32
    %c0_i32_0 = arith.constant 0 : i32
    %c0_i32_1 = arith.constant 0 : i32
    return %c0_i32, %c0_i32_0 : i32, i32
  }
  func.func @transform_4(%arg0: i32) -> (i32, i32) {
    %c0_i32 = arith.constant 0 : i32
    %c0_i32_0 = arith.constant 0 : i32
    %c0_i32_1 = arith.constant 0 : i32
    return %c0_i32, %c0_i32_0 : i32, i32
  }
  func.func @transform_5(%arg0: i32) -> i32 {
    %c0_i32 = arith.constant 0 : i32
    %c0_i32_0 = arith.constant 0 : i32
    return %c0_i32 : i32
  }
  func.func @transform_6(%arg0: i32) -> i32 {
    %c0_i32 = arith.constant 0 : i32
    %c0_i32_0 = arith.constant 0 : i32
    return %c0_i32 : i32
  }
  func.func @transform_7(%arg0: i32) -> (i32, i32, i32) {
    %c0_i32 = arith.constant 0 : i32
    %c0_i32_0 = arith.constant 0 : i32
    %c0_i32_1 = arith.constant 0 : i32
    %c0_i32_2 = arith.constant 0 : i32
    return %c0_i32, %c0_i32_0, %c0_i32_1 : i32, i32, i32
  }
  func.func @transform_8(%arg0: i32) -> (i32, i32) {
    %c0_i32 = arith.constant 0 : i32
    %c0_i32_0 = arith.constant 0 : i32
    return %arg0, %c0_i32 : i32, i32
  }
}

</mosaic_0001>

<llo_original>
// kernel: tpu_custom_call.1
$region0: #{tpu_custom_call.1}
  #allocation0 [shape = 'u32[]', space=smem, size = 0x4, offset = 0x4, fixed_abs, tag = 'smem constant byte address 0x4 - core index']
  #allocation1 [shape = 'u32[72,128]{1,0:T(1,128)}', space=vmem, size = 0x9000, scoped, tag = 'internal scratch']
  #allocation2 [shape = 'f32[8,8,32]{2,1,0:T(8,128)}', space=vmem, size = 0x8000, scoped, tag = 'scratch operand']
  %s0 = inlined_call_operand.hbm [shape: f32[8,8,16], index: 0, kind: input, shape index: {}]
  %s1 = inlined_call_operand.hbm [shape: f32[16,32], index: 1, kind: input, shape index: {}]
  %s2 = inlined_call_operand.vmem [shape: f32[1,32], index: 2, kind: input, shape index: {}]
  %s3 = inlined_call_operand.hbm [shape: f32[32,32], index: 3, kind: input, shape index: {}]
  %s4 = inlined_call_operand.vmem [shape: f32[1,32], index: 4, kind: input, shape index: {}]
  %s5 = inlined_call_operand.vmem [shape: f32[128], index: 5, kind: input, shape index: {}]
  %s6 = inlined_call_operand.vmem [shape: f32[16], index: 6, kind: input, shape index: {}]
  %s7 = inlined_call_operand.hbm [shape: f32[16,32,128], index: 7, kind: input, shape index: {}]
  %s8 = inlined_call_operand.hbm [shape: f32[8,128], index: 8, kind: output, shape index: {}]
  %s9 = sld [smem:[#allocation0]]
  $region66: #{tpu_custom_call.1} parent=0
    _
  %s11 = ssub.s32 1, %s9
  %s12 = scalar_select 0, %s11, %s9
  $region1: #{tpu_custom_call.1} parent=0
    #allocation3 [shape = 'u8[32768]{0}', space=vmem, size = 0x8000, scoped, tag = 'input window, operand 0, single buffered']
    #allocation4 [shape = 's32[1]{0}', space=sflag, size = 0x4, scoped, tag = 'scoped memory for tpu_custom_call.1']
    #allocation5 [shape = 's32[1]{0}', space=sflag, size = 0x4, scoped, tag = 'scoped memory for tpu_custom_call.1']
    #allocation6 [shape = 's32[1]{0}', space=sflag, size = 0x4, scoped, tag = 'scoped memory for tpu_custom_call.1']
    #allocation7 [shape = 'u8[8192]{0}', space=vmem, size = 0x2000, scoped, tag = 'input window, operand 1, single buffered']
    #allocation8 [shape = 's32[1]{0}', space=sflag, size = 0x4, scoped, tag = 'scoped memory for tpu_custom_call.1']
    #allocation9 [shape = 'u8[16384]{0}', space=vmem, size = 0x4000, scoped, tag = 'input window, operand 3, single buffered']
    #allocation10 [shape = 'u8[512]{0}', space=smem, size = 0x200, scoped, tag = 'input window, operand 5, single buffered']
    #allocation11 [shape = 'u8[512]{0}', space=smem, size = 0x200, scoped, tag = 'input window, operand 6, single buffered']
    #allocation12 [shape = 's32[1]{0}', space=sflag, size = 0x4, scoped, tag = 'scoped memory for tpu_custom_call.1']
    #allocation13 [shape = 'u8[262144]{0}', space=vmem, size = 0x40000, scoped, tag = 'input window, operand 7, single buffered']
    #allocation14 [shape = 's32[1]{0}', space=sflag, size = 0x4, scoped, tag = 'scoped memory for tpu_custom_call.1']
    #allocation15 [shape = 'u8[4096]{0}', space=vmem, size = 0x1000, scoped, tag = 'output window, operand 0, single buffered']
    %13 = vsyncpa [#allocation4], 0
    %14 = vsyncpa [#allocation8], 0
    %15 = vsyncpa [#allocation6], 0
    %16 = vsyncpa [#allocation12], 0
    %17 = vsyncpa [#allocation14], 0
    %18 = vsyncpa [#allocation5], 0
    // Predicated region
    $region2: #{tpu_custom_call.1} parent=1 // pred_check
      _
    $region3: #{tpu_custom_call.1} parent=1 // pred_check_branch
      %20 = sbr.rel (0) target = $region5
    $region4: #{tpu_custom_call.1} parent=1 // pred_region
      %22 = vsyncadd [#allocation4], 0
      %s23 = sshll.u32 %s0, 4
      %s24 = int_to_ptr.hbm [resolvable:$true] %s23
      %s25 = sshll.u32 [#allocation3], 4
      %s26 = int_to_ptr.vmem [resolvable:$true] %s25
      %31 = dma.hbm_to_vmem [thread:$0]  %s24, 1024, %s26, [#allocation4], 128, 128, 8
    $region5: #{tpu_custom_call.1} parent=1 // pred_fallthru
      _
    // Predicated region
    $region6: #{tpu_custom_call.1} parent=1 // pred_check
      _
    $region7: #{tpu_custom_call.1} parent=1 // pred_check_branch
      %33 = sbr.rel (0) target = $region9
    $region8: #{tpu_custom_call.1} parent=1 // pred_region
      %35 = vsyncadd [#allocation8], 0
      %s36 = sshll.u32 %s1, 4
      %s37 = int_to_ptr.hbm [resolvable:$true] %s36
      %s38 = sshll.u32 [#allocation7], 4
      %s39 = int_to_ptr.vmem [resolvable:$true] %s38
      %44 = dma.hbm_to_vmem [thread:$0]  %s37, 256, %s39, [#allocation8], 128, 128, 8
    $region9: #{tpu_custom_call.1} parent=1 // pred_fallthru
      _
    // Predicated region
    $region10: #{tpu_custom_call.1} parent=1 // pred_check
      _
    $region11: #{tpu_custom_call.1} parent=1 // pred_check_branch
      %46 = sbr.rel (0) target = $region13
    $region12: #{tpu_custom_call.1} parent=1 // pred_region
      _
    $region13: #{tpu_custom_call.1} parent=1 // pred_fallthru
      _
    // Predicated region
    $region14: #{tpu_custom_call.1} parent=1 // pred_check
      _
    $region15: #{tpu_custom_call.1} parent=1 // pred_check_branch
      %48 = sbr.rel (0) target = $region17
    $region16: #{tpu_custom_call.1} parent=1 // pred_region
      %50 = vsyncadd [#allocation8], 0
      %s51 = sshll.u32 %s3, 4
      %s52 = int_to_ptr.hbm [resolvable:$true] %s51
      %s53 = sshll.u32 [#allocation9], 4
      %s54 = int_to_ptr.vmem [resolvable:$true] %s53
      %59 = dma.hbm_to_vmem [thread:$0]  %s52, 512, %s54, [#allocation8], 128, 128, 8
    $region17: #{tpu_custom_call.1} parent=1 // pred_fallthru
      _
    // Predicated region
    $region18: #{tpu_custom_call.1} parent=1 // pred_check
      _
    $region19: #{tpu_custom_call.1} parent=1 // pred_check_branch
      %61 = sbr.rel (0) target = $region21
    $region20: #{tpu_custom_call.1} parent=1 // pred_region
      _
    $region21: #{tpu_custom_call.1} parent=1 // pred_fallthru
      _
    // Predicated region
    $region22: #{tpu_custom_call.1} parent=1 // pred_check
      _
    $region23: #{tpu_custom_call.1} parent=1 // pred_check_branch
      %63 = sbr.rel (0) target = $region25
    $region24: #{tpu_custom_call.1} parent=1 // pred_region
      %65 = vsyncadd [#allocation6], 0
      %s67 = sshll.u32 %s5, 4
      %s68 = int_to_ptr.vmem [resolvable:$true] %s67
      %70 = dma.vmem_to_smem %s68, 16, [#allocation10], [#allocation6]
    $region25: #{tpu_custom_call.1} parent=1 // pred_fallthru
      _
    // Predicated region
    $region26: #{tpu_custom_call.1} parent=1 // pred_check
      _
    $region27: #{tpu_custom_call.1} parent=1 // pred_check_branch
      %72 = sbr.rel (0) target = $region29
    $region28: #{tpu_custom_call.1} parent=1 // pred_region
      %74 = vsyncadd [#allocation12], 0
      %s76 = sshll.u32 %s6, 4
      %s77 = int_to_ptr.vmem [resolvable:$true] %s76
      %79 = dma.vmem_to_smem %s77, 16, [#allocation11], [#allocation12]
    $region29: #{tpu_custom_call.1} parent=1 // pred_fallthru
      _
    // Predicated region
    $region30: #{tpu_custom_call.1} parent=1 // pred_check
      _
    $region31: #{tpu_custom_call.1} parent=1 // pred_check_branch
      %81 = sbr.rel (0) target = $region33
    $region32: #{tpu_custom_call.1} parent=1 // pred_region
      %83 = vsyncadd [#allocation14], 0
      %s84 = sshll.u32 %s7, 4
      %s85 = int_to_ptr.hbm [resolvable:$true] %s84
      %s86 = sshll.u32 [#allocation13], 4
      %s87 = int_to_ptr.vmem [resolvable:$true] %s86
      %92 = dma.hbm_to_vmem [thread:$0]  %s85, 8192, %s87, [#allocation14], 128, 128, 8
    $region33: #{tpu_custom_call.1} parent=1 // pred_fallthru
      _
    // Predicated region
    $region34: #{tpu_custom_call.1} parent=1 // pred_check
      _
    $region35: #{tpu_custom_call.1} parent=1 // pred_check_branch
      %94 = sbr.rel (0) target = $region37
    $region36: #{tpu_custom_call.1} parent=1 // pred_region
      %96 = dma.done [#allocation4], 1024
    $region37: #{tpu_custom_call.1} parent=1 // pred_fallthru
      _
    // Predicated region
    $region38: #{tpu_custom_call.1} parent=1 // pred_check
      _
    $region39: #{tpu_custom_call.1} parent=1 // pred_check_branch
      %98 = sbr.rel (0) target = $region41
    $region40: #{tpu_custom_call.1} parent=1 // pred_region
      %100 = dma.done [#allocation8], 256
    $region41: #{tpu_custom_call.1} parent=1 // pred_fallthru
      _
    // Predicated region
    $region42: #{tpu_custom_call.1} parent=1 // pred_check
      _
    $region43: #{tpu_custom_call.1} parent=1 // pred_check_branch
      %102 = sbr.rel (0) target = $region45
    $region44: #{tpu_custom_call.1} parent=1 // pred_region
      %104 = dma.done [#allocation8], 512
    $region45: #{tpu_custom_call.1} parent=1 // pred_fallthru
      _
    // Predicated region
    $region46: #{tpu_custom_call.1} parent=1 // pred_check
      _
    $region47: #{tpu_custom_call.1} parent=1 // pred_check_branch
      %106 = sbr.rel (0) target = $region49
    $region48: #{tpu_custom_call.1} parent=1 // pred_region
      %108 = dma.done [#allocation6], 16
    $region49: #{tpu_custom_call.1} parent=1 // pred_fallthru
      _
    // Predicated region
    $region50: #{tpu_custom_call.1} parent=1 // pred_check
      _
    $region51: #{tpu_custom_call.1} parent=1 // pred_check_branch
      %110 = sbr.rel (0) target = $region53
    $region52: #{tpu_custom_call.1} parent=1 // pred_region
      %112 = dma.done [#allocation12], 16
    $region53: #{tpu_custom_call.1} parent=1 // pred_fallthru
      _
    // Predicated region
    $region54: #{tpu_custom_call.1} parent=1 // pred_check
      _
    $region55: #{tpu_custom_call.1} parent=1 // pred_check_branch
      %114 = sbr.rel (0) target = $region57
    $region56: #{tpu_custom_call.1} parent=1 // pred_region
      %116 = dma.done [#allocation14], 8192
    $region57: #{tpu_custom_call.1} parent=1 // pred_fallthru
      _
    %117 = sfence
    %v118 = vld [vmem:[#allocation7] sm:$0xff]
    %v119 = vld [vmem:[#allocation7 + $0x8] sm:$0xff]
    %v120 = vld [vmem:[#allocation9] sm:$0xff]
    %v121 = vld [vmem:[#allocation9 + $0x8] sm:$0xff]
    %v122 = vld [vmem:[#allocation9 + $0x10] sm:$0xff]
    %v123 = vld [vmem:[#allocation9 + $0x18] sm:$0xff]
    %v124 = vld [vmem:[%s2] sm:$0x1]
    %v125 = vld [vmem:[%s4] sm:$0x1]
    %v126 = vld [vmem:[#allocation3] sm:$0xff]
    %v128 = vperm.slane %v124, 0
    %vm130 = vcmask 130048
    %v132 = vsel %vm130, %v126, 0
    %134 = vmatpush.msra.mxu0 0.0
    %135 = vmatpush.msra.mxu0 0.0
    %136 = vmatpush.msra.mxu0 0.0
    %137 = vmatpush.msra.mxu0 0.0
    %138 = vmatpush.msra.mxu0 0.0
    %139 = vmatpush.msra.mxu0 0.0
    %140 = vmatpush.msra.mxu0 0.0
    %141 = vmatpush.msra.mxu0 0.0
    %142 = vmatpush.msra.mxu0 0.0
    %143 = vmatpush.msra.mxu0 0.0
    %144 = vmatpush.msra.mxu0 0.0
    %145 = vmatpush.msra.mxu0 0.0
    %146 = vmatpush.msra.mxu0 0.0
    %147 = vmatpush.msra.mxu0 0.0
    %148 = vmatpush.msra.mxu0 %v119
    %149 = vmatpush.msra.mxu0 %v118
    %150 = vmatmul.f32.gmra.mxu0 %v132
    %v151 = vpop.f32.mrf.mxu0
    %v152 = vadd.f32 %v128, %v151
    %153 = vdwg.mxu0
    %v154 = vmax.f32 %v152, 0.0
    %v156 = vperm.slane %v125, 0
    %vm158 = vcmask 261120
    %v160 = vsel %vm158, %v154, 0
    %162 = vmatpush.msra.mxu0 0.0
    %163 = vmatpush.msra.mxu0 0.0
    %164 = vmatpush.msra.mxu0 0.0
    %165 = vmatpush.msra.mxu0 0.0
    %166 = vmatpush.msra.mxu0 0.0
    %167 = vmatpush.msra.mxu0 0.0
    %168 = vmatpush.msra.mxu0 0.0
    %169 = vmatpush.msra.mxu0 0.0
    %170 = vmatpush.msra.mxu0 0.0
    %171 = vmatpush.msra.mxu0 0.0
    %172 = vmatpush.msra.mxu0 0.0
    %173 = vmatpush.msra.mxu0 0.0
    %174 = vmatpush.msra.mxu0 %v123
    %175 = vmatpush.msra.mxu0 %v122
    %176 = vmatpush.msra.mxu0 %v121
    %177 = vmatpush.msra.mxu0 %v120
    %178 = vmatmul.f32.gmra.mxu0 %v160
    %v179 = vpop.f32.mrf.mxu0
    %v180 = vadd.f32 %v156, %v179
    %181 = vdwg.mxu0
    %182 = vst.msk [vmem:[#allocation2] sm:$0xff] %vm158, %v180
    %s183 = scalar_lea.vmem [#allocation3], 8
    %v184 = vld [vmem:[%s183] sm:$0xff]
    %v186 = vsel %vm130, %v184, 0
    %188 = vmatpush.msra.mxu0 0.0
    %189 = vmatpush.msra.mxu0 0.0
    %190 = vmatpush.msra.mxu0 0.0
    %191 = vmatpush.msra.mxu0 0.0
    %192 = vmatpush.msra.mxu0 0.0
    %193 = vmatpush.msra.mxu0 0.0
    %194 = vmatpush.msra.mxu0 0.0
    %195 = vmatpush.msra.mxu0 0.0
    %196 = vmatpush.msra.mxu0 0.0
    %197 = vmatpush.msra.mxu0 0.0
    %198 = vmatpush.msra.mxu0 0.0
    %199 = vmatpush.msra.mxu0 0.0
    %200 = vmatpush.msra.mxu0 0.0
    %201 = vmatpush.msra.mxu0 0.0
    %202 = vmatpush.msra.mxu0 %v119
    %203 = vmatpush.msra.mxu0 %v118
    %204 = vmatmul.f32.gmra.mxu0 %v186
    %v205 = vpop.f32.mrf.mxu0
    %v206 = vadd.f32 %v128, %v205
    %207 = vdwg.mxu0
    %v208 = vmax.f32 %v206, 0.0
    %v210 = vsel %vm158, %v208, 0
    %212 = vmatpush.msra.mxu0 0.0
    %213 = vmatpush.msra.mxu0 0.0
    %214 = vmatpush.msra.mxu0 0.0
    %215 = vmatpush.msra.mxu0 0.0
    %216 = vmatpush.msra.mxu0 0.0
    %217 = vmatpush.msra.mxu0 0.0
    %218 = vmatpush.msra.mxu0 0.0
    %219 = vmatpush.msra.mxu0 0.0
    %220 = vmatpush.msra.mxu0 0.0
    %221 = vmatpush.msra.mxu0 0.0
    %222 = vmatpush.msra.mxu0 0.0
    %223 = vmatpush.msra.mxu0 0.0
    %224 = vmatpush.msra.mxu0 %v123
    %225 = vmatpush.msra.mxu0 %v122
    %226 = vmatpush.msra.mxu0 %v121
    %227 = vmatpush.msra.mxu0 %v120
    %228 = vmatmul.f32.gmra.mxu0 %v210
    %v229 = vpop.f32.mrf.mxu0
    %v230 = vadd.f32 %v156, %v229
    %231 = vdwg.mxu0
    %s232 = scalar_lea.vmem [#allocation2], 8
    %233 = vst.msk [vmem:[%s232] sm:$0xff] %vm158, %v230
    %s234 = scalar_lea.vmem [#allocation3], 16
    %v235 = vld [vmem:[%s234] sm:$0xff]
    %v237 = vsel %vm130, %v235, 0
    %239 = vmatpush.msra.mxu0 0.0
    %240 = vmatpush.msra.mxu0 0.0
    %241 = vmatpush.msra.mxu0 0.0
    %242 = vmatpush.msra.mxu0 0.0
    %243 = vmatpush.msra.mxu0 0.0
    %244 = vmatpush.msra.mxu0 0.0
    %245 = vmatpush.msra.mxu0 0.0
    %246 = vmatpush.msra.mxu0 0.0
    %247 = vmatpush.msra.mxu0 0.0
    %248 = vmatpush.msra.mxu0 0.0
    %249 = vmatpush.msra.mxu0 0.0
    %250 = vmatpush.msra.mxu0 0.0
    %251 = vmatpush.msra.mxu0 0.0
    %252 = vmatpush.msra.mxu0 0.0
    %253 = vmatpush.msra.mxu0 %v119
    %254 = vmatpush.msra.mxu0 %v118
    %255 = vmatmul.f32.gmra.mxu0 %v237
    %v256 = vpop.f32.mrf.mxu0
    %v257 = vadd.f32 %v128, %v256
    %258 = vdwg.mxu0
    %v259 = vmax.f32 %v257, 0.0
    %v261 = vsel %vm158, %v259, 0
    %263 = vmatpush.msra.mxu0 0.0
    %264 = vmatpush.msra.mxu0 0.0
    %265 = vmatpush.msra.mxu0 0.0
    %266 = vmatpush.msra.mxu0 0.0
    %267 = vmatpush.msra.mxu0 0.0
    %268 = vmatpush.msra.mxu0 0.0
    %269 = vmatpush.msra.mxu0 0.0
    %270 = vmatpush.msra.mxu0 0.0
    %271 = vmatpush.msra.mxu0 0.0
    %272 = vmatpush.msra.mxu0 0.0
    %273 = vmatpush.msra.mxu0 0.0
    %274 = vmatpush.msra.mxu0 0.0
    %275 = vmatpush.msra.mxu0 %v123
    %276 = vmatpush.msra.mxu0 %v122
    %277 = vmatpush.msra.mxu0 %v121
    %278 = vmatpush.msra.mxu0 %v120
    %279 = vmatmul.f32.gmra.mxu0 %v261
    %v280 = vpop.f32.mrf.mxu0
    %v281 = vadd.f32 %v156, %v280
    %282 = vdwg.mxu0
    %s283 = scalar_lea.vmem [#allocation2], 16
    %284 = vst.msk [vmem:[%s283] sm:$0xff] %vm158, %v281
    %s285 = scalar_lea.vmem [#allocation3], 24
    %v286 = vld [vmem:[%s285] sm:$0xff]
    %v288 = vsel %vm130, %v286, 0
    %290 = vmatpush.msra.mxu0 0.0
    %291 = vmatpush.msra.mxu0 0.0
    %292 = vmatpush.msra.mxu0 0.0
    %293 = vmatpush.msra.mxu0 0.0
    %294 = vmatpush.msra.mxu0 0.0
    %295 = vmatpush.msra.mxu0 0.0
    %296 = vmatpush.msra.mxu0 0.0
    %297 = vmatpush.msra.mxu0 0.0
    %298 = vmatpush.msra.mxu0 0.0
    %299 = vmatpush.msra.mxu0 0.0
    %300 = vmatpush.msra.mxu0 0.0
    %301 = vmatpush.msra.mxu0 0.0
    %302 = vmatpush.msra.mxu0 0.0
    %303 = vmatpush.msra.mxu0 0.0
    %304 = vmatpush.msra.mxu0 %v119
    %305 = vmatpush.msra.mxu0 %v118
    %306 = vmatmul.f32.gmra.mxu0 %v288
    %v307 = vpop.f32.mrf.mxu0
    %v308 = vadd.f32 %v128, %v307
    %309 = vdwg.mxu0
    %v310 = vmax.f32 %v308, 0.0
    %v312 = vsel %vm158, %v310, 0
    %314 = vmatpush.msra.mxu0 0.0
    %315 = vmatpush.msra.mxu0 0.0
    %316 = vmatpush.msra.mxu0 0.0
    %317 = vmatpush.msra.mxu0 0.0
    %318 = vmatpush.msra.mxu0 0.0
    %319 = vmatpush.msra.mxu0 0.0
    %320 = vmatpush.msra.mxu0 0.0
    %321 = vmatpush.msra.mxu0 0.0
    %322 = vmatpush.msra.mxu0 0.0
    %323 = vmatpush.msra.mxu0 0.0
    %324 = vmatpush.msra.mxu0 0.0
    %325 = vmatpush.msra.mxu0 0.0
    %326 = vmatpush.msra.mxu0 %v123
    %327 = vmatpush.msra.mxu0 %v122
    %328 = vmatpush.msra.mxu0 %v121
    %329 = vmatpush.msra.mxu0 %v120
    %330 = vmatmul.f32.gmra.mxu0 %v312
    %v331 = vpop.f32.mrf.mxu0
    %v332 = vadd.f32 %v156, %v331
    %333 = vdwg.mxu0
    %s334 = scalar_lea.vmem [#allocation2], 24
    %335 = vst.msk [vmem:[%s334] sm:$0xff] %vm158, %v332
    %s336 = scalar_lea.vmem [#allocation3], 32
    %v337 = vld [vmem:[%s336] sm:$0xff]
    %v339 = vsel %vm130, %v337, 0
    %341 = vmatpush.msra.mxu0 0.0
    %342 = vmatpush.msra.mxu0 0.0
    %343 = vmatpush.msra.mxu0 0.0
    %344 = vmatpush.msra.mxu0 0.0
    %345 = vmatpush.msra.mxu0 0.0
    %346 = vmatpush.msra.mxu0 0.0
    %347 = vmatpush.msra.mxu0 0.0
    %348 = vmatpush.msra.mxu0 0.0
    %349 = vmatpush.msra.mxu0 0.0
    %350 = vmatpush.msra.mxu0 0.0
    %351 = vmatpush.msra.mxu0 0.0
    %352 = vmatpush.msra.mxu0 0.0
    %353 = vmatpush.msra.mxu0 0.0
    %354 = vmatpush.msra.mxu0 0.0
    %355 = vmatpush.msra.mxu0 %v119
    %356 = vmatpush.msra.mxu0 %v118
    %357 = vmatmul.f32.gmra.mxu0 %v339
    %v358 = vpop.f32.mrf.mxu0
    %v359 = vadd.f32 %v128, %v358
    %360 = vdwg.mxu0
    %v361 = vmax.f32 %v359, 0.0
    %v363 = vsel %vm158, %v361, 0
    %365 = vmatpush.msra.mxu0 0.0
    %366 = vmatpush.msra.mxu0 0.0
    %367 = vmatpush.msra.mxu0 0.0
    %368 = vmatpush.msra.mxu0 0.0
    %369 = vmatpush.msra.mxu0 0.0
    %370 = vmatpush.msra.mxu0 0.0
    %371 = vmatpush.msra.mxu0 0.0
    %372 = vmatpush.msra.mxu0 0.0
    %373 = vmatpush.msra.mxu0 0.0
    %374 = vmatpush.msra.mxu0 0.0
    %375 = vmatpush.msra.mxu0 0.0
    %376 = vmatpush.msra.mxu0 0.0
    %377 = vmatpush.msra.mxu0 %v123
    %378 = vmatpush.msra.mxu0 %v122
    %379 = vmatpush.msra.mxu0 %v121
    %380 = vmatpush.msra.mxu0 %v120
    %381 = vmatmul.f32.gmra.mxu0 %v363
    %v382 = vpop.f32.mrf.mxu0
    %v383 = vadd.f32 %v156, %v382
    %384 = vdwg.mxu0
    %s385 = scalar_lea.vmem [#allocation2], 32
    %386 = vst.msk [vmem:[%s385] sm:$0xff] %vm158, %v383
    %s387 = scalar_lea.vmem [#allocation3], 40
    %v388 = vld [vmem:[%s387] sm:$0xff]
    %v390 = vsel %vm130, %v388, 0
    %392 = vmatpush.msra.mxu0 0.0
    %393 = vmatpush.msra.mxu0 0.0
    %394 = vmatpush.msra.mxu0 0.0
    %395 = vmatpush.msra.mxu0 0.0
    %396 = vmatpush.msra.mxu0 0.0
    %397 = vmatpush.msra.mxu0 0.0
    %398 = vmatpush.msra.mxu0 0.0
    %399 = vmatpush.msra.mxu0 0.0
    %400 = vmatpush.msra.mxu0 0.0
    %401 = vmatpush.msra.mxu0 0.0
    %402 = vmatpush.msra.mxu0 0.0
    %403 = vmatpush.msra.mxu0 0.0
    %404 = vmatpush.msra.mxu0 0.0
    %405 = vmatpush.msra.mxu0 0.0
    %406 = vmatpush.msra.mxu0 %v119
    %407 = vmatpush.msra.mxu0 %v118
    %408 = vmatmul.f32.gmra.mxu0 %v390
    %v409 = vpop.f32.mrf.mxu0
    %v410 = vadd.f32 %v128, %v409
    %411 = vdwg.mxu0
    %v412 = vmax.f32 %v410, 0.0
    %v414 = vsel %vm158, %v412, 0
    %416 = vmatpush.msra.mxu0 0.0
    %417 = vmatpush.msra.mxu0 0.0
    %418 = vmatpush.msra.mxu0 0.0
    %419 = vmatpush.msra.mxu0 0.0
    %420 = vmatpush.msra.mxu0 0.0
    %421 = vmatpush.msra.mxu0 0.0
    %422 = vmatpush.msra.mxu0 0.0
    %423 = vmatpush.msra.mxu0 0.0
    %424 = vmatpush.msra.mxu0 0.0
    %425 = vmatpush.msra.mxu0 0.0
    %426 = vmatpush.msra.mxu0 0.0
    %427 = vmatpush.msra.mxu0 0.0
    %428 = vmatpush.msra.mxu0 %v123
    %429 = vmatpush.msra.mxu0 %v122
    %430 = vmatpush.msra.mxu0 %v121
    %431 = vmatpush.msra.mxu0 %v120
    %432 = vmatmul.f32.gmra.mxu0 %v414
    %v433 = vpop.f32.mrf.mxu0
    %v434 = vadd.f32 %v156, %v433
    %435 = vdwg.mxu0
    %s436 = scalar_lea.vmem [#allocation2], 40
    %437 = vst.msk [vmem:[%s436] sm:$0xff] %vm158, %v434
    %s438 = scalar_lea.vmem [#allocation3], 48
    %v439 = vld [vmem:[%s438] sm:$0xff]
    %v441 = vsel %vm130, %v439, 0
    %443 = vmatpush.msra.mxu0 0.0
    %444 = vmatpush.msra.mxu0 0.0
    %445 = vmatpush.msra.mxu0 0.0
    %446 = vmatpush.msra.mxu0 0.0
    %447 = vmatpush.msra.mxu0 0.0
    %448 = vmatpush.msra.mxu0 0.0
    %449 = vmatpush.msra.mxu0 0.0
    %450 = vmatpush.msra.mxu0 0.0
    %451 = vmatpush.msra.mxu0 0.0
    %452 = vmatpush.msra.mxu0 0.0
    %453 = vmatpush.msra.mxu0 0.0
    %454 = vmatpush.msra.mxu0 0.0
    %455 = vmatpush.msra.mxu0 0.0
    %456 = vmatpush.msra.mxu0 0.0
    %457 = vmatpush.msra.mxu0 %v119
    %458 = vmatpush.msra.mxu0 %v118
    %459 = vmatmul.f32.gmra.mxu0 %v441
    %v460 = vpop.f32.mrf.mxu0
    %v461 = vadd.f32 %v128, %v460
    %462 = vdwg.mxu0
    %v463 = vmax.f32 %v461, 0.0
    %v465 = vsel %vm158, %v463, 0
    %467 = vmatpush.msra.mxu0 0.0
    %468 = vmatpush.msra.mxu0 0.0
    %469 = vmatpush.msra.mxu0 0.0
    %470 = vmatpush.msra.mxu0 0.0
    %471 = vmatpush.msra.mxu0 0.0
    %472 = vmatpush.msra.mxu0 0.0
    %473 = vmatpush.msra.mxu0 0.0
    %474 = vmatpush.msra.mxu0 0.0
    %475 = vmatpush.msra.mxu0 0.0
    %476 = vmatpush.msra.mxu0 0.0
    %477 = vmatpush.msra.mxu0 0.0
    %478 = vmatpush.msra.mxu0 0.0
    %479 = vmatpush.msra.mxu0 %v123
    %480 = vmatpush.msra.mxu0 %v122
    %481 = vmatpush.msra.mxu0 %v121
    %482 = vmatpush.msra.mxu0 %v120
    %483 = vmatmul.f32.gmra.mxu0 %v465
    %v484 = vpop.f32.mrf.mxu0
    %v485 = vadd.f32 %v156, %v484
    %486 = vdwg.mxu0
    %s487 = scalar_lea.vmem [#allocation2], 48
    %488 = vst.msk [vmem:[%s487] sm:$0xff] %vm158, %v485
    %s489 = scalar_lea.vmem [#allocation3], 56
    %v490 = vld [vmem:[%s489] sm:$0xff]
    %v492 = vsel %vm130, %v490, 0
    %494 = vmatpush.msra.mxu0 0.0
    %495 = vmatpush.msra.mxu0 0.0
    %496 = vmatpush.msra.mxu0 0.0
    %497 = vmatpush.msra.mxu0 0.0
    %498 = vmatpush.msra.mxu0 0.0
    %499 = vmatpush.msra.mxu0 0.0
    %500 = vmatpush.msra.mxu0 0.0
    %501 = vmatpush.msra.mxu0 0.0
    %502 = vmatpush.msra.mxu0 0.0
    %503 = vmatpush.msra.mxu0 0.0
    %504 = vmatpush.msra.mxu0 0.0
    %505 = vmatpush.msra.mxu0 0.0
    %506 = vmatpush.msra.mxu0 0.0
    %507 = vmatpush.msra.mxu0 0.0
    %508 = vmatpush.msra.mxu0 %v119
    %509 = vmatpush.msra.mxu0 %v118
    %510 = vmatmul.f32.gmra.mxu0 %v492
    %v511 = vpop.f32.mrf.mxu0
    %v512 = vadd.f32 %v128, %v511
    %513 = vdwg.mxu0
    %v514 = vmax.f32 %v512, 0.0
    %v516 = vsel %vm158, %v514, 0
    %518 = vmatpush.msra.mxu0 0.0
    %519 = vmatpush.msra.mxu0 0.0
    %520 = vmatpush.msra.mxu0 0.0
    %521 = vmatpush.msra.mxu0 0.0
    %522 = vmatpush.msra.mxu0 0.0
    %523 = vmatpush.msra.mxu0 0.0
    %524 = vmatpush.msra.mxu0 0.0
    %525 = vmatpush.msra.mxu0 0.0
    %526 = vmatpush.msra.mxu0 0.0
    %527 = vmatpush.msra.mxu0 0.0
    %528 = vmatpush.msra.mxu0 0.0
    %529 = vmatpush.msra.mxu0 0.0
    %530 = vmatpush.msra.mxu0 %v123
    %531 = vmatpush.msra.mxu0 %v122
    %532 = vmatpush.msra.mxu0 %v121
    %533 = vmatpush.msra.mxu0 %v120
    %534 = vmatmul.f32.gmra.mxu0 %v516
    %v535 = vpop.f32.mrf.mxu0
    %v536 = vadd.f32 %v156, %v535
    %537 = vdwg.mxu0
    %s538 = scalar_lea.vmem [#allocation2], 56
    %539 = vst.msk [vmem:[%s538] sm:$0xff] %vm158, %v536
    %s540 = sld [smem:[#allocation10]]
    %v541 = vld [vmem:[#allocation2] sm:$0xff]
    %v542 = vstv %s540
    %v543 = vmul.f32 %v542, %v541
    %s544 = sld [smem:[#allocation11]]
    %v545 = vstv %s544
    %v546 = vadd.f32 %v543, %v545
    %s547 = sld [smem:[#allocation10 + $0x1]]
    %v548 = vld [vmem:[%s232] sm:$0xff]
    %v549 = vstv %s547
    %v550 = vmul.f32 %v549, %v548
    %v551 = vadd.f32 %v546, %v550
    %s552 = sld [smem:[#allocation10 + $0x2]]
    %v553 = vld [vmem:[%s283] sm:$0xff]
    %v554 = vstv %s552
    %v555 = vmul.f32 %v554, %v553
    %v556 = vadd.f32 %v551, %v555
    %s557 = sld [smem:[#allocation10 + $0x3]]
    %v558 = vld [vmem:[%s334] sm:$0xff]
    %v559 = vstv %s557
    %v560 = vmul.f32 %v559, %v558
    %v561 = vadd.f32 %v556, %v560
    %s562 = sld [smem:[#allocation10 + $0x4]]
    %v563 = vld [vmem:[%s385] sm:$0xff]
    %v564 = vstv %s562
    %v565 = vmul.f32 %v564, %v563
    %v566 = vadd.f32 %v561, %v565
    %s567 = sld [smem:[#allocation10 + $0x5]]
    %v568 = vld [vmem:[%s436] sm:$0xff]
    %v569 = vstv %s567
    %v570 = vmul.f32 %v569, %v568
    %v571 = vadd.f32 %v566, %v570
    %s572 = sld [smem:[#allocation10 + $0x6]]
    %v573 = vld [vmem:[%s487] sm:$0xff]
    %v574 = vstv %s572
    %v575 = vmul.f32 %v574, %v573
    %v576 = vadd.f32 %v571, %v575
    %s577 = sld [smem:[#allocation10 + $0x7]]
    %v578 = vld [vmem:[%s538] sm:$0xff]
    %v579 = vstv %s577
    %v580 = vmul.f32 %v579, %v578
    %v581 = vadd.f32 %v576, %v580
    %v582 = vmax.f32 %v581, 0.0
    %v583 = vld [vmem:[#allocation13] sm:$0xff]
    %v584 = vld [vmem:[#allocation13 + $0x8] sm:$0xff]
    %v585 = vld [vmem:[#allocation13 + $0x10] sm:$0xff]
    %v586 = vld [vmem:[#allocation13 + $0x18] sm:$0xff]
    %s587 = sld [smem:[#allocation10 + $0x8]]
    %v588 = vstv %s587
    %v589 = vmul.f32 %v588, %v541
    %s590 = sld [smem:[#allocation11 + $0x1]]
    %v591 = vstv %s590
    %v592 = vadd.f32 %v589, %v591
    %s593 = sld [smem:[#allocation10 + $0x9]]
    %v594 = vstv %s593
    %v595 = vmul.f32 %v594, %v548
    %v596 = vadd.f32 %v592, %v595
    %s597 = sld [smem:[#allocation10 + $0xa]]
    %v598 = vstv %s597
    %v599 = vmul.f32 %v598, %v553
    %v600 = vadd.f32 %v596, %v599
    %s601 = sld [smem:[#allocation10 + $0xb]]
    %v602 = vstv %s601
    %v603 = vmul.f32 %v602, %v558
    %v604 = vadd.f32 %v600, %v603
    %s605 = sld [smem:[#allocation10 + $0xc]]
    %v606 = vstv %s605
    %v607 = vmul.f32 %v606, %v563
    %v608 = vadd.f32 %v604, %v607
    %s609 = sld [smem:[#allocation10 + $0xd]]
    %v610 = vstv %s609
    %v611 = vmul.f32 %v610, %v568
    %v612 = vadd.f32 %v608, %v611
    %s613 = sld [smem:[#allocation10 + $0xe]]
    %v614 = vstv %s613
    %v615 = vmul.f32 %v614, %v573
    %v616 = vadd.f32 %v612, %v615
    %s617 = sld [smem:[#allocation10 + $0xf]]
    %v618 = vstv %s617
    %v619 = vmul.f32 %v618, %v578
    %v620 = vadd.f32 %v616, %v619
    %v621 = vmax.f32 %v620, 0.0
    %s622 = scalar_lea.vmem [#allocation13], 32
    %v623 = vld [vmem:[%s622] sm:$0xff]
    %v624 = vld [vmem:[%s622 + $0x8] sm:$0xff]
    %v625 = vld [vmem:[%s622 + $0x10] sm:$0xff]
    %v626 = vld [vmem:[%s622 + $0x18] sm:$0xff]
    %v628 = vsel %vm158, %v621, 0
    %630 = vmatpush.msra.mxu0 0.0
    %631 = vmatpush.msra.mxu0 0.0
    %632 = vmatpush.msra.mxu0 0.0
    %633 = vmatpush.msra.mxu0 0.0
    %634 = vmatpush.msra.mxu0 0.0
    %635 = vmatpush.msra.mxu0 0.0
    %636 = vmatpush.msra.mxu0 0.0
    %637 = vmatpush.msra.mxu0 0.0
    %638 = vmatpush.msra.mxu0 0.0
    %639 = vmatpush.msra.mxu0 0.0
    %640 = vmatpush.msra.mxu0 0.0
    %641 = vmatpush.msra.mxu0 0.0
    %642 = vmatpush.msra.mxu0 %v626
    %643 = vmatpush.msra.mxu0 %v625
    %644 = vmatpush.msra.mxu0 %v624
    %645 = vmatpush.msra.mxu0 %v623
    %646 = vmatmul.f32.gmra.mxu0 %v628
    %v647 = vpop.f32.mrf.mxu0
    %v648 = vadd.f32 0.0, %v647
    %649 = vdwg.mxu0
    %v651 = vsel %vm158, %v582, 0
    %653 = vmatpush.msra.mxu0 0.0
    %654 = vmatpush.msra.mxu0 0.0
    %655 = vmatpush.msra.mxu0 0.0
    %656 = vmatpush.msra.mxu0 0.0
    %657 = vmatpush.msra.mxu0 0.0
    %658 = vmatpush.msra.mxu0 0.0
    %659 = vmatpush.msra.mxu0 0.0
    %660 = vmatpush.msra.mxu0 0.0
    %661 = vmatpush.msra.mxu0 0.0
    %662 = vmatpush.msra.mxu0 0.0
    %663 = vmatpush.msra.mxu0 0.0
    %664 = vmatpush.msra.mxu0 0.0
    %665 = vmatpush.msra.mxu0 %v586
    %666 = vmatpush.msra.mxu0 %v585
    %667 = vmatpush.msra.mxu0 %v584
    %668 = vmatpush.msra.mxu0 %v583
    %669 = vmatmul.f32.gmra.mxu0 %v651
    %v670 = vpop.f32.mrf.mxu0
    %v671 = vadd.f32 %v648, %v670
    %672 = vdwg.mxu0
    %s673 = sld [smem:[#allocation10 + $0x10]]
    %v674 = vstv %s673
    %v675 = vmul.f32 %v674, %v541
    %s676 = sld [smem:[#allocation11 + $0x2]]
    %v677 = vstv %s676
    %v678 = vadd.f32 %v675, %v677
    %s679 = sld [smem:[#allocation10 + $0x11]]
    %v680 = vstv %s679
    %v681 = vmul.f32 %v680, %v548
    %v682 = vadd.f32 %v678, %v681
    %s683 = sld [smem:[#allocation10 + $0x12]]
    %v684 = vstv %s683
    %v685 = vmul.f32 %v684, %v553
    %v686 = vadd.f32 %v682, %v685
    %s687 = sld [smem:[#allocation10 + $0x13]]
    %v688 = vstv %s687
    %v689 = vmul.f32 %v688, %v558
    %v690 = vadd.f32 %v686, %v689
    %s691 = sld [smem:[#allocation10 + $0x14]]
    %v692 = vstv %s691
    %v693 = vmul.f32 %v692, %v563
    %v694 = vadd.f32 %v690, %v693
    %s695 = sld [smem:[#allocation10 + $0x15]]
    %v696 = vstv %s695
    %v697 = vmul.f32 %v696, %v568
    %v698 = vadd.f32 %v694, %v697
    %s699 = sld [smem:[#allocation10 + $0x16]]
    %v700 = vstv %s699
    %v701 = vmul.f32 %v700, %v573
    %v702 = vadd.f32 %v698, %v701
    %s703 = sld [smem:[#allocation10 + $0x17]]
    %v704 = vstv %s703
    %v705 = vmul.f32 %v704, %v578
    %v706 = vadd.f32 %v702, %v705
    %v707 = vmax.f32 %v706, 0.0
    %s708 = scalar_lea.vmem [#allocation13], 64
    %v709 = vld [vmem:[%s708] sm:$0xff]
    %v710 = vld [vmem:[%s708 + $0x8] sm:$0xff]
    %v711 = vld [vmem:[%s708 + $0x10] sm:$0xff]
    %v712 = vld [vmem:[%s708 + $0x18] sm:$0xff]
    %v714 = vsel %vm158, %v707, 0
    %716 = vmatpush.msra.mxu0 0.0
    %717 = vmatpush.msra.mxu0 0.0
    %718 = vmatpush.msra.mxu0 0.0
    %719 = vmatpush.msra.mxu0 0.0
    %720 = vmatpush.msra.mxu0 0.0
    %721 = vmatpush.msra.mxu0 0.0
    %722 = vmatpush.msra.mxu0 0.0
    %723 = vmatpush.msra.mxu0 0.0
    %724 = vmatpush.msra.mxu0 0.0
    %725 = vmatpush.msra.mxu0 0.0
    %726 = vmatpush.msra.mxu0 0.0
    %727 = vmatpush.msra.mxu0 0.0
    %728 = vmatpush.msra.mxu0 %v712
    %729 = vmatpush.msra.mxu0 %v711
    %730 = vmatpush.msra.mxu0 %v710
    %731 = vmatpush.msra.mxu0 %v709
    %732 = vmatmul.f32.gmra.mxu0 %v714
    %v733 = vpop.f32.mrf.mxu0
    %v734 = vadd.f32 0.0, %v733
    %735 = vdwg.mxu0
    %v736 = vadd.f32 %v671, %v734
    %s737 = sld [smem:[#allocation10 + $0x18]]
    %v738 = vstv %s737
    %v739 = vmul.f32 %v738, %v541
    %s740 = sld [smem:[#allocation11 + $0x3]]
    %v741 = vstv %s740
    %v742 = vadd.f32 %v739, %v741
    %s743 = sld [smem:[#allocation10 + $0x19]]
    %v744 = vstv %s743
    %v745 = vmul.f32 %v744, %v548
    %v746 = vadd.f32 %v742, %v745
    %s747 = sld [smem:[#allocation10 + $0x1a]]
    %v748 = vstv %s747
    %v749 = vmul.f32 %v748, %v553
    %v750 = vadd.f32 %v746, %v749
    %s751 = sld [smem:[#allocation10 + $0x1b]]
    %v752 = vstv %s751
    %v753 = vmul.f32 %v752, %v558
    %v754 = vadd.f32 %v750, %v753
    %s755 = sld [smem:[#allocation10 + $0x1c]]
    %v756 = vstv %s755
    %v757 = vmul.f32 %v756, %v563
    %v758 = vadd.f32 %v754, %v757
    %s759 = sld [smem:[#allocation10 + $0x1d]]
    %v760 = vstv %s759
    %v761 = vmul.f32 %v760, %v568
    %v762 = vadd.f32 %v758, %v761
    %s763 = sld [smem:[#allocation10 + $0x1e]]
    %v764 = vstv %s763
    %v765 = vmul.f32 %v764, %v573
    %v766 = vadd.f32 %v762, %v765
    %s767 = sld [smem:[#allocation10 + $0x1f]]
    %v768 = vstv %s767
    %v769 = vmul.f32 %v768, %v578
    %v770 = vadd.f32 %v766, %v769
    %v771 = vmax.f32 %v770, 0.0
    %s772 = scalar_lea.vmem [#allocation13], 96
    %v773 = vld [vmem:[%s772] sm:$0xff]
    %v774 = vld [vmem:[%s772 + $0x8] sm:$0xff]
    %v775 = vld [vmem:[%s772 + $0x10] sm:$0xff]
    %v776 = vld [vmem:[%s772 + $0x18] sm:$0xff]
    %v778 = vsel %vm158, %v771, 0
    %780 = vmatpush.msra.mxu0 0.0
    %781 = vmatpush.msra.mxu0 0.0
    %782 = vmatpush.msra.mxu0 0.0
    %783 = vmatpush.msra.mxu0 0.0
    %784 = vmatpush.msra.mxu0 0.0
    %785 = vmatpush.msra.mxu0 0.0
    %786 = vmatpush.msra.mxu0 0.0
    %787 = vmatpush.msra.mxu0 0.0
    %788 = vmatpush.msra.mxu0 0.0
    %789 = vmatpush.msra.mxu0 0.0
    %790 = vmatpush.msra.mxu0 0.0
    %791 = vmatpush.msra.mxu0 0.0
    %792 = vmatpush.msra.mxu0 %v776
    %793 = vmatpush.msra.mxu0 %v775
    %794 = vmatpush.msra.mxu0 %v774
    %795 = vmatpush.msra.mxu0 %v773
    %796 = vmatmul.f32.gmra.mxu0 %v778
    %v797 = vpop.f32.mrf.mxu0
    %v798 = vadd.f32 0.0, %v797
    %799 = vdwg.mxu0
    %v800 = vadd.f32 %v736, %v798
    %s801 = sld [smem:[#allocation10 + $0x20]]
    %v802 = vstv %s801
    %v803 = vmul.f32 %v802, %v541
    %s804 = sld [smem:[#allocation11 + $0x4]]
    %v805 = vstv %s804
    %v806 = vadd.f32 %v803, %v805
    %s807 = sld [smem:[#allocation10 + $0x21]]
    %v808 = vstv %s807
    %v809 = vmul.f32 %v808, %v548
    %v810 = vadd.f32 %v806, %v809
    %s811 = sld [smem:[#allocation10 + $0x22]]
    %v812 = vstv %s811
    %v813 = vmul.f32 %v812, %v553
    %v814 = vadd.f32 %v810, %v813
    %s815 = sld [smem:[#allocation10 + $0x23]]
    %v816 = vstv %s815
    %v817 = vmul.f32 %v816, %v558
    %v818 = vadd.f32 %v814, %v817
    %s819 = sld [smem:[#allocation10 + $0x24]]
    %v820 = vstv %s819
    %v821 = vmul.f32 %v820, %v563
    %v822 = vadd.f32 %v818, %v821
    %s823 = sld [smem:[#allocation10 + $0x25]]
    %v824 = vstv %s823
    %v825 = vmul.f32 %v824, %v568
    %v826 = vadd.f32 %v822, %v825
    %s827 = sld [smem:[#allocation10 + $0x26]]
    %v828 = vstv %s827
    %v829 = vmul.f32 %v828, %v573
    %v830 = vadd.f32 %v826, %v829
    %s831 = sld [smem:[#allocation10 + $0x27]]
    %v832 = vstv %s831
    %v833 = vmul.f32 %v832, %v578
    %v834 = vadd.f32 %v830, %v833
    %v835 = vmax.f32 %v834, 0.0
    %s836 = scalar_lea.vmem [#allocation13], 128
    %v837 = vld [vmem:[%s836] sm:$0xff]
    %v838 = vld [vmem:[%s836 + $0x8] sm:$0xff]
    %v839 = vld [vmem:[%s836 + $0x10] sm:$0xff]
    %v840 = vld [vmem:[%s836 + $0x18] sm:$0xff]
    %v842 = vsel %vm158, %v835, 0
    %844 = vmatpush.msra.mxu0 0.0
    %845 = vmatpush.msra.mxu0 0.0
    %846 = vmatpush.msra.mxu0 0.0
    %847 = vmatpush.msra.mxu0 0.0
    %848 = vmatpush.msra.mxu0 0.0
    %849 = vmatpush.msra.mxu0 0.0
    %850 = vmatpush.msra.mxu0 0.0
    %851 = vmatpush.msra.mxu0 0.0
    %852 = vmatpush.msra.mxu0 0.0
    %853 = vmatpush.msra.mxu0 0.0
    %854 = vmatpush.msra.mxu0 0.0
    %855 = vmatpush.msra.mxu0 0.0
    %856 = vmatpush.msra.mxu0 %v840
    %857 = vmatpush.msra.mxu0 %v839
    %858 = vmatpush.msra.mxu0 %v838
    %859 = vmatpush.msra.mxu0 %v837
    %860 = vmatmul.f32.gmra.mxu0 %v842
    %v861 = vpop.f32.mrf.mxu0
    %v862 = vadd.f32 0.0, %v861
    %863 = vdwg.mxu0
    %v864 = vadd.f32 %v800, %v862
    %s865 = sld [smem:[#allocation10 + $0x28]]
    %v866 = vstv %s865
    %v867 = vmul.f32 %v866, %v541
    %s868 = sld [smem:[#allocation11 + $0x5]]
    %v869 = vstv %s868
    %v870 = vadd.f32 %v867, %v869
    %s871 = sld [smem:[#allocation10 + $0x29]]
    %v872 = vstv %s871
    %v873 = vmul.f32 %v872, %v548
    %v874 = vadd.f32 %v870, %v873
    %s875 = sld [smem:[#allocation10 + $0x2a]]
    %v876 = vstv %s875
    %v877 = vmul.f32 %v876, %v553
    %v878 = vadd.f32 %v874, %v877
    %s879 = sld [smem:[#allocation10 + $0x2b]]
    %v880 = vstv %s879
    %v881 = vmul.f32 %v880, %v558
    %v882 = vadd.f32 %v878, %v881
    %s883 = sld [smem:[#allocation10 + $0x2c]]
    %v884 = vstv %s883
    %v885 = vmul.f32 %v884, %v563
    %v886 = vadd.f32 %v882, %v885
    %s887 = sld [smem:[#allocation10 + $0x2d]]
    %v888 = vstv %s887
    %v889 = vmul.f32 %v888, %v568
    %v890 = vadd.f32 %v886, %v889
    %s891 = sld [smem:[#allocation10 + $0x2e]]
    %v892 = vstv %s891
    %v893 = vmul.f32 %v892, %v573
    %v894 = vadd.f32 %v890, %v893
    %s895 = sld [smem:[#allocation10 + $0x2f]]
    %v896 = vstv %s895
    %v897 = vmul.f32 %v896, %v578
    %v898 = vadd.f32 %v894, %v897
    %v899 = vmax.f32 %v898, 0.0
    %s900 = scalar_lea.vmem [#allocation13], 160
    %v901 = vld [vmem:[%s900] sm:$0xff]
    %v902 = vld [vmem:[%s900 + $0x8] sm:$0xff]
    %v903 = vld [vmem:[%s900 + $0x10] sm:$0xff]
    %v904 = vld [vmem:[%s900 + $0x18] sm:$0xff]
    %v906 = vsel %vm158, %v899, 0
    %908 = vmatpush.msra.mxu0 0.0
    %909 = vmatpush.msra.mxu0 0.0
    %910 = vmatpush.msra.mxu0 0.0
    %911 = vmatpush.msra.mxu0 0.0
    %912 = vmatpush.msra.mxu0 0.0
    %913 = vmatpush.msra.mxu0 0.0
    %914 = vmatpush.msra.mxu0 0.0
    %915 = vmatpush.msra.mxu0 0.0
    %916 = vmatpush.msra.mxu0 0.0
    %917 = vmatpush.msra.mxu0 0.0
    %918 = vmatpush.msra.mxu0 0.0
    %919 = vmatpush.msra.mxu0 0.0
    %920 = vmatpush.msra.mxu0 %v904
    %921 = vmatpush.msra.mxu0 %v903
    %922 = vmatpush.msra.mxu0 %v902
    %923 = vmatpush.msra.mxu0 %v901
    %924 = vmatmul.f32.gmra.mxu0 %v906
    %v925 = vpop.f32.mrf.mxu0
    %v926 = vadd.f32 0.0, %v925
    %927 = vdwg.mxu0
    %v928 = vadd.f32 %v864, %v926
    %s929 = sld [smem:[#allocation10 + $0x30]]
    %v930 = vstv %s929
    %v931 = vmul.f32 %v930, %v541
    %s932 = sld [smem:[#allocation11 + $0x6]]
    %v933 = vstv %s932
    %v934 = vadd.f32 %v931, %v933
    %s935 = sld [smem:[#allocation10 + $0x31]]
    %v936 = vstv %s935
    %v937 = vmul.f32 %v936, %v548
    %v938 = vadd.f32 %v934, %v937
    %s939 = sld [smem:[#allocation10 + $0x32]]
    %v940 = vstv %s939
    %v941 = vmul.f32 %v940, %v553
    %v942 = vadd.f32 %v938, %v941
    %s943 = sld [smem:[#allocation10 + $0x33]]
    %v944 = vstv %s943
    %v945 = vmul.f32 %v944, %v558
    %v946 = vadd.f32 %v942, %v945
    %s947 = sld [smem:[#allocation10 + $0x34]]
    %v948 = vstv %s947
    %v949 = vmul.f32 %v948, %v563
    %v950 = vadd.f32 %v946, %v949
    %s951 = sld [smem:[#allocation10 + $0x35]]
    %v952 = vstv %s951
    %v953 = vmul.f32 %v952, %v568
    %v954 = vadd.f32 %v950, %v953
    %s955 = sld [smem:[#allocation10 + $0x36]]
    %v956 = vstv %s955
    %v957 = vmul.f32 %v956, %v573
    %v958 = vadd.f32 %v954, %v957
    %s959 = sld [smem:[#allocation10 + $0x37]]
    %v960 = vstv %s959
    %v961 = vmul.f32 %v960, %v578
    %v962 = vadd.f32 %v958, %v961
    %v963 = vmax.f32 %v962, 0.0
    %s964 = scalar_lea.vmem [#allocation13], 192
    %v965 = vld [vmem:[%s964] sm:$0xff]
    %v966 = vld [vmem:[%s964 + $0x8] sm:$0xff]
    %v967 = vld [vmem:[%s964 + $0x10] sm:$0xff]
    %v968 = vld [vmem:[%s964 + $0x18] sm:$0xff]
    %v970 = vsel %vm158, %v963, 0
    %972 = vmatpush.msra.mxu0 0.0
    %973 = vmatpush.msra.mxu0 0.0
    %974 = vmatpush.msra.mxu0 0.0
    %975 = vmatpush.msra.mxu0 0.0
    %976 = vmatpush.msra.mxu0 0.0
    %977 = vmatpush.msra.mxu0 0.0
    %978 = vmatpush.msra.mxu0 0.0
    %979 = vmatpush.msra.mxu0 0.0
    %980 = vmatpush.msra.mxu0 0.0
    %981 = vmatpush.msra.mxu0 0.0
    %982 = vmatpush.msra.mxu0 0.0
    %983 = vmatpush.msra.mxu0 0.0
    %984 = vmatpush.msra.mxu0 %v968
    %985 = vmatpush.msra.mxu0 %v967
    %986 = vmatpush.msra.mxu0 %v966
    %987 = vmatpush.msra.mxu0 %v965
    %988 = vmatmul.f32.gmra.mxu0 %v970
    %v989 = vpop.f32.mrf.mxu0
    %v990 = vadd.f32 0.0, %v989
    %991 = vdwg.mxu0
    %v992 = vadd.f32 %v928, %v990
    %s993 = sld [smem:[#allocation10 + $0x38]]
    %v994 = vstv %s993
    %v995 = vmul.f32 %v994, %v541
    %s996 = sld [smem:[#allocation11 + $0x7]]
    %v997 = vstv %s996
    %v998 = vadd.f32 %v995, %v997
    %s999 = sld [smem:[#allocation10 + $0x39]]
    %v1000 = vstv %s999
    %v1001 = vmul.f32 %v1000, %v548
    %v1002 = vadd.f32 %v998, %v1001
    %s1003 = sld [smem:[#allocation10 + $0x3a]]
    %v1004 = vstv %s1003
    %v1005 = vmul.f32 %v1004, %v553
    %v1006 = vadd.f32 %v1002, %v1005
    %s1007 = sld [smem:[#allocation10 + $0x3b]]
    %v1008 = vstv %s1007
    %v1009 = vmul.f32 %v1008, %v558
    %v1010 = vadd.f32 %v1006, %v1009
    %s1011 = sld [smem:[#allocation10 + $0x3c]]
    %v1012 = vstv %s1011
    %v1013 = vmul.f32 %v1012, %v563
    %v1014 = vadd.f32 %v1010, %v1013
    %s1015 = sld [smem:[#allocation10 + $0x3d]]
    %v1016 = vstv %s1015
    %v1017 = vmul.f32 %v1016, %v568
    %v1018 = vadd.f32 %v1014, %v1017
    %s1019 = sld [smem:[#allocation10 + $0x3e]]
    %v1020 = vstv %s1019
    %v1021 = vmul.f32 %v1020, %v573
    %v1022 = vadd.f32 %v1018, %v1021
    %s1023 = sld [smem:[#allocation10 + $0x3f]]
    %v1024 = vstv %s1023
    %v1025 = vmul.f32 %v1024, %v578
    %v1026 = vadd.f32 %v1022, %v1025
    %v1027 = vmax.f32 %v1026, 0.0
    %s1028 = scalar_lea.vmem [#allocation13], 224
    %v1029 = vld [vmem:[%s1028] sm:$0xff]
    %v1030 = vld [vmem:[%s1028 + $0x8] sm:$0xff]
    %v1031 = vld [vmem:[%s1028 + $0x10] sm:$0xff]
    %v1032 = vld [vmem:[%s1028 + $0x18] sm:$0xff]
    %v1034 = vsel %vm158, %v1027, 0
    %1036 = vmatpush.msra.mxu0 0.0
    %1037 = vmatpush.msra.mxu0 0.0
    %1038 = vmatpush.msra.mxu0 0.0
    %1039 = vmatpush.msra.mxu0 0.0
    %1040 = vmatpush.msra.mxu0 0.0
    %1041 = vmatpush.msra.mxu0 0.0
    %1042 = vmatpush.msra.mxu0 0.0
    %1043 = vmatpush.msra.mxu0 0.0
    %1044 = vmatpush.msra.mxu0 0.0
    %1045 = vmatpush.msra.mxu0 0.0
    %1046 = vmatpush.msra.mxu0 0.0
    %1047 = vmatpush.msra.mxu0 0.0
    %1048 = vmatpush.msra.mxu0 %v1032
    %1049 = vmatpush.msra.mxu0 %v1031
    %1050 = vmatpush.msra.mxu0 %v1030
    %1051 = vmatpush.msra.mxu0 %v1029
    %1052 = vmatmul.f32.gmra.mxu0 %v1034
    %v1053 = vpop.f32.mrf.mxu0
    %v1054 = vadd.f32 0.0, %v1053
    %1055 = vdwg.mxu0
    %v1056 = vadd.f32 %v992, %v1054
    %s1057 = sld [smem:[#allocation10 + $0x40]]
    %v1058 = vstv %s1057
    %v1059 = vmul.f32 %v1058, %v541
    %s1060 = sld [smem:[#allocation11 + $0x8]]
    %v1061 = vstv %s1060
    %v1062 = vadd.f32 %v1059, %v1061
    %s1063 = sld [smem:[#allocation10 + $0x41]]
    %v1064 = vstv %s1063
    %v1065 = vmul.f32 %v1064, %v548
    %v1066 = vadd.f32 %v1062, %v1065
    %s1067 = sld [smem:[#allocation10 + $0x42]]
    %v1068 = vstv %s1067
    %v1069 = vmul.f32 %v1068, %v553
    %v1070 = vadd.f32 %v1066, %v1069
    %s1071 = sld [smem:[#allocation10 + $0x43]]
    %v1072 = vstv %s1071
    %v1073 = vmul.f32 %v1072, %v558
    %v1074 = vadd.f32 %v1070, %v1073
    %s1075 = sld [smem:[#allocation10 + $0x44]]
    %v1076 = vstv %s1075
    %v1077 = vmul.f32 %v1076, %v563
    %v1078 = vadd.f32 %v1074, %v1077
    %s1079 = sld [smem:[#allocation10 + $0x45]]
    %v1080 = vstv %s1079
    %v1081 = vmul.f32 %v1080, %v568
    %v1082 = vadd.f32 %v1078, %v1081
    %s1083 = sld [smem:[#allocation10 + $0x46]]
    %v1084 = vstv %s1083
    %v1085 = vmul.f32 %v1084, %v573
    %v1086 = vadd.f32 %v1082, %v1085
    %s1087 = sld [smem:[#allocation10 + $0x47]]
    %v1088 = vstv %s1087
    %v1089 = vmul.f32 %v1088, %v578
    %v1090 = vadd.f32 %v1086, %v1089
    %v1091 = vmax.f32 %v1090, 0.0
    %s1092 = scalar_lea.vmem [#allocation13], 256
    %v1093 = vld [vmem:[%s1092] sm:$0xff]
    %v1094 = vld [vmem:[%s1092 + $0x8] sm:$0xff]
    %v1095 = vld [vmem:[%s1092 + $0x10] sm:$0xff]
    %v1096 = vld [vmem:[%s1092 + $0x18] sm:$0xff]
    %v1098 = vsel %vm158, %v1091, 0
    %1100 = vmatpush.msra.mxu0 0.0
    %1101 = vmatpush.msra.mxu0 0.0
    %1102 = vmatpush.msra.mxu0 0.0
    %1103 = vmatpush.msra.mxu0 0.0
    %1104 = vmatpush.msra.mxu0 0.0
    %1105 = vmatpush.msra.mxu0 0.0
    %1106 = vmatpush.msra.mxu0 0.0
    %1107 = vmatpush.msra.mxu0 0.0
    %1108 = vmatpush.msra.mxu0 0.0
    %1109 = vmatpush.msra.mxu0 0.0
    %1110 = vmatpush.msra.mxu0 0.0
    %1111 = vmatpush.msra.mxu0 0.0
    %1112 = vmatpush.msra.mxu0 %v1096
    %1113 = vmatpush.msra.mxu0 %v1095
    %1114 = vmatpush.msra.mxu0 %v1094
    %1115 = vmatpush.msra.mxu0 %v1093
    %1116 = vmatmul.f32.gmra.mxu0 %v1098
    %v1117 = vpop.f32.mrf.mxu0
    %v1118 = vadd.f32 0.0, %v1117
    %1119 = vdwg.mxu0
    %v1120 = vadd.f32 %v1056, %v1118
    %s1121 = sld [smem:[#allocation10 + $0x48]]
    %v1122 = vstv %s1121
    %v1123 = vmul.f32 %v1122, %v541
    %s1124 = sld [smem:[#allocation11 + $0x9]]
    %v1125 = vstv %s1124
    %v1126 = vadd.f32 %v1123, %v1125
    %s1127 = sld [smem:[#allocation10 + $0x49]]
    %v1128 = vstv %s1127
    %v1129 = vmul.f32 %v1128, %v548
    %v1130 = vadd.f32 %v1126, %v1129
    %s1131 = sld [smem:[#allocation10 + $0x4a]]
    %v1132 = vstv %s1131
    %v1133 = vmul.f32 %v1132, %v553
    %v1134 = vadd.f32 %v1130, %v1133
    %s1135 = sld [smem:[#allocation10 + $0x4b]]
    %v1136 = vstv %s1135
    %v1137 = vmul.f32 %v1136, %v558
    %v1138 = vadd.f32 %v1134, %v1137
    %s1139 = sld [smem:[#allocation10 + $0x4c]]
    %v1140 = vstv %s1139
    %v1141 = vmul.f32 %v1140, %v563
    %v1142 = vadd.f32 %v1138, %v1141
    %s1143 = sld [smem:[#allocation10 + $0x4d]]
    %v1144 = vstv %s1143
    %v1145 = vmul.f32 %v1144, %v568
    %v1146 = vadd.f32 %v1142, %v1145
    %s1147 = sld [smem:[#allocation10 + $0x4e]]
    %v1148 = vstv %s1147
    %v1149 = vmul.f32 %v1148, %v573
    %v1150 = vadd.f32 %v1146, %v1149
    %s1151 = sld [smem:[#allocation10 + $0x4f]]
    %v1152 = vstv %s1151
    %v1153 = vmul.f32 %v1152, %v578
    %v1154 = vadd.f32 %v1150, %v1153
    %v1155 = vmax.f32 %v1154, 0.0
    %s1156 = scalar_lea.vmem [#allocation13], 288
    %v1157 = vld [vmem:[%s1156] sm:$0xff]
    %v1158 = vld [vmem:[%s1156 + $0x8] sm:$0xff]
    %v1159 = vld [vmem:[%s1156 + $0x10] sm:$0xff]
    %v1160 = vld [vmem:[%s1156 + $0x18] sm:$0xff]
    %v1162 = vsel %vm158, %v1155, 0
    %1164 = vmatpush.msra.mxu0 0.0
    %1165 = vmatpush.msra.mxu0 0.0
    %1166 = vmatpush.msra.mxu0 0.0
    %1167 = vmatpush.msra.mxu0 0.0
    %1168 = vmatpush.msra.mxu0 0.0
    %1169 = vmatpush.msra.mxu0 0.0
    %1170 = vmatpush.msra.mxu0 0.0
    %1171 = vmatpush.msra.mxu0 0.0
    %1172 = vmatpush.msra.mxu0 0.0
    %1173 = vmatpush.msra.mxu0 0.0
    %1174 = vmatpush.msra.mxu0 0.0
    %1175 = vmatpush.msra.mxu0 0.0
    %1176 = vmatpush.msra.mxu0 %v1160
    %1177 = vmatpush.msra.mxu0 %v1159
    %1178 = vmatpush.msra.mxu0 %v1158
    %1179 = vmatpush.msra.mxu0 %v1157
    %1180 = vmatmul.f32.gmra.mxu0 %v1162
    %v1181 = vpop.f32.mrf.mxu0
    %v1182 = vadd.f32 0.0, %v1181
    %1183 = vdwg.mxu0
    %v1184 = vadd.f32 %v1120, %v1182
    %s1185 = sld [smem:[#allocation10 + $0x50]]
    %v1186 = vstv %s1185
    %v1187 = vmul.f32 %v1186, %v541
    %s1188 = sld [smem:[#allocation11 + $0xa]]
    %v1189 = vstv %s1188
    %v1190 = vadd.f32 %v1187, %v1189
    %s1191 = sld [smem:[#allocation10 + $0x51]]
    %v1192 = vstv %s1191
    %v1193 = vmul.f32 %v1192, %v548
    %v1194 = vadd.f32 %v1190, %v1193
    %s1195 = sld [smem:[#allocation10 + $0x52]]
    %v1196 = vstv %s1195
    %v1197 = vmul.f32 %v1196, %v553
    %v1198 = vadd.f32 %v1194, %v1197
    %s1199 = sld [smem:[#allocation10 + $0x53]]
    %v1200 = vstv %s1199
    %v1201 = vmul.f32 %v1200, %v558
    %v1202 = vadd.f32 %v1198, %v1201
    %s1203 = sld [smem:[#allocation10 + $0x54]]
    %v1204 = vstv %s1203
    %v1205 = vmul.f32 %v1204, %v563
    %v1206 = vadd.f32 %v1202, %v1205
    %s1207 = sld [smem:[#allocation10 + $0x55]]
    %v1208 = vstv %s1207
    %v1209 = vmul.f32 %v1208, %v568
    %v1210 = vadd.f32 %v1206, %v1209
    %s1211 = sld [smem:[#allocation10 + $0x56]]
    %v1212 = vstv %s1211
    %v1213 = vmul.f32 %v1212, %v573
    %v1214 = vadd.f32 %v1210, %v1213
    %s1215 = sld [smem:[#allocation10 + $0x57]]
    %v1216 = vstv %s1215
    %v1217 = vmul.f32 %v1216, %v578
    %v1218 = vadd.f32 %v1214, %v1217
    %v1219 = vmax.f32 %v1218, 0.0
    %s1220 = scalar_lea.vmem [#allocation13], 320
    %v1221 = vld [vmem:[%s1220] sm:$0xff]
    %v1222 = vld [vmem:[%s1220 + $0x8] sm:$0xff]
    %v1223 = vld [vmem:[%s1220 + $0x10] sm:$0xff]
    %v1224 = vld [vmem:[%s1220 + $0x18] sm:$0xff]
    %v1226 = vsel %vm158, %v1219, 0
    %1228 = vmatpush.msra.mxu0 0.0
    %1229 = vmatpush.msra.mxu0 0.0
    %1230 = vmatpush.msra.mxu0 0.0
    %1231 = vmatpush.msra.mxu0 0.0
    %1232 = vmatpush.msra.mxu0 0.0
    %1233 = vmatpush.msra.mxu0 0.0
    %1234 = vmatpush.msra.mxu0 0.0
    %1235 = vmatpush.msra.mxu0 0.0
    %1236 = vmatpush.msra.mxu0 0.0
    %1237 = vmatpush.msra.mxu0 0.0
    %1238 = vmatpush.msra.mxu0 0.0
    %1239 = vmatpush.msra.mxu0 0.0
    %1240 = vmatpush.msra.mxu0 %v1224
    %1241 = vmatpush.msra.mxu0 %v1223
    %1242 = vmatpush.msra.mxu0 %v1222
    %1243 = vmatpush.msra.mxu0 %v1221
    %1244 = vmatmul.f32.gmra.mxu0 %v1226
    %v1245 = vpop.f32.mrf.mxu0
    %v1246 = vadd.f32 0.0, %v1245
    %1247 = vdwg.mxu0
    %v1248 = vadd.f32 %v1184, %v1246
    %s1249 = sld [smem:[#allocation10 + $0x58]]
    %v1250 = vstv %s1249
    %v1251 = vmul.f32 %v1250, %v541
    %s1252 = sld [smem:[#allocation11 + $0xb]]
    %v1253 = vstv %s1252
    %v1254 = vadd.f32 %v1251, %v1253
    %s1255 = sld [smem:[#allocation10 + $0x59]]
    %v1256 = vstv %s1255
    %v1257 = vmul.f32 %v1256, %v548
    %v1258 = vadd.f32 %v1254, %v1257
    %s1259 = sld [smem:[#allocation10 + $0x5a]]
    %v1260 = vstv %s1259
    %v1261 = vmul.f32 %v1260, %v553
    %v1262 = vadd.f32 %v1258, %v1261
    %s1263 = sld [smem:[#allocation10 + $0x5b]]
    %v1264 = vstv %s1263
    %v1265 = vmul.f32 %v1264, %v558
    %v1266 = vadd.f32 %v1262, %v1265
    %s1267 = sld [smem:[#allocation10 + $0x5c]]
    %v1268 = vstv %s1267
    %v1269 = vmul.f32 %v1268, %v563
    %v1270 = vadd.f32 %v1266, %v1269
    %s1271 = sld [smem:[#allocation10 + $0x5d]]
    %v1272 = vstv %s1271
    %v1273 = vmul.f32 %v1272, %v568
    %v1274 = vadd.f32 %v1270, %v1273
    %s1275 = sld [smem:[#allocation10 + $0x5e]]
    %v1276 = vstv %s1275
    %v1277 = vmul.f32 %v1276, %v573
    %v1278 = vadd.f32 %v1274, %v1277
    %s1279 = sld [smem:[#allocation10 + $0x5f]]
    %v1280 = vstv %s1279
    %v1281 = vmul.f32 %v1280, %v578
    %v1282 = vadd.f32 %v1278, %v1281
    %v1283 = vmax.f32 %v1282, 0.0
    %s1284 = scalar_lea.vmem [#allocation13], 352
    %v1285 = vld [vmem:[%s1284] sm:$0xff]
    %v1286 = vld [vmem:[%s1284 + $0x8] sm:$0xff]
    %v1287 = vld [vmem:[%s1284 + $0x10] sm:$0xff]
    %v1288 = vld [vmem:[%s1284 + $0x18] sm:$0xff]
    %v1290 = vsel %vm158, %v1283, 0
    %1292 = vmatpush.msra.mxu0 0.0
    %1293 = vmatpush.msra.mxu0 0.0
    %1294 = vmatpush.msra.mxu0 0.0
    %1295 = vmatpush.msra.mxu0 0.0
    %1296 = vmatpush.msra.mxu0 0.0
    %1297 = vmatpush.msra.mxu0 0.0
    %1298 = vmatpush.msra.mxu0 0.0
    %1299 = vmatpush.msra.mxu0 0.0
    %1300 = vmatpush.msra.mxu0 0.0
    %1301 = vmatpush.msra.mxu0 0.0
    %1302 = vmatpush.msra.mxu0 0.0
    %1303 = vmatpush.msra.mxu0 0.0
    %1304 = vmatpush.msra.mxu0 %v1288
    %1305 = vmatpush.msra.mxu0 %v1287
    %1306 = vmatpush.msra.mxu0 %v1286
    %1307 = vmatpush.msra.mxu0 %v1285
    %1308 = vmatmul.f32.gmra.mxu0 %v1290
    %v1309 = vpop.f32.mrf.mxu0
    %v1310 = vadd.f32 0.0, %v1309
    %1311 = vdwg.mxu0
    %v1312 = vadd.f32 %v1248, %v1310
    %s1313 = sld [smem:[#allocation10 + $0x60]]
    %v1314 = vstv %s1313
    %v1315 = vmul.f32 %v1314, %v541
    %s1316 = sld [smem:[#allocation11 + $0xc]]
    %v1317 = vstv %s1316
    %v1318 = vadd.f32 %v1315, %v1317
    %s1319 = sld [smem:[#allocation10 + $0x61]]
    %v1320 = vstv %s1319
    %v1321 = vmul.f32 %v1320, %v548
    %v1322 = vadd.f32 %v1318, %v1321
    %s1323 = sld [smem:[#allocation10 + $0x62]]
    %v1324 = vstv %s1323
    %v1325 = vmul.f32 %v1324, %v553
    %v1326 = vadd.f32 %v1322, %v1325
    %s1327 = sld [smem:[#allocation10 + $0x63]]
    %v1328 = vstv %s1327
    %v1329 = vmul.f32 %v1328, %v558
    %v1330 = vadd.f32 %v1326, %v1329
    %s1331 = sld [smem:[#allocation10 + $0x64]]
    %v1332 = vstv %s1331
    %v1333 = vmul.f32 %v1332, %v563
    %v1334 = vadd.f32 %v1330, %v1333
    %s1335 = sld [smem:[#allocation10 + $0x65]]
    %v1336 = vstv %s1335
    %v1337 = vmul.f32 %v1336, %v568
    %v1338 = vadd.f32 %v1334, %v1337
    %s1339 = sld [smem:[#allocation10 + $0x66]]
    %v1340 = vstv %s1339
    %v1341 = vmul.f32 %v1340, %v573
    %v1342 = vadd.f32 %v1338, %v1341
    %s1343 = sld [smem:[#allocation10 + $0x67]]
    %v1344 = vstv %s1343
    %v1345 = vmul.f32 %v1344, %v578
    %v1346 = vadd.f32 %v1342, %v1345
    %v1347 = vmax.f32 %v1346, 0.0
    %s1348 = scalar_lea.vmem [#allocation13], 384
    %v1349 = vld [vmem:[%s1348] sm:$0xff]
    %v1350 = vld [vmem:[%s1348 + $0x8] sm:$0xff]
    %v1351 = vld [vmem:[%s1348 + $0x10] sm:$0xff]
    %v1352 = vld [vmem:[%s1348 + $0x18] sm:$0xff]
    %v1354 = vsel %vm158, %v1347, 0
    %1356 = vmatpush.msra.mxu0 0.0
    %1357 = vmatpush.msra.mxu0 0.0
    %1358 = vmatpush.msra.mxu0 0.0
    %1359 = vmatpush.msra.mxu0 0.0
    %1360 = vmatpush.msra.mxu0 0.0
    %1361 = vmatpush.msra.mxu0 0.0
    %1362 = vmatpush.msra.mxu0 0.0
    %1363 = vmatpush.msra.mxu0 0.0
    %1364 = vmatpush.msra.mxu0 0.0
    %1365 = vmatpush.msra.mxu0 0.0
    %1366 = vmatpush.msra.mxu0 0.0
    %1367 = vmatpush.msra.mxu0 0.0
    %1368 = vmatpush.msra.mxu0 %v1352
    %1369 = vmatpush.msra.mxu0 %v1351
    %1370 = vmatpush.msra.mxu0 %v1350
    %1371 = vmatpush.msra.mxu0 %v1349
    %1372 = vmatmul.f32.gmra.mxu0 %v1354
    %v1373 = vpop.f32.mrf.mxu0
    %v1374 = vadd.f32 0.0, %v1373
    %1375 = vdwg.mxu0
    %v1376 = vadd.f32 %v1312, %v1374
    %s1377 = sld [smem:[#allocation10 + $0x68]]
    %v1378 = vstv %s1377
    %v1379 = vmul.f32 %v1378, %v541
    %s1380 = sld [smem:[#allocation11 + $0xd]]
    %v1381 = vstv %s1380
    %v1382 = vadd.f32 %v1379, %v1381
    %s1383 = sld [smem:[#allocation10 + $0x69]]
    %v1384 = vstv %s1383
    %v1385 = vmul.f32 %v1384, %v548
    %v1386 = vadd.f32 %v1382, %v1385
    %s1387 = sld [smem:[#allocation10 + $0x6a]]
    %v1388 = vstv %s1387
    %v1389 = vmul.f32 %v1388, %v553
    %v1390 = vadd.f32 %v1386, %v1389
    %s1391 = sld [smem:[#allocation10 + $0x6b]]
    %v1392 = vstv %s1391
    %v1393 = vmul.f32 %v1392, %v558
    %v1394 = vadd.f32 %v1390, %v1393
    %s1395 = sld [smem:[#allocation10 + $0x6c]]
    %v1396 = vstv %s1395
    %v1397 = vmul.f32 %v1396, %v563
    %v1398 = vadd.f32 %v1394, %v1397
    %s1399 = sld [smem:[#allocation10 + $0x6d]]
    %v1400 = vstv %s1399
    %v1401 = vmul.f32 %v1400, %v568
    %v1402 = vadd.f32 %v1398, %v1401
    %s1403 = sld [smem:[#allocation10 + $0x6e]]
    %v1404 = vstv %s1403
    %v1405 = vmul.f32 %v1404, %v573
    %v1406 = vadd.f32 %v1402, %v1405
    %s1407 = sld [smem:[#allocation10 + $0x6f]]
    %v1408 = vstv %s1407
    %v1409 = vmul.f32 %v1408, %v578
    %v1410 = vadd.f32 %v1406, %v1409
    %v1411 = vmax.f32 %v1410, 0.0
    %s1412 = scalar_lea.vmem [#allocation13], 416
    %v1413 = vld [vmem:[%s1412] sm:$0xff]
    %v1414 = vld [vmem:[%s1412 + $0x8] sm:$0xff]
    %v1415 = vld [vmem:[%s1412 + $0x10] sm:$0xff]
    %v1416 = vld [vmem:[%s1412 + $0x18] sm:$0xff]
    %v1418 = vsel %vm158, %v1411, 0
    %1420 = vmatpush.msra.mxu0 0.0
    %1421 = vmatpush.msra.mxu0 0.0
    %1422 = vmatpush.msra.mxu0 0.0
    %1423 = vmatpush.msra.mxu0 0.0
    %1424 = vmatpush.msra.mxu0 0.0
    %1425 = vmatpush.msra.mxu0 0.0
    %1426 = vmatpush.msra.mxu0 0.0
    %1427 = vmatpush.msra.mxu0 0.0
    %1428 = vmatpush.msra.mxu0 0.0
    %1429 = vmatpush.msra.mxu0 0.0
    %1430 = vmatpush.msra.mxu0 0.0
    %1431 = vmatpush.msra.mxu0 0.0
    %1432 = vmatpush.msra.mxu0 %v1416
    %1433 = vmatpush.msra.mxu0 %v1415
    %1434 = vmatpush.msra.mxu0 %v1414
    %1435 = vmatpush.msra.mxu0 %v1413
    %1436 = vmatmul.f32.gmra.mxu0 %v1418
    %v1437 = vpop.f32.mrf.mxu0
    %v1438 = vadd.f32 0.0, %v1437
    %1439 = vdwg.mxu0
    %v1440 = vadd.f32 %v1376, %v1438
    %s1441 = sld [smem:[#allocation10 + $0x70]]
    %v1442 = vstv %s1441
    %v1443 = vmul.f32 %v1442, %v541
    %s1444 = sld [smem:[#allocation11 + $0xe]]
    %v1445 = vstv %s1444
    %v1446 = vadd.f32 %v1443, %v1445
    %s1447 = sld [smem:[#allocation10 + $0x71]]
    %v1448 = vstv %s1447
    %v1449 = vmul.f32 %v1448, %v548
    %v1450 = vadd.f32 %v1446, %v1449
    %s1451 = sld [smem:[#allocation10 + $0x72]]
    %v1452 = vstv %s1451
    %v1453 = vmul.f32 %v1452, %v553
    %v1454 = vadd.f32 %v1450, %v1453
    %s1455 = sld [smem:[#allocation10 + $0x73]]
    %v1456 = vstv %s1455
    %v1457 = vmul.f32 %v1456, %v558
    %v1458 = vadd.f32 %v1454, %v1457
    %s1459 = sld [smem:[#allocation10 + $0x74]]
    %v1460 = vstv %s1459
    %v1461 = vmul.f32 %v1460, %v563
    %v1462 = vadd.f32 %v1458, %v1461
    %s1463 = sld [smem:[#allocation10 + $0x75]]
    %v1464 = vstv %s1463
    %v1465 = vmul.f32 %v1464, %v568
    %v1466 = vadd.f32 %v1462, %v1465
    %s1467 = sld [smem:[#allocation10 + $0x76]]
    %v1468 = vstv %s1467
    %v1469 = vmul.f32 %v1468, %v573
    %v1470 = vadd.f32 %v1466, %v1469
    %s1471 = sld [smem:[#allocation10 + $0x77]]
    %v1472 = vstv %s1471
    %v1473 = vmul.f32 %v1472, %v578
    %v1474 = vadd.f32 %v1470, %v1473
    %v1475 = vmax.f32 %v1474, 0.0
    %s1476 = scalar_lea.vmem [#allocation13], 448
    %v1477 = vld [vmem:[%s1476] sm:$0xff]
    %v1478 = vld [vmem:[%s1476 + $0x8] sm:$0xff]
    %v1479 = vld [vmem:[%s1476 + $0x10] sm:$0xff]
    %v1480 = vld [vmem:[%s1476 + $0x18] sm:$0xff]
    %v1482 = vsel %vm158, %v1475, 0
    %1484 = vmatpush.msra.mxu0 0.0
    %1485 = vmatpush.msra.mxu0 0.0
    %1486 = vmatpush.msra.mxu0 0.0
    %1487 = vmatpush.msra.mxu0 0.0
    %1488 = vmatpush.msra.mxu0 0.0
    %1489 = vmatpush.msra.mxu0 0.0
    %1490 = vmatpush.msra.mxu0 0.0
    %1491 = vmatpush.msra.mxu0 0.0
    %1492 = vmatpush.msra.mxu0 0.0
    %1493 = vmatpush.msra.mxu0 0.0
    %1494 = vmatpush.msra.mxu0 0.0
    %1495 = vmatpush.msra.mxu0 0.0
    %1496 = vmatpush.msra.mxu0 %v1480
    %1497 = vmatpush.msra.mxu0 %v1479
    %1498 = vmatpush.msra.mxu0 %v1478
    %1499 = vmatpush.msra.mxu0 %v1477
    %1500 = vmatmul.f32.gmra.mxu0 %v1482
    %v1501 = vpop.f32.mrf.mxu0
    %v1502 = vadd.f32 0.0, %v1501
    %1503 = vdwg.mxu0
    %v1504 = vadd.f32 %v1440, %v1502
    %s1505 = sld [smem:[#allocation10 + $0x78]]
    %v1506 = vstv %s1505
    %v1507 = vmul.f32 %v1506, %v541
    %s1508 = sld [smem:[#allocation11 + $0xf]]
    %v1509 = vstv %s1508
    %v1510 = vadd.f32 %v1507, %v1509
    %s1511 = sld [smem:[#allocation10 + $0x79]]
    %v1512 = vstv %s1511
    %v1513 = vmul.f32 %v1512, %v548
    %v1514 = vadd.f32 %v1510, %v1513
    %s1515 = sld [smem:[#allocation10 + $0x7a]]
    %v1516 = vstv %s1515
    %v1517 = vmul.f32 %v1516, %v553
    %v1518 = vadd.f32 %v1514, %v1517
    %s1519 = sld [smem:[#allocation10 + $0x7b]]
    %v1520 = vstv %s1519
    %v1521 = vmul.f32 %v1520, %v558
    %v1522 = vadd.f32 %v1518, %v1521
    %s1523 = sld [smem:[#allocation10 + $0x7c]]
    %v1524 = vstv %s1523
    %v1525 = vmul.f32 %v1524, %v563
    %v1526 = vadd.f32 %v1522, %v1525
    %s1527 = sld [smem:[#allocation10 + $0x7d]]
    %v1528 = vstv %s1527
    %v1529 = vmul.f32 %v1528, %v568
    %v1530 = vadd.f32 %v1526, %v1529
    %s1531 = sld [smem:[#allocation10 + $0x7e]]
    %v1532 = vstv %s1531
    %v1533 = vmul.f32 %v1532, %v573
    %v1534 = vadd.f32 %v1530, %v1533
    %s1535 = sld [smem:[#allocation10 + $0x7f]]
    %v1536 = vstv %s1535
    %v1537 = vmul.f32 %v1536, %v578
    %v1538 = vadd.f32 %v1534, %v1537
    %v1539 = vmax.f32 %v1538, 0.0
    %s1540 = scalar_lea.vmem [#allocation13], 480
    %v1541 = vld [vmem:[%s1540] sm:$0xff]
    %v1542 = vld [vmem:[%s1540 + $0x8] sm:$0xff]
    %v1543 = vld [vmem:[%s1540 + $0x10] sm:$0xff]
    %v1544 = vld [vmem:[%s1540 + $0x18] sm:$0xff]
    %v1546 = vsel %vm158, %v1539, 0
    %1548 = vmatpush.msra.mxu0 0.0
    %1549 = vmatpush.msra.mxu0 0.0
    %1550 = vmatpush.msra.mxu0 0.0
    %1551 = vmatpush.msra.mxu0 0.0
    %1552 = vmatpush.msra.mxu0 0.0
    %1553 = vmatpush.msra.mxu0 0.0
    %1554 = vmatpush.msra.mxu0 0.0
    %1555 = vmatpush.msra.mxu0 0.0
    %1556 = vmatpush.msra.mxu0 0.0
    %1557 = vmatpush.msra.mxu0 0.0
    %1558 = vmatpush.msra.mxu0 0.0
    %1559 = vmatpush.msra.mxu0 0.0
    %1560 = vmatpush.msra.mxu0 %v1544
    %1561 = vmatpush.msra.mxu0 %v1543
    %1562 = vmatpush.msra.mxu0 %v1542
    %1563 = vmatpush.msra.mxu0 %v1541
    %1564 = vmatmul.f32.gmra.mxu0 %v1546
    %v1565 = vpop.f32.mrf.mxu0
    %v1566 = vadd.f32 0.0, %v1565
    %1567 = vdwg.mxu0
    %v1568 = vadd.f32 %v1504, %v1566
    %1569 = vst [vmem:[#allocation15] sm:$0xff] %v1568
    // Predicated region
    $region58: #{tpu_custom_call.1} parent=1 // pred_check
      _
    $region59: #{tpu_custom_call.1} parent=1 // pred_check_branch
      %1571 = sbr.rel (0) target = $region61
    $region60: #{tpu_custom_call.1} parent=1 // pred_region
      %1573 = vsyncadd [#allocation5], 0
      %s1575 = sshll.u32 [#allocation15], 4
      %s1576 = int_to_ptr.vmem [resolvable:$true] %s1575
      %s1577 = sshll.u32 %s8, 4
      %s1578 = int_to_ptr.hbm [resolvable:$true] %s1577
      %1580 = dma.vmem_to_hbm [thread:$0]  %s1576, 128, %s1578, [#allocation5]
    $region61: #{tpu_custom_call.1} parent=1 // pred_fallthru
      _
    // Predicated region
    $region62: #{tpu_custom_call.1} parent=1 // pred_check
      _
    $region63: #{tpu_custom_call.1} parent=1 // pred_check_branch
      %1582 = sbr.rel (0) target = $region65
    $region64: #{tpu_custom_call.1} parent=1 // pred_region
      %1584 = dma.done [#allocation5], 128
    $region65: #{tpu_custom_call.1} parent=1 // pred_fallthru
      _
    %1585 = vsyncpa [#allocation4], 1
    %1586 = vsyncpa [#allocation8], 1
    %1587 = vsyncpa [#allocation14], 1
    %1588 = vsyncpa [#allocation5], 1
    %1589 = vsyncpa [#allocation6], 1
    %1590 = vsyncpa [#allocation12], 1

// kernel: tpu_custom_call.1
$region0: #{tpu_custom_call.1}
  #allocation0 [shape = 'u32[]', space=smem, size = 0x4, offset = 0x4, fixed_abs, tag = 'smem constant byte address 0x4 - core index']
  #allocation1 [shape = 'u32[72,128]{1,0:T(1,128)}', space=vmem, size = 0x9000, scoped, tag = 'internal scratch']
  #allocation2 [shape = 'f32[8,8,32]{2,1,0:T(8,128)}', space=vmem, size = 0x8000, scoped, tag = 'scratch operand']
  %s0 = inlined_call_operand.hbm [shape: f32[8,8,16], index: 0, kind: input, shape index: {}]
  %s1 = inlined_call_operand.hbm [shape: f32[16,32], index: 1, kind: input, shape index: {}]
  %s2 = inlined_call_operand.vmem [shape: f32[1,32], index: 2, kind: input, shape index: {}]
  %s3 = inlined_call_operand.hbm [shape: f32[32,32], index: 3, kind: input, shape index: {}]
  %s4 = inlined_call_operand.vmem [shape: f32[1,32], index: 4, kind: input, shape index: {}]
  %s5 = inlined_call_operand.vmem [shape: f32[128], index: 5, kind: input, shape index: {}]
  %s6 = inlined_call_operand.vmem [shape: f32[16], index: 6, kind: input, shape index: {}]
  %s7 = inlined_call_operand.hbm [shape: f32[16,32,128], index: 7, kind: input, shape index: {}]
  %s8 = inlined_call_operand.hbm [shape: f32[8,128], index: 8, kind: output, shape index: {}]
  %s9 = sld [smem:[#allocation0]]
  $region66: #{tpu_custom_call.1} parent=0
    _
  %s11 = ssub.s32 1, %s9
  %s12 = scalar_select 0, %s11, %s9
  $region1: #{tpu_custom_call.1} parent=0
    #allocation3 [shape = 'u8[32768]{0}', space=vmem, size = 0x8000, scoped, tag = 'input window, operand 0, single buffered']
    #allocation4 [shape = 's32[1]{0}', space=sflag, size = 0x4, scoped, tag = 'scoped memory for tpu_custom_call.1']
    #allocation5 [shape = 's32[1]{0}', space=sflag, size = 0x4, scoped, tag = 'scoped memory for tpu_custom_call.1']
    #allocation6 [shape = 's32[1]{0}', space=sflag, size = 0x4, scoped, tag = 'scoped memory for tpu_custom_call.1']
    #allocation7 [shape = 'u8[8192]{0}', space=vmem, size = 0x2000, scoped, tag = 'input window, operand 1, single buffered']
    #allocation8 [shape = 's32[1]{0}', space=sflag, size = 0x4, scoped, tag = 'scoped memory for tpu_custom_call.1']
    #allocation9 [shape = 'u8[16384]{0}', space=vmem, size = 0x4000, scoped, tag = 'input window, operand 3, single buffered']
    #allocation10 [shape = 'u8[512]{0}', space=smem, size = 0x200, scoped, tag = 'input window, operand 5, single buffered']
    #allocation11 [shape = 'u8[512]{0}', space=smem, size = 0x200, scoped, tag = 'input window, operand 6, single buffered']
    #allocation12 [shape = 's32[1]{0}', space=sflag, size = 0x4, scoped, tag = 'scoped memory for tpu_custom_call.1']
    #allocation13 [shape = 'u8[262144]{0}', space=vmem, size = 0x40000, scoped, tag = 'input window, operand 7, single buffered']
    #allocation14 [shape = 's32[1]{0}', space=sflag, size = 0x4, scoped, tag = 'scoped memory for tpu_custom_call.1']
    #allocation15 [shape = 'u8[4096]{0}', space=vmem, size = 0x1000, scoped, tag = 'output window, operand 0, single buffered']
    %13 = vsyncpa [#allocation4], 0
    %14 = vsyncpa [#allocation8], 0
    %15 = vsyncpa [#allocation6], 0
    %16 = vsyncpa [#allocation12], 0
    %17 = vsyncpa [#allocation14], 0
    %18 = vsyncpa [#allocation5], 0
    // Predicated region
    $region2: #{tpu_custom_call.1} parent=1 // pred_check
      _
    $region3: #{tpu_custom_call.1} parent=1 // pred_check_branch
      %20 = sbr.rel (0) target = $region5
    $region4: #{tpu_custom_call.1} parent=1 // pred_region
      %22 = vsyncadd [#allocation4], 0
      %s23 = sshll.u32 %s0, 4
      %s24 = int_to_ptr.hbm [resolvable:$true] %s23
      %s25 = sshll.u32 [#allocation3], 4
      %s26 = int_to_ptr.vmem [resolvable:$true] %s25
      %31 = dma.hbm_to_vmem [thread:$0]  %s24, 1024, %s26, [#allocation4], 128, 128, 8
    $region5: #{tpu_custom_call.1} parent=1 // pred_fallthru
      _
    // Predicated region
    $region6: #{tpu_custom_call.1} parent=1 // pred_check
      _
    $region7: #{tpu_custom_call.1} parent=1 // pred_check_branch
      %33 = sbr.rel (0) target = $region9
    $region8: #{tpu_custom_call.1} parent=1 // pred_region
      %35 = vsyncadd [#allocation8], 0
      %s36 = sshll.u32 %s1, 4
      %s37 = int_to_ptr.hbm [resolvable:$true] %s36
      %s38 = sshll.u32 [#allocation7], 4
      %s39 = int_to_ptr.vmem [resolvable:$true] %s38
      %44 = dma.hbm_to_vmem [thread:$0]  %s37, 256, %s39, [#allocation8], 128, 128, 8
    $region9: #{tpu_custom_call.1} parent=1 // pred_fallthru
      _
    // Predicated region
    $region10: #{tpu_custom_call.1} parent=1 // pred_check
      _
    $region11: #{tpu_custom_call.1} parent=1 // pred_check_branch
      %46 = sbr.rel (0) target = $region13
    $region12: #{tpu_custom_call.1} parent=1 // pred_region
      _
    $region13: #{tpu_custom_call.1} parent=1 // pred_fallthru
      _
    // Predicated region
    $region14: #{tpu_custom_call.1} parent=1 // pred_check
      _
    $region15: #{tpu_custom_call.1} parent=1 // pred_check_branch
      %48 = sbr.rel (0) target = $region17
    $region16: #{tpu_custom_call.1} parent=1 // pred_region
      %50 = vsyncadd [#allocation8], 0
      %s51 = sshll.u32 %s3, 4
      %s52 = int_to_ptr.hbm [resolvable:$true] %s51
      %s53 = sshll.u32 [#allocation9], 4
      %s54 = int_to_ptr.vmem [resolvable:$true] %s53
      %59 = dma.hbm_to_vmem [thread:$0]  %s52, 512, %s54, [#allocation8], 128, 128, 8
    $region17: #{tpu_custom_call.1} parent=1 // pred_fallthru
      _
    // Predicated region
    $region18: #{tpu_custom_call.1} parent=1 // pred_check
      _
    $region19: #{tpu_custom_call.1} parent=1 // pred_check_branch
      %61 = sbr.rel (0) target = $region21
    $region20: #{tpu_custom_call.1} parent=1 // pred_region
      _
    $region21: #{tpu_custom_call.1} parent=1 // pred_fallthru
      _
    // Predicated region
    $region22: #{tpu_custom_call.1} parent=1 // pred_check
      _
    $region23: #{tpu_custom_call.1} parent=1 // pred_check_branch
      %63 = sbr.rel (0) target = $region25
    $region24: #{tpu_custom_call.1} parent=1 // pred_region
      %65 = vsyncadd [#allocation6], 0
      %s67 = sshll.u32 %s5, 4
      %s68 = int_to_ptr.vmem [resolvable:$true] %s67
      %70 = dma.vmem_to_smem %s68, 16, [#allocation10], [#allocation6]
    $region25: #{tpu_custom_call.1} parent=1 // pred_fallthru
      _
    // Predicated region
    $region26: #{tpu_custom_call.1} parent=1 // pred_check
      _
    $region27: #{tpu_custom_call.1} parent=1 // pred_check_branch
      %72 = sbr.rel (0) target = $region29
    $region28: #{tpu_custom_call.1} parent=1 // pred_region
      %74 = vsyncadd [#allocation12], 0
      %s76 = sshll.u32 %s6, 4
      %s77 = int_to_ptr.vmem [resolvable:$true] %s76
      %79 = dma.vmem_to_smem %s77, 16, [#allocation11], [#allocation12]
    $region29: #{tpu_custom_call.1} parent=1 // pred_fallthru
      _
    // Predicated region
    $region30: #{tpu_custom_call.1} parent=1 // pred_check
      _
    $region31: #{tpu_custom_call.1} parent=1 // pred_check_branch
      %81 = sbr.rel (0) target = $region33
    $region32: #{tpu_custom_call.1} parent=1 // pred_region
      %83 = vsyncadd [#allocation14], 0
      %s84 = sshll.u32 %s7, 4
      %s85 = int_to_ptr.hbm [resolvable:$true] %s84
      %s86 = sshll.u32 [#allocation13], 4
      %s87 = int_to_ptr.vmem [resolvable:$true] %s86
      %92 = dma.hbm_to_vmem [thread:$0]  %s85, 8192, %s87, [#allocation14], 128, 128, 8
    $region33: #{tpu_custom_call.1} parent=1 // pred_fallthru
      _
    // Predicated region
    $region34: #{tpu_custom_call.1} parent=1 // pred_check
      _
    $region35: #{tpu_custom_call.1} parent=1 // pred_check_branch
      %94 = sbr.rel (0) target = $region37
    $region36: #{tpu_custom_call.1} parent=1 // pred_region
      %96 = dma.done [#allocation4], 1024
    $region37: #{tpu_custom_call.1} parent=1 // pred_fallthru
      _
    // Predicated region
    $region38: #{tpu_custom_call.1} parent=1 // pred_check
      _
    $region39: #{tpu_custom_call.1} parent=1 // pred_check_branch
      %98 = sbr.rel (0) target = $region41
    $region40: #{tpu_custom_call.1} parent=1 // pred_region
      %100 = dma.done [#allocation8], 256
    $region41: #{tpu_custom_call.1} parent=1 // pred_fallthru
      _
    // Predicated region
    $region42: #{tpu_custom_call.1} parent=1 // pred_check
      _
    $region43: #{tpu_custom_call.1} parent=1 // pred_check_branch
      %102 = sbr.rel (0) target = $region45
    $region44: #{tpu_custom_call.1} parent=1 // pred_region
      %104 = dma.done [#allocation8], 512
    $region45: #{tpu_custom_call.1} parent=1 // pred_fallthru
      _
    // Predicated region
    $region46: #{tpu_custom_call.1} parent=1 // pred_check
      _
    $region47: #{tpu_custom_call.1} parent=1 // pred_check_branch
      %106 = sbr.rel (0) target = $region49
    $region48: #{tpu_custom_call.1} parent=1 // pred_region
      %108 = dma.done [#allocation6], 16
    $region49: #{tpu_custom_call.1} parent=1 // pred_fallthru
      _
    // Predicated region
    $region50: #{tpu_custom_call.1} parent=1 // pred_check
      _
    $region51: #{tpu_custom_call.1} parent=1 // pred_check_branch
      %110 = sbr.rel (0) target = $region53
    $region52: #{tpu_custom_call.1} parent=1 // pred_region
      %112 = dma.done [#allocation12], 16
    $region53: #{tpu_custom_call.1} parent=1 // pred_fallthru
      _
    // Predicated region
    $region54: #{tpu_custom_call.1} parent=1 // pred_check
      _
    $region55: #{tpu_custom_call.1} parent=1 // pred_check_branch
      %114 = sbr.rel (0) target = $region57
    $region56: #{tpu_custom_call.1} parent=1 // pred_region
      %116 = dma.done [#allocation14], 8192
    $region57: #{tpu_custom_call.1} parent=1 // pred_fallthru
      _
    %117 = sfence
    %v118 = vld [vmem:[#allocation7] sm:$0xff]
    %v119 = vld [vmem:[#allocation7 + $0x8] sm:$0xff]
    %v120 = vld [vmem:[#allocation9] sm:$0xff]
    %v121 = vld [vmem:[#allocation9 + $0x8] sm:$0xff]
    %v122 = vld [vmem:[#allocation9 + $0x10] sm:$0xff]
    %v123 = vld [vmem:[#allocation9 + $0x18] sm:$0xff]
    %v124 = vld [vmem:[%s2] sm:$0x1]
    %v125 = vld [vmem:[%s4] sm:$0x1]
    %v126 = vld [vmem:[#allocation3] sm:$0xff]
    %v128 = vperm.slane %v124, 0
    %vm130 = vcmask 130048
    %v132 = vsel %vm130, %v126, 0
    %134 = vmatpush.msra.mxu0 0.0
    %135 = vmatpush.msra.mxu0 0.0
    %136 = vmatpush.msra.mxu0 0.0
    %137 = vmatpush.msra.mxu0 0.0
    %138 = vmatpush.msra.mxu0 0.0
    %139 = vmatpush.msra.mxu0 0.0
    %140 = vmatpush.msra.mxu0 0.0
    %141 = vmatpush.msra.mxu0 0.0
    %142 = vmatpush.msra.mxu0 0.0
    %143 = vmatpush.msra.mxu0 0.0
    %144 = vmatpush.msra.mxu0 0.0
    %145 = vmatpush.msra.mxu0 0.0
    %146 = vmatpush.msra.mxu0 0.0
    %147 = vmatpush.msra.mxu0 0.0
    %148 = vmatpush.msra.mxu0 %v119
    %149 = vmatpush.msra.mxu0 %v118
    %150 = vmatmul.f32.gmra.mxu0 %v132
    %v151 = vpop.f32.mrf.mxu0
    %v152 = vadd.f32 %v128, %v151
    %153 = vdwg.mxu0
    %v154 = vmax.f32 %v152, 0.0
    %v156 = vperm.slane %v125, 0
    %vm158 = vcmask 261120
    %v160 = vsel %vm158, %v154, 0
    %162 = vmatpush.msra.mxu0 0.0
    %163 = vmatpush.msra.mxu0 0.0
    %164 = vmatpush.msra.mxu0 0.0
    %165 = vmatpush.msra.mxu0 0.0
    %166 = vmatpush.msra.mxu0 0.0
    %167 = vmatpush.msra.mxu0 0.0
    %168 = vmatpush.msra.mxu0 0.0
    %169 = vmatpush.msra.mxu0 0.0
    %170 = vmatpush.msra.mxu0 0.0
    %171 = vmatpush.msra.mxu0 0.0
    %172 = vmatpush.msra.mxu0 0.0
    %173 = vmatpush.msra.mxu0 0.0
    %174 = vmatpush.msra.mxu0 %v123
    %175 = vmatpush.msra.mxu0 %v122
    %176 = vmatpush.msra.mxu0 %v121
    %177 = vmatpush.msra.mxu0 %v120
    %178 = vmatmul.f32.gmra.mxu0 %v160
    %v179 = vpop.f32.mrf.mxu0
    %v180 = vadd.f32 %v156, %v179
    %181 = vdwg.mxu0
    %182 = vst.msk [vmem:[#allocation2] sm:$0xff] %vm158, %v180
    %s183 = scalar_lea.vmem [#allocation3], 8
    %v184 = vld [vmem:[%s183] sm:$0xff]
    %v186 = vsel %vm130, %v184, 0
    %188 = vmatpush.msra.mxu0 0.0
    %189 = vmatpush.msra.mxu0 0.0
    %190 = vmatpush.msra.mxu0 0.0
    %191 = vmatpush.msra.mxu0 0.0
    %192 = vmatpush.msra.mxu0 0.0
    %193 = vmatpush.msra.mxu0 0.0
    %194 = vmatpush.msra.mxu0 0.0
    %195 = vmatpush.msra.mxu0 0.0
    %196 = vmatpush.msra.mxu0 0.0
    %197 = vmatpush.msra.mxu0 0.0
    %198 = vmatpush.msra.mxu0 0.0
    %199 = vmatpush.msra.mxu0 0.0
    %200 = vmatpush.msra.mxu0 0.0
    %201 = vmatpush.msra.mxu0 0.0
    %202 = vmatpush.msra.mxu0 %v119
    %203 = vmatpush.msra.mxu0 %v118
    %204 = vmatmul.f32.gmra.mxu0 %v186
    %v205 = vpop.f32.mrf.mxu0
    %v206 = vadd.f32 %v128, %v205
    %207 = vdwg.mxu0
    %v208 = vmax.f32 %v206, 0.0
    %v210 = vsel %vm158, %v208, 0
    %212 = vmatpush.msra.mxu0 0.0
    %213 = vmatpush.msra.mxu0 0.0
    %214 = vmatpush.msra.mxu0 0.0
    %215 = vmatpush.msra.mxu0 0.0
    %216 = vmatpush.msra.mxu0 0.0
    %217 = vmatpush.msra.mxu0 0.0
    %218 = vmatpush.msra.mxu0 0.0
    %219 = vmatpush.msra.mxu0 0.0
    %220 = vmatpush.msra.mxu0 0.0
    %221 = vmatpush.msra.mxu0 0.0
    %222 = vmatpush.msra.mxu0 0.0
    %223 = vmatpush.msra.mxu0 0.0
    %224 = vmatpush.msra.mxu0 %v123
    %225 = vmatpush.msra.mxu0 %v122
    %226 = vmatpush.msra.mxu0 %v121
    %227 = vmatpush.msra.mxu0 %v120
    %228 = vmatmul.f32.gmra.mxu0 %v210
    %v229 = vpop.f32.mrf.mxu0
    %v230 = vadd.f32 %v156, %v229
    %231 = vdwg.mxu0
    %s232 = scalar_lea.vmem [#allocation2], 8
    %233 = vst.msk [vmem:[%s232] sm:$0xff] %vm158, %v230
    %s234 = scalar_lea.vmem [#allocation3], 16
    %v235 = vld [vmem:[%s234] sm:$0xff]
    %v237 = vsel %vm130, %v235, 0
    %239 = vmatpush.msra.mxu0 0.0
    %240 = vmatpush.msra.mxu0 0.0
    %241 = vmatpush.msra.mxu0 0.0
    %242 = vmatpush.msra.mxu0 0.0
    %243 = vmatpush.msra.mxu0 0.0
    %244 = vmatpush.msra.mxu0 0.0
    %245 = vmatpush.msra.mxu0 0.0
    %246 = vmatpush.msra.mxu0 0.0
    %247 = vmatpush.msra.mxu0 0.0
    %248 = vmatpush.msra.mxu0 0.0
    %249 = vmatpush.msra.mxu0 0.0
    %250 = vmatpush.msra.mxu0 0.0
    %251 = vmatpush.msra.mxu0 0.0
    %252 = vmatpush.msra.mxu0 0.0
    %253 = vmatpush.msra.mxu0 %v119
    %254 = vmatpush.msra.mxu0 %v118
    %255 = vmatmul.f32.gmra.mxu0 %v237
    %v256 = vpop.f32.mrf.mxu0
    %v257 = vadd.f32 %v128, %v256
    %258 = vdwg.mxu0
    %v259 = vmax.f32 %v257, 0.0
    %v261 = vsel %vm158, %v259, 0
    %263 = vmatpush.msra.mxu0 0.0
    %264 = vmatpush.msra.mxu0 0.0
    %265 = vmatpush.msra.mxu0 0.0
    %266 = vmatpush.msra.mxu0 0.0
    %267 = vmatpush.msra.mxu0 0.0
    %268 = vmatpush.msra.mxu0 0.0
    %269 = vmatpush.msra.mxu0 0.0
    %270 = vmatpush.msra.mxu0 0.0
    %271 = vmatpush.msra.mxu0 0.0
    %272 = vmatpush.msra.mxu0 0.0
    %273 = vmatpush.msra.mxu0 0.0
    %274 = vmatpush.msra.mxu0 0.0
    %275 = vmatpush.msra.mxu0 %v123
    %276 = vmatpush.msra.mxu0 %v122
    %277 = vmatpush.msra.mxu0 %v121
    %278 = vmatpush.msra.mxu0 %v120
    %279 = vmatmul.f32.gmra.mxu0 %v261
    %v280 = vpop.f32.mrf.mxu0
    %v281 = vadd.f32 %v156, %v280
    %282 = vdwg.mxu0
    %s283 = scalar_lea.vmem [#allocation2], 16
    %284 = vst.msk [vmem:[%s283] sm:$0xff] %vm158, %v281
    %s285 = scalar_lea.vmem [#allocation3], 24
    %v286 = vld [vmem:[%s285] sm:$0xff]
    %v288 = vsel %vm130, %v286, 0
    %290 = vmatpush.msra.mxu0 0.0
    %291 = vmatpush.msra.mxu0 0.0
    %292 = vmatpush.msra.mxu0 0.0
    %293 = vmatpush.msra.mxu0 0.0
    %294 = vmatpush.msra.mxu0 0.0
    %295 = vmatpush.msra.mxu0 0.0
    %296 = vmatpush.msra.mxu0 0.0
    %297 = vmatpush.msra.mxu0 0.0
    %298 = vmatpush.msra.mxu0 0.0
    %299 = vmatpush.msra.mxu0 0.0
    %300 = vmatpush.msra.mxu0 0.0
    %301 = vmatpush.msra.mxu0 0.0
    %302 = vmatpush.msra.mxu0 0.0
    %303 = vmatpush.msra.mxu0 0.0
    %304 = vmatpush.msra.mxu0 %v119
    %305 = vmatpush.msra.mxu0 %v118
    %306 = vmatmul.f32.gmra.mxu0 %v288
    %v307 = vpop.f32.mrf.mxu0
    %v308 = vadd.f32 %v128, %v307
    %309 = vdwg.mxu0
    %v310 = vmax.f32 %v308, 0.0
    %v312 = vsel %vm158, %v310, 0
    %314 = vmatpush.msra.mxu0 0.0
    %315 = vmatpush.msra.mxu0 0.0
    %316 = vmatpush.msra.mxu0 0.0
    %317 = vmatpush.msra.mxu0 0.0
    %318 = vmatpush.msra.mxu0 0.0
    %319 = vmatpush.msra.mxu0 0.0
    %320 = vmatpush.msra.mxu0 0.0
    %321 = vmatpush.msra.mxu0 0.0
    %322 = vmatpush.msra.mxu0 0.0
    %323 = vmatpush.msra.mxu0 0.0
    %324 = vmatpush.msra.mxu0 0.0
    %325 = vmatpush.msra.mxu0 0.0
    %326 = vmatpush.msra.mxu0 %v123
    %327 = vmatpush.msra.mxu0 %v122
    %328 = vmatpush.msra.mxu0 %v121
    %329 = vmatpush.msra.mxu0 %v120
    %330 = vmatmul.f32.gmra.mxu0 %v312
    %v331 = vpop.f32.mrf.mxu0
    %v332 = vadd.f32 %v156, %v331
    %333 = vdwg.mxu0
    %s334 = scalar_lea.vmem [#allocation2], 24
    %335 = vst.msk [vmem:[%s334] sm:$0xff] %vm158, %v332
    %s336 = scalar_lea.vmem [#allocation3], 32
    %v337 = vld [vmem:[%s336] sm:$0xff]
    %v339 = vsel %vm130, %v337, 0
    %341 = vmatpush.msra.mxu0 0.0
    %342 = vmatpush.msra.mxu0 0.0
    %343 = vmatpush.msra.mxu0 0.0
    %344 = vmatpush.msra.mxu0 0.0
    %345 = vmatpush.msra.mxu0 0.0
    %346 = vmatpush.msra.mxu0 0.0
    %347 = vmatpush.msra.mxu0 0.0
    %348 = vmatpush.msra.mxu0 0.0
    %349 = vmatpush.msra.mxu0 0.0
    %350 = vmatpush.msra.mxu0 0.0
    %351 = vmatpush.msra.mxu0 0.0
    %352 = vmatpush.msra.mxu0 0.0
    %353 = vmatpush.msra.mxu0 0.0
    %354 = vmatpush.msra.mxu0 0.0
    %355 = vmatpush.msra.mxu0 %v119
    %356 = vmatpush.msra.mxu0 %v118
    %357 = vmatmul.f32.gmra.mxu0 %v339
    %v358 = vpop.f32.mrf.mxu0
    %v359 = vadd.f32 %v128, %v358
    %360 = vdwg.mxu0
    %v361 = vmax.f32 %v359, 0.0
    %v363 = vsel %vm158, %v361, 0
    %365 = vmatpush.msra.mxu0 0.0
    %366 = vmatpush.msra.mxu0 0.0
    %367 = vmatpush.msra.mxu0 0.0
    %368 = vmatpush.msra.mxu0 0.0
    %369 = vmatpush.msra.mxu0 0.0
    %370 = vmatpush.msra.mxu0 0.0
    %371 = vmatpush.msra.mxu0 0.0
    %372 = vmatpush.msra.mxu0 0.0
    %373 = vmatpush.msra.mxu0 0.0
    %374 = vmatpush.msra.mxu0 0.0
    %375 = vmatpush.msra.mxu0 0.0
    %376 = vmatpush.msra.mxu0 0.0
    %377 = vmatpush.msra.mxu0 %v123
    %378 = vmatpush.msra.mxu0 %v122
    %379 = vmatpush.msra.mxu0 %v121
    %380 = vmatpush.msra.mxu0 %v120
    %381 = vmatmul.f32.gmra.mxu0 %v363
    %v382 = vpop.f32.mrf.mxu0
    %v383 = vadd.f32 %v156, %v382
    %384 = vdwg.mxu0
    %s385 = scalar_lea.vmem [#allocation2], 32
    %386 = vst.msk [vmem:[%s385] sm:$0xff] %vm158, %v383
    %s387 = scalar_lea.vmem [#allocation3], 40
    %v388 = vld [vmem:[%s387] sm:$0xff]
    %v390 = vsel %vm130, %v388, 0
    %392 = vmatpush.msra.mxu0 0.0
    %393 = vmatpush.msra.mxu0 0.0
    %394 = vmatpush.msra.mxu0 0.0
    %395 = vmatpush.msra.mxu0 0.0
    %396 = vmatpush.msra.mxu0 0.0
    %397 = vmatpush.msra.mxu0 0.0
    %398 = vmatpush.msra.mxu0 0.0
    %399 = vmatpush.msra.mxu0 0.0
    %400 = vmatpush.msra.mxu0 0.0
    %401 = vmatpush.msra.mxu0 0.0
    %402 = vmatpush.msra.mxu0 0.0
    %403 = vmatpush.msra.mxu0 0.0
    %404 = vmatpush.msra.mxu0 0.0
    %405 = vmatpush.msra.mxu0 0.0
    %406 = vmatpush.msra.mxu0 %v119
    %407 = vmatpush.msra.mxu0 %v118
    %408 = vmatmul.f32.gmra.mxu0 %v390
    %v409 = vpop.f32.mrf.mxu0
    %v410 = vadd.f32 %v128, %v409
    %411 = vdwg.mxu0
    %v412 = vmax.f32 %v410, 0.0
    %v414 = vsel %vm158, %v412, 0
    %416 = vmatpush.msra.mxu0 0.0
    %417 = vmatpush.msra.mxu0 0.0
    %418 = vmatpush.msra.mxu0 0.0
    %419 = vmatpush.msra.mxu0 0.0
    %420 = vmatpush.msra.mxu0 0.0
    %421 = vmatpush.msra.mxu0 0.0
    %422 = vmatpush.msra.mxu0 0.0
    %423 = vmatpush.msra.mxu0 0.0
    %424 = vmatpush.msra.mxu0 0.0
    %425 = vmatpush.msra.mxu0 0.0
    %426 = vmatpush.msra.mxu0 0.0
    %427 = vmatpush.msra.mxu0 0.0
    %428 = vmatpush.msra.mxu0 %v123
    %429 = vmatpush.msra.mxu0 %v122
    %430 = vmatpush.msra.mxu0 %v121
    %431 = vmatpush.msra.mxu0 %v120
    %432 = vmatmul.f32.gmra.mxu0 %v414
    %v433 = vpop.f32.mrf.mxu0
    %v434 = vadd.f32 %v156, %v433
    %435 = vdwg.mxu0
    %s436 = scalar_lea.vmem [#allocation2], 40
    %437 = vst.msk [vmem:[%s436] sm:$0xff] %vm158, %v434
    %s438 = scalar_lea.vmem [#allocation3], 48
    %v439 = vld [vmem:[%s438] sm:$0xff]
    %v441 = vsel %vm130, %v439, 0
    %443 = vmatpush.msra.mxu0 0.0
    %444 = vmatpush.msra.mxu0 0.0
    %445 = vmatpush.msra.mxu0 0.0
    %446 = vmatpush.msra.mxu0 0.0
    %447 = vmatpush.msra.mxu0 0.0
    %448 = vmatpush.msra.mxu0 0.0
    %449 = vmatpush.msra.mxu0 0.0
    %450 = vmatpush.msra.mxu0 0.0
    %451 = vmatpush.msra.mxu0 0.0
    %452 = vmatpush.msra.mxu0 0.0
    %453 = vmatpush.msra.mxu0 0.0
    %454 = vmatpush.msra.mxu0 0.0
    %455 = vmatpush.msra.mxu0 0.0
    %456 = vmatpush.msra.mxu0 0.0
    %457 = vmatpush.msra.mxu0 %v119
    %458 = vmatpush.msra.mxu0 %v118
    %459 = vmatmul.f32.gmra.mxu0 %v441
    %v460 = vpop.f32.mrf.mxu0
    %v461 = vadd.f32 %v128, %v460
    %462 = vdwg.mxu0
    %v463 = vmax.f32 %v461, 0.0
    %v465 = vsel %vm158, %v463, 0
    %467 = vmatpush.msra.mxu0 0.0
    %468 = vmatpush.msra.mxu0 0.0
    %469 = vmatpush.msra.mxu0 0.0
    %470 = vmatpush.msra.mxu0 0.0
    %471 = vmatpush.msra.mxu0 0.0
    %472 = vmatpush.msra.mxu0 0.0
    %473 = vmatpush.msra.mxu0 0.0
    %474 = vmatpush.msra.mxu0 0.0
    %475 = vmatpush.msra.mxu0 0.0
    %476 = vmatpush.msra.mxu0 0.0
    %477 = vmatpush.msra.mxu0 0.0
    %478 = vmatpush.msra.mxu0 0.0
    %479 = vmatpush.msra.mxu0 %v123
    %480 = vmatpush.msra.mxu0 %v122
    %481 = vmatpush.msra.mxu0 %v121
    %482 = vmatpush.msra.mxu0 %v120
    %483 = vmatmul.f32.gmra.mxu0 %v465
    %v484 = vpop.f32.mrf.mxu0
    %v485 = vadd.f32 %v156, %v484
    %486 = vdwg.mxu0
    %s487 = scalar_lea.vmem [#allocation2], 48
    %488 = vst.msk [vmem:[%s487] sm:$0xff] %vm158, %v485
    %s489 = scalar_lea.vmem [#allocation3], 56
    %v490 = vld [vmem:[%s489] sm:$0xff]
    %v492 = vsel %vm130, %v490, 0
    %494 = vmatpush.msra.mxu0 0.0
    %495 = vmatpush.msra.mxu0 0.0
    %496 = vmatpush.msra.mxu0 0.0
    %497 = vmatpush.msra.mxu0 0.0
    %498 = vmatpush.msra.mxu0 0.0
    %499 = vmatpush.msra.mxu0 0.0
    %500 = vmatpush.msra.mxu0 0.0
    %501 = vmatpush.msra.mxu0 0.0
    %502 = vmatpush.msra.mxu0 0.0
    %503 = vmatpush.msra.mxu0 0.0
    %504 = vmatpush.msra.mxu0 0.0
    %505 = vmatpush.msra.mxu0 0.0
    %506 = vmatpush.msra.mxu0 0.0
    %507 = vmatpush.msra.mxu0 0.0
    %508 = vmatpush.msra.mxu0 %v119
    %509 = vmatpush.msra.mxu0 %v118
    %510 = vmatmul.f32.gmra.mxu0 %v492
    %v511 = vpop.f32.mrf.mxu0
    %v512 = vadd.f32 %v128, %v511
    %513 = vdwg.mxu0
    %v514 = vmax.f32 %v512, 0.0
    %v516 = vsel %vm158, %v514, 0
    %518 = vmatpush.msra.mxu0 0.0
    %519 = vmatpush.msra.mxu0 0.0
    %520 = vmatpush.msra.mxu0 0.0
    %521 = vmatpush.msra.mxu0 0.0
    %522 = vmatpush.msra.mxu0 0.0
    %523 = vmatpush.msra.mxu0 0.0
    %524 = vmatpush.msra.mxu0 0.0
    %525 = vmatpush.msra.mxu0 0.0
    %526 = vmatpush.msra.mxu0 0.0
    %527 = vmatpush.msra.mxu0 0.0
    %528 = vmatpush.msra.mxu0 0.0
    %529 = vmatpush.msra.mxu0 0.0
    %530 = vmatpush.msra.mxu0 %v123
    %531 = vmatpush.msra.mxu0 %v122
    %532 = vmatpush.msra.mxu0 %v121
    %533 = vmatpush.msra.mxu0 %v120
    %534 = vmatmul.f32.gmra.mxu0 %v516
    %v535 = vpop.f32.mrf.mxu0
    %v536 = vadd.f32 %v156, %v535
    %537 = vdwg.mxu0
    %s538 = scalar_lea.vmem [#allocation2], 56
    %539 = vst.msk [vmem:[%s538] sm:$0xff] %vm158, %v536
    %s540 = sld [smem:[#allocation10]]
    %v541 = vld [vmem:[#allocation2] sm:$0xff]
    %v542 = vstv %s540
    %v543 = vmul.f32 %v542, %v541
    %s544 = sld [smem:[#allocation11]]
    %v545 = vstv %s544
    %v546 = vadd.f32 %v543, %v545
    %s547 = sld [smem:[#allocation10 + $0x1]]
    %v548 = vld [vmem:[%s232] sm:$0xff]
    %v549 = vstv %s547
    %v550 = vmul.f32 %v549, %v548
    %v551 = vadd.f32 %v546, %v550
    %s552 = sld [smem:[#allocation10 + $0x2]]
    %v553 = vld [vmem:[%s283] sm:$0xff]
    %v554 = vstv %s552
    %v555 = vmul.f32 %v554, %v553
    %v556 = vadd.f32 %v551, %v555
    %s557 = sld [smem:[#allocation10 + $0x3]]
    %v558 = vld [vmem:[%s334] sm:$0xff]
    %v559 = vstv %s557
    %v560 = vmul.f32 %v559, %v558
    %v561 = vadd.f32 %v556, %v560
    %s562 = sld [smem:[#allocation10 + $0x4]]
    %v563 = vld [vmem:[%s385] sm:$0xff]
    %v564 = vstv %s562
    %v565 = vmul.f32 %v564, %v563
    %v566 = vadd.f32 %v561, %v565
    %s567 = sld [smem:[#allocation10 + $0x5]]
    %v568 = vld [vmem:[%s436] sm:$0xff]
    %v569 = vstv %s567
    %v570 = vmul.f32 %v569, %v568
    %v571 = vadd.f32 %v566, %v570
    %s572 = sld [smem:[#allocation10 + $0x6]]
    %v573 = vld [vmem:[%s487] sm:$0xff]
    %v574 = vstv %s572
    %v575 = vmul.f32 %v574, %v573
    %v576 = vadd.f32 %v571, %v575
    %s577 = sld [smem:[#allocation10 + $0x7]]
    %v578 = vld [vmem:[%s538] sm:$0xff]
    %v579 = vstv %s577
    %v580 = vmul.f32 %v579, %v578
    %v581 = vadd.f32 %v576, %v580
    %v582 = vmax.f32 %v581, 0.0
    %v583 = vld [vmem:[#allocation13] sm:$0xff]
    %v584 = vld [vmem:[#allocation13 + $0x8] sm:$0xff]
    %v585 = vld [vmem:[#allocation13 + $0x10] sm:$0xff]
    %v586 = vld [vmem:[#allocation13 + $0x18] sm:$0xff]
    %s587 = sld [smem:[#allocation10 + $0x8]]
    %v588 = vstv %s587
    %v589 = vmul.f32 %v588, %v541
    %s590 = sld [smem:[#allocation11 + $0x1]]
    %v591 = vstv %s590
    %v592 = vadd.f32 %v589, %v591
    %s593 = sld [smem:[#allocation10 + $0x9]]
    %v594 = vstv %s593
    %v595 = vmul.f32 %v594, %v548
    %v596 = vadd.f32 %v592, %v595
    %s597 = sld [smem:[#allocation10 + $0xa]]
    %v598 = vstv %s597
    %v599 = vmul.f32 %v598, %v553
    %v600 = vadd.f32 %v596, %v599
    %s601 = sld [smem:[#allocation10 + $0xb]]
    %v602 = vstv %s601
    %v603 = vmul.f32 %v602, %v558
    %v604 = vadd.f32 %v600, %v603
    %s605 = sld [smem:[#allocation10 + $0xc]]
    %v606 = vstv %s605
    %v607 = vmul.f32 %v606, %v563
    %v608 = vadd.f32 %v604, %v607
    %s609 = sld [smem:[#allocation10 + $0xd]]
    %v610 = vstv %s609
    %v611 = vmul.f32 %v610, %v568
    %v612 = vadd.f32 %v608, %v611
    %s613 = sld [smem:[#allocation10 + $0xe]]
    %v614 = vstv %s613
    %v615 = vmul.f32 %v614, %v573
    %v616 = vadd.f32 %v612, %v615
    %s617 = sld [smem:[#allocation10 + $0xf]]
    %v618 = vstv %s617
    %v619 = vmul.f32 %v618, %v578
    %v620 = vadd.f32 %v616, %v619
    %v621 = vmax.f32 %v620, 0.0
    %s622 = scalar_lea.vmem [#allocation13], 32
    %v623 = vld [vmem:[%s622] sm:$0xff]
    %v624 = vld [vmem:[%s622 + $0x8] sm:$0xff]
    %v625 = vld [vmem:[%s622 + $0x10] sm:$0xff]
    %v626 = vld [vmem:[%s622 + $0x18] sm:$0xff]
    %v628 = vsel %vm158, %v621, 0
    %630 = vmatpush.msra.mxu0 0.0
    %631 = vmatpush.msra.mxu0 0.0
    %632 = vmatpush.msra.mxu0 0.0
    %633 = vmatpush.msra.mxu0 0.0
    %634 = vmatpush.msra.mxu0 0.0
    %635 = vmatpush.msra.mxu0 0.0
    %636 = vmatpush.msra.mxu0 0.0
    %637 = vmatpush.msra.mxu0 0.0
    %638 = vmatpush.msra.mxu0 0.0
    %639 = vmatpush.msra.mxu0 0.0
    %640 = vmatpush.msra.mxu0 0.0
    %641 = vmatpush.msra.mxu0 0.0
    %642 = vmatpush.msra.mxu0 %v626
    %643 = vmatpush.msra.mxu0 %v625
    %644 = vmatpush.msra.mxu0 %v624
    %645 = vmatpush.msra.mxu0 %v623
    %646 = vmatmul.f32.gmra.mxu0 %v628
    %v647 = vpop.f32.mrf.mxu0
    %v648 = vadd.f32 0.0, %v647
    %649 = vdwg.mxu0
    %v651 = vsel %vm158, %v582, 0
    %653 = vmatpush.msra.mxu0 0.0
    %654 = vmatpush.msra.mxu0 0.0
    %655 = vmatpush.msra.mxu0 0.0
    %656 = vmatpush.msra.mxu0 0.0
    %657 = vmatpush.msra.mxu0 0.0
    %658 = vmatpush.msra.mxu0 0.0
    %659 = vmatpush.msra.mxu0 0.0
    %660 = vmatpush.msra.mxu0 0.0
    %661 = vmatpush.msra.mxu0 0.0
    %662 = vmatpush.msra.mxu0 0.0
    %663 = vmatpush.msra.mxu0 0.0
    %664 = vmatpush.msra.mxu0 0.0
    %665 = vmatpush.msra.mxu0 %v586
    %666 = vmatpush.msra.mxu0 %v585
    %667 = vmatpush.msra.mxu0 %v584
    %668 = vmatpush.msra.mxu0 %v583
    %669 = vmatmul.f32.gmra.mxu0 %v651
    %v670 = vpop.f32.mrf.mxu0
    %v671 = vadd.f32 %v648, %v670
    %672 = vdwg.mxu0
    %s673 = sld [smem:[#allocation10 + $0x10]]
    %v674 = vstv %s673
    %v675 = vmul.f32 %v674, %v541
    %s676 = sld [smem:[#allocation11 + $0x2]]
    %v677 = vstv %s676
    %v678 = vadd.f32 %v675, %v677
    %s679 = sld [smem:[#allocation10 + $0x11]]
    %v680 = vstv %s679
    %v681 = vmul.f32 %v680, %v548
    %v682 = vadd.f32 %v678, %v681
    %s683 = sld [smem:[#allocation10 + $0x12]]
    %v684 = vstv %s683
    %v685 = vmul.f32 %v684, %v553
    %v686 = vadd.f32 %v682, %v685
    %s687 = sld [smem:[#allocation10 + $0x13]]
    %v688 = vstv %s687
    %v689 = vmul.f32 %v688, %v558
    %v690 = vadd.f32 %v686, %v689
    %s691 = sld [smem:[#allocation10 + $0x14]]
    %v692 = vstv %s691
    %v693 = vmul.f32 %v692, %v563
    %v694 = vadd.f32 %v690, %v693
    %s695 = sld [smem:[#allocation10 + $0x15]]
    %v696 = vstv %s695
    %v697 = vmul.f32 %v696, %v568
    %v698 = vadd.f32 %v694, %v697
    %s699 = sld [smem:[#allocation10 + $0x16]]
    %v700 = vstv %s699
    %v701 = vmul.f32 %v700, %v573
    %v702 = vadd.f32 %v698, %v701
    %s703 = sld [smem:[#allocation10 + $0x17]]
    %v704 = vstv %s703
    %v705 = vmul.f32 %v704, %v578
    %v706 = vadd.f32 %v702, %v705
    %v707 = vmax.f32 %v706, 0.0
    %s708 = scalar_lea.vmem [#allocation13], 64
    %v709 = vld [vmem:[%s708] sm:$0xff]
    %v710 = vld [vmem:[%s708 + $0x8] sm:$0xff]
    %v711 = vld [vmem:[%s708 + $0x10] sm:$0xff]
    %v712 = vld [vmem:[%s708 + $0x18] sm:$0xff]
    %v714 = vsel %vm158, %v707, 0
    %716 = vmatpush.msra.mxu0 0.0
    %717 = vmatpush.msra.mxu0 0.0
    %718 = vmatpush.msra.mxu0 0.0
    %719 = vmatpush.msra.mxu0 0.0
    %720 = vmatpush.msra.mxu0 0.0
    %721 = vmatpush.msra.mxu0 0.0
    %722 = vmatpush.msra.mxu0 0.0
    %723 = vmatpush.msra.mxu0 0.0
    %724 = vmatpush.msra.mxu0 0.0
    %725 = vmatpush.msra.mxu0 0.0
    %726 = vmatpush.msra.mxu0 0.0
    %727 = vmatpush.msra.mxu0 0.0
    %728 = vmatpush.msra.mxu0 %v712
    %729 = vmatpush.msra.mxu0 %v711
    %730 = vmatpush.msra.mxu0 %v710
    %731 = vmatpush.msra.mxu0 %v709
    %732 = vmatmul.f32.gmra.mxu0 %v714
    %v733 = vpop.f32.mrf.mxu0
    %v734 = vadd.f32 0.0, %v733
    %735 = vdwg.mxu0
    %v736 = vadd.f32 %v671, %v734
    %s737 = sld [smem:[#allocation10 + $0x18]]
    %v738 = vstv %s737
    %v739 = vmul.f32 %v738, %v541
    %s740 = sld [smem:[#allocation11 + $0x3]]
    %v741 = vstv %s740
    %v742 = vadd.f32 %v739, %v741
    %s743 = sld [smem:[#allocation10 + $0x19]]
    %v744 = vstv %s743
    %v745 = vmul.f32 %v744, %v548
    %v746 = vadd.f32 %v742, %v745
    %s747 = sld [smem:[#allocation10 + $0x1a]]
    %v748 = vstv %s747
    %v749 = vmul.f32 %v748, %v553
    %v750 = vadd.f32 %v746, %v749
    %s751 = sld [smem:[#allocation10 + $0x1b]]
    %v752 = vstv %s751
    %v753 = vmul.f32 %v752, %v558
    %v754 = vadd.f32 %v750, %v753
    %s755 = sld [smem:[#allocation10 + $0x1c]]
    %v756 = vstv %s755
    %v757 = vmul.f32 %v756, %v563
    %v758 = vadd.f32 %v754, %v757
    %s759 = sld [smem:[#allocation10 + $0x1d]]
    %v760 = vstv %s759
    %v761 = vmul.f32 %v760, %v568
    %v762 = vadd.f32 %v758, %v761
    %s763 = sld [smem:[#allocation10 + $0x1e]]
    %v764 = vstv %s763
    %v765 = vmul.f32 %v764, %v573
    %v766 = vadd.f32 %v762, %v765
    %s767 = sld [smem:[#allocation10 + $0x1f]]
    %v768 = vstv %s767
    %v769 = vmul.f32 %v768, %v578
    %v770 = vadd.f32 %v766, %v769
    %v771 = vmax.f32 %v770, 0.0
    %s772 = scalar_lea.vmem [#allocation13], 96
    %v773 = vld [vmem:[%s772] sm:$0xff]
    %v774 = vld [vmem:[%s772 + $0x8] sm:$0xff]
    %v775 = vld [vmem:[%s772 + $0x10] sm:$0xff]
    %v776 = vld [vmem:[%s772 + $0x18] sm:$0xff]
    %v778 = vsel %vm158, %v771, 0
    %780 = vmatpush.msra.mxu0 0.0
    %781 = vmatpush.msra.mxu0 0.0
    %782 = vmatpush.msra.mxu0 0.0
    %783 = vmatpush.msra.mxu0 0.0
    %784 = vmatpush.msra.mxu0 0.0
    %785 = vmatpush.msra.mxu0 0.0
    %786 = vmatpush.msra.mxu0 0.0
    %787 = vmatpush.msra.mxu0 0.0
    %788 = vmatpush.msra.mxu0 0.0
    %789 = vmatpush.msra.mxu0 0.0
    %790 = vmatpush.msra.mxu0 0.0
    %791 = vmatpush.msra.mxu0 0.0
    %792 = vmatpush.msra.mxu0 %v776
    %793 = vmatpush.msra.mxu0 %v775
    %794 = vmatpush.msra.mxu0 %v774
    %795 = vmatpush.msra.mxu0 %v773
    %796 = vmatmul.f32.gmra.mxu0 %v778
    %v797 = vpop.f32.mrf.mxu0
    %v798 = vadd.f32 0.0, %v797
    %799 = vdwg.mxu0
    %v800 = vadd.f32 %v736, %v798
    %s801 = sld [smem:[#allocation10 + $0x20]]
    %v802 = vstv %s801
    %v803 = vmul.f32 %v802, %v541
    %s804 = sld [smem:[#allocation11 + $0x4]]
    %v805 = vstv %s804
    %v806 = vadd.f32 %v803, %v805
    %s807 = sld [smem:[#allocation10 + $0x21]]
    %v808 = vstv %s807
    %v809 = vmul.f32 %v808, %v548
    %v810 = vadd.f32 %v806, %v809
    %s811 = sld [smem:[#allocation10 + $0x22]]
    %v812 = vstv %s811
    %v813 = vmul.f32 %v812, %v553
    %v814 = vadd.f32 %v810, %v813
    %s815 = sld [smem:[#allocation10 + $0x23]]
    %v816 = vstv %s815
    %v817 = vmul.f32 %v816, %v558
    %v818 = vadd.f32 %v814, %v817
    %s819 = sld [smem:[#allocation10 + $0x24]]
    %v820 = vstv %s819
    %v821 = vmul.f32 %v820, %v563
    %v822 = vadd.f32 %v818, %v821
    %s823 = sld [smem:[#allocation10 + $0x25]]
    %v824 = vstv %s823
    %v825 = vmul.f32 %v824, %v568
    %v826 = vadd.f32 %v822, %v825
    %s827 = sld [smem:[#allocation10 + $0x26]]
    %v828 = vstv %s827
    %v829 = vmul.f32 %v828, %v573
    %v830 = vadd.f32 %v826, %v829
    %s831 = sld [smem:[#allocation10 + $0x27]]
    %v832 = vstv %s831
    %v833 = vmul.f32 %v832, %v578
    %v834 = vadd.f32 %v830, %v833
    %v835 = vmax.f32 %v834, 0.0
    %s836 = scalar_lea.vmem [#allocation13], 128
    %v837 = vld [vmem:[%s836] sm:$0xff]
    %v838 = vld [vmem:[%s836 + $0x8] sm:$0xff]
    %v839 = vld [vmem:[%s836 + $0x10] sm:$0xff]
    %v840 = vld [vmem:[%s836 + $0x18] sm:$0xff]
    %v842 = vsel %vm158, %v835, 0
    %844 = vmatpush.msra.mxu0 0.0
    %845 = vmatpush.msra.mxu0 0.0
    %846 = vmatpush.msra.mxu0 0.0
    %847 = vmatpush.msra.mxu0 0.0
    %848 = vmatpush.msra.mxu0 0.0
    %849 = vmatpush.msra.mxu0 0.0
    %850 = vmatpush.msra.mxu0 0.0
    %851 = vmatpush.msra.mxu0 0.0
    %852 = vmatpush.msra.mxu0 0.0
    %853 = vmatpush.msra.mxu0 0.0
    %854 = vmatpush.msra.mxu0 0.0
    %855 = vmatpush.msra.mxu0 0.0
    %856 = vmatpush.msra.mxu0 %v840
    %857 = vmatpush.msra.mxu0 %v839
    %858 = vmatpush.msra.mxu0 %v838
    %859 = vmatpush.msra.mxu0 %v837
    %860 = vmatmul.f32.gmra.mxu0 %v842
    %v861 = vpop.f32.mrf.mxu0
    %v862 = vadd.f32 0.0, %v861
    %863 = vdwg.mxu0
    %v864 = vadd.f32 %v800, %v862
    %s865 = sld [smem:[#allocation10 + $0x28]]
    %v866 = vstv %s865
    %v867 = vmul.f32 %v866, %v541
    %s868 = sld [smem:[#allocation11 + $0x5]]
    %v869 = vstv %s868
    %v870 = vadd.f32 %v867, %v869
    %s871 = sld [smem:[#allocation10 + $0x29]]
    %v872 = vstv %s871
    %v873 = vmul.f32 %v872, %v548
    %v874 = vadd.f32 %v870, %v873
    %s875 = sld [smem:[#allocation10 + $0x2a]]
    %v876 = vstv %s875
    %v877 = vmul.f32 %v876, %v553
    %v878 = vadd.f32 %v874, %v877
    %s879 = sld [smem:[#allocation10 + $0x2b]]
    %v880 = vstv %s879
    %v881 = vmul.f32 %v880, %v558
    %v882 = vadd.f32 %v878, %v881
    %s883 = sld [smem:[#allocation10 + $0x2c]]
    %v884 = vstv %s883
    %v885 = vmul.f32 %v884, %v563
    %v886 = vadd.f32 %v882, %v885
    %s887 = sld [smem:[#allocation10 + $0x2d]]
    %v888 = vstv %s887
    %v889 = vmul.f32 %v888, %v568
    %v890 = vadd.f32 %v886, %v889
    %s891 = sld [smem:[#allocation10 + $0x2e]]
    %v892 = vstv %s891
    %v893 = vmul.f32 %v892, %v573
    %v894 = vadd.f32 %v890, %v893
    %s895 = sld [smem:[#allocation10 + $0x2f]]
    %v896 = vstv %s895
    %v897 = vmul.f32 %v896, %v578
    %v898 = vadd.f32 %v894, %v897
    %v899 = vmax.f32 %v898, 0.0
    %s900 = scalar_lea.vmem [#allocation13], 160
    %v901 = vld [vmem:[%s900] sm:$0xff]
    %v902 = vld [vmem:[%s900 + $0x8] sm:$0xff]
    %v903 = vld [vmem:[%s900 + $0x10] sm:$0xff]
    %v904 = vld [vmem:[%s900 + $0x18] sm:$0xff]
    %v906 = vsel %vm158, %v899, 0
    %908 = vmatpush.msra.mxu0 0.0
    %909 = vmatpush.msra.mxu0 0.0
    %910 = vmatpush.msra.mxu0 0.0
    %911 = vmatpush.msra.mxu0 0.0
    %912 = vmatpush.msra.mxu0 0.0
    %913 = vmatpush.msra.mxu0 0.0
    %914 = vmatpush.msra.mxu0 0.0
    %915 = vmatpush.msra.mxu0 0.0
    %916 = vmatpush.msra.mxu0 0.0
    %917 = vmatpush.msra.mxu0 0.0
    %918 = vmatpush.msra.mxu0 0.0
    %919 = vmatpush.msra.mxu0 0.0
    %920 = vmatpush.msra.mxu0 %v904
    %921 = vmatpush.msra.mxu0 %v903
    %922 = vmatpush.msra.mxu0 %v902
    %923 = vmatpush.msra.mxu0 %v901
    %924 = vmatmul.f32.gmra.mxu0 %v906
    %v925 = vpop.f32.mrf.mxu0
    %v926 = vadd.f32 0.0, %v925
    %927 = vdwg.mxu0
    %v928 = vadd.f32 %v864, %v926
    %s929 = sld [smem:[#allocation10 + $0x30]]
    %v930 = vstv %s929
    %v931 = vmul.f32 %v930, %v541
    %s932 = sld [smem:[#allocation11 + $0x6]]
    %v933 = vstv %s932
    %v934 = vadd.f32 %v931, %v933
    %s935 = sld [smem:[#allocation10 + $0x31]]
    %v936 = vstv %s935
    %v937 = vmul.f32 %v936, %v548
    %v938 = vadd.f32 %v934, %v937
    %s939 = sld [smem:[#allocation10 + $0x32]]
    %v940 = vstv %s939
    %v941 = vmul.f32 %v940, %v553
    %v942 = vadd.f32 %v938, %v941
    %s943 = sld [smem:[#allocation10 + $0x33]]
    %v944 = vstv %s943
    %v945 = vmul.f32 %v944, %v558
    %v946 = vadd.f32 %v942, %v945
    %s947 = sld [smem:[#allocation10 + $0x34]]
    %v948 = vstv %s947
    %v949 = vmul.f32 %v948, %v563
    %v950 = vadd.f32 %v946, %v949
    %s951 = sld [smem:[#allocation10 + $0x35]]
    %v952 = vstv %s951
    %v953 = vmul.f32 %v952, %v568
    %v954 = vadd.f32 %v950, %v953
    %s955 = sld [smem:[#allocation10 + $0x36]]
    %v956 = vstv %s955
    %v957 = vmul.f32 %v956, %v573
    %v958 = vadd.f32 %v954, %v957
    %s959 = sld [smem:[#allocation10 + $0x37]]
    %v960 = vstv %s959
    %v961 = vmul.f32 %v960, %v578
    %v962 = vadd.f32 %v958, %v961
    %v963 = vmax.f32 %v962, 0.0
    %s964 = scalar_lea.vmem [#allocation13], 192
    %v965 = vld [vmem:[%s964] sm:$0xff]
    %v966 = vld [vmem:[%s964 + $0x8] sm:$0xff]
    %v967 = vld [vmem:[%s964 + $0x10] sm:$0xff]
    %v968 = vld [vmem:[%s964 + $0x18] sm:$0xff]
    %v970 = vsel %vm158, %v963, 0
    %972 = vmatpush.msra.mxu0 0.0
    %973 = vmatpush.msra.mxu0 0.0
    %974 = vmatpush.msra.mxu0 0.0
    %975 = vmatpush.msra.mxu0 0.0
    %976 = vmatpush.msra.mxu0 0.0
    %977 = vmatpush.msra.mxu0 0.0
    %978 = vmatpush.msra.mxu0 0.0
    %979 = vmatpush.msra.mxu0 0.0
    %980 = vmatpush.msra.mxu0 0.0
    %981 = vmatpush.msra.mxu0 0.0
    %982 = vmatpush.msra.mxu0 0.0
    %983 = vmatpush.msra.mxu0 0.0
    %984 = vmatpush.msra.mxu0 %v968
    %985 = vmatpush.msra.mxu0 %v967
    %986 = vmatpush.msra.mxu0 %v966
    %987 = vmatpush.msra.mxu0 %v965
    %988 = vmatmul.f32.gmra.mxu0 %v970
    %v989 = vpop.f32.mrf.mxu0
    %v990 = vadd.f32 0.0, %v989
    %991 = vdwg.mxu0
    %v992 = vadd.f32 %v928, %v990
    %s993 = sld [smem:[#allocation10 + $0x38]]
    %v994 = vstv %s993
    %v995 = vmul.f32 %v994, %v541
    %s996 = sld [smem:[#allocation11 + $0x7]]
    %v997 = vstv %s996
    %v998 = vadd.f32 %v995, %v997
    %s999 = sld [smem:[#allocation10 + $0x39]]
    %v1000 = vstv %s999
    %v1001 = vmul.f32 %v1000, %v548
    %v1002 = vadd.f32 %v998, %v1001
    %s1003 = sld [smem:[#allocation10 + $0x3a]]
    %v1004 = vstv %s1003
    %v1005 = vmul.f32 %v1004, %v553
    %v1006 = vadd.f32 %v1002, %v1005
    %s1007 = sld [smem:[#allocation10 + $0x3b]]
    %v1008 = vstv %s1007
    %v1009 = vmul.f32 %v1008, %v558
    %v1010 = vadd.f32 %v1006, %v1009
    %s1011 = sld [smem:[#allocation10 + $0x3c]]
    %v1012 = vstv %s1011
    %v1013 = vmul.f32 %v1012, %v563
    %v1014 = vadd.f32 %v1010, %v1013
    %s1015 = sld [smem:[#allocation10 + $0x3d]]
    %v1016 = vstv %s1015
    %v1017 = vmul.f32 %v1016, %v568
    %v1018 = vadd.f32 %v1014, %v1017
    %s1019 = sld [smem:[#allocation10 + $0x3e]]
    %v1020 = vstv %s1019
    %v1021 = vmul.f32 %v1020, %v573
    %v1022 = vadd.f32 %v1018, %v1021
    %s1023 = sld [smem:[#allocation10 + $0x3f]]
    %v1024 = vstv %s1023
    %v1025 = vmul.f32 %v1024, %v578
    %v1026 = vadd.f32 %v1022, %v1025
    %v1027 = vmax.f32 %v1026, 0.0
    %s1028 = scalar_lea.vmem [#allocation13], 224
    %v1029 = vld [vmem:[%s1028] sm:$0xff]
    %v1030 = vld [vmem:[%s1028 + $0x8] sm:$0xff]
    %v1031 = vld [vmem:[%s1028 + $0x10] sm:$0xff]
    %v1032 = vld [vmem:[%s1028 + $0x18] sm:$0xff]
    %v1034 = vsel %vm158, %v1027, 0
    %1036 = vmatpush.msra.mxu0 0.0
    %1037 = vmatpush.msra.mxu0 0.0
    %1038 = vmatpush.msra.mxu0 0.0
    %1039 = vmatpush.msra.mxu0 0.0
    %1040 = vmatpush.msra.mxu0 0.0
    %1041 = vmatpush.msra.mxu0 0.0
    %1042 = vmatpush.msra.mxu0 0.0
    %1043 = vmatpush.msra.mxu0 0.0
    %1044 = vmatpush.msra.mxu0 0.0
    %1045 = vmatpush.msra.mxu0 0.0
    %1046 = vmatpush.msra.mxu0 0.0
    %1047 = vmatpush.msra.mxu0 0.0
    %1048 = vmatpush.msra.mxu0 %v1032
    %1049 = vmatpush.msra.mxu0 %v1031
    %1050 = vmatpush.msra.mxu0 %v1030
    %1051 = vmatpush.msra.mxu0 %v1029
    %1052 = vmatmul.f32.gmra.mxu0 %v1034
    %v1053 = vpop.f32.mrf.mxu0
    %v1054 = vadd.f32 0.0, %v1053
    %1055 = vdwg.mxu0
    %v1056 = vadd.f32 %v992, %v1054
    %s1057 = sld [smem:[#allocation10 + $0x40]]
    %v1058 = vstv %s1057
    %v1059 = vmul.f32 %v1058, %v541
    %s1060 = sld [smem:[#allocation11 + $0x8]]
    %v1061 = vstv %s1060
    %v1062 = vadd.f32 %v1059, %v1061
    %s1063 = sld [smem:[#allocation10 + $0x41]]
    %v1064 = vstv %s1063
    %v1065 = vmul.f32 %v1064, %v548
    %v1066 = vadd.f32 %v1062, %v1065
    %s1067 = sld [smem:[#allocation10 + $0x42]]
    %v1068 = vstv %s1067
    %v1069 = vmul.f32 %v1068, %v553
    %v1070 = vadd.f32 %v1066, %v1069
    %s1071 = sld [smem:[#allocation10 + $0x43]]
    %v1072 = vstv %s1071
    %v1073 = vmul.f32 %v1072, %v558
    %v1074 = vadd.f32 %v1070, %v1073
    %s1075 = sld [smem:[#allocation10 + $0x44]]
    %v1076 = vstv %s1075
    %v1077 = vmul.f32 %v1076, %v563
    %v1078 = vadd.f32 %v1074, %v1077
    %s1079 = sld [smem:[#allocation10 + $0x45]]
    %v1080 = vstv %s1079
    %v1081 = vmul.f32 %v1080, %v568
    %v1082 = vadd.f32 %v1078, %v1081
    %s1083 = sld [smem:[#allocation10 + $0x46]]
    %v1084 = vstv %s1083
    %v1085 = vmul.f32 %v1084, %v573
    %v1086 = vadd.f32 %v1082, %v1085
    %s1087 = sld [smem:[#allocation10 + $0x47]]
    %v1088 = vstv %s1087
    %v1089 = vmul.f32 %v1088, %v578
    %v1090 = vadd.f32 %v1086, %v1089
    %v1091 = vmax.f32 %v1090, 0.0
    %s1092 = scalar_lea.vmem [#allocation13], 256
    %v1093 = vld [vmem:[%s1092] sm:$0xff]
    %v1094 = vld [vmem:[%s1092 + $0x8] sm:$0xff]
    %v1095 = vld [vmem:[%s1092 + $0x10] sm:$0xff]
    %v1096 = vld [vmem:[%s1092 + $0x18] sm:$0xff]
    %v1098 = vsel %vm158, %v1091, 0
    %1100 = vmatpush.msra.mxu0 0.0
    %1101 = vmatpush.msra.mxu0 0.0
    %1102 = vmatpush.msra.mxu0 0.0
    %1103 = vmatpush.msra.mxu0 0.0
    %1104 = vmatpush.msra.mxu0 0.0
    %1105 = vmatpush.msra.mxu0 0.0
    %1106 = vmatpush.msra.mxu0 0.0
    %1107 = vmatpush.msra.mxu0 0.0
    %1108 = vmatpush.msra.mxu0 0.0
    %1109 = vmatpush.msra.mxu0 0.0
    %1110 = vmatpush.msra.mxu0 0.0
    %1111 = vmatpush.msra.mxu0 0.0
    %1112 = vmatpush.msra.mxu0 %v1096
    %1113 = vmatpush.msra.mxu0 %v1095
    %1114 = vmatpush.msra.mxu0 %v1094
    %1115 = vmatpush.msra.mxu0 %v1093
    %1116 = vmatmul.f32.gmra.mxu0 %v1098
    %v1117 = vpop.f32.mrf.mxu0
    %v1118 = vadd.f32 0.0, %v1117
    %1119 = vdwg.mxu0
    %v1120 = vadd.f32 %v1056, %v1118
    %s1121 = sld [smem:[#allocation10 + $0x48]]
    %v1122 = vstv %s1121
    %v1123 = vmul.f32 %v1122, %v541
    %s1124 = sld [smem:[#allocation11 + $0x9]]
    %v1125 = vstv %s1124
    %v1126 = vadd.f32 %v1123, %v1125
    %s1127 = sld [smem:[#allocation10 + $0x49]]
    %v1128 = vstv %s1127
    %v1129 = vmul.f32 %v1128, %v548
    %v1130 = vadd.f32 %v1126, %v1129
    %s1131 = sld [smem:[#allocation10 + $0x4a]]
    %v1132 = vstv %s1131
    %v1133 = vmul.f32 %v1132, %v553
    %v1134 = vadd.f32 %v1130, %v1133
    %s1135 = sld [smem:[#allocation10 + $0x4b]]
    %v1136 = vstv %s1135
    %v1137 = vmul.f32 %v1136, %v558
    %v1138 = vadd.f32 %v1134, %v1137
    %s1139 = sld [smem:[#allocation10 + $0x4c]]
    %v1140 = vstv %s1139
    %v1141 = vmul.f32 %v1140, %v563
    %v1142 = vadd.f32 %v1138, %v1141
    %s1143 = sld [smem:[#allocation10 + $0x4d]]
    %v1144 = vstv %s1143
    %v1145 = vmul.f32 %v1144, %v568
    %v1146 = vadd.f32 %v1142, %v1145
    %s1147 = sld [smem:[#allocation10 + $0x4e]]
    %v1148 = vstv %s1147
    %v1149 = vmul.f32 %v1148, %v573
    %v1150 = vadd.f32 %v1146, %v1149
    %s1151 = sld [smem:[#allocation10 + $0x4f]]
    %v1152 = vstv %s1151
    %v1153 = vmul.f32 %v1152, %v578
    %v1154 = vadd.f32 %v1150, %v1153
    %v1155 = vmax.f32 %v1154, 0.0
    %s1156 = scalar_lea.vmem [#allocation13], 288
    %v1157 = vld [vmem:[%s1156] sm:$0xff]
    %v1158 = vld [vmem:[%s1156 + $0x8] sm:$0xff]
    %v1159 = vld [vmem:[%s1156 + $0x10] sm:$0xff]
    %v1160 = vld [vmem:[%s1156 + $0x18] sm:$0xff]
    %v1162 = vsel %vm158, %v1155, 0
    %1164 = vmatpush.msra.mxu0 0.0
    %1165 = vmatpush.msra.mxu0 0.0
    %1166 = vmatpush.msra.mxu0 0.0
    %1167 = vmatpush.msra.mxu0 0.0
    %1168 = vmatpush.msra.mxu0 0.0
    %1169 = vmatpush.msra.mxu0 0.0
    %1170 = vmatpush.msra.mxu0 0.0
    %1171 = vmatpush.msra.mxu0 0.0
    %1172 = vmatpush.msra.mxu0 0.0
    %1173 = vmatpush.msra.mxu0 0.0
    %1174 = vmatpush.msra.mxu0 0.0
    %1175 = vmatpush.msra.mxu0 0.0
    %1176 = vmatpush.msra.mxu0 %v1160
    %1177 = vmatpush.msra.mxu0 %v1159
    %1178 = vmatpush.msra.mxu0 %v1158
    %1179 = vmatpush.msra.mxu0 %v1157
    %1180 = vmatmul.f32.gmra.mxu0 %v1162
    %v1181 = vpop.f32.mrf.mxu0
    %v1182 = vadd.f32 0.0, %v1181
    %1183 = vdwg.mxu0
    %v1184 = vadd.f32 %v1120, %v1182
    %s1185 = sld [smem:[#allocation10 + $0x50]]
    %v1186 = vstv %s1185
    %v1187 = vmul.f32 %v1186, %v541
    %s1188 = sld [smem:[#allocation11 + $0xa]]
    %v1189 = vstv %s1188
    %v1190 = vadd.f32 %v1187, %v1189
    %s1191 = sld [smem:[#allocation10 + $0x51]]
    %v1192 = vstv %s1191
    %v1193 = vmul.f32 %v1192, %v548
    %v1194 = vadd.f32 %v1190, %v1193
    %s1195 = sld [smem:[#allocation10 + $0x52]]
    %v1196 = vstv %s1195
    %v1197 = vmul.f32 %v1196, %v553
    %v1198 = vadd.f32 %v1194, %v1197
    %s1199 = sld [smem:[#allocation10 + $0x53]]
    %v1200 = vstv %s1199
    %v1201 = vmul.f32 %v1200, %v558
    %v1202 = vadd.f32 %v1198, %v1201
    %s1203 = sld [smem:[#allocation10 + $0x54]]
    %v1204 = vstv %s1203
    %v1205 = vmul.f32 %v1204, %v563
    %v1206 = vadd.f32 %v1202, %v1205
    %s1207 = sld [smem:[#allocation10 + $0x55]]
    %v1208 = vstv %s1207
    %v1209 = vmul.f32 %v1208, %v568
    %v1210 = vadd.f32 %v1206, %v1209
    %s1211 = sld [smem:[#allocation10 + $0x56]]
    %v1212 = vstv %s1211
    %v1213 = vmul.f32 %v1212, %v573
    %v1214 = vadd.f32 %v1210, %v1213
    %s1215 = sld [smem:[#allocation10 + $0x57]]
    %v1216 = vstv %s1215
    %v1217 = vmul.f32 %v1216, %v578
    %v1218 = vadd.f32 %v1214, %v1217
    %v1219 = vmax.f32 %v1218, 0.0
    %s1220 = scalar_lea.vmem [#allocation13], 320
    %v1221 = vld [vmem:[%s1220] sm:$0xff]
    %v1222 = vld [vmem:[%s1220 + $0x8] sm:$0xff]
    %v1223 = vld [vmem:[%s1220 + $0x10] sm:$0xff]
    %v1224 = vld [vmem:[%s1220 + $0x18] sm:$0xff]
    %v1226 = vsel %vm158, %v1219, 0
    %1228 = vmatpush.msra.mxu0 0.0
    %1229 = vmatpush.msra.mxu0 0.0
    %1230 = vmatpush.msra.mxu0 0.0
    %1231 = vmatpush.msra.mxu0 0.0
    %1232 = vmatpush.msra.mxu0 0.0
    %1233 = vmatpush.msra.mxu0 0.0
    %1234 = vmatpush.msra.mxu0 0.0
    %1235 = vmatpush.msra.mxu0 0.0
    %1236 = vmatpush.msra.mxu0 0.0
    %1237 = vmatpush.msra.mxu0 0.0
    %1238 = vmatpush.msra.mxu0 0.0
    %1239 = vmatpush.msra.mxu0 0.0
    %1240 = vmatpush.msra.mxu0 %v1224
    %1241 = vmatpush.msra.mxu0 %v1223
    %1242 = vmatpush.msra.mxu0 %v1222
    %1243 = vmatpush.msra.mxu0 %v1221
    %1244 = vmatmul.f32.gmra.mxu0 %v1226
    %v1245 = vpop.f32.mrf.mxu0
    %v1246 = vadd.f32 0.0, %v1245
    %1247 = vdwg.mxu0
    %v1248 = vadd.f32 %v1184, %v1246
    %s1249 = sld [smem:[#allocation10 + $0x58]]
    %v1250 = vstv %s1249
    %v1251 = vmul.f32 %v1250, %v541
    %s1252 = sld [smem:[#allocation11 + $0xb]]
    %v1253 = vstv %s1252
    %v1254 = vadd.f32 %v1251, %v1253
    %s1255 = sld [smem:[#allocation10 + $0x59]]
    %v1256 = vstv %s1255
    %v1257 = vmul.f32 %v1256, %v548
    %v1258 = vadd.f32 %v1254, %v1257
    %s1259 = sld [smem:[#allocation10 + $0x5a]]
    %v1260 = vstv %s1259
    %v1261 = vmul.f32 %v1260, %v553
    %v1262 = vadd.f32 %v1258, %v1261
    %s1263 = sld [smem:[#allocation10 + $0x5b]]
    %v1264 = vstv %s1263
    %v1265 = vmul.f32 %v1264, %v558
    %v1266 = vadd.f32 %v1262, %v1265
    %s1267 = sld [smem:[#allocation10 + $0x5c]]
    %v1268 = vstv %s1267
    %v1269 = vmul.f32 %v1268, %v563
    %v1270 = vadd.f32 %v1266, %v1269
    %s1271 = sld [smem:[#allocation10 + $0x5d]]
    %v1272 = vstv %s1271
    %v1273 = vmul.f32 %v1272, %v568
    %v1274 = vadd.f32 %v1270, %v1273
    %s1275 = sld [smem:[#allocation10 + $0x5e]]
    %v1276 = vstv %s1275
    %v1277 = vmul.f32 %v1276, %v573
    %v1278 = vadd.f32 %v1274, %v1277
    %s1279 = sld [smem:[#allocation10 + $0x5f]]
    %v1280 = vstv %s1279
    %v1281 = vmul.f32 %v1280, %v578
    %v1282 = vadd.f32 %v1278, %v1281
    %v1283 = vmax.f32 %v1282, 0.0
    %s1284 = scalar_lea.vmem [#allocation13], 352
    %v1285 = vld [vmem:[%s1284] sm:$0xff]
    %v1286 = vld [vmem:[%s1284 + $0x8] sm:$0xff]
    %v1287 = vld [vmem:[%s1284 + $0x10] sm:$0xff]
    %v1288 = vld [vmem:[%s1284 + $0x18] sm:$0xff]
    %v1290 = vsel %vm158, %v1283, 0
    %1292 = vmatpush.msra.mxu0 0.0
    %1293 = vmatpush.msra.mxu0 0.0
    %1294 = vmatpush.msra.mxu0 0.0
    %1295 = vmatpush.msra.mxu0 0.0
    %1296 = vmatpush.msra.mxu0 0.0
    %1297 = vmatpush.msra.mxu0 0.0
    %1298 = vmatpush.msra.mxu0 0.0
    %1299 = vmatpush.msra.mxu0 0.0
    %1300 = vmatpush.msra.mxu0 0.0
    %1301 = vmatpush.msra.mxu0 0.0
    %1302 = vmatpush.msra.mxu0 0.0
    %1303 = vmatpush.msra.mxu0 0.0
    %1304 = vmatpush.msra.mxu0 %v1288
    %1305 = vmatpush.msra.mxu0 %v1287
    %1306 = vmatpush.msra.mxu0 %v1286
    %1307 = vmatpush.msra.mxu0 %v1285
    %1308 = vmatmul.f32.gmra.mxu0 %v1290
    %v1309 = vpop.f32.mrf.mxu0
    %v1310 = vadd.f32 0.0, %v1309
    %1311 = vdwg.mxu0
    %v1312 = vadd.f32 %v1248, %v1310
    %s1313 = sld [smem:[#allocation10 + $0x60]]
    %v1314 = vstv %s1313
    %v1315 = vmul.f32 %v1314, %v541
    %s1316 = sld [smem:[#allocation11 + $0xc]]
    %v1317 = vstv %s1316
    %v1318 = vadd.f32 %v1315, %v1317
    %s1319 = sld [smem:[#allocation10 + $0x61]]
    %v1320 = vstv %s1319
    %v1321 = vmul.f32 %v1320, %v548
    %v1322 = vadd.f32 %v1318, %v1321
    %s1323 = sld [smem:[#allocation10 + $0x62]]
    %v1324 = vstv %s1323
    %v1325 = vmul.f32 %v1324, %v553
    %v1326 = vadd.f32 %v1322, %v1325
    %s1327 = sld [smem:[#allocation10 + $0x63]]
    %v1328 = vstv %s1327
    %v1329 = vmul.f32 %v1328, %v558
    %v1330 = vadd.f32 %v1326, %v1329
    %s1331 = sld [smem:[#allocation10 + $0x64]]
    %v1332 = vstv %s1331
    %v1333 = vmul.f32 %v1332, %v563
    %v1334 = vadd.f32 %v1330, %v1333
    %s1335 = sld [smem:[#allocation10 + $0x65]]
    %v1336 = vstv %s1335
    %v1337 = vmul.f32 %v1336, %v568
    %v1338 = vadd.f32 %v1334, %v1337
    %s1339 = sld [smem:[#allocation10 + $0x66]]
    %v1340 = vstv %s1339
    %v1341 = vmul.f32 %v1340, %v573
    %v1342 = vadd.f32 %v1338, %v1341
    %s1343 = sld [smem:[#allocation10 + $0x67]]
    %v1344 = vstv %s1343
    %v1345 = vmul.f32 %v1344, %v578
    %v1346 = vadd.f32 %v1342, %v1345
    %v1347 = vmax.f32 %v1346, 0.0
    %s1348 = scalar_lea.vmem [#allocation13], 384
    %v1349 = vld [vmem:[%s1348] sm:$0xff]
    %v1350 = vld [vmem:[%s1348 + $0x8] sm:$0xff]
    %v1351 = vld [vmem:[%s1348 + $0x10] sm:$0xff]
    %v1352 = vld [vmem:[%s1348 + $0x18] sm:$0xff]
    %v1354 = vsel %vm158, %v1347, 0
    %1356 = vmatpush.msra.mxu0 0.0
    %1357 = vmatpush.msra.mxu0 0.0
    %1358 = vmatpush.msra.mxu0 0.0
    %1359 = vmatpush.msra.mxu0 0.0
    %1360 = vmatpush.msra.mxu0 0.0
    %1361 = vmatpush.msra.mxu0 0.0
    %1362 = vmatpush.msra.mxu0 0.0
    %1363 = vmatpush.msra.mxu0 0.0
    %1364 = vmatpush.msra.mxu0 0.0
    %1365 = vmatpush.msra.mxu0 0.0
    %1366 = vmatpush.msra.mxu0 0.0
    %1367 = vmatpush.msra.mxu0 0.0
    %1368 = vmatpush.msra.mxu0 %v1352
    %1369 = vmatpush.msra.mxu0 %v1351
    %1370 = vmatpush.msra.mxu0 %v1350
    %1371 = vmatpush.msra.mxu0 %v1349
    %1372 = vmatmul.f32.gmra.mxu0 %v1354
    %v1373 = vpop.f32.mrf.mxu0
    %v1374 = vadd.f32 0.0, %v1373
    %1375 = vdwg.mxu0
    %v1376 = vadd.f32 %v1312, %v1374
    %s1377 = sld [smem:[#allocation10 + $0x68]]
    %v1378 = vstv %s1377
    %v1379 = vmul.f32 %v1378, %v541
    %s1380 = sld [smem:[#allocation11 + $0xd]]
    %v1381 = vstv %s1380
    %v1382 = vadd.f32 %v1379, %v1381
    %s1383 = sld [smem:[#allocation10 + $0x69]]
    %v1384 = vstv %s1383
    %v1385 = vmul.f32 %v1384, %v548
    %v1386 = vadd.f32 %v1382, %v1385
    %s1387 = sld [smem:[#allocation10 + $0x6a]]
    %v1388 = vstv %s1387
    %v1389 = vmul.f32 %v1388, %v553
    %v1390 = vadd.f32 %v1386, %v1389
    %s1391 = sld [smem:[#allocation10 + $0x6b]]
    %v1392 = vstv %s1391
    %v1393 = vmul.f32 %v1392, %v558
    %v1394 = vadd.f32 %v1390, %v1393
    %s1395 = sld [smem:[#allocation10 + $0x6c]]
    %v1396 = vstv %s1395
    %v1397 = vmul.f32 %v1396, %v563
    %v1398 = vadd.f32 %v1394, %v1397
    %s1399 = sld [smem:[#allocation10 + $0x6d]]
    %v1400 = vstv %s1399
    %v1401 = vmul.f32 %v1400, %v568
    %v1402 = vadd.f32 %v1398, %v1401
    %s1403 = sld [smem:[#allocation10 + $0x6e]]
    %v1404 = vstv %s1403
    %v1405 = vmul.f32 %v1404, %v573
    %v1406 = vadd.f32 %v1402, %v1405
    %s1407 = sld [smem:[#allocation10 + $0x6f]]
    %v1408 = vstv %s1407
    %v1409 = vmul.f32 %v1408, %v578
    %v1410 = vadd.f32 %v1406, %v1409
    %v1411 = vmax.f32 %v1410, 0.0
    %s1412 = scalar_lea.vmem [#allocation13], 416
    %v1413 = vld [vmem:[%s1412] sm:$0xff]
    %v1414 = vld [vmem:[%s1412 + $0x8] sm:$0xff]
    %v1415 = vld [vmem:[%s1412 + $0x10] sm:$0xff]
    %v1416 = vld [vmem:[%s1412 + $0x18] sm:$0xff]
    %v1418 = vsel %vm158, %v1411, 0
    %1420 = vmatpush.msra.mxu0 0.0
    %1421 = vmatpush.msra.mxu0 0.0
    %1422 = vmatpush.msra.mxu0 0.0
    %1423 = vmatpush.msra.mxu0 0.0
    %1424 = vmatpush.msra.mxu0 0.0
    %1425 = vmatpush.msra.mxu0 0.0
    %1426 = vmatpush.msra.mxu0 0.0
    %1427 = vmatpush.msra.mxu0 0.0
    %1428 = vmatpush.msra.mxu0 0.0
    %1429 = vmatpush.msra.mxu0 0.0
    %1430 = vmatpush.msra.mxu0 0.0
    %1431 = vmatpush.msra.mxu0 0.0
    %1432 = vmatpush.msra.mxu0 %v1416
    %1433 = vmatpush.msra.mxu0 %v1415
    %1434 = vmatpush.msra.mxu0 %v1414
    %1435 = vmatpush.msra.mxu0 %v1413
    %1436 = vmatmul.f32.gmra.mxu0 %v1418
    %v1437 = vpop.f32.mrf.mxu0
    %v1438 = vadd.f32 0.0, %v1437
    %1439 = vdwg.mxu0
    %v1440 = vadd.f32 %v1376, %v1438
    %s1441 = sld [smem:[#allocation10 + $0x70]]
    %v1442 = vstv %s1441
    %v1443 = vmul.f32 %v1442, %v541
    %s1444 = sld [smem:[#allocation11 + $0xe]]
    %v1445 = vstv %s1444
    %v1446 = vadd.f32 %v1443, %v1445
    %s1447 = sld [smem:[#allocation10 + $0x71]]
    %v1448 = vstv %s1447
    %v1449 = vmul.f32 %v1448, %v548
    %v1450 = vadd.f32 %v1446, %v1449
    %s1451 = sld [smem:[#allocation10 + $0x72]]
    %v1452 = vstv %s1451
    %v1453 = vmul.f32 %v1452, %v553
    %v1454 = vadd.f32 %v1450, %v1453
    %s1455 = sld [smem:[#allocation10 + $0x73]]
    %v1456 = vstv %s1455
    %v1457 = vmul.f32 %v1456, %v558
    %v1458 = vadd.f32 %v1454, %v1457
    %s1459 = sld [smem:[#allocation10 + $0x74]]
    %v1460 = vstv %s1459
    %v1461 = vmul.f32 %v1460, %v563
    %v1462 = vadd.f32 %v1458, %v1461
    %s1463 = sld [smem:[#allocation10 + $0x75]]
    %v1464 = vstv %s1463
    %v1465 = vmul.f32 %v1464, %v568
    %v1466 = vadd.f32 %v1462, %v1465
    %s1467 = sld [smem:[#allocation10 + $0x76]]
    %v1468 = vstv %s1467
    %v1469 = vmul.f32 %v1468, %v573
    %v1470 = vadd.f32 %v1466, %v1469
    %s1471 = sld [smem:[#allocation10 + $0x77]]
    %v1472 = vstv %s1471
    %v1473 = vmul.f32 %v1472, %v578
    %v1474 = vadd.f32 %v1470, %v1473
    %v1475 = vmax.f32 %v1474, 0.0
    %s1476 = scalar_lea.vmem [#allocation13], 448
    %v1477 = vld [vmem:[%s1476] sm:$0xff]
    %v1478 = vld [vmem:[%s1476 + $0x8] sm:$0xff]
    %v1479 = vld [vmem:[%s1476 + $0x10] sm:$0xff]
    %v1480 = vld [vmem:[%s1476 + $0x18] sm:$0xff]
    %v1482 = vsel %vm158, %v1475, 0
    %1484 = vmatpush.msra.mxu0 0.0
    %1485 = vmatpush.msra.mxu0 0.0
    %1486 = vmatpush.msra.mxu0 0.0
    %1487 = vmatpush.msra.mxu0 0.0
    %1488 = vmatpush.msra.mxu0 0.0
    %1489 = vmatpush.msra.mxu0 0.0
    %1490 = vmatpush.msra.mxu0 0.0
    %1491 = vmatpush.msra.mxu0 0.0
    %1492 = vmatpush.msra.mxu0 0.0
    %1493 = vmatpush.msra.mxu0 0.0
    %1494 = vmatpush.msra.mxu0 0.0
    %1495 = vmatpush.msra.mxu0 0.0
    %1496 = vmatpush.msra.mxu0 %v1480
    %1497 = vmatpush.msra.mxu0 %v1479
    %1498 = vmatpush.msra.mxu0 %v1478
    %1499 = vmatpush.msra.mxu0 %v1477
    %1500 = vmatmul.f32.gmra.mxu0 %v1482
    %v1501 = vpop.f32.mrf.mxu0
    %v1502 = vadd.f32 0.0, %v1501
    %1503 = vdwg.mxu0
    %v1504 = vadd.f32 %v1440, %v1502
    %s1505 = sld [smem:[#allocation10 + $0x78]]
    %v1506 = vstv %s1505
    %v1507 = vmul.f32 %v1506, %v541
    %s1508 = sld [smem:[#allocation11 + $0xf]]
    %v1509 = vstv %s1508
    %v1510 = vadd.f32 %v1507, %v1509
    %s1511 = sld [smem:[#allocation10 + $0x79]]
    %v1512 = vstv %s1511
    %v1513 = vmul.f32 %v1512, %v548
    %v1514 = vadd.f32 %v1510, %v1513
    %s1515 = sld [smem:[#allocation10 + $0x7a]]
    %v1516 = vstv %s1515
    %v1517 = vmul.f32 %v1516, %v553
    %v1518 = vadd.f32 %v1514, %v1517
    %s1519 = sld [smem:[#allocation10 + $0x7b]]
    %v1520 = vstv %s1519
    %v1521 = vmul.f32 %v1520, %v558
    %v1522 = vadd.f32 %v1518, %v1521
    %s1523 = sld [smem:[#allocation10 + $0x7c]]
    %v1524 = vstv %s1523
    %v1525 = vmul.f32 %v1524, %v563
    %v1526 = vadd.f32 %v1522, %v1525
    %s1527 = sld [smem:[#allocation10 + $0x7d]]
    %v1528 = vstv %s1527
    %v1529 = vmul.f32 %v1528, %v568
    %v1530 = vadd.f32 %v1526, %v1529
    %s1531 = sld [smem:[#allocation10 + $0x7e]]
    %v1532 = vstv %s1531
    %v1533 = vmul.f32 %v1532, %v573
    %v1534 = vadd.f32 %v1530, %v1533
    %s1535 = sld [smem:[#allocation10 + $0x7f]]
    %v1536 = vstv %s1535
    %v1537 = vmul.f32 %v1536, %v578
    %v1538 = vadd.f32 %v1534, %v1537
    %v1539 = vmax.f32 %v1538, 0.0
    %s1540 = scalar_lea.vmem [#allocation13], 480
    %v1541 = vld [vmem:[%s1540] sm:$0xff]
    %v1542 = vld [vmem:[%s1540 + $0x8] sm:$0xff]
    %v1543 = vld [vmem:[%s1540 + $0x10] sm:$0xff]
    %v1544 = vld [vmem:[%s1540 + $0x18] sm:$0xff]
    %v1546 = vsel %vm158, %v1539, 0
    %1548 = vmatpush.msra.mxu0 0.0
    %1549 = vmatpush.msra.mxu0 0.0
    %1550 = vmatpush.msra.mxu0 0.0
    %1551 = vmatpush.msra.mxu0 0.0
    %1552 = vmatpush.msra.mxu0 0.0
    %1553 = vmatpush.msra.mxu0 0.0
    %1554 = vmatpush.msra.mxu0 0.0
    %1555 = vmatpush.msra.mxu0 0.0
    %1556 = vmatpush.msra.mxu0 0.0
    %1557 = vmatpush.msra.mxu0 0.0
    %1558 = vmatpush.msra.mxu0 0.0
    %1559 = vmatpush.msra.mxu0 0.0
    %1560 = vmatpush.msra.mxu0 %v1544
    %1561 = vmatpush.msra.mxu0 %v1543
    %1562 = vmatpush.msra.mxu0 %v1542
    %1563 = vmatpush.msra.mxu0 %v1541
    %1564 = vmatmul.f32.gmra.mxu0 %v1546
    %v1565 = vpop.f32.mrf.mxu0
    %v1566 = vadd.f32 0.0, %v1565
    %1567 = vdwg.mxu0
    %v1568 = vadd.f32 %v1504, %v1566
    %1569 = vst [vmem:[#allocation15] sm:$0xff] %v1568
    // Predicated region
    $region58: #{tpu_custom_call.1} parent=1 // pred_check
      _
    $region59: #{tpu_custom_call.1} parent=1 // pred_check_branch
      %1571 = sbr.rel (0) target = $region61
    $region60: #{tpu_custom_call.1} parent=1 // pred_region
      %1573 = vsyncadd [#allocation5], 0
      %s1575 = sshll.u32 [#allocation15], 4
      %s1576 = int_to_ptr.vmem [resolvable:$true] %s1575
      %s1577 = sshll.u32 %s8, 4
      %s1578 = int_to_ptr.hbm [resolvable:$true] %s1577
      %1580 = dma.vmem_to_hbm [thread:$0]  %s1576, 128, %s1578, [#allocation5]
    $region61: #{tpu_custom_call.1} parent=1 // pred_fallthru
      _
    // Predicated region
    $region62: #{tpu_custom_call.1} parent=1 // pred_check
      _
    $region63: #{tpu_custom_call.1} parent=1 // pred_check_branch
      %1582 = sbr.rel (0) target = $region65
    $region64: #{tpu_custom_call.1} parent=1 // pred_region
      %1584 = dma.done [#allocation5], 128
    $region65: #{tpu_custom_call.1} parent=1 // pred_fallthru
      _
    %1585 = vsyncpa [#allocation4], 1
    %1586 = vsyncpa [#allocation8], 1
    %1587 = vsyncpa [#allocation14], 1
    %1588 = vsyncpa [#allocation5], 1
    %1589 = vsyncpa [#allocation6], 1
    %1590 = vsyncpa [#allocation12], 1

</llo_original>
